<compile_context>
chip_gen: v7x
topology: tpu7x:2x2x1
jax: 0.10.0
libtpu: 0.0.40
codegen_flags: <defaults>
</compile_context>

<pallas_src>
import numpy as np
import jax
import jax.numpy as jnp
from jax.experimental import pallas as pl
from jax.experimental.pallas import tpu as pltpu


def _db2_analysis_matrix(n):
    """Periodized single-level Daubechies-2 (D4) analysis matrix (orthogonal)."""
    s3 = np.sqrt(3.0)
    h = np.array([1.0 + s3, 3.0 + s3, 3.0 - s3, 1.0 - s3]) / (4.0 * np.sqrt(2.0))
    g = np.array([h[3], -h[2], h[1], -h[0]])
    W = np.zeros((n, n), dtype=np.float64)
    for j in range(n // 2):
        for k in range(4):
            W[j, (2 * j + k) % n] += h[k]
            W[n // 2 + j, (2 * j + k) % n] += g[k]
    return W.astype(np.float32)


def _centered_dft_matrix(n):
    """A such that fftshift(fft(ifftshift(y), norm='ortho')) == A @ y (n even)."""
    assert n % 2 == 0
    k = np.arange(n)
    F = np.exp(-2j * np.pi * np.outer(k, k) / n) / np.sqrt(n)
    return np.roll(np.roll(F, n // 2, axis=0), n // 2, axis=1).astype(np.complex64)


def _dot(a, b):
    return jnp.dot(a, b, preferred_element_type=jnp.float32)


def _cmm_left(ar, ai, br, bi):
    """(ar + i*ai) @ (br + i*bi) using 3 real matmuls (Karatsuba)."""
    p1 = _dot(ar, br)
    p2 = _dot(ai, bi)
    p3 = _dot(ar + ai, br + bi)
    return p1 - p2, p3 - p1 - p2


def _cmm_right(br, bi, ar, ai):
    """(br + i*bi) @ (ar + i*ai) using 3 real matmuls (Karatsuba)."""
    p1 = _dot(br, ar)
    p2 = _dot(bi, ai)
    p3 = _dot(br + bi, ar + ai)
    return p1 - p2, p3 - p1 - p2


def _prox_kernel(cr, ci, wht, ww, ahr, ahi, awr, awi, m,
                 smr, smi, bkr, bki,
                 outr, outi):
    H, W = outr.shape
    nC = smr.shape[1] // W

    # 1) single-level 2-D inverse Daubechies-2 wavelet transform: X = WH^T @ C @ WW
    xr = _dot(_dot(wht[...], cr[...]), ww[...])
    xi = _dot(_dot(wht[...], ci[...]), ww[...])

    # 2) coil images Y_c = sMaps_c * X, coil-batched along lanes (L1 = (H, nC*W))
    xtr = jnp.concatenate([xr] * nC, axis=1)
    xti = jnp.concatenate([xi] * nC, axis=1)
    sr, si = smr[...], smi[...]
    yr = sr * xtr - si * xti
    yi = sr * xti + si * xtr

    AHr, AHi = ahr[...], ahi[...]
    AWr, AWi = awr[...], awi[...]

    # 3) centered ortho DFT along H for all coils at once: T = A_H @ Y
    tr, ti = _cmm_left(AHr, AHi, yr, yi)

    # 4) relayout L1 (H, nC*W) -> L2 (nC*H, W) (rows ordered coil-major, then h)
    tr2 = jnp.concatenate([tr[:, c * W:(c + 1) * W] for c in range(nC)], axis=0)
    ti2 = jnp.concatenate([ti[:, c * W:(c + 1) * W] for c in range(nC)], axis=0)

    # 5) centered ortho DFT along W: K = T @ A_W
    kr, ki = _cmm_right(tr2, ti2, AWr, AWi)

    # 6) data consistency: boolean select with the measured k-space (no 0*NaN blend)
    mk = m[...].astype(jnp.float32) != 0.0
    kr = jnp.where(mk, bkr[...], kr)
    ki = jnp.where(mk, bki[...], ki)

    # 7) inverse DFT along W: U = K @ conj(A_W)
    ur, ui = _cmm_right(kr, ki, AWr, -AWi)

    # 8) relayout L2 -> L1
    ur1 = jnp.concatenate([ur[c * H:(c + 1) * H, :] for c in range(nC)], axis=1)
    ui1 = jnp.concatenate([ui[c * H:(c + 1) * H, :] for c in range(nC)], axis=1)

    # 9) inverse DFT along H: V = conj(A_H) @ U
    vr, vi = _cmm_left(AHr, -AHi, ur1, ui1)

    # 10) coil combine: out = sum_c conj(sMaps_c) * V_c
    pr = sr * vr + si * vi
    pi = sr * vi - si * vr
    accr = pr[:, 0:W]
    acci = pi[:, 0:W]
    for c in range(1, nC):
        accr = accr + pr[:, c * W:(c + 1) * W]
        acci = acci + pi[:, c * W:(c + 1) * W]
    outr[...] = accr
    outi[...] = acci


def prox_block_forward(x, mask, b, sMaps, wavSplit):
    """
    x:      (1, 1, H, W)         complex64 wavelet-domain image
    mask:   (W,) bool, (H, W) bool, or (..., H, W, nCoils) bool
    b:      (1, 1, H, W, nCoils) complex64 measured k-space
    sMaps:  (H, W, nCoils)       complex64 coil sensitivity maps
    returns (1, 1, H, W)         complex64
    """
    # TODO(synk): math_utils.iwtDaubechies2 supports recursive wavSplit trees; only a
    # single-level split (wavSplit of size 1) is implemented here.
    assert np.asarray(wavSplit).size == 1

    sMaps = jnp.asarray(sMaps)
    H, W, nCoils = sMaps.shape
    assert H % 2 == 0 and W % 2 == 0

    x = jnp.asarray(x)
    b = jnp.asarray(b)
    assert int(np.prod(x.shape[:-2])) == 1 and x.shape[-2:] == (H, W), x.shape
    assert int(np.prod(b.shape[:-3])) == 1 and b.shape[-3:] == (H, W, nCoils), b.shape

    c = x.reshape(H, W).astype(jnp.complex64)
    b2 = b.reshape(H, W, nCoils).astype(jnp.complex64)
    sm = sMaps.astype(jnp.complex64)

    # Constant operator matrices (host precompute).
    WHt = _db2_analysis_matrix(H).T
    WWm = _db2_analysis_matrix(W)
    AH = _centered_dft_matrix(H)
    AW = _centered_dft_matrix(W)

    # Coil-batched layouts (built once in the wrapper, outside the kernel):
    #   L1 (H, nCoils*W): col = c*W + w
    #   L2 (nCoils*H, W): row = c*H + h
    sm_l1 = jnp.transpose(sm, (0, 2, 1)).reshape(H, nCoils * W)
    b_l2 = jnp.moveaxis(b2, -1, 0).reshape(nCoils * H, W)

    mask = jnp.asarray(mask)
    if mask.ndim == 1:
        m_hwc = jnp.broadcast_to(mask.reshape(W)[None, :, None], (H, W, nCoils))
    elif mask.ndim == 2:
        m_hwc = jnp.broadcast_to(mask.reshape(H, W)[:, :, None], (H, W, nCoils))
    else:
        m_hwc = jnp.broadcast_to(mask.reshape(mask.shape[-3:]), (H, W, nCoils))
    m_l2 = jnp.moveaxis(m_hwc, -1, 0).reshape(nCoils * H, W).astype(jnp.int8)

    f32 = lambda a: jnp.asarray(a, jnp.float32)
    args = (f32(c.real), f32(c.imag),
            f32(WHt), f32(WWm),
            f32(AH.real), f32(AH.imag), f32(AW.real), f32(AW.imag),
            m_l2,
            f32(sm_l1.real), f32(sm_l1.imag),
            f32(b_l2.real), f32(b_l2.imag))

    out_shape = (jax.ShapeDtypeStruct((H, W), jnp.float32),
                 jax.ShapeDtypeStruct((H, W), jnp.float32))

    # Advisory cost estimate for the XLA scheduler around the custom call.
    matmul_flops = (12 * nCoils * H * W * (H + W)     # 3M complex DFT/IDFT, coil-batched
                    + 4 * H * W * (H + W))            # inverse wavelet transform
    arg_bytes = sum(int(np.prod(a.shape)) * a.dtype.itemsize for a in args)
    bytes_accessed = arg_bytes + 2 * H * W * 4

    # Everything is resident at once (no grid -> single-buffered operands); budget VMEM
    # with headroom for matmul temporaries, capped at v7x physical VMEM (64 MiB).
    interm_bytes = 16 * nCoils * H * W * 4
    vmem_limit = int(min(max(3 * arg_bytes + interm_bytes, 32 * 1024 * 1024),
                         64 * 1024 * 1024))

    outr, outi = pl.pallas_call(
        _prox_kernel,
        out_shape=out_shape,
        cost_estimate=pl.CostEstimate(flops=int(matmul_flops),
                                      transcendentals=0,
                                      bytes_accessed=int(bytes_accessed)),
        compiler_params=pltpu.CompilerParams(vmem_limit_bytes=vmem_limit),
    )(*args)

    return (outr + 1j * outi).reshape(x.shape[:-2] + (H, W)).astype(jnp.complex64)


def prox_block_ref(x, mask, b, sMaps):
    """Plain-JAX reference mirroring the PyTorch forward (single-level iwt)."""
    H, W, _ = sMaps.shape
    WH = jnp.asarray(_db2_analysis_matrix(H))
    WW = jnp.asarray(_db2_analysis_matrix(W))
    img = WH.T @ jnp.squeeze(x) @ WW                                  # iwtDaubechies2
    coil_imgs = sMaps * img[:, :, None]                               # (H, W, nCoils)
    ksp = jnp.fft.fftshift(jnp.fft.fftn(jnp.fft.ifftshift(coil_imgs, axes=(0, 1)),
                                        axes=(0, 1), norm='ortho'), axes=(0, 1))
    b2 = jnp.squeeze(b)
    if mask.ndim == 1:
        m = jnp.broadcast_to(mask[None, :, None], ksp.shape)
    else:
        m = jnp.broadcast_to(mask[:, :, None], ksp.shape)
    ksp = jnp.where(m, b2, ksp)
    rec = jnp.fft.fftshift(jnp.fft.ifftn(jnp.fft.ifftshift(ksp, axes=(0, 1)),
                                         axes=(0, 1), norm='ortho'), axes=(0, 1))
    out = jnp.sum(jnp.conj(sMaps) * rec, axis=-1)
    return out[None, None, :, :]


if __name__ == "__main__":
    # W and nCoils*W are multiples of 128 so every slice/concat/store is lane-dense.
    H, W, nCoils = 128, 128, 4
    key = jax.random.PRNGKey(0)
    k1, k2, k3, k4, k5, k6 = jax.random.split(key, 6)

    x = (jax.random.normal(k1, (1, 1, H, W)) +
         1j * jax.random.normal(k2, (1, 1, H, W))).astype(jnp.complex64)
    sMaps = (jax.random.normal(k3, (H, W, nCoils)) +
             1j * jax.random.normal(k4, (H, W, nCoils))).astype(jnp.complex64)
    b = (jax.random.normal(k5, (1, 1, H, W, nCoils)) +
         1j * jax.random.normal(k6, (1, 1, H, W, nCoils))).astype(jnp.complex64)
    mask = (jnp.arange(W) % 3 == 0)          # sampled k-space columns
    wavSplit = np.ones((1, 1))               # single-level wavelet split

    out = jax.block_until_ready(prox_block_forward(x, mask, b, sMaps, wavSplit))

    ref = prox_block_ref(x, mask, b, sMaps)
    rel_err = float(jnp.max(jnp.abs(out - ref)) / (jnp.max(jnp.abs(ref)) + 1e-8))
    assert rel_err < 1e-3, f"kernel/reference mismatch: rel err = {rel_err}"
    print("KERNEL_OK")
</pallas_src>

<mosaic_0001>
module attributes {stable_mosaic.version = 11 : i64} {
  func.func @_prox_kernel(%arg0: memref<128x128xf32, #tpu.memory_space<vmem>>, %arg1: memref<128x128xf32, #tpu.memory_space<vmem>>, %arg2: memref<128x128xf32, #tpu.memory_space<vmem>>, %arg3: memref<128x128xf32, #tpu.memory_space<vmem>>, %arg4: memref<128x128xf32, #tpu.memory_space<vmem>>, %arg5: memref<128x128xf32, #tpu.memory_space<vmem>>, %arg6: memref<128x128xf32, #tpu.memory_space<vmem>>, %arg7: memref<128x128xf32, #tpu.memory_space<vmem>>, %arg8: memref<512x128xi8, #tpu.memory_space<vmem>>, %arg9: memref<128x512xf32, #tpu.memory_space<vmem>>, %arg10: memref<128x512xf32, #tpu.memory_space<vmem>>, %arg11: memref<512x128xf32, #tpu.memory_space<vmem>>, %arg12: memref<512x128xf32, #tpu.memory_space<vmem>>, %arg13: memref<128x128xf32, #tpu.memory_space<vmem>>, %arg14: memref<128x128xf32, #tpu.memory_space<vmem>>) attributes {dimension_semantics = [], scalar_prefetch = 0 : i64, scratch_operands = 0 : i64, tpu.core_type = #tpu.core_type<tc>} {
    %c0 = arith.constant 0 : index
    %c0_0 = arith.constant 0 : index
    %0 = vector.load %arg2[%c0, %c0_0] : memref<128x128xf32, #tpu.memory_space<vmem>>, vector<128x128xf32>
    %c0_1 = arith.constant 0 : index
    %c0_2 = arith.constant 0 : index
    %1 = vector.load %arg0[%c0_1, %c0_2] : memref<128x128xf32, #tpu.memory_space<vmem>>, vector<128x128xf32>
    %cst = arith.constant dense<0.000000e+00> : vector<128x128xf32>
    %2 = tpu.matmul %0, %1, %cst {dimension_numbers = #tpu.dot_dimension_numbers<[1], [0], [0], [1], [0, 0, 1, 1], [], []>} : vector<128x128xf32>, vector<128x128xf32>, vector<128x128xf32> -> vector<128x128xf32>
    %c0_3 = arith.constant 0 : index
    %c0_4 = arith.constant 0 : index
    %3 = vector.load %arg3[%c0_3, %c0_4] : memref<128x128xf32, #tpu.memory_space<vmem>>, vector<128x128xf32>
    %cst_5 = arith.constant dense<0.000000e+00> : vector<128x128xf32>
    %4 = tpu.matmul %2, %3, %cst_5 {dimension_numbers = #tpu.dot_dimension_numbers<[1], [0], [0], [1], [0, 0, 1, 1], [], []>} : vector<128x128xf32>, vector<128x128xf32>, vector<128x128xf32> -> vector<128x128xf32>
    %c0_6 = arith.constant 0 : index
    %c0_7 = arith.constant 0 : index
    %5 = vector.load %arg2[%c0_6, %c0_7] : memref<128x128xf32, #tpu.memory_space<vmem>>, vector<128x128xf32>
    %c0_8 = arith.constant 0 : index
    %c0_9 = arith.constant 0 : index
    %6 = vector.load %arg1[%c0_8, %c0_9] : memref<128x128xf32, #tpu.memory_space<vmem>>, vector<128x128xf32>
    %cst_10 = arith.constant dense<0.000000e+00> : vector<128x128xf32>
    %7 = tpu.matmul %5, %6, %cst_10 {dimension_numbers = #tpu.dot_dimension_numbers<[1], [0], [0], [1], [0, 0, 1, 1], [], []>} : vector<128x128xf32>, vector<128x128xf32>, vector<128x128xf32> -> vector<128x128xf32>
    %c0_11 = arith.constant 0 : index
    %c0_12 = arith.constant 0 : index
    %8 = vector.load %arg3[%c0_11, %c0_12] : memref<128x128xf32, #tpu.memory_space<vmem>>, vector<128x128xf32>
    %cst_13 = arith.constant dense<0.000000e+00> : vector<128x128xf32>
    %9 = tpu.matmul %7, %8, %cst_13 {dimension_numbers = #tpu.dot_dimension_numbers<[1], [0], [0], [1], [0, 0, 1, 1], [], []>} : vector<128x128xf32>, vector<128x128xf32>, vector<128x128xf32> -> vector<128x128xf32>
    %10 = tpu.concatenate %4, %4, %4, %4 in 1 : vector<128x128xf32>, vector<128x128xf32>, vector<128x128xf32>, vector<128x128xf32> -> vector<128x512xf32>
    %11 = tpu.concatenate %9, %9, %9, %9 in 1 : vector<128x128xf32>, vector<128x128xf32>, vector<128x128xf32>, vector<128x128xf32> -> vector<128x512xf32>
    %c0_14 = arith.constant 0 : index
    %c0_15 = arith.constant 0 : index
    %12 = vector.load %arg9[%c0_14, %c0_15] : memref<128x512xf32, #tpu.memory_space<vmem>>, vector<128x512xf32>
    %c0_16 = arith.constant 0 : index
    %c0_17 = arith.constant 0 : index
    %13 = vector.load %arg10[%c0_16, %c0_17] : memref<128x512xf32, #tpu.memory_space<vmem>>, vector<128x512xf32>
    %14 = arith.mulf %12, %10 : vector<128x512xf32>
    %15 = arith.mulf %13, %11 : vector<128x512xf32>
    %16 = arith.subf %14, %15 : vector<128x512xf32>
    %17 = arith.mulf %12, %11 : vector<128x512xf32>
    %18 = arith.mulf %13, %10 : vector<128x512xf32>
    %19 = arith.addf %17, %18 : vector<128x512xf32>
    %c0_18 = arith.constant 0 : index
    %c0_19 = arith.constant 0 : index
    %20 = vector.load %arg4[%c0_18, %c0_19] : memref<128x128xf32, #tpu.memory_space<vmem>>, vector<128x128xf32>
    %c0_20 = arith.constant 0 : index
    %c0_21 = arith.constant 0 : index
    %21 = vector.load %arg5[%c0_20, %c0_21] : memref<128x128xf32, #tpu.memory_space<vmem>>, vector<128x128xf32>
    %c0_22 = arith.constant 0 : index
    %c0_23 = arith.constant 0 : index
    %22 = vector.load %arg6[%c0_22, %c0_23] : memref<128x128xf32, #tpu.memory_space<vmem>>, vector<128x128xf32>
    %c0_24 = arith.constant 0 : index
    %c0_25 = arith.constant 0 : index
    %23 = vector.load %arg7[%c0_24, %c0_25] : memref<128x128xf32, #tpu.memory_space<vmem>>, vector<128x128xf32>
    %cst_26 = arith.constant dense<0.000000e+00> : vector<128x512xf32>
    %24 = tpu.matmul %20, %16, %cst_26 {dimension_numbers = #tpu.dot_dimension_numbers<[1], [0], [0], [1], [0, 0, 1, 1], [], []>} : vector<128x128xf32>, vector<128x512xf32>, vector<128x512xf32> -> vector<128x512xf32>
    %cst_27 = arith.constant dense<0.000000e+00> : vector<128x512xf32>
    %25 = tpu.matmul %21, %19, %cst_27 {dimension_numbers = #tpu.dot_dimension_numbers<[1], [0], [0], [1], [0, 0, 1, 1], [], []>} : vector<128x128xf32>, vector<128x512xf32>, vector<128x512xf32> -> vector<128x512xf32>
    %26 = arith.addf %20, %21 : vector<128x128xf32>
    %27 = arith.addf %16, %19 : vector<128x512xf32>
    %cst_28 = arith.constant dense<0.000000e+00> : vector<128x512xf32>
    %28 = tpu.matmul %26, %27, %cst_28 {dimension_numbers = #tpu.dot_dimension_numbers<[1], [0], [0], [1], [0, 0, 1, 1], [], []>} : vector<128x128xf32>, vector<128x512xf32>, vector<128x512xf32> -> vector<128x512xf32>
    %29 = arith.subf %24, %25 : vector<128x512xf32>
    %30 = arith.subf %28, %24 : vector<128x512xf32>
    %31 = arith.subf %30, %25 : vector<128x512xf32>
    %32 = vector.extract_strided_slice %29 {offsets = [0, 0], sizes = [128, 128], strides = [1, 1]} : vector<128x512xf32> to vector<128x128xf32>
    %33 = vector.extract_strided_slice %29 {offsets = [0, 128], sizes = [128, 128], strides = [1, 1]} : vector<128x512xf32> to vector<128x128xf32>
    %34 = vector.extract_strided_slice %29 {offsets = [0, 256], sizes = [128, 128], strides = [1, 1]} : vector<128x512xf32> to vector<128x128xf32>
    %35 = vector.extract_strided_slice %29 {offsets = [0, 384], sizes = [128, 128], strides = [1, 1]} : vector<128x512xf32> to vector<128x128xf32>
    %36 = tpu.concatenate %32, %33, %34, %35 in 0 : vector<128x128xf32>, vector<128x128xf32>, vector<128x128xf32>, vector<128x128xf32> -> vector<512x128xf32>
    %37 = vector.extract_strided_slice %31 {offsets = [0, 0], sizes = [128, 128], strides = [1, 1]} : vector<128x512xf32> to vector<128x128xf32>
    %38 = vector.extract_strided_slice %31 {offsets = [0, 128], sizes = [128, 128], strides = [1, 1]} : vector<128x512xf32> to vector<128x128xf32>
    %39 = vector.extract_strided_slice %31 {offsets = [0, 256], sizes = [128, 128], strides = [1, 1]} : vector<128x512xf32> to vector<128x128xf32>
    %40 = vector.extract_strided_slice %31 {offsets = [0, 384], sizes = [128, 128], strides = [1, 1]} : vector<128x512xf32> to vector<128x128xf32>
    %41 = tpu.concatenate %37, %38, %39, %40 in 0 : vector<128x128xf32>, vector<128x128xf32>, vector<128x128xf32>, vector<128x128xf32> -> vector<512x128xf32>
    %cst_29 = arith.constant dense<0.000000e+00> : vector<512x128xf32>
    %42 = tpu.matmul %36, %22, %cst_29 {dimension_numbers = #tpu.dot_dimension_numbers<[1], [0], [0], [1], [0, 0, 1, 1], [], []>} : vector<512x128xf32>, vector<128x128xf32>, vector<512x128xf32> -> vector<512x128xf32>
    %cst_30 = arith.constant dense<0.000000e+00> : vector<512x128xf32>
    %43 = tpu.matmul %41, %23, %cst_30 {dimension_numbers = #tpu.dot_dimension_numbers<[1], [0], [0], [1], [0, 0, 1, 1], [], []>} : vector<512x128xf32>, vector<128x128xf32>, vector<512x128xf32> -> vector<512x128xf32>
    %44 = arith.addf %36, %41 : vector<512x128xf32>
    %45 = arith.addf %22, %23 : vector<128x128xf32>
    %cst_31 = arith.constant dense<0.000000e+00> : vector<512x128xf32>
    %46 = tpu.matmul %44, %45, %cst_31 {dimension_numbers = #tpu.dot_dimension_numbers<[1], [0], [0], [1], [0, 0, 1, 1], [], []>} : vector<512x128xf32>, vector<128x128xf32>, vector<512x128xf32> -> vector<512x128xf32>
    %47 = arith.subf %42, %43 : vector<512x128xf32>
    %48 = arith.subf %46, %42 : vector<512x128xf32>
    %49 = arith.subf %48, %43 : vector<512x128xf32>
    %c0_32 = arith.constant 0 : index
    %c0_33 = arith.constant 0 : index
    %50 = vector.load %arg8[%c0_32, %c0_33] : memref<512x128xi8, #tpu.memory_space<vmem>>, vector<512x128xi8>
    %51 = arith.sitofp %50 : vector<512x128xi8> to vector<512x128xf32>
    %cst_34 = arith.constant 0.000000e+00 : f32
    %52 = vector.broadcast %cst_34 : f32 to vector<512x128xf32>
    %53 = arith.cmpf one, %51, %52 : vector<512x128xf32>
    %c0_35 = arith.constant 0 : index
    %c0_36 = arith.constant 0 : index
    %54 = vector.load %arg11[%c0_35, %c0_36] : memref<512x128xf32, #tpu.memory_space<vmem>>, vector<512x128xf32>
    %55 = arith.select %53, %54, %47 : vector<512x128xi1>, vector<512x128xf32>
    %c0_37 = arith.constant 0 : index
    %c0_38 = arith.constant 0 : index
    %56 = vector.load %arg12[%c0_37, %c0_38] : memref<512x128xf32, #tpu.memory_space<vmem>>, vector<512x128xf32>
    %57 = arith.select %53, %56, %49 : vector<512x128xi1>, vector<512x128xf32>
    %cst_39 = arith.constant 0.000000e+00 : f32
    %58 = vector.broadcast %cst_39 : f32 to vector<128x128xf32>
    %59 = arith.subf %58, %23 : vector<128x128xf32>
    %cst_40 = arith.constant dense<0.000000e+00> : vector<512x128xf32>
    %60 = tpu.matmul %55, %22, %cst_40 {dimension_numbers = #tpu.dot_dimension_numbers<[1], [0], [0], [1], [0, 0, 1, 1], [], []>} : vector<512x128xf32>, vector<128x128xf32>, vector<512x128xf32> -> vector<512x128xf32>
    %cst_41 = arith.constant dense<0.000000e+00> : vector<512x128xf32>
    %61 = tpu.matmul %57, %59, %cst_41 {dimension_numbers = #tpu.dot_dimension_numbers<[1], [0], [0], [1], [0, 0, 1, 1], [], []>} : vector<512x128xf32>, vector<128x128xf32>, vector<512x128xf32> -> vector<512x128xf32>
    %62 = arith.addf %55, %57 : vector<512x128xf32>
    %63 = arith.addf %22, %59 : vector<128x128xf32>
    %cst_42 = arith.constant dense<0.000000e+00> : vector<512x128xf32>
    %64 = tpu.matmul %62, %63, %cst_42 {dimension_numbers = #tpu.dot_dimension_numbers<[1], [0], [0], [1], [0, 0, 1, 1], [], []>} : vector<512x128xf32>, vector<128x128xf32>, vector<512x128xf32> -> vector<512x128xf32>
    %65 = arith.subf %60, %61 : vector<512x128xf32>
    %66 = arith.subf %64, %60 : vector<512x128xf32>
    %67 = arith.subf %66, %61 : vector<512x128xf32>
    %68 = vector.extract_strided_slice %65 {offsets = [0, 0], sizes = [128, 128], strides = [1, 1]} : vector<512x128xf32> to vector<128x128xf32>
    %69 = vector.extract_strided_slice %65 {offsets = [128, 0], sizes = [128, 128], strides = [1, 1]} : vector<512x128xf32> to vector<128x128xf32>
    %70 = vector.extract_strided_slice %65 {offsets = [256, 0], sizes = [128, 128], strides = [1, 1]} : vector<512x128xf32> to vector<128x128xf32>
    %71 = vector.extract_strided_slice %65 {offsets = [384, 0], sizes = [128, 128], strides = [1, 1]} : vector<512x128xf32> to vector<128x128xf32>
    %72 = tpu.concatenate %68, %69, %70, %71 in 1 : vector<128x128xf32>, vector<128x128xf32>, vector<128x128xf32>, vector<128x128xf32> -> vector<128x512xf32>
    %73 = vector.extract_strided_slice %67 {offsets = [0, 0], sizes = [128, 128], strides = [1, 1]} : vector<512x128xf32> to vector<128x128xf32>
    %74 = vector.extract_strided_slice %67 {offsets = [128, 0], sizes = [128, 128], strides = [1, 1]} : vector<512x128xf32> to vector<128x128xf32>
    %75 = vector.extract_strided_slice %67 {offsets = [256, 0], sizes = [128, 128], strides = [1, 1]} : vector<512x128xf32> to vector<128x128xf32>
    %76 = vector.extract_strided_slice %67 {offsets = [384, 0], sizes = [128, 128], strides = [1, 1]} : vector<512x128xf32> to vector<128x128xf32>
    %77 = tpu.concatenate %73, %74, %75, %76 in 1 : vector<128x128xf32>, vector<128x128xf32>, vector<128x128xf32>, vector<128x128xf32> -> vector<128x512xf32>
    %cst_43 = arith.constant 0.000000e+00 : f32
    %78 = vector.broadcast %cst_43 : f32 to vector<128x128xf32>
    %79 = arith.subf %78, %21 : vector<128x128xf32>
    %cst_44 = arith.constant dense<0.000000e+00> : vector<128x512xf32>
    %80 = tpu.matmul %20, %72, %cst_44 {dimension_numbers = #tpu.dot_dimension_numbers<[1], [0], [0], [1], [0, 0, 1, 1], [], []>} : vector<128x128xf32>, vector<128x512xf32>, vector<128x512xf32> -> vector<128x512xf32>
    %cst_45 = arith.constant dense<0.000000e+00> : vector<128x512xf32>
    %81 = tpu.matmul %79, %77, %cst_45 {dimension_numbers = #tpu.dot_dimension_numbers<[1], [0], [0], [1], [0, 0, 1, 1], [], []>} : vector<128x128xf32>, vector<128x512xf32>, vector<128x512xf32> -> vector<128x512xf32>
    %82 = arith.addf %20, %79 : vector<128x128xf32>
    %83 = arith.addf %72, %77 : vector<128x512xf32>
    %cst_46 = arith.constant dense<0.000000e+00> : vector<128x512xf32>
    %84 = tpu.matmul %82, %83, %cst_46 {dimension_numbers = #tpu.dot_dimension_numbers<[1], [0], [0], [1], [0, 0, 1, 1], [], []>} : vector<128x128xf32>, vector<128x512xf32>, vector<128x512xf32> -> vector<128x512xf32>
    %85 = arith.subf %80, %81 : vector<128x512xf32>
    %86 = arith.subf %84, %80 : vector<128x512xf32>
    %87 = arith.subf %86, %81 : vector<128x512xf32>
    %88 = arith.mulf %12, %85 : vector<128x512xf32>
    %89 = arith.mulf %13, %87 : vector<128x512xf32>
    %90 = arith.addf %88, %89 : vector<128x512xf32>
    %91 = arith.mulf %12, %87 : vector<128x512xf32>
    %92 = arith.mulf %13, %85 : vector<128x512xf32>
    %93 = arith.subf %91, %92 : vector<128x512xf32>
    %94 = vector.extract_strided_slice %90 {offsets = [0, 0], sizes = [128, 128], strides = [1, 1]} : vector<128x512xf32> to vector<128x128xf32>
    %95 = vector.extract_strided_slice %93 {offsets = [0, 0], sizes = [128, 128], strides = [1, 1]} : vector<128x512xf32> to vector<128x128xf32>
    %96 = vector.extract_strided_slice %90 {offsets = [0, 128], sizes = [128, 128], strides = [1, 1]} : vector<128x512xf32> to vector<128x128xf32>
    %97 = arith.addf %94, %96 : vector<128x128xf32>
    %98 = vector.extract_strided_slice %93 {offsets = [0, 128], sizes = [128, 128], strides = [1, 1]} : vector<128x512xf32> to vector<128x128xf32>
    %99 = arith.addf %95, %98 : vector<128x128xf32>
    %100 = vector.extract_strided_slice %90 {offsets = [0, 256], sizes = [128, 128], strides = [1, 1]} : vector<128x512xf32> to vector<128x128xf32>
    %101 = arith.addf %97, %100 : vector<128x128xf32>
    %102 = vector.extract_strided_slice %93 {offsets = [0, 256], sizes = [128, 128], strides = [1, 1]} : vector<128x512xf32> to vector<128x128xf32>
    %103 = arith.addf %99, %102 : vector<128x128xf32>
    %104 = vector.extract_strided_slice %90 {offsets = [0, 384], sizes = [128, 128], strides = [1, 1]} : vector<128x512xf32> to vector<128x128xf32>
    %105 = arith.addf %101, %104 : vector<128x128xf32>
    %106 = vector.extract_strided_slice %93 {offsets = [0, 384], sizes = [128, 128], strides = [1, 1]} : vector<128x512xf32> to vector<128x128xf32>
    %107 = arith.addf %103, %106 : vector<128x128xf32>
    %c0_47 = arith.constant 0 : index
    %c0_48 = arith.constant 0 : index
    %108 = vector.load %arg13[%c0_47, %c0_48] : memref<128x128xf32, #tpu.memory_space<vmem>>, vector<128x128xf32>
    tpu.vector_store %arg13[%c0_47, %c0_48], %105 {strides = array<i32>} : memref<128x128xf32, #tpu.memory_space<vmem>>, vector<128x128xf32>,
    %c0_49 = arith.constant 0 : index
    %c0_50 = arith.constant 0 : index
    %109 = vector.load %arg14[%c0_49, %c0_50] : memref<128x128xf32, #tpu.memory_space<vmem>>, vector<128x128xf32>
    tpu.vector_store %arg14[%c0_49, %c0_50], %107 {strides = array<i32>} : memref<128x128xf32, #tpu.memory_space<vmem>>, vector<128x128xf32>,
    return
  }
}

</mosaic_0001>

<llo_original>
// kernel: tpu_custom_call.1
$region0: #{tpu_custom_call.1}
  #allocation0 [shape = 'u32[]', space=smem, size = 0x4, offset = 0x4, fixed_abs, tag = 'smem constant byte address 0x4 - core index']
  #allocation1 [shape = 'u32[144,128]{1,0:T(1,128)}', space=vmem, size = 0x12000, scoped, tag = 'internal scratch']
  %s0 = inlined_call_operand.hbm [shape: f32[128,128], index: 0, kind: input, shape index: {}]
  %s1 = inlined_call_operand.hbm [shape: f32[128,128], index: 1, kind: input, shape index: {}]
  %s2 = inlined_call_operand.hbm [shape: f32[128,128], index: 2, kind: input, shape index: {}]
  %s3 = inlined_call_operand.hbm [shape: f32[128,128], index: 3, kind: input, shape index: {}]
  %s4 = inlined_call_operand.hbm [shape: f32[128,128], index: 4, kind: input, shape index: {}]
  %s5 = inlined_call_operand.hbm [shape: f32[128,128], index: 5, kind: input, shape index: {}]
  %s6 = inlined_call_operand.hbm [shape: f32[128,128], index: 6, kind: input, shape index: {}]
  %s7 = inlined_call_operand.hbm [shape: f32[128,128], index: 7, kind: input, shape index: {}]
  %s8 = inlined_call_operand.hbm [shape: s8[512,128], index: 8, kind: input, shape index: {}]
  %s9 = inlined_call_operand.hbm [shape: f32[128,512], index: 9, kind: input, shape index: {}]
  %s10 = inlined_call_operand.hbm [shape: f32[128,512], index: 10, kind: input, shape index: {}]
  %s11 = inlined_call_operand.hbm [shape: f32[512,128], index: 11, kind: input, shape index: {}]
  %s12 = inlined_call_operand.hbm [shape: f32[512,128], index: 12, kind: input, shape index: {}]
  %s13 = inlined_call_operand.hbm [shape: f32[128,128], index: 13, kind: output, shape index: {0}]
  %s14 = inlined_call_operand.hbm [shape: f32[128,128], index: 14, kind: output, shape index: {1}]
  %15 = xla_tuple %s13, %s14
  %s16 = sld [smem:[#allocation0]]
  $region122: #{tpu_custom_call.1} parent=0
    _
  %s18 = ssub.s32 1, %s16
  %s19 = scalar_select 0, %s18, %s16
  $region1: #{tpu_custom_call.1} parent=0
    #allocation2 [shape = 'u8[65536]{0}', space=vmem, size = 0x10000, scoped, tag = 'input window, operand 0, single buffered']
    #allocation3 [shape = 's32[1]{0}', space=sflag, size = 0x4, scoped, tag = 'scoped memory for tpu_custom_call.1']
    #allocation4 [shape = 's32[1]{0}', space=sflag, size = 0x4, scoped, tag = 'scoped memory for tpu_custom_call.1']
    #allocation5 [shape = 'u8[65536]{0}', space=vmem, size = 0x10000, scoped, tag = 'input window, operand 1, single buffered']
    #allocation6 [shape = 's32[1]{0}', space=sflag, size = 0x4, scoped, tag = 'scoped memory for tpu_custom_call.1']
    #allocation7 [shape = 'u8[65536]{0}', space=vmem, size = 0x10000, scoped, tag = 'input window, operand 2, single buffered']
    #allocation8 [shape = 'u8[65536]{0}', space=vmem, size = 0x10000, scoped, tag = 'input window, operand 3, single buffered']
    #allocation9 [shape = 's32[1]{0}', space=sflag, size = 0x4, scoped, tag = 'scoped memory for tpu_custom_call.1']
    #allocation10 [shape = 'u8[65536]{0}', space=vmem, size = 0x10000, scoped, tag = 'input window, operand 4, single buffered']
    #allocation11 [shape = 'u8[65536]{0}', space=vmem, size = 0x10000, scoped, tag = 'input window, operand 5, single buffered']
    #allocation12 [shape = 's32[1]{0}', space=sflag, size = 0x4, scoped, tag = 'scoped memory for tpu_custom_call.1']
    #allocation13 [shape = 'u8[65536]{0}', space=vmem, size = 0x10000, scoped, tag = 'input window, operand 6, single buffered']
    #allocation14 [shape = 'u8[65536]{0}', space=vmem, size = 0x10000, scoped, tag = 'input window, operand 7, single buffered']
    #allocation15 [shape = 's32[1]{0}', space=sflag, size = 0x4, scoped, tag = 'scoped memory for tpu_custom_call.1']
    #allocation16 [shape = 'u8[65536]{0}', space=vmem, size = 0x10000, scoped, tag = 'input window, operand 8, single buffered']
    #allocation17 [shape = 'u8[262144]{0}', space=vmem, size = 0x40000, scoped, tag = 'input window, operand 9, single buffered']
    #allocation18 [shape = 's32[1]{0}', space=sflag, size = 0x4, scoped, tag = 'scoped memory for tpu_custom_call.1']
    #allocation19 [shape = 'u8[262144]{0}', space=vmem, size = 0x40000, scoped, tag = 'input window, operand 10, single buffered']
    #allocation20 [shape = 'u8[262144]{0}', space=vmem, size = 0x40000, scoped, tag = 'input window, operand 11, single buffered']
    #allocation21 [shape = 's32[1]{0}', space=sflag, size = 0x4, scoped, tag = 'scoped memory for tpu_custom_call.1']
    #allocation22 [shape = 'u8[262144]{0}', space=vmem, size = 0x40000, scoped, tag = 'input window, operand 12, single buffered']
    #allocation23 [shape = 'u8[65536]{0}', space=vmem, size = 0x10000, scoped, tag = 'output window, operand 0, single buffered']
    #allocation24 [shape = 'u8[65536]{0}', space=vmem, size = 0x10000, scoped, tag = 'output window, operand 1, single buffered']
    #allocation25 [shape = 's32[1]{0}', space=sflag, size = 0x4, scoped, tag = 'scoped memory for tpu_custom_call.1']
    %20 = vsyncpa [#allocation3], 0
    %21 = vsyncpa [#allocation6], 0
    %22 = vsyncpa [#allocation9], 0
    %23 = vsyncpa [#allocation12], 0
    %24 = vsyncpa [#allocation15], 0
    %25 = vsyncpa [#allocation18], 0
    %26 = vsyncpa [#allocation21], 0
    %27 = vsyncpa [#allocation4], 0
    %28 = vsyncpa [#allocation25], 0
    // Predicated region
    $region2: #{tpu_custom_call.1} parent=1 // pred_check
      _
    $region3: #{tpu_custom_call.1} parent=1 // pred_check_branch
      %30 = sbr.rel (0) target = $region5
    $region4: #{tpu_custom_call.1} parent=1 // pred_region
      %s32 = ssub.s32 2048, 2048
      %33 = vsyncadd [#allocation3], %s32
      %s34 = sshll.u32 [#allocation2], 4
      %s35 = int_to_ptr.vmem [resolvable:$true] %s34
      %40 = dma.hbm_to_vmem [thread:$0]  %s0, 2048, %s35, [#allocation3], 128, 128, 8
    $region5: #{tpu_custom_call.1} parent=1 // pred_fallthru
      _
    // Predicated region
    $region6: #{tpu_custom_call.1} parent=1 // pred_check
      _
    $region7: #{tpu_custom_call.1} parent=1 // pred_check_branch
      %42 = sbr.rel (0) target = $region9
    $region8: #{tpu_custom_call.1} parent=1 // pred_region
      %s44 = ssub.s32 2048, 2048
      %45 = vsyncadd [#allocation6], %s44
      %s46 = sshll.u32 [#allocation5], 4
      %s47 = int_to_ptr.vmem [resolvable:$true] %s46
      %52 = dma.hbm_to_vmem [thread:$0]  %s1, 2048, %s47, [#allocation6], 128, 128, 8
    $region9: #{tpu_custom_call.1} parent=1 // pred_fallthru
      _
    // Predicated region
    $region10: #{tpu_custom_call.1} parent=1 // pred_check
      _
    $region11: #{tpu_custom_call.1} parent=1 // pred_check_branch
      %54 = sbr.rel (0) target = $region13
    $region12: #{tpu_custom_call.1} parent=1 // pred_region
      %s56 = ssub.s32 2048, 2048
      %57 = vsyncadd [#allocation6], %s56
      %s58 = sshll.u32 [#allocation7], 4
      %s59 = int_to_ptr.vmem [resolvable:$true] %s58
      %64 = dma.hbm_to_vmem [thread:$0]  %s2, 2048, %s59, [#allocation6], 128, 128, 8
    $region13: #{tpu_custom_call.1} parent=1 // pred_fallthru
      _
    // Predicated region
    $region14: #{tpu_custom_call.1} parent=1 // pred_check
      _
    $region15: #{tpu_custom_call.1} parent=1 // pred_check_branch
      %66 = sbr.rel (0) target = $region17
    $region16: #{tpu_custom_call.1} parent=1 // pred_region
      %s68 = ssub.s32 2048, 2048
      %69 = vsyncadd [#allocation9], %s68
      %s70 = sshll.u32 [#allocation8], 4
      %s71 = int_to_ptr.vmem [resolvable:$true] %s70
      %76 = dma.hbm_to_vmem [thread:$0]  %s3, 2048, %s71, [#allocation9], 128, 128, 8
    $region17: #{tpu_custom_call.1} parent=1 // pred_fallthru
      _
    // Predicated region
    $region18: #{tpu_custom_call.1} parent=1 // pred_check
      _
    $region19: #{tpu_custom_call.1} parent=1 // pred_check_branch
      %78 = sbr.rel (0) target = $region21
    $region20: #{tpu_custom_call.1} parent=1 // pred_region
      %s80 = ssub.s32 2048, 2048
      %81 = vsyncadd [#allocation9], %s80
      %s82 = sshll.u32 [#allocation10], 4
      %s83 = int_to_ptr.vmem [resolvable:$true] %s82
      %88 = dma.hbm_to_vmem [thread:$0]  %s4, 2048, %s83, [#allocation9], 128, 128, 8
    $region21: #{tpu_custom_call.1} parent=1 // pred_fallthru
      _
    // Predicated region
    $region22: #{tpu_custom_call.1} parent=1 // pred_check
      _
    $region23: #{tpu_custom_call.1} parent=1 // pred_check_branch
      %90 = sbr.rel (0) target = $region25
    $region24: #{tpu_custom_call.1} parent=1 // pred_region
      %s92 = ssub.s32 2048, 2048
      %93 = vsyncadd [#allocation12], %s92
      %s94 = sshll.u32 [#allocation11], 4
      %s95 = int_to_ptr.vmem [resolvable:$true] %s94
      %100 = dma.hbm_to_vmem [thread:$0]  %s5, 2048, %s95, [#allocation12], 128, 128, 8
    $region25: #{tpu_custom_call.1} parent=1 // pred_fallthru
      _
    // Predicated region
    $region26: #{tpu_custom_call.1} parent=1 // pred_check
      _
    $region27: #{tpu_custom_call.1} parent=1 // pred_check_branch
      %102 = sbr.rel (0) target = $region29
    $region28: #{tpu_custom_call.1} parent=1 // pred_region
      %s104 = ssub.s32 2048, 2048
      %105 = vsyncadd [#allocation12], %s104
      %s106 = sshll.u32 [#allocation13], 4
      %s107 = int_to_ptr.vmem [resolvable:$true] %s106
      %112 = dma.hbm_to_vmem [thread:$0]  %s6, 2048, %s107, [#allocation12], 128, 128, 8
    $region29: #{tpu_custom_call.1} parent=1 // pred_fallthru
      _
    // Predicated region
    $region30: #{tpu_custom_call.1} parent=1 // pred_check
      _
    $region31: #{tpu_custom_call.1} parent=1 // pred_check_branch
      %114 = sbr.rel (0) target = $region33
    $region32: #{tpu_custom_call.1} parent=1 // pred_region
      %s116 = ssub.s32 2048, 2048
      %117 = vsyncadd [#allocation15], %s116
      %s118 = sshll.u32 [#allocation14], 4
      %s119 = int_to_ptr.vmem [resolvable:$true] %s118
      %124 = dma.hbm_to_vmem [thread:$0]  %s7, 2048, %s119, [#allocation15], 128, 128, 8
    $region33: #{tpu_custom_call.1} parent=1 // pred_fallthru
      _
    // Predicated region
    $region34: #{tpu_custom_call.1} parent=1 // pred_check
      _
    $region35: #{tpu_custom_call.1} parent=1 // pred_check_branch
      %126 = sbr.rel (0) target = $region37
    $region36: #{tpu_custom_call.1} parent=1 // pred_region
      %s128 = ssub.s32 2048, 2048
      %129 = vsyncadd [#allocation15], %s128
      %s130 = sshll.u32 [#allocation16], 4
      %s131 = int_to_ptr.vmem [resolvable:$true] %s130
      %136 = dma.hbm_to_vmem [thread:$0]  %s8, 2048, %s131, [#allocation15], 128, 128, 8
    $region37: #{tpu_custom_call.1} parent=1 // pred_fallthru
      _
    // Predicated region
    $region38: #{tpu_custom_call.1} parent=1 // pred_check
      _
    $region39: #{tpu_custom_call.1} parent=1 // pred_check_branch
      %138 = sbr.rel (0) target = $region41
    $region40: #{tpu_custom_call.1} parent=1 // pred_region
      %s140 = ssub.s32 8192, 8192
      %141 = vsyncadd [#allocation18], %s140
      %s142 = sshll.u32 [#allocation17], 4
      %s143 = int_to_ptr.vmem [resolvable:$true] %s142
      %148 = dma.hbm_to_vmem [thread:$0]  %s9, 8192, %s143, [#allocation18], 512, 512, 32
    $region41: #{tpu_custom_call.1} parent=1 // pred_fallthru
      _
    // Predicated region
    $region42: #{tpu_custom_call.1} parent=1 // pred_check
      _
    $region43: #{tpu_custom_call.1} parent=1 // pred_check_branch
      %150 = sbr.rel (0) target = $region45
    $region44: #{tpu_custom_call.1} parent=1 // pred_region
      %s152 = ssub.s32 8192, 8192
      %153 = vsyncadd [#allocation18], %s152
      %s154 = sshll.u32 [#allocation19], 4
      %s155 = int_to_ptr.vmem [resolvable:$true] %s154
      %160 = dma.hbm_to_vmem [thread:$0]  %s10, 8192, %s155, [#allocation18], 512, 512, 32
    $region45: #{tpu_custom_call.1} parent=1 // pred_fallthru
      _
    // Predicated region
    $region46: #{tpu_custom_call.1} parent=1 // pred_check
      _
    $region47: #{tpu_custom_call.1} parent=1 // pred_check_branch
      %162 = sbr.rel (0) target = $region49
    $region48: #{tpu_custom_call.1} parent=1 // pred_region
      %s164 = ssub.s32 8192, 8192
      %165 = vsyncadd [#allocation21], %s164
      %s166 = sshll.u32 [#allocation20], 4
      %s167 = int_to_ptr.vmem [resolvable:$true] %s166
      %172 = dma.hbm_to_vmem [thread:$0]  %s11, 8192, %s167, [#allocation21], 128, 128, 8
    $region49: #{tpu_custom_call.1} parent=1 // pred_fallthru
      _
    // Predicated region
    $region50: #{tpu_custom_call.1} parent=1 // pred_check
      _
    $region51: #{tpu_custom_call.1} parent=1 // pred_check_branch
      %174 = sbr.rel (0) target = $region53
    $region52: #{tpu_custom_call.1} parent=1 // pred_region
      %s176 = ssub.s32 8192, 8192
      %177 = vsyncadd [#allocation21], %s176
      %s178 = sshll.u32 [#allocation22], 4
      %s179 = int_to_ptr.vmem [resolvable:$true] %s178
      %184 = dma.hbm_to_vmem [thread:$0]  %s12, 8192, %s179, [#allocation21], 128, 128, 8
    $region53: #{tpu_custom_call.1} parent=1 // pred_fallthru
      _
    // Predicated region
    $region54: #{tpu_custom_call.1} parent=1 // pred_check
      _
    $region55: #{tpu_custom_call.1} parent=1 // pred_check_branch
      %186 = sbr.rel (0) target = $region57
    $region56: #{tpu_custom_call.1} parent=1 // pred_region
      %187 = dma.done [#allocation3], 2048
    $region57: #{tpu_custom_call.1} parent=1 // pred_fallthru
      _
    // Predicated region
    $region58: #{tpu_custom_call.1} parent=1 // pred_check
      _
    $region59: #{tpu_custom_call.1} parent=1 // pred_check_branch
      %189 = sbr.rel (0) target = $region61
    $region60: #{tpu_custom_call.1} parent=1 // pred_region
      %190 = dma.done [#allocation6], 2048
    $region61: #{tpu_custom_call.1} parent=1 // pred_fallthru
      _
    // Predicated region
    $region62: #{tpu_custom_call.1} parent=1 // pred_check
      _
    $region63: #{tpu_custom_call.1} parent=1 // pred_check_branch
      %192 = sbr.rel (0) target = $region65
    $region64: #{tpu_custom_call.1} parent=1 // pred_region
      %193 = dma.done [#allocation6], 2048
    $region65: #{tpu_custom_call.1} parent=1 // pred_fallthru
      _
    // Predicated region
    $region66: #{tpu_custom_call.1} parent=1 // pred_check
      _
    $region67: #{tpu_custom_call.1} parent=1 // pred_check_branch
      %195 = sbr.rel (0) target = $region69
    $region68: #{tpu_custom_call.1} parent=1 // pred_region
      %196 = dma.done [#allocation9], 2048
    $region69: #{tpu_custom_call.1} parent=1 // pred_fallthru
      _
    // Predicated region
    $region70: #{tpu_custom_call.1} parent=1 // pred_check
      _
    $region71: #{tpu_custom_call.1} parent=1 // pred_check_branch
      %198 = sbr.rel (0) target = $region73
    $region72: #{tpu_custom_call.1} parent=1 // pred_region
      %199 = dma.done [#allocation9], 2048
    $region73: #{tpu_custom_call.1} parent=1 // pred_fallthru
      _
    // Predicated region
    $region74: #{tpu_custom_call.1} parent=1 // pred_check
      _
    $region75: #{tpu_custom_call.1} parent=1 // pred_check_branch
      %201 = sbr.rel (0) target = $region77
    $region76: #{tpu_custom_call.1} parent=1 // pred_region
      %202 = dma.done [#allocation12], 2048
    $region77: #{tpu_custom_call.1} parent=1 // pred_fallthru
      _
    // Predicated region
    $region78: #{tpu_custom_call.1} parent=1 // pred_check
      _
    $region79: #{tpu_custom_call.1} parent=1 // pred_check_branch
      %204 = sbr.rel (0) target = $region81
    $region80: #{tpu_custom_call.1} parent=1 // pred_region
      %205 = dma.done [#allocation12], 2048
    $region81: #{tpu_custom_call.1} parent=1 // pred_fallthru
      _
    // Predicated region
    $region82: #{tpu_custom_call.1} parent=1 // pred_check
      _
    $region83: #{tpu_custom_call.1} parent=1 // pred_check_branch
      %207 = sbr.rel (0) target = $region85
    $region84: #{tpu_custom_call.1} parent=1 // pred_region
      %208 = dma.done [#allocation15], 2048
    $region85: #{tpu_custom_call.1} parent=1 // pred_fallthru
      _
    // Predicated region
    $region86: #{tpu_custom_call.1} parent=1 // pred_check
      _
    $region87: #{tpu_custom_call.1} parent=1 // pred_check_branch
      %210 = sbr.rel (0) target = $region89
    $region88: #{tpu_custom_call.1} parent=1 // pred_region
      %211 = dma.done [#allocation15], 2048
    $region89: #{tpu_custom_call.1} parent=1 // pred_fallthru
      _
    // Predicated region
    $region90: #{tpu_custom_call.1} parent=1 // pred_check
      _
    $region91: #{tpu_custom_call.1} parent=1 // pred_check_branch
      %213 = sbr.rel (0) target = $region93
    $region92: #{tpu_custom_call.1} parent=1 // pred_region
      %214 = dma.done [#allocation18], 8192
    $region93: #{tpu_custom_call.1} parent=1 // pred_fallthru
      _
    // Predicated region
    $region94: #{tpu_custom_call.1} parent=1 // pred_check
      _
    $region95: #{tpu_custom_call.1} parent=1 // pred_check_branch
      %216 = sbr.rel (0) target = $region97
    $region96: #{tpu_custom_call.1} parent=1 // pred_region
      %217 = dma.done [#allocation18], 8192
    $region97: #{tpu_custom_call.1} parent=1 // pred_fallthru
      _
    // Predicated region
    $region98: #{tpu_custom_call.1} parent=1 // pred_check
      _
    $region99: #{tpu_custom_call.1} parent=1 // pred_check_branch
      %219 = sbr.rel (0) target = $region101
    $region100: #{tpu_custom_call.1} parent=1 // pred_region
      %220 = dma.done [#allocation21], 8192
    $region101: #{tpu_custom_call.1} parent=1 // pred_fallthru
      _
    // Predicated region
    $region102: #{tpu_custom_call.1} parent=1 // pred_check
      _
    $region103: #{tpu_custom_call.1} parent=1 // pred_check_branch
      %222 = sbr.rel (0) target = $region105
    $region104: #{tpu_custom_call.1} parent=1 // pred_region
      %223 = dma.done [#allocation21], 8192
    $region105: #{tpu_custom_call.1} parent=1 // pred_fallthru
      _
    %v224 = vld [vmem:[#allocation7] sm:$0xff]
    %v225 = vld [vmem:[#allocation7 + $0x8] sm:$0xff]
    %v226 = vld [vmem:[#allocation7 + $0x10] sm:$0xff]
    %v227 = vld [vmem:[#allocation7 + $0x18] sm:$0xff]
    %v228 = vld [vmem:[#allocation7 + $0x20] sm:$0xff]
    %v229 = vld [vmem:[#allocation7 + $0x28] sm:$0xff]
    %v230 = vld [vmem:[#allocation7 + $0x30] sm:$0xff]
    %v231 = vld [vmem:[#allocation7 + $0x38] sm:$0xff]
    %v232 = vld [vmem:[#allocation7 + $0x40] sm:$0xff]
    %v233 = vld [vmem:[#allocation7 + $0x48] sm:$0xff]
    %v234 = vld [vmem:[#allocation7 + $0x50] sm:$0xff]
    %v235 = vld [vmem:[#allocation7 + $0x58] sm:$0xff]
    %v236 = vld [vmem:[#allocation7 + $0x60] sm:$0xff]
    %v237 = vld [vmem:[#allocation7 + $0x68] sm:$0xff]
    %v238 = vld [vmem:[#allocation7 + $0x70] sm:$0xff]
    %v239 = vld [vmem:[#allocation7 + $0x78] sm:$0xff]
    %v240 = vld [vmem:[#allocation2] sm:$0xff]
    %v241 = vld [vmem:[#allocation2 + $0x8] sm:$0xff]
    %v242 = vld [vmem:[#allocation2 + $0x10] sm:$0xff]
    %v243 = vld [vmem:[#allocation2 + $0x18] sm:$0xff]
    %v244 = vld [vmem:[#allocation2 + $0x20] sm:$0xff]
    %v245 = vld [vmem:[#allocation2 + $0x28] sm:$0xff]
    %v246 = vld [vmem:[#allocation2 + $0x30] sm:$0xff]
    %v247 = vld [vmem:[#allocation2 + $0x38] sm:$0xff]
    %v248 = vld [vmem:[#allocation2 + $0x40] sm:$0xff]
    %v249 = vld [vmem:[#allocation2 + $0x48] sm:$0xff]
    %v250 = vld [vmem:[#allocation2 + $0x50] sm:$0xff]
    %v251 = vld [vmem:[#allocation2 + $0x58] sm:$0xff]
    %v252 = vld [vmem:[#allocation2 + $0x60] sm:$0xff]
    %v253 = vld [vmem:[#allocation2 + $0x68] sm:$0xff]
    %v254 = vld [vmem:[#allocation2 + $0x70] sm:$0xff]
    %v255 = vld [vmem:[#allocation2 + $0x78] sm:$0xff]
    %256 = vmatprep.subr.mxu0 0.0
    %257 = vmatpush1.msra.mxu0 %v240
    %258 = vmatprep.subr.mxu0 0.0
    %259 = vmatpush1.msra.mxu0 %v241
    %260 = vmatprep.subr.mxu0 0.0
    %261 = vmatpush1.msra.mxu0 %v242
    %262 = vmatprep.subr.mxu0 0.0
    %263 = vmatpush1.msra.mxu0 %v243
    %264 = vmatprep.subr.mxu0 0.0
    %265 = vmatpush1.msra.mxu0 %v244
    %266 = vmatprep.subr.mxu0 0.0
    %267 = vmatpush1.msra.mxu0 %v245
    %268 = vmatprep.subr.mxu0 0.0
    %269 = vmatpush1.msra.mxu0 %v246
    %270 = vmatprep.subr.mxu0 0.0
    %271 = vmatpush1.msra.mxu0 %v247
    %272 = vmatprep.subr.mxu0 0.0
    %273 = vmatpush1.msra.mxu0 %v248
    %274 = vmatprep.subr.mxu0 0.0
    %275 = vmatpush1.msra.mxu0 %v249
    %276 = vmatprep.subr.mxu0 0.0
    %277 = vmatpush1.msra.mxu0 %v250
    %278 = vmatprep.subr.mxu0 0.0
    %279 = vmatpush1.msra.mxu0 %v251
    %280 = vmatprep.subr.mxu0 0.0
    %281 = vmatpush1.msra.mxu0 %v252
    %282 = vmatprep.subr.mxu0 0.0
    %283 = vmatpush1.msra.mxu0 %v253
    %284 = vmatprep.subr.mxu0 0.0
    %285 = vmatpush1.msra.mxu0 %v254
    %286 = vmatprep.subr.mxu0 0.0
    %287 = vmatpush1.msra.mxu0 %v255
    %288 = vmatprep.subr.mxu0 0.0
    %289 = vmatpush1.msra.mxu0 0.0
    %290 = vmatprep.subr.mxu0 0.0
    %291 = vmatpush1.msra.mxu0 0.0
    %292 = vmatprep.subr.mxu0 0.0
    %293 = vmatpush1.msra.mxu0 0.0
    %294 = vmatprep.subr.mxu0 0.0
    %295 = vmatpush1.msra.mxu0 0.0
    %296 = vmatprep.subr.mxu0 0.0
    %297 = vmatpush1.msra.mxu0 0.0
    %298 = vmatprep.subr.mxu0 0.0
    %299 = vmatpush1.msra.mxu0 0.0
    %300 = vmatprep.subr.mxu0 0.0
    %301 = vmatpush1.msra.mxu0 0.0
    %302 = vmatprep.subr.mxu0 0.0
    %303 = vmatpush1.msra.mxu0 0.0
    %304 = vmatprep.subr.mxu0 0.0
    %305 = vmatpush1.msra.mxu0 0.0
    %306 = vmatprep.subr.mxu0 0.0
    %307 = vmatpush1.msra.mxu0 0.0
    %308 = vmatprep.subr.mxu0 0.0
    %309 = vmatpush1.msra.mxu0 0.0
    %310 = vmatprep.subr.mxu0 0.0
    %311 = vmatpush1.msra.mxu0 0.0
    %312 = vmatprep.subr.mxu0 0.0
    %313 = vmatpush1.msra.mxu0 0.0
    %314 = vmatprep.subr.mxu0 0.0
    %315 = vmatpush1.msra.mxu0 0.0
    %316 = vmatprep.subr.mxu0 0.0
    %317 = vmatpush1.msra.mxu0 0.0
    %318 = vmatprep.subr.mxu0 0.0
    %319 = vmatpush1.msra.mxu0 0.0
    %320 = vmatprep.mubr.f32.mxu0 0.0
    %321 = vmatmul.mubr.f32.gmra.mrb[0].mxu0 %v224
    %v322 = vpop.f32.mrb[0].mxu0
    %v323 = vadd.f32 0.0, %v322
    %v324 = vpop.f32.mrb[0].mxu0
    %325 = vmatprep.mubr.f32.mxu0 0.0
    %326 = vmatmul.mubr.f32.gmra.mrb[0].mxu0 %v225
    %v327 = vpop.f32.mrb[0].mxu0
    %v328 = vadd.f32 0.0, %v327
    %v329 = vpop.f32.mrb[0].mxu0
    %330 = vmatprep.mubr.f32.mxu0 0.0
    %331 = vmatmul.mubr.f32.gmra.mrb[0].mxu0 %v226
    %v332 = vpop.f32.mrb[0].mxu0
    %v333 = vadd.f32 0.0, %v332
    %v334 = vpop.f32.mrb[0].mxu0
    %335 = vmatprep.mubr.f32.mxu0 0.0
    %336 = vmatmul.mubr.f32.gmra.mrb[0].mxu0 %v227
    %v337 = vpop.f32.mrb[0].mxu0
    %v338 = vadd.f32 0.0, %v337
    %v339 = vpop.f32.mrb[0].mxu0
    %340 = vmatprep.mubr.f32.mxu0 0.0
    %341 = vmatmul.mubr.f32.gmra.mrb[0].mxu0 %v228
    %v342 = vpop.f32.mrb[0].mxu0
    %v343 = vadd.f32 0.0, %v342
    %v344 = vpop.f32.mrb[0].mxu0
    %345 = vmatprep.mubr.f32.mxu0 0.0
    %346 = vmatmul.mubr.f32.gmra.mrb[0].mxu0 %v229
    %v347 = vpop.f32.mrb[0].mxu0
    %v348 = vadd.f32 0.0, %v347
    %v349 = vpop.f32.mrb[0].mxu0
    %350 = vmatprep.mubr.f32.mxu0 0.0
    %351 = vmatmul.mubr.f32.gmra.mrb[0].mxu0 %v230
    %v352 = vpop.f32.mrb[0].mxu0
    %v353 = vadd.f32 0.0, %v352
    %v354 = vpop.f32.mrb[0].mxu0
    %355 = vmatprep.mubr.f32.mxu0 0.0
    %356 = vmatmul.mubr.f32.gmra.mrb[0].mxu0 %v231
    %v357 = vpop.f32.mrb[0].mxu0
    %v358 = vadd.f32 0.0, %v357
    %v359 = vpop.f32.mrb[0].mxu0
    %360 = vmatprep.mubr.f32.mxu0 0.0
    %361 = vmatmul.mubr.f32.gmra.mrb[0].mxu0 %v232
    %v362 = vpop.f32.mrb[0].mxu0
    %v363 = vadd.f32 0.0, %v362
    %v364 = vpop.f32.mrb[0].mxu0
    %365 = vmatprep.mubr.f32.mxu0 0.0
    %366 = vmatmul.mubr.f32.gmra.mrb[0].mxu0 %v233
    %v367 = vpop.f32.mrb[0].mxu0
    %v368 = vadd.f32 0.0, %v367
    %v369 = vpop.f32.mrb[0].mxu0
    %370 = vmatprep.mubr.f32.mxu0 0.0
    %371 = vmatmul.mubr.f32.gmra.mrb[0].mxu0 %v234
    %v372 = vpop.f32.mrb[0].mxu0
    %v373 = vadd.f32 0.0, %v372
    %v374 = vpop.f32.mrb[0].mxu0
    %375 = vmatprep.mubr.f32.mxu0 0.0
    %376 = vmatmul.mubr.f32.gmra.mrb[0].mxu0 %v235
    %v377 = vpop.f32.mrb[0].mxu0
    %v378 = vadd.f32 0.0, %v377
    %v379 = vpop.f32.mrb[0].mxu0
    %380 = vmatprep.mubr.f32.mxu0 0.0
    %381 = vmatmul.mubr.f32.gmra.mrb[0].mxu0 %v236
    %v382 = vpop.f32.mrb[0].mxu0
    %v383 = vadd.f32 0.0, %v382
    %v384 = vpop.f32.mrb[0].mxu0
    %385 = vmatprep.mubr.f32.mxu0 0.0
    %386 = vmatmul.mubr.f32.gmra.mrb[0].mxu0 %v237
    %v387 = vpop.f32.mrb[0].mxu0
    %v388 = vadd.f32 0.0, %v387
    %v389 = vpop.f32.mrb[0].mxu0
    %390 = vmatprep.mubr.f32.mxu0 0.0
    %391 = vmatmul.mubr.f32.gmra.mrb[0].mxu0 %v238
    %v392 = vpop.f32.mrb[0].mxu0
    %v393 = vadd.f32 0.0, %v392
    %v394 = vpop.f32.mrb[0].mxu0
    %395 = vmatprep.mubr.f32.mxu0 0.0
    %396 = vmatmul.mubr.f32.gmra.mrb[0].mxu0 %v239
    %v397 = vpop.f32.mrb[0].mxu0
    %v398 = vadd.f32 0.0, %v397
    %v399 = vpop.f32.mrb[0].mxu0
    %400 = vdwg.mxu0
    %v401 = vld [vmem:[#allocation8] sm:$0xff]
    %v402 = vld [vmem:[#allocation8 + $0x8] sm:$0xff]
    %v403 = vld [vmem:[#allocation8 + $0x10] sm:$0xff]
    %v404 = vld [vmem:[#allocation8 + $0x18] sm:$0xff]
    %v405 = vld [vmem:[#allocation8 + $0x20] sm:$0xff]
    %v406 = vld [vmem:[#allocation8 + $0x28] sm:$0xff]
    %v407 = vld [vmem:[#allocation8 + $0x30] sm:$0xff]
    %v408 = vld [vmem:[#allocation8 + $0x38] sm:$0xff]
    %v409 = vld [vmem:[#allocation8 + $0x40] sm:$0xff]
    %v410 = vld [vmem:[#allocation8 + $0x48] sm:$0xff]
    %v411 = vld [vmem:[#allocation8 + $0x50] sm:$0xff]
    %v412 = vld [vmem:[#allocation8 + $0x58] sm:$0xff]
    %v413 = vld [vmem:[#allocation8 + $0x60] sm:$0xff]
    %v414 = vld [vmem:[#allocation8 + $0x68] sm:$0xff]
    %v415 = vld [vmem:[#allocation8 + $0x70] sm:$0xff]
    %v416 = vld [vmem:[#allocation8 + $0x78] sm:$0xff]
    %417 = vmatprep.subr.mxu0 0.0
    %418 = vmatpush1.msra.mxu0 %v401
    %419 = vmatprep.subr.mxu0 0.0
    %420 = vmatpush1.msra.mxu0 %v402
    %421 = vmatprep.subr.mxu0 0.0
    %422 = vmatpush1.msra.mxu0 %v403
    %423 = vmatprep.subr.mxu0 0.0
    %424 = vmatpush1.msra.mxu0 %v404
    %425 = vmatprep.subr.mxu0 0.0
    %426 = vmatpush1.msra.mxu0 %v405
    %427 = vmatprep.subr.mxu0 0.0
    %428 = vmatpush1.msra.mxu0 %v406
    %429 = vmatprep.subr.mxu0 0.0
    %430 = vmatpush1.msra.mxu0 %v407
    %431 = vmatprep.subr.mxu0 0.0
    %432 = vmatpush1.msra.mxu0 %v408
    %433 = vmatprep.subr.mxu0 0.0
    %434 = vmatpush1.msra.mxu0 %v409
    %435 = vmatprep.subr.mxu0 0.0
    %436 = vmatpush1.msra.mxu0 %v410
    %437 = vmatprep.subr.mxu0 0.0
    %438 = vmatpush1.msra.mxu0 %v411
    %439 = vmatprep.subr.mxu0 0.0
    %440 = vmatpush1.msra.mxu0 %v412
    %441 = vmatprep.subr.mxu0 0.0
    %442 = vmatpush1.msra.mxu0 %v413
    %443 = vmatprep.subr.mxu0 0.0
    %444 = vmatpush1.msra.mxu0 %v414
    %445 = vmatprep.subr.mxu0 0.0
    %446 = vmatpush1.msra.mxu0 %v415
    %447 = vmatprep.subr.mxu0 0.0
    %448 = vmatpush1.msra.mxu0 %v416
    %449 = vmatprep.subr.mxu0 0.0
    %450 = vmatpush1.msra.mxu0 0.0
    %451 = vmatprep.subr.mxu0 0.0
    %452 = vmatpush1.msra.mxu0 0.0
    %453 = vmatprep.subr.mxu0 0.0
    %454 = vmatpush1.msra.mxu0 0.0
    %455 = vmatprep.subr.mxu0 0.0
    %456 = vmatpush1.msra.mxu0 0.0
    %457 = vmatprep.subr.mxu0 0.0
    %458 = vmatpush1.msra.mxu0 0.0
    %459 = vmatprep.subr.mxu0 0.0
    %460 = vmatpush1.msra.mxu0 0.0
    %461 = vmatprep.subr.mxu0 0.0
    %462 = vmatpush1.msra.mxu0 0.0
    %463 = vmatprep.subr.mxu0 0.0
    %464 = vmatpush1.msra.mxu0 0.0
    %465 = vmatprep.subr.mxu0 0.0
    %466 = vmatpush1.msra.mxu0 0.0
    %467 = vmatprep.subr.mxu0 0.0
    %468 = vmatpush1.msra.mxu0 0.0
    %469 = vmatprep.subr.mxu0 0.0
    %470 = vmatpush1.msra.mxu0 0.0
    %471 = vmatprep.subr.mxu0 0.0
    %472 = vmatpush1.msra.mxu0 0.0
    %473 = vmatprep.subr.mxu0 0.0
    %474 = vmatpush1.msra.mxu0 0.0
    %475 = vmatprep.subr.mxu0 0.0
    %476 = vmatpush1.msra.mxu0 0.0
    %477 = vmatprep.subr.mxu0 0.0
    %478 = vmatpush1.msra.mxu0 0.0
    %479 = vmatprep.subr.mxu0 0.0
    %480 = vmatpush1.msra.mxu0 0.0
    %481 = vmatprep.mubr.f32.mxu0 0.0
    %482 = vmatmul.mubr.f32.gmra.mrb[0].mxu0 %v323
    %v483 = vpop.f32.mrb[0].mxu0
    %v484 = vadd.f32 0.0, %v483
    %v485 = vpop.f32.mrb[0].mxu0
    %486 = vmatprep.mubr.f32.mxu0 0.0
    %487 = vmatmul.mubr.f32.gmra.mrb[0].mxu0 %v328
    %v488 = vpop.f32.mrb[0].mxu0
    %v489 = vadd.f32 0.0, %v488
    %v490 = vpop.f32.mrb[0].mxu0
    %491 = vmatprep.mubr.f32.mxu0 0.0
    %492 = vmatmul.mubr.f32.gmra.mrb[0].mxu0 %v333
    %v493 = vpop.f32.mrb[0].mxu0
    %v494 = vadd.f32 0.0, %v493
    %v495 = vpop.f32.mrb[0].mxu0
    %496 = vmatprep.mubr.f32.mxu0 0.0
    %497 = vmatmul.mubr.f32.gmra.mrb[0].mxu0 %v338
    %v498 = vpop.f32.mrb[0].mxu0
    %v499 = vadd.f32 0.0, %v498
    %v500 = vpop.f32.mrb[0].mxu0
    %501 = vmatprep.mubr.f32.mxu0 0.0
    %502 = vmatmul.mubr.f32.gmra.mrb[0].mxu0 %v343
    %v503 = vpop.f32.mrb[0].mxu0
    %v504 = vadd.f32 0.0, %v503
    %v505 = vpop.f32.mrb[0].mxu0
    %506 = vmatprep.mubr.f32.mxu0 0.0
    %507 = vmatmul.mubr.f32.gmra.mrb[0].mxu0 %v348
    %v508 = vpop.f32.mrb[0].mxu0
    %v509 = vadd.f32 0.0, %v508
    %v510 = vpop.f32.mrb[0].mxu0
    %511 = vmatprep.mubr.f32.mxu0 0.0
    %512 = vmatmul.mubr.f32.gmra.mrb[0].mxu0 %v353
    %v513 = vpop.f32.mrb[0].mxu0
    %v514 = vadd.f32 0.0, %v513
    %v515 = vpop.f32.mrb[0].mxu0
    %516 = vmatprep.mubr.f32.mxu0 0.0
    %517 = vmatmul.mubr.f32.gmra.mrb[0].mxu0 %v358
    %v518 = vpop.f32.mrb[0].mxu0
    %v519 = vadd.f32 0.0, %v518
    %v520 = vpop.f32.mrb[0].mxu0
    %521 = vmatprep.mubr.f32.mxu0 0.0
    %522 = vmatmul.mubr.f32.gmra.mrb[0].mxu0 %v363
    %v523 = vpop.f32.mrb[0].mxu0
    %v524 = vadd.f32 0.0, %v523
    %v525 = vpop.f32.mrb[0].mxu0
    %526 = vmatprep.mubr.f32.mxu0 0.0
    %527 = vmatmul.mubr.f32.gmra.mrb[0].mxu0 %v368
    %v528 = vpop.f32.mrb[0].mxu0
    %v529 = vadd.f32 0.0, %v528
    %v530 = vpop.f32.mrb[0].mxu0
    %531 = vmatprep.mubr.f32.mxu0 0.0
    %532 = vmatmul.mubr.f32.gmra.mrb[0].mxu0 %v373
    %v533 = vpop.f32.mrb[0].mxu0
    %v534 = vadd.f32 0.0, %v533
    %v535 = vpop.f32.mrb[0].mxu0
    %536 = vmatprep.mubr.f32.mxu0 0.0
    %537 = vmatmul.mubr.f32.gmra.mrb[0].mxu0 %v378
    %v538 = vpop.f32.mrb[0].mxu0
    %v539 = vadd.f32 0.0, %v538
    %v540 = vpop.f32.mrb[0].mxu0
    %541 = vmatprep.mubr.f32.mxu0 0.0
    %542 = vmatmul.mubr.f32.gmra.mrb[0].mxu0 %v383
    %v543 = vpop.f32.mrb[0].mxu0
    %v544 = vadd.f32 0.0, %v543
    %v545 = vpop.f32.mrb[0].mxu0
    %546 = vmatprep.mubr.f32.mxu0 0.0
    %547 = vmatmul.mubr.f32.gmra.mrb[0].mxu0 %v388
    %v548 = vpop.f32.mrb[0].mxu0
    %v549 = vadd.f32 0.0, %v548
    %v550 = vpop.f32.mrb[0].mxu0
    %551 = vmatprep.mubr.f32.mxu0 0.0
    %552 = vmatmul.mubr.f32.gmra.mrb[0].mxu0 %v393
    %v553 = vpop.f32.mrb[0].mxu0
    %v554 = vadd.f32 0.0, %v553
    %v555 = vpop.f32.mrb[0].mxu0
    %556 = vmatprep.mubr.f32.mxu0 0.0
    %557 = vmatmul.mubr.f32.gmra.mrb[0].mxu0 %v398
    %v558 = vpop.f32.mrb[0].mxu0
    %v559 = vadd.f32 0.0, %v558
    %v560 = vpop.f32.mrb[0].mxu0
    %561 = vdwg.mxu0
    %v562 = vld [vmem:[#allocation5] sm:$0xff]
    %v563 = vld [vmem:[#allocation5 + $0x8] sm:$0xff]
    %v564 = vld [vmem:[#allocation5 + $0x10] sm:$0xff]
    %v565 = vld [vmem:[#allocation5 + $0x18] sm:$0xff]
    %v566 = vld [vmem:[#allocation5 + $0x20] sm:$0xff]
    %v567 = vld [vmem:[#allocation5 + $0x28] sm:$0xff]
    %v568 = vld [vmem:[#allocation5 + $0x30] sm:$0xff]
    %v569 = vld [vmem:[#allocation5 + $0x38] sm:$0xff]
    %v570 = vld [vmem:[#allocation5 + $0x40] sm:$0xff]
    %v571 = vld [vmem:[#allocation5 + $0x48] sm:$0xff]
    %v572 = vld [vmem:[#allocation5 + $0x50] sm:$0xff]
    %v573 = vld [vmem:[#allocation5 + $0x58] sm:$0xff]
    %v574 = vld [vmem:[#allocation5 + $0x60] sm:$0xff]
    %v575 = vld [vmem:[#allocation5 + $0x68] sm:$0xff]
    %v576 = vld [vmem:[#allocation5 + $0x70] sm:$0xff]
    %v577 = vld [vmem:[#allocation5 + $0x78] sm:$0xff]
    %578 = vmatprep.subr.mxu0 0.0
    %579 = vmatpush1.msra.mxu0 %v562
    %580 = vmatprep.subr.mxu0 0.0
    %581 = vmatpush1.msra.mxu0 %v563
    %582 = vmatprep.subr.mxu0 0.0
    %583 = vmatpush1.msra.mxu0 %v564
    %584 = vmatprep.subr.mxu0 0.0
    %585 = vmatpush1.msra.mxu0 %v565
    %586 = vmatprep.subr.mxu0 0.0
    %587 = vmatpush1.msra.mxu0 %v566
    %588 = vmatprep.subr.mxu0 0.0
    %589 = vmatpush1.msra.mxu0 %v567
    %590 = vmatprep.subr.mxu0 0.0
    %591 = vmatpush1.msra.mxu0 %v568
    %592 = vmatprep.subr.mxu0 0.0
    %593 = vmatpush1.msra.mxu0 %v569
    %594 = vmatprep.subr.mxu0 0.0
    %595 = vmatpush1.msra.mxu0 %v570
    %596 = vmatprep.subr.mxu0 0.0
    %597 = vmatpush1.msra.mxu0 %v571
    %598 = vmatprep.subr.mxu0 0.0
    %599 = vmatpush1.msra.mxu0 %v572
    %600 = vmatprep.subr.mxu0 0.0
    %601 = vmatpush1.msra.mxu0 %v573
    %602 = vmatprep.subr.mxu0 0.0
    %603 = vmatpush1.msra.mxu0 %v574
    %604 = vmatprep.subr.mxu0 0.0
    %605 = vmatpush1.msra.mxu0 %v575
    %606 = vmatprep.subr.mxu0 0.0
    %607 = vmatpush1.msra.mxu0 %v576
    %608 = vmatprep.subr.mxu0 0.0
    %609 = vmatpush1.msra.mxu0 %v577
    %610 = vmatprep.subr.mxu0 0.0
    %611 = vmatpush1.msra.mxu0 0.0
    %612 = vmatprep.subr.mxu0 0.0
    %613 = vmatpush1.msra.mxu0 0.0
    %614 = vmatprep.subr.mxu0 0.0
    %615 = vmatpush1.msra.mxu0 0.0
    %616 = vmatprep.subr.mxu0 0.0
    %617 = vmatpush1.msra.mxu0 0.0
    %618 = vmatprep.subr.mxu0 0.0
    %619 = vmatpush1.msra.mxu0 0.0
    %620 = vmatprep.subr.mxu0 0.0
    %621 = vmatpush1.msra.mxu0 0.0
    %622 = vmatprep.subr.mxu0 0.0
    %623 = vmatpush1.msra.mxu0 0.0
    %624 = vmatprep.subr.mxu0 0.0
    %625 = vmatpush1.msra.mxu0 0.0
    %626 = vmatprep.subr.mxu0 0.0
    %627 = vmatpush1.msra.mxu0 0.0
    %628 = vmatprep.subr.mxu0 0.0
    %629 = vmatpush1.msra.mxu0 0.0
    %630 = vmatprep.subr.mxu0 0.0
    %631 = vmatpush1.msra.mxu0 0.0
    %632 = vmatprep.subr.mxu0 0.0
    %633 = vmatpush1.msra.mxu0 0.0
    %634 = vmatprep.subr.mxu0 0.0
    %635 = vmatpush1.msra.mxu0 0.0
    %636 = vmatprep.subr.mxu0 0.0
    %637 = vmatpush1.msra.mxu0 0.0
    %638 = vmatprep.subr.mxu0 0.0
    %639 = vmatpush1.msra.mxu0 0.0
    %640 = vmatprep.subr.mxu0 0.0
    %641 = vmatpush1.msra.mxu0 0.0
    %642 = vmatprep.mubr.f32.mxu0 0.0
    %643 = vmatmul.mubr.f32.gmra.mrb[0].mxu0 %v224
    %v644 = vpop.f32.mrb[0].mxu0
    %v645 = vadd.f32 0.0, %v644
    %v646 = vpop.f32.mrb[0].mxu0
    %647 = vmatprep.mubr.f32.mxu0 0.0
    %648 = vmatmul.mubr.f32.gmra.mrb[0].mxu0 %v225
    %v649 = vpop.f32.mrb[0].mxu0
    %v650 = vadd.f32 0.0, %v649
    %v651 = vpop.f32.mrb[0].mxu0
    %652 = vmatprep.mubr.f32.mxu0 0.0
    %653 = vmatmul.mubr.f32.gmra.mrb[0].mxu0 %v226
    %v654 = vpop.f32.mrb[0].mxu0
    %v655 = vadd.f32 0.0, %v654
    %v656 = vpop.f32.mrb[0].mxu0
    %657 = vmatprep.mubr.f32.mxu0 0.0
    %658 = vmatmul.mubr.f32.gmra.mrb[0].mxu0 %v227
    %v659 = vpop.f32.mrb[0].mxu0
    %v660 = vadd.f32 0.0, %v659
    %v661 = vpop.f32.mrb[0].mxu0
    %662 = vmatprep.mubr.f32.mxu0 0.0
    %663 = vmatmul.mubr.f32.gmra.mrb[0].mxu0 %v228
    %v664 = vpop.f32.mrb[0].mxu0
    %v665 = vadd.f32 0.0, %v664
    %v666 = vpop.f32.mrb[0].mxu0
    %667 = vmatprep.mubr.f32.mxu0 0.0
    %668 = vmatmul.mubr.f32.gmra.mrb[0].mxu0 %v229
    %v669 = vpop.f32.mrb[0].mxu0
    %v670 = vadd.f32 0.0, %v669
    %v671 = vpop.f32.mrb[0].mxu0
    %672 = vmatprep.mubr.f32.mxu0 0.0
    %673 = vmatmul.mubr.f32.gmra.mrb[0].mxu0 %v230
    %v674 = vpop.f32.mrb[0].mxu0
    %v675 = vadd.f32 0.0, %v674
    %v676 = vpop.f32.mrb[0].mxu0
    %677 = vmatprep.mubr.f32.mxu0 0.0
    %678 = vmatmul.mubr.f32.gmra.mrb[0].mxu0 %v231
    %v679 = vpop.f32.mrb[0].mxu0
    %v680 = vadd.f32 0.0, %v679
    %v681 = vpop.f32.mrb[0].mxu0
    %682 = vmatprep.mubr.f32.mxu0 0.0
    %683 = vmatmul.mubr.f32.gmra.mrb[0].mxu0 %v232
    %v684 = vpop.f32.mrb[0].mxu0
    %v685 = vadd.f32 0.0, %v684
    %v686 = vpop.f32.mrb[0].mxu0
    %687 = vmatprep.mubr.f32.mxu0 0.0
    %688 = vmatmul.mubr.f32.gmra.mrb[0].mxu0 %v233
    %v689 = vpop.f32.mrb[0].mxu0
    %v690 = vadd.f32 0.0, %v689
    %v691 = vpop.f32.mrb[0].mxu0
    %692 = vmatprep.mubr.f32.mxu0 0.0
    %693 = vmatmul.mubr.f32.gmra.mrb[0].mxu0 %v234
    %v694 = vpop.f32.mrb[0].mxu0
    %v695 = vadd.f32 0.0, %v694
    %v696 = vpop.f32.mrb[0].mxu0
    %697 = vmatprep.mubr.f32.mxu0 0.0
    %698 = vmatmul.mubr.f32.gmra.mrb[0].mxu0 %v235
    %v699 = vpop.f32.mrb[0].mxu0
    %v700 = vadd.f32 0.0, %v699
    %v701 = vpop.f32.mrb[0].mxu0
    %702 = vmatprep.mubr.f32.mxu0 0.0
    %703 = vmatmul.mubr.f32.gmra.mrb[0].mxu0 %v236
    %v704 = vpop.f32.mrb[0].mxu0
    %v705 = vadd.f32 0.0, %v704
    %v706 = vpop.f32.mrb[0].mxu0
    %707 = vmatprep.mubr.f32.mxu0 0.0
    %708 = vmatmul.mubr.f32.gmra.mrb[0].mxu0 %v237
    %v709 = vpop.f32.mrb[0].mxu0
    %v710 = vadd.f32 0.0, %v709
    %v711 = vpop.f32.mrb[0].mxu0
    %712 = vmatprep.mubr.f32.mxu0 0.0
    %713 = vmatmul.mubr.f32.gmra.mrb[0].mxu0 %v238
    %v714 = vpop.f32.mrb[0].mxu0
    %v715 = vadd.f32 0.0, %v714
    %v716 = vpop.f32.mrb[0].mxu0
    %717 = vmatprep.mubr.f32.mxu0 0.0
    %718 = vmatmul.mubr.f32.gmra.mrb[0].mxu0 %v239
    %v719 = vpop.f32.mrb[0].mxu0
    %v720 = vadd.f32 0.0, %v719
    %v721 = vpop.f32.mrb[0].mxu0
    %722 = vdwg.mxu0
    %723 = vmatprep.subr.mxu0 0.0
    %724 = vmatpush1.msra.mxu0 %v401
    %725 = vmatprep.subr.mxu0 0.0
    %726 = vmatpush1.msra.mxu0 %v402
    %727 = vmatprep.subr.mxu0 0.0
    %728 = vmatpush1.msra.mxu0 %v403
    %729 = vmatprep.subr.mxu0 0.0
    %730 = vmatpush1.msra.mxu0 %v404
    %731 = vmatprep.subr.mxu0 0.0
    %732 = vmatpush1.msra.mxu0 %v405
    %733 = vmatprep.subr.mxu0 0.0
    %734 = vmatpush1.msra.mxu0 %v406
    %735 = vmatprep.subr.mxu0 0.0
    %736 = vmatpush1.msra.mxu0 %v407
    %737 = vmatprep.subr.mxu0 0.0
    %738 = vmatpush1.msra.mxu0 %v408
    %739 = vmatprep.subr.mxu0 0.0
    %740 = vmatpush1.msra.mxu0 %v409
    %741 = vmatprep.subr.mxu0 0.0
    %742 = vmatpush1.msra.mxu0 %v410
    %743 = vmatprep.subr.mxu0 0.0
    %744 = vmatpush1.msra.mxu0 %v411
    %745 = vmatprep.subr.mxu0 0.0
    %746 = vmatpush1.msra.mxu0 %v412
    %747 = vmatprep.subr.mxu0 0.0
    %748 = vmatpush1.msra.mxu0 %v413
    %749 = vmatprep.subr.mxu0 0.0
    %750 = vmatpush1.msra.mxu0 %v414
    %751 = vmatprep.subr.mxu0 0.0
    %752 = vmatpush1.msra.mxu0 %v415
    %753 = vmatprep.subr.mxu0 0.0
    %754 = vmatpush1.msra.mxu0 %v416
    %755 = vmatprep.subr.mxu0 0.0
    %756 = vmatpush1.msra.mxu0 0.0
    %757 = vmatprep.subr.mxu0 0.0
    %758 = vmatpush1.msra.mxu0 0.0
    %759 = vmatprep.subr.mxu0 0.0
    %760 = vmatpush1.msra.mxu0 0.0
    %761 = vmatprep.subr.mxu0 0.0
    %762 = vmatpush1.msra.mxu0 0.0
    %763 = vmatprep.subr.mxu0 0.0
    %764 = vmatpush1.msra.mxu0 0.0
    %765 = vmatprep.subr.mxu0 0.0
    %766 = vmatpush1.msra.mxu0 0.0
    %767 = vmatprep.subr.mxu0 0.0
    %768 = vmatpush1.msra.mxu0 0.0
    %769 = vmatprep.subr.mxu0 0.0
    %770 = vmatpush1.msra.mxu0 0.0
    %771 = vmatprep.subr.mxu0 0.0
    %772 = vmatpush1.msra.mxu0 0.0
    %773 = vmatprep.subr.mxu0 0.0
    %774 = vmatpush1.msra.mxu0 0.0
    %775 = vmatprep.subr.mxu0 0.0
    %776 = vmatpush1.msra.mxu0 0.0
    %777 = vmatprep.subr.mxu0 0.0
    %778 = vmatpush1.msra.mxu0 0.0
    %779 = vmatprep.subr.mxu0 0.0
    %780 = vmatpush1.msra.mxu0 0.0
    %781 = vmatprep.subr.mxu0 0.0
    %782 = vmatpush1.msra.mxu0 0.0
    %783 = vmatprep.subr.mxu0 0.0
    %784 = vmatpush1.msra.mxu0 0.0
    %785 = vmatprep.subr.mxu0 0.0
    %786 = vmatpush1.msra.mxu0 0.0
    %787 = vmatprep.mubr.f32.mxu0 0.0
    %788 = vmatmul.mubr.f32.gmra.mrb[0].mxu0 %v645
    %v789 = vpop.f32.mrb[0].mxu0
    %v790 = vadd.f32 0.0, %v789
    %v791 = vpop.f32.mrb[0].mxu0
    %792 = vmatprep.mubr.f32.mxu0 0.0
    %793 = vmatmul.mubr.f32.gmra.mrb[0].mxu0 %v650
    %v794 = vpop.f32.mrb[0].mxu0
    %v795 = vadd.f32 0.0, %v794
    %v796 = vpop.f32.mrb[0].mxu0
    %797 = vmatprep.mubr.f32.mxu0 0.0
    %798 = vmatmul.mubr.f32.gmra.mrb[0].mxu0 %v655
    %v799 = vpop.f32.mrb[0].mxu0
    %v800 = vadd.f32 0.0, %v799
    %v801 = vpop.f32.mrb[0].mxu0
    %802 = vmatprep.mubr.f32.mxu0 0.0
    %803 = vmatmul.mubr.f32.gmra.mrb[0].mxu0 %v660
    %v804 = vpop.f32.mrb[0].mxu0
    %v805 = vadd.f32 0.0, %v804
    %v806 = vpop.f32.mrb[0].mxu0
    %807 = vmatprep.mubr.f32.mxu0 0.0
    %808 = vmatmul.mubr.f32.gmra.mrb[0].mxu0 %v665
    %v809 = vpop.f32.mrb[0].mxu0
    %v810 = vadd.f32 0.0, %v809
    %v811 = vpop.f32.mrb[0].mxu0
    %812 = vmatprep.mubr.f32.mxu0 0.0
    %813 = vmatmul.mubr.f32.gmra.mrb[0].mxu0 %v670
    %v814 = vpop.f32.mrb[0].mxu0
    %v815 = vadd.f32 0.0, %v814
    %v816 = vpop.f32.mrb[0].mxu0
    %817 = vmatprep.mubr.f32.mxu0 0.0
    %818 = vmatmul.mubr.f32.gmra.mrb[0].mxu0 %v675
    %v819 = vpop.f32.mrb[0].mxu0
    %v820 = vadd.f32 0.0, %v819
    %v821 = vpop.f32.mrb[0].mxu0
    %822 = vmatprep.mubr.f32.mxu0 0.0
    %823 = vmatmul.mubr.f32.gmra.mrb[0].mxu0 %v680
    %v824 = vpop.f32.mrb[0].mxu0
    %v825 = vadd.f32 0.0, %v824
    %v826 = vpop.f32.mrb[0].mxu0
    %827 = vmatprep.mubr.f32.mxu0 0.0
    %828 = vmatmul.mubr.f32.gmra.mrb[0].mxu0 %v685
    %v829 = vpop.f32.mrb[0].mxu0
    %v830 = vadd.f32 0.0, %v829
    %v831 = vpop.f32.mrb[0].mxu0
    %832 = vmatprep.mubr.f32.mxu0 0.0
    %833 = vmatmul.mubr.f32.gmra.mrb[0].mxu0 %v690
    %v834 = vpop.f32.mrb[0].mxu0
    %v835 = vadd.f32 0.0, %v834
    %v836 = vpop.f32.mrb[0].mxu0
    %837 = vmatprep.mubr.f32.mxu0 0.0
    %838 = vmatmul.mubr.f32.gmra.mrb[0].mxu0 %v695
    %v839 = vpop.f32.mrb[0].mxu0
    %v840 = vadd.f32 0.0, %v839
    %v841 = vpop.f32.mrb[0].mxu0
    %842 = vmatprep.mubr.f32.mxu0 0.0
    %843 = vmatmul.mubr.f32.gmra.mrb[0].mxu0 %v700
    %v844 = vpop.f32.mrb[0].mxu0
    %v845 = vadd.f32 0.0, %v844
    %v846 = vpop.f32.mrb[0].mxu0
    %847 = vmatprep.mubr.f32.mxu0 0.0
    %848 = vmatmul.mubr.f32.gmra.mrb[0].mxu0 %v705
    %v849 = vpop.f32.mrb[0].mxu0
    %v850 = vadd.f32 0.0, %v849
    %v851 = vpop.f32.mrb[0].mxu0
    %852 = vmatprep.mubr.f32.mxu0 0.0
    %853 = vmatmul.mubr.f32.gmra.mrb[0].mxu0 %v710
    %v854 = vpop.f32.mrb[0].mxu0
    %v855 = vadd.f32 0.0, %v854
    %v856 = vpop.f32.mrb[0].mxu0
    %857 = vmatprep.mubr.f32.mxu0 0.0
    %858 = vmatmul.mubr.f32.gmra.mrb[0].mxu0 %v715
    %v859 = vpop.f32.mrb[0].mxu0
    %v860 = vadd.f32 0.0, %v859
    %v861 = vpop.f32.mrb[0].mxu0
    %862 = vmatprep.mubr.f32.mxu0 0.0
    %863 = vmatmul.mubr.f32.gmra.mrb[0].mxu0 %v720
    %v864 = vpop.f32.mrb[0].mxu0
    %v865 = vadd.f32 0.0, %v864
    %v866 = vpop.f32.mrb[0].mxu0
    %867 = vdwg.mxu0
    %v868 = vld [vmem:[#allocation17] sm:$0xff]
    %v869 = vld [vmem:[#allocation17 + $0x8] sm:$0xff]
    %v870 = vld [vmem:[#allocation17 + $0x10] sm:$0xff]
    %v871 = vld [vmem:[#allocation17 + $0x18] sm:$0xff]
    %v872 = vld [vmem:[#allocation17 + $0x20] sm:$0xff]
    %v873 = vld [vmem:[#allocation17 + $0x28] sm:$0xff]
    %v874 = vld [vmem:[#allocation17 + $0x30] sm:$0xff]
    %v875 = vld [vmem:[#allocation17 + $0x38] sm:$0xff]
    %v876 = vld [vmem:[#allocation17 + $0x40] sm:$0xff]
    %v877 = vld [vmem:[#allocation17 + $0x48] sm:$0xff]
    %v878 = vld [vmem:[#allocation17 + $0x50] sm:$0xff]
    %v879 = vld [vmem:[#allocation17 + $0x58] sm:$0xff]
    %v880 = vld [vmem:[#allocation17 + $0x60] sm:$0xff]
    %v881 = vld [vmem:[#allocation17 + $0x68] sm:$0xff]
    %v882 = vld [vmem:[#allocation17 + $0x70] sm:$0xff]
    %v883 = vld [vmem:[#allocation17 + $0x78] sm:$0xff]
    %v884 = vld [vmem:[#allocation17 + $0x80] sm:$0xff]
    %v885 = vld [vmem:[#allocation17 + $0x88] sm:$0xff]
    %v886 = vld [vmem:[#allocation17 + $0x90] sm:$0xff]
    %v887 = vld [vmem:[#allocation17 + $0x98] sm:$0xff]
    %v888 = vld [vmem:[#allocation17 + $0xa0] sm:$0xff]
    %v889 = vld [vmem:[#allocation17 + $0xa8] sm:$0xff]
    %v890 = vld [vmem:[#allocation17 + $0xb0] sm:$0xff]
    %v891 = vld [vmem:[#allocation17 + $0xb8] sm:$0xff]
    %v892 = vld [vmem:[#allocation17 + $0xc0] sm:$0xff]
    %v893 = vld [vmem:[#allocation17 + $0xc8] sm:$0xff]
    %v894 = vld [vmem:[#allocation17 + $0xd0] sm:$0xff]
    %v895 = vld [vmem:[#allocation17 + $0xd8] sm:$0xff]
    %v896 = vld [vmem:[#allocation17 + $0xe0] sm:$0xff]
    %v897 = vld [vmem:[#allocation17 + $0xe8] sm:$0xff]
    %v898 = vld [vmem:[#allocation17 + $0xf0] sm:$0xff]
    %v899 = vld [vmem:[#allocation17 + $0xf8] sm:$0xff]
    %v900 = vld [vmem:[#allocation17 + $0x100] sm:$0xff]
    %v901 = vld [vmem:[#allocation17 + $0x108] sm:$0xff]
    %v902 = vld [vmem:[#allocation17 + $0x110] sm:$0xff]
    %v903 = vld [vmem:[#allocation17 + $0x118] sm:$0xff]
    %v904 = vld [vmem:[#allocation17 + $0x120] sm:$0xff]
    %v905 = vld [vmem:[#allocation17 + $0x128] sm:$0xff]
    %v906 = vld [vmem:[#allocation17 + $0x130] sm:$0xff]
    %v907 = vld [vmem:[#allocation17 + $0x138] sm:$0xff]
    %v908 = vld [vmem:[#allocation17 + $0x140] sm:$0xff]
    %v909 = vld [vmem:[#allocation17 + $0x148] sm:$0xff]
    %v910 = vld [vmem:[#allocation17 + $0x150] sm:$0xff]
    %v911 = vld [vmem:[#allocation17 + $0x158] sm:$0xff]
    %v912 = vld [vmem:[#allocation17 + $0x160] sm:$0xff]
    %v913 = vld [vmem:[#allocation17 + $0x168] sm:$0xff]
    %v914 = vld [vmem:[#allocation17 + $0x170] sm:$0xff]
    %v915 = vld [vmem:[#allocation17 + $0x178] sm:$0xff]
    %v916 = vld [vmem:[#allocation17 + $0x180] sm:$0xff]
    %v917 = vld [vmem:[#allocation17 + $0x188] sm:$0xff]
    %v918 = vld [vmem:[#allocation17 + $0x190] sm:$0xff]
    %v919 = vld [vmem:[#allocation17 + $0x198] sm:$0xff]
    %v920 = vld [vmem:[#allocation17 + $0x1a0] sm:$0xff]
    %v921 = vld [vmem:[#allocation17 + $0x1a8] sm:$0xff]
    %v922 = vld [vmem:[#allocation17 + $0x1b0] sm:$0xff]
    %v923 = vld [vmem:[#allocation17 + $0x1b8] sm:$0xff]
    %v924 = vld [vmem:[#allocation17 + $0x1c0] sm:$0xff]
    %v925 = vld [vmem:[#allocation17 + $0x1c8] sm:$0xff]
    %v926 = vld [vmem:[#allocation17 + $0x1d0] sm:$0xff]
    %v927 = vld [vmem:[#allocation17 + $0x1d8] sm:$0xff]
    %v928 = vld [vmem:[#allocation17 + $0x1e0] sm:$0xff]
    %v929 = vld [vmem:[#allocation17 + $0x1e8] sm:$0xff]
    %v930 = vld [vmem:[#allocation17 + $0x1f0] sm:$0xff]
    %v931 = vld [vmem:[#allocation17 + $0x1f8] sm:$0xff]
    %v932 = vld [vmem:[#allocation19] sm:$0xff]
    %v933 = vld [vmem:[#allocation19 + $0x8] sm:$0xff]
    %v934 = vld [vmem:[#allocation19 + $0x10] sm:$0xff]
    %v935 = vld [vmem:[#allocation19 + $0x18] sm:$0xff]
    %v936 = vld [vmem:[#allocation19 + $0x20] sm:$0xff]
    %v937 = vld [vmem:[#allocation19 + $0x28] sm:$0xff]
    %v938 = vld [vmem:[#allocation19 + $0x30] sm:$0xff]
    %v939 = vld [vmem:[#allocation19 + $0x38] sm:$0xff]
    %v940 = vld [vmem:[#allocation19 + $0x40] sm:$0xff]
    %v941 = vld [vmem:[#allocation19 + $0x48] sm:$0xff]
    %v942 = vld [vmem:[#allocation19 + $0x50] sm:$0xff]
    %v943 = vld [vmem:[#allocation19 + $0x58] sm:$0xff]
    %v944 = vld [vmem:[#allocation19 + $0x60] sm:$0xff]
    %v945 = vld [vmem:[#allocation19 + $0x68] sm:$0xff]
    %v946 = vld [vmem:[#allocation19 + $0x70] sm:$0xff]
    %v947 = vld [vmem:[#allocation19 + $0x78] sm:$0xff]
    %v948 = vld [vmem:[#allocation19 + $0x80] sm:$0xff]
    %v949 = vld [vmem:[#allocation19 + $0x88] sm:$0xff]
    %v950 = vld [vmem:[#allocation19 + $0x90] sm:$0xff]
    %v951 = vld [vmem:[#allocation19 + $0x98] sm:$0xff]
    %v952 = vld [vmem:[#allocation19 + $0xa0] sm:$0xff]
    %v953 = vld [vmem:[#allocation19 + $0xa8] sm:$0xff]
    %v954 = vld [vmem:[#allocation19 + $0xb0] sm:$0xff]
    %v955 = vld [vmem:[#allocation19 + $0xb8] sm:$0xff]
    %v956 = vld [vmem:[#allocation19 + $0xc0] sm:$0xff]
    %v957 = vld [vmem:[#allocation19 + $0xc8] sm:$0xff]
    %v958 = vld [vmem:[#allocation19 + $0xd0] sm:$0xff]
    %v959 = vld [vmem:[#allocation19 + $0xd8] sm:$0xff]
    %v960 = vld [vmem:[#allocation19 + $0xe0] sm:$0xff]
    %v961 = vld [vmem:[#allocation19 + $0xe8] sm:$0xff]
    %v962 = vld [vmem:[#allocation19 + $0xf0] sm:$0xff]
    %v963 = vld [vmem:[#allocation19 + $0xf8] sm:$0xff]
    %v964 = vld [vmem:[#allocation19 + $0x100] sm:$0xff]
    %v965 = vld [vmem:[#allocation19 + $0x108] sm:$0xff]
    %v966 = vld [vmem:[#allocation19 + $0x110] sm:$0xff]
    %v967 = vld [vmem:[#allocation19 + $0x118] sm:$0xff]
    %v968 = vld [vmem:[#allocation19 + $0x120] sm:$0xff]
    %v969 = vld [vmem:[#allocation19 + $0x128] sm:$0xff]
    %v970 = vld [vmem:[#allocation19 + $0x130] sm:$0xff]
    %v971 = vld [vmem:[#allocation19 + $0x138] sm:$0xff]
    %v972 = vld [vmem:[#allocation19 + $0x140] sm:$0xff]
    %v973 = vld [vmem:[#allocation19 + $0x148] sm:$0xff]
    %v974 = vld [vmem:[#allocation19 + $0x150] sm:$0xff]
    %v975 = vld [vmem:[#allocation19 + $0x158] sm:$0xff]
    %v976 = vld [vmem:[#allocation19 + $0x160] sm:$0xff]
    %v977 = vld [vmem:[#allocation19 + $0x168] sm:$0xff]
    %v978 = vld [vmem:[#allocation19 + $0x170] sm:$0xff]
    %v979 = vld [vmem:[#allocation19 + $0x178] sm:$0xff]
    %v980 = vld [vmem:[#allocation19 + $0x180] sm:$0xff]
    %v981 = vld [vmem:[#allocation19 + $0x188] sm:$0xff]
    %v982 = vld [vmem:[#allocation19 + $0x190] sm:$0xff]
    %v983 = vld [vmem:[#allocation19 + $0x198] sm:$0xff]
    %v984 = vld [vmem:[#allocation19 + $0x1a0] sm:$0xff]
    %v985 = vld [vmem:[#allocation19 + $0x1a8] sm:$0xff]
    %v986 = vld [vmem:[#allocation19 + $0x1b0] sm:$0xff]
    %v987 = vld [vmem:[#allocation19 + $0x1b8] sm:$0xff]
    %v988 = vld [vmem:[#allocation19 + $0x1c0] sm:$0xff]
    %v989 = vld [vmem:[#allocation19 + $0x1c8] sm:$0xff]
    %v990 = vld [vmem:[#allocation19 + $0x1d0] sm:$0xff]
    %v991 = vld [vmem:[#allocation19 + $0x1d8] sm:$0xff]
    %v992 = vld [vmem:[#allocation19 + $0x1e0] sm:$0xff]
    %v993 = vld [vmem:[#allocation19 + $0x1e8] sm:$0xff]
    %v994 = vld [vmem:[#allocation19 + $0x1f0] sm:$0xff]
    %v995 = vld [vmem:[#allocation19 + $0x1f8] sm:$0xff]
    %v996 = vmul.f32 %v868, %v484
    %v997 = vmul.f32 %v869, %v484
    %v998 = vmul.f32 %v870, %v484
    %v999 = vmul.f32 %v871, %v484
    %v1000 = vmul.f32 %v872, %v489
    %v1001 = vmul.f32 %v873, %v489
    %v1002 = vmul.f32 %v874, %v489
    %v1003 = vmul.f32 %v875, %v489
    %v1004 = vmul.f32 %v876, %v494
    %v1005 = vmul.f32 %v877, %v494
    %v1006 = vmul.f32 %v878, %v494
    %v1007 = vmul.f32 %v879, %v494
    %v1008 = vmul.f32 %v880, %v499
    %v1009 = vmul.f32 %v881, %v499
    %v1010 = vmul.f32 %v882, %v499
    %v1011 = vmul.f32 %v883, %v499
    %v1012 = vmul.f32 %v884, %v504
    %v1013 = vmul.f32 %v885, %v504
    %v1014 = vmul.f32 %v886, %v504
    %v1015 = vmul.f32 %v887, %v504
    %v1016 = vmul.f32 %v888, %v509
    %v1017 = vmul.f32 %v889, %v509
    %v1018 = vmul.f32 %v890, %v509
    %v1019 = vmul.f32 %v891, %v509
    %v1020 = vmul.f32 %v892, %v514
    %v1021 = vmul.f32 %v893, %v514
    %v1022 = vmul.f32 %v894, %v514
    %v1023 = vmul.f32 %v895, %v514
    %v1024 = vmul.f32 %v896, %v519
    %v1025 = vmul.f32 %v897, %v519
    %v1026 = vmul.f32 %v898, %v519
    %v1027 = vmul.f32 %v899, %v519
    %v1028 = vmul.f32 %v900, %v524
    %v1029 = vmul.f32 %v901, %v524
    %v1030 = vmul.f32 %v902, %v524
    %v1031 = vmul.f32 %v903, %v524
    %v1032 = vmul.f32 %v904, %v529
    %v1033 = vmul.f32 %v905, %v529
    %v1034 = vmul.f32 %v906, %v529
    %v1035 = vmul.f32 %v907, %v529
    %v1036 = vmul.f32 %v908, %v534
    %v1037 = vmul.f32 %v909, %v534
    %v1038 = vmul.f32 %v910, %v534
    %v1039 = vmul.f32 %v911, %v534
    %v1040 = vmul.f32 %v912, %v539
    %v1041 = vmul.f32 %v913, %v539
    %v1042 = vmul.f32 %v914, %v539
    %v1043 = vmul.f32 %v915, %v539
    %v1044 = vmul.f32 %v916, %v544
    %v1045 = vmul.f32 %v917, %v544
    %v1046 = vmul.f32 %v918, %v544
    %v1047 = vmul.f32 %v919, %v544
    %v1048 = vmul.f32 %v920, %v549
    %v1049 = vmul.f32 %v921, %v549
    %v1050 = vmul.f32 %v922, %v549
    %v1051 = vmul.f32 %v923, %v549
    %v1052 = vmul.f32 %v924, %v554
    %v1053 = vmul.f32 %v925, %v554
    %v1054 = vmul.f32 %v926, %v554
    %v1055 = vmul.f32 %v927, %v554
    %v1056 = vmul.f32 %v928, %v559
    %v1057 = vmul.f32 %v929, %v559
    %v1058 = vmul.f32 %v930, %v559
    %v1059 = vmul.f32 %v931, %v559
    %v1060 = vmul.f32 %v932, %v790
    %v1061 = vmul.f32 %v933, %v790
    %v1062 = vmul.f32 %v934, %v790
    %v1063 = vmul.f32 %v935, %v790
    %v1064 = vmul.f32 %v936, %v795
    %v1065 = vmul.f32 %v937, %v795
    %v1066 = vmul.f32 %v938, %v795
    %v1067 = vmul.f32 %v939, %v795
    %v1068 = vmul.f32 %v940, %v800
    %v1069 = vmul.f32 %v941, %v800
    %v1070 = vmul.f32 %v942, %v800
    %v1071 = vmul.f32 %v943, %v800
    %v1072 = vmul.f32 %v944, %v805
    %v1073 = vmul.f32 %v945, %v805
    %v1074 = vmul.f32 %v946, %v805
    %v1075 = vmul.f32 %v947, %v805
    %v1076 = vmul.f32 %v948, %v810
    %v1077 = vmul.f32 %v949, %v810
    %v1078 = vmul.f32 %v950, %v810
    %v1079 = vmul.f32 %v951, %v810
    %v1080 = vmul.f32 %v952, %v815
    %v1081 = vmul.f32 %v953, %v815
    %v1082 = vmul.f32 %v954, %v815
    %v1083 = vmul.f32 %v955, %v815
    %v1084 = vmul.f32 %v956, %v820
    %v1085 = vmul.f32 %v957, %v820
    %v1086 = vmul.f32 %v958, %v820
    %v1087 = vmul.f32 %v959, %v820
    %v1088 = vmul.f32 %v960, %v825
    %v1089 = vmul.f32 %v961, %v825
    %v1090 = vmul.f32 %v962, %v825
    %v1091 = vmul.f32 %v963, %v825
    %v1092 = vmul.f32 %v964, %v830
    %v1093 = vmul.f32 %v965, %v830
    %v1094 = vmul.f32 %v966, %v830
    %v1095 = vmul.f32 %v967, %v830
    %v1096 = vmul.f32 %v968, %v835
    %v1097 = vmul.f32 %v969, %v835
    %v1098 = vmul.f32 %v970, %v835
    %v1099 = vmul.f32 %v971, %v835
    %v1100 = vmul.f32 %v972, %v840
    %v1101 = vmul.f32 %v973, %v840
    %v1102 = vmul.f32 %v974, %v840
    %v1103 = vmul.f32 %v975, %v840
    %v1104 = vmul.f32 %v976, %v845
    %v1105 = vmul.f32 %v977, %v845
    %v1106 = vmul.f32 %v978, %v845
    %v1107 = vmul.f32 %v979, %v845
    %v1108 = vmul.f32 %v980, %v850
    %v1109 = vmul.f32 %v981, %v850
    %v1110 = vmul.f32 %v982, %v850
    %v1111 = vmul.f32 %v983, %v850
    %v1112 = vmul.f32 %v984, %v855
    %v1113 = vmul.f32 %v985, %v855
    %v1114 = vmul.f32 %v986, %v855
    %v1115 = vmul.f32 %v987, %v855
    %v1116 = vmul.f32 %v988, %v860
    %v1117 = vmul.f32 %v989, %v860
    %v1118 = vmul.f32 %v990, %v860
    %v1119 = vmul.f32 %v991, %v860
    %v1120 = vmul.f32 %v992, %v865
    %v1121 = vmul.f32 %v993, %v865
    %v1122 = vmul.f32 %v994, %v865
    %v1123 = vmul.f32 %v995, %v865
    %v1124 = vsub.f32 %v996, %v1060
    %v1125 = vsub.f32 %v997, %v1061
    %v1126 = vsub.f32 %v998, %v1062
    %v1127 = vsub.f32 %v999, %v1063
    %v1128 = vsub.f32 %v1000, %v1064
    %v1129 = vsub.f32 %v1001, %v1065
    %v1130 = vsub.f32 %v1002, %v1066
    %v1131 = vsub.f32 %v1003, %v1067
    %v1132 = vsub.f32 %v1004, %v1068
    %v1133 = vsub.f32 %v1005, %v1069
    %v1134 = vsub.f32 %v1006, %v1070
    %v1135 = vsub.f32 %v1007, %v1071
    %v1136 = vsub.f32 %v1008, %v1072
    %v1137 = vsub.f32 %v1009, %v1073
    %v1138 = vsub.f32 %v1010, %v1074
    %v1139 = vsub.f32 %v1011, %v1075
    %v1140 = vsub.f32 %v1012, %v1076
    %v1141 = vsub.f32 %v1013, %v1077
    %v1142 = vsub.f32 %v1014, %v1078
    %v1143 = vsub.f32 %v1015, %v1079
    %v1144 = vsub.f32 %v1016, %v1080
    %v1145 = vsub.f32 %v1017, %v1081
    %v1146 = vsub.f32 %v1018, %v1082
    %v1147 = vsub.f32 %v1019, %v1083
    %v1148 = vsub.f32 %v1020, %v1084
    %v1149 = vsub.f32 %v1021, %v1085
    %v1150 = vsub.f32 %v1022, %v1086
    %v1151 = vsub.f32 %v1023, %v1087
    %v1152 = vsub.f32 %v1024, %v1088
    %v1153 = vsub.f32 %v1025, %v1089
    %v1154 = vsub.f32 %v1026, %v1090
    %v1155 = vsub.f32 %v1027, %v1091
    %v1156 = vsub.f32 %v1028, %v1092
    %v1157 = vsub.f32 %v1029, %v1093
    %v1158 = vsub.f32 %v1030, %v1094
    %v1159 = vsub.f32 %v1031, %v1095
    %v1160 = vsub.f32 %v1032, %v1096
    %v1161 = vsub.f32 %v1033, %v1097
    %v1162 = vsub.f32 %v1034, %v1098
    %v1163 = vsub.f32 %v1035, %v1099
    %v1164 = vsub.f32 %v1036, %v1100
    %v1165 = vsub.f32 %v1037, %v1101
    %v1166 = vsub.f32 %v1038, %v1102
    %v1167 = vsub.f32 %v1039, %v1103
    %v1168 = vsub.f32 %v1040, %v1104
    %v1169 = vsub.f32 %v1041, %v1105
    %v1170 = vsub.f32 %v1042, %v1106
    %v1171 = vsub.f32 %v1043, %v1107
    %v1172 = vsub.f32 %v1044, %v1108
    %v1173 = vsub.f32 %v1045, %v1109
    %v1174 = vsub.f32 %v1046, %v1110
    %v1175 = vsub.f32 %v1047, %v1111
    %v1176 = vsub.f32 %v1048, %v1112
    %v1177 = vsub.f32 %v1049, %v1113
    %v1178 = vsub.f32 %v1050, %v1114
    %v1179 = vsub.f32 %v1051, %v1115
    %v1180 = vsub.f32 %v1052, %v1116
    %v1181 = vsub.f32 %v1053, %v1117
    %v1182 = vsub.f32 %v1054, %v1118
    %v1183 = vsub.f32 %v1055, %v1119
    %v1184 = vsub.f32 %v1056, %v1120
    %v1185 = vsub.f32 %v1057, %v1121
    %v1186 = vsub.f32 %v1058, %v1122
    %v1187 = vsub.f32 %v1059, %v1123
    %v1188 = vmul.f32 %v868, %v790
    %v1189 = vmul.f32 %v869, %v790
    %v1190 = vmul.f32 %v870, %v790
    %v1191 = vmul.f32 %v871, %v790
    %v1192 = vmul.f32 %v872, %v795
    %v1193 = vmul.f32 %v873, %v795
    %v1194 = vmul.f32 %v874, %v795
    %v1195 = vmul.f32 %v875, %v795
    %v1196 = vmul.f32 %v876, %v800
    %v1197 = vmul.f32 %v877, %v800
    %v1198 = vmul.f32 %v878, %v800
    %v1199 = vmul.f32 %v879, %v800
    %v1200 = vmul.f32 %v880, %v805
    %v1201 = vmul.f32 %v881, %v805
    %v1202 = vmul.f32 %v882, %v805
    %v1203 = vmul.f32 %v883, %v805
    %v1204 = vmul.f32 %v884, %v810
    %v1205 = vmul.f32 %v885, %v810
    %v1206 = vmul.f32 %v886, %v810
    %v1207 = vmul.f32 %v887, %v810
    %v1208 = vmul.f32 %v888, %v815
    %v1209 = vmul.f32 %v889, %v815
    %v1210 = vmul.f32 %v890, %v815
    %v1211 = vmul.f32 %v891, %v815
    %v1212 = vmul.f32 %v892, %v820
    %v1213 = vmul.f32 %v893, %v820
    %v1214 = vmul.f32 %v894, %v820
    %v1215 = vmul.f32 %v895, %v820
    %v1216 = vmul.f32 %v896, %v825
    %v1217 = vmul.f32 %v897, %v825
    %v1218 = vmul.f32 %v898, %v825
    %v1219 = vmul.f32 %v899, %v825
    %v1220 = vmul.f32 %v900, %v830
    %v1221 = vmul.f32 %v901, %v830
    %v1222 = vmul.f32 %v902, %v830
    %v1223 = vmul.f32 %v903, %v830
    %v1224 = vmul.f32 %v904, %v835
    %v1225 = vmul.f32 %v905, %v835
    %v1226 = vmul.f32 %v906, %v835
    %v1227 = vmul.f32 %v907, %v835
    %v1228 = vmul.f32 %v908, %v840
    %v1229 = vmul.f32 %v909, %v840
    %v1230 = vmul.f32 %v910, %v840
    %v1231 = vmul.f32 %v911, %v840
    %v1232 = vmul.f32 %v912, %v845
    %v1233 = vmul.f32 %v913, %v845
    %v1234 = vmul.f32 %v914, %v845
    %v1235 = vmul.f32 %v915, %v845
    %v1236 = vmul.f32 %v916, %v850
    %v1237 = vmul.f32 %v917, %v850
    %v1238 = vmul.f32 %v918, %v850
    %v1239 = vmul.f32 %v919, %v850
    %v1240 = vmul.f32 %v920, %v855
    %v1241 = vmul.f32 %v921, %v855
    %v1242 = vmul.f32 %v922, %v855
    %v1243 = vmul.f32 %v923, %v855
    %v1244 = vmul.f32 %v924, %v860
    %v1245 = vmul.f32 %v925, %v860
    %v1246 = vmul.f32 %v926, %v860
    %v1247 = vmul.f32 %v927, %v860
    %v1248 = vmul.f32 %v928, %v865
    %v1249 = vmul.f32 %v929, %v865
    %v1250 = vmul.f32 %v930, %v865
    %v1251 = vmul.f32 %v931, %v865
    %v1252 = vmul.f32 %v932, %v484
    %v1253 = vmul.f32 %v933, %v484
    %v1254 = vmul.f32 %v934, %v484
    %v1255 = vmul.f32 %v935, %v484
    %v1256 = vmul.f32 %v936, %v489
    %v1257 = vmul.f32 %v937, %v489
    %v1258 = vmul.f32 %v938, %v489
    %v1259 = vmul.f32 %v939, %v489
    %v1260 = vmul.f32 %v940, %v494
    %v1261 = vmul.f32 %v941, %v494
    %v1262 = vmul.f32 %v942, %v494
    %v1263 = vmul.f32 %v943, %v494
    %v1264 = vmul.f32 %v944, %v499
    %v1265 = vmul.f32 %v945, %v499
    %v1266 = vmul.f32 %v946, %v499
    %v1267 = vmul.f32 %v947, %v499
    %v1268 = vmul.f32 %v948, %v504
    %v1269 = vmul.f32 %v949, %v504
    %v1270 = vmul.f32 %v950, %v504
    %v1271 = vmul.f32 %v951, %v504
    %v1272 = vmul.f32 %v952, %v509
    %v1273 = vmul.f32 %v953, %v509
    %v1274 = vmul.f32 %v954, %v509
    %v1275 = vmul.f32 %v955, %v509
    %v1276 = vmul.f32 %v956, %v514
    %v1277 = vmul.f32 %v957, %v514
    %v1278 = vmul.f32 %v958, %v514
    %v1279 = vmul.f32 %v959, %v514
    %v1280 = vmul.f32 %v960, %v519
    %v1281 = vmul.f32 %v961, %v519
    %v1282 = vmul.f32 %v962, %v519
    %v1283 = vmul.f32 %v963, %v519
    %v1284 = vmul.f32 %v964, %v524
    %v1285 = vmul.f32 %v965, %v524
    %v1286 = vmul.f32 %v966, %v524
    %v1287 = vmul.f32 %v967, %v524
    %v1288 = vmul.f32 %v968, %v529
    %v1289 = vmul.f32 %v969, %v529
    %v1290 = vmul.f32 %v970, %v529
    %v1291 = vmul.f32 %v971, %v529
    %v1292 = vmul.f32 %v972, %v534
    %v1293 = vmul.f32 %v973, %v534
    %v1294 = vmul.f32 %v974, %v534
    %v1295 = vmul.f32 %v975, %v534
    %v1296 = vmul.f32 %v976, %v539
    %v1297 = vmul.f32 %v977, %v539
    %v1298 = vmul.f32 %v978, %v539
    %v1299 = vmul.f32 %v979, %v539
    %v1300 = vmul.f32 %v980, %v544
    %v1301 = vmul.f32 %v981, %v544
    %v1302 = vmul.f32 %v982, %v544
    %v1303 = vmul.f32 %v983, %v544
    %v1304 = vmul.f32 %v984, %v549
    %v1305 = vmul.f32 %v985, %v549
    %v1306 = vmul.f32 %v986, %v549
    %v1307 = vmul.f32 %v987, %v549
    %v1308 = vmul.f32 %v988, %v554
    %v1309 = vmul.f32 %v989, %v554
    %v1310 = vmul.f32 %v990, %v554
    %v1311 = vmul.f32 %v991, %v554
    %v1312 = vmul.f32 %v992, %v559
    %v1313 = vmul.f32 %v993, %v559
    %v1314 = vmul.f32 %v994, %v559
    %v1315 = vmul.f32 %v995, %v559
    %v1316 = vadd.f32 %v1188, %v1252
    %v1317 = vadd.f32 %v1189, %v1253
    %v1318 = vadd.f32 %v1190, %v1254
    %v1319 = vadd.f32 %v1191, %v1255
    %v1320 = vadd.f32 %v1192, %v1256
    %v1321 = vadd.f32 %v1193, %v1257
    %v1322 = vadd.f32 %v1194, %v1258
    %v1323 = vadd.f32 %v1195, %v1259
    %v1324 = vadd.f32 %v1196, %v1260
    %v1325 = vadd.f32 %v1197, %v1261
    %v1326 = vadd.f32 %v1198, %v1262
    %v1327 = vadd.f32 %v1199, %v1263
    %v1328 = vadd.f32 %v1200, %v1264
    %v1329 = vadd.f32 %v1201, %v1265
    %v1330 = vadd.f32 %v1202, %v1266
    %v1331 = vadd.f32 %v1203, %v1267
    %v1332 = vadd.f32 %v1204, %v1268
    %v1333 = vadd.f32 %v1205, %v1269
    %v1334 = vadd.f32 %v1206, %v1270
    %v1335 = vadd.f32 %v1207, %v1271
    %v1336 = vadd.f32 %v1208, %v1272
    %v1337 = vadd.f32 %v1209, %v1273
    %v1338 = vadd.f32 %v1210, %v1274
    %v1339 = vadd.f32 %v1211, %v1275
    %v1340 = vadd.f32 %v1212, %v1276
    %v1341 = vadd.f32 %v1213, %v1277
    %v1342 = vadd.f32 %v1214, %v1278
    %v1343 = vadd.f32 %v1215, %v1279
    %v1344 = vadd.f32 %v1216, %v1280
    %v1345 = vadd.f32 %v1217, %v1281
    %v1346 = vadd.f32 %v1218, %v1282
    %v1347 = vadd.f32 %v1219, %v1283
    %v1348 = vadd.f32 %v1220, %v1284
    %v1349 = vadd.f32 %v1221, %v1285
    %v1350 = vadd.f32 %v1222, %v1286
    %v1351 = vadd.f32 %v1223, %v1287
    %v1352 = vadd.f32 %v1224, %v1288
    %v1353 = vadd.f32 %v1225, %v1289
    %v1354 = vadd.f32 %v1226, %v1290
    %v1355 = vadd.f32 %v1227, %v1291
    %v1356 = vadd.f32 %v1228, %v1292
    %v1357 = vadd.f32 %v1229, %v1293
    %v1358 = vadd.f32 %v1230, %v1294
    %v1359 = vadd.f32 %v1231, %v1295
    %v1360 = vadd.f32 %v1232, %v1296
    %v1361 = vadd.f32 %v1233, %v1297
    %v1362 = vadd.f32 %v1234, %v1298
    %v1363 = vadd.f32 %v1235, %v1299
    %v1364 = vadd.f32 %v1236, %v1300
    %v1365 = vadd.f32 %v1237, %v1301
    %v1366 = vadd.f32 %v1238, %v1302
    %v1367 = vadd.f32 %v1239, %v1303
    %v1368 = vadd.f32 %v1240, %v1304
    %v1369 = vadd.f32 %v1241, %v1305
    %v1370 = vadd.f32 %v1242, %v1306
    %v1371 = vadd.f32 %v1243, %v1307
    %v1372 = vadd.f32 %v1244, %v1308
    %v1373 = vadd.f32 %v1245, %v1309
    %v1374 = vadd.f32 %v1246, %v1310
    %v1375 = vadd.f32 %v1247, %v1311
    %v1376 = vadd.f32 %v1248, %v1312
    %v1377 = vadd.f32 %v1249, %v1313
    %v1378 = vadd.f32 %v1250, %v1314
    %v1379 = vadd.f32 %v1251, %v1315
    %v1380 = vld [vmem:[#allocation10] sm:$0xff]
    %v1381 = vld [vmem:[#allocation10 + $0x8] sm:$0xff]
    %v1382 = vld [vmem:[#allocation10 + $0x10] sm:$0xff]
    %v1383 = vld [vmem:[#allocation10 + $0x18] sm:$0xff]
    %v1384 = vld [vmem:[#allocation10 + $0x20] sm:$0xff]
    %v1385 = vld [vmem:[#allocation10 + $0x28] sm:$0xff]
    %v1386 = vld [vmem:[#allocation10 + $0x30] sm:$0xff]
    %v1387 = vld [vmem:[#allocation10 + $0x38] sm:$0xff]
    %v1388 = vld [vmem:[#allocation10 + $0x40] sm:$0xff]
    %v1389 = vld [vmem:[#allocation10 + $0x48] sm:$0xff]
    %v1390 = vld [vmem:[#allocation10 + $0x50] sm:$0xff]
    %v1391 = vld [vmem:[#allocation10 + $0x58] sm:$0xff]
    %v1392 = vld [vmem:[#allocation10 + $0x60] sm:$0xff]
    %v1393 = vld [vmem:[#allocation10 + $0x68] sm:$0xff]
    %v1394 = vld [vmem:[#allocation10 + $0x70] sm:$0xff]
    %v1395 = vld [vmem:[#allocation10 + $0x78] sm:$0xff]
    %v1396 = vld [vmem:[#allocation11] sm:$0xff]
    %v1397 = vld [vmem:[#allocation11 + $0x8] sm:$0xff]
    %v1398 = vld [vmem:[#allocation11 + $0x10] sm:$0xff]
    %v1399 = vld [vmem:[#allocation11 + $0x18] sm:$0xff]
    %v1400 = vld [vmem:[#allocation11 + $0x20] sm:$0xff]
    %v1401 = vld [vmem:[#allocation11 + $0x28] sm:$0xff]
    %v1402 = vld [vmem:[#allocation11 + $0x30] sm:$0xff]
    %v1403 = vld [vmem:[#allocation11 + $0x38] sm:$0xff]
    %v1404 = vld [vmem:[#allocation11 + $0x40] sm:$0xff]
    %v1405 = vld [vmem:[#allocation11 + $0x48] sm:$0xff]
    %v1406 = vld [vmem:[#allocation11 + $0x50] sm:$0xff]
    %v1407 = vld [vmem:[#allocation11 + $0x58] sm:$0xff]
    %v1408 = vld [vmem:[#allocation11 + $0x60] sm:$0xff]
    %v1409 = vld [vmem:[#allocation11 + $0x68] sm:$0xff]
    %v1410 = vld [vmem:[#allocation11 + $0x70] sm:$0xff]
    %v1411 = vld [vmem:[#allocation11 + $0x78] sm:$0xff]
    %v1412 = vld [vmem:[#allocation13] sm:$0xff]
    %v1413 = vld [vmem:[#allocation13 + $0x8] sm:$0xff]
    %v1414 = vld [vmem:[#allocation13 + $0x10] sm:$0xff]
    %v1415 = vld [vmem:[#allocation13 + $0x18] sm:$0xff]
    %v1416 = vld [vmem:[#allocation13 + $0x20] sm:$0xff]
    %v1417 = vld [vmem:[#allocation13 + $0x28] sm:$0xff]
    %v1418 = vld [vmem:[#allocation13 + $0x30] sm:$0xff]
    %v1419 = vld [vmem:[#allocation13 + $0x38] sm:$0xff]
    %v1420 = vld [vmem:[#allocation13 + $0x40] sm:$0xff]
    %v1421 = vld [vmem:[#allocation13 + $0x48] sm:$0xff]
    %v1422 = vld [vmem:[#allocation13 + $0x50] sm:$0xff]
    %v1423 = vld [vmem:[#allocation13 + $0x58] sm:$0xff]
    %v1424 = vld [vmem:[#allocation13 + $0x60] sm:$0xff]
    %v1425 = vld [vmem:[#allocation13 + $0x68] sm:$0xff]
    %v1426 = vld [vmem:[#allocation13 + $0x70] sm:$0xff]
    %v1427 = vld [vmem:[#allocation13 + $0x78] sm:$0xff]
    %v1428 = vld [vmem:[#allocation14] sm:$0xff]
    %v1429 = vld [vmem:[#allocation14 + $0x8] sm:$0xff]
    %v1430 = vld [vmem:[#allocation14 + $0x10] sm:$0xff]
    %v1431 = vld [vmem:[#allocation14 + $0x18] sm:$0xff]
    %v1432 = vld [vmem:[#allocation14 + $0x20] sm:$0xff]
    %v1433 = vld [vmem:[#allocation14 + $0x28] sm:$0xff]
    %v1434 = vld [vmem:[#allocation14 + $0x30] sm:$0xff]
    %v1435 = vld [vmem:[#allocation14 + $0x38] sm:$0xff]
    %v1436 = vld [vmem:[#allocation14 + $0x40] sm:$0xff]
    %v1437 = vld [vmem:[#allocation14 + $0x48] sm:$0xff]
    %v1438 = vld [vmem:[#allocation14 + $0x50] sm:$0xff]
    %v1439 = vld [vmem:[#allocation14 + $0x58] sm:$0xff]
    %v1440 = vld [vmem:[#allocation14 + $0x60] sm:$0xff]
    %v1441 = vld [vmem:[#allocation14 + $0x68] sm:$0xff]
    %v1442 = vld [vmem:[#allocation14 + $0x70] sm:$0xff]
    %v1443 = vld [vmem:[#allocation14 + $0x78] sm:$0xff]
    %1444 = vmatprep.subr.mxu0 %v1125
    %1445 = vmatpush1.msra.mxu0 %v1124
    %1446 = vmatprep.subr.mxu0 %v1129
    %1447 = vmatpush1.msra.mxu0 %v1128
    %1448 = vmatprep.subr.mxu0 %v1133
    %1449 = vmatpush1.msra.mxu0 %v1132
    %1450 = vmatprep.subr.mxu0 %v1137
    %1451 = vmatpush1.msra.mxu0 %v1136
    %1452 = vmatprep.subr.mxu0 %v1141
    %1453 = vmatpush1.msra.mxu0 %v1140
    %1454 = vmatprep.subr.mxu0 %v1145
    %1455 = vmatpush1.msra.mxu0 %v1144
    %1456 = vmatprep.subr.mxu0 %v1149
    %1457 = vmatpush1.msra.mxu0 %v1148
    %1458 = vmatprep.subr.mxu0 %v1153
    %1459 = vmatpush1.msra.mxu0 %v1152
    %1460 = vmatprep.subr.mxu0 %v1157
    %1461 = vmatpush1.msra.mxu0 %v1156
    %1462 = vmatprep.subr.mxu0 %v1161
    %1463 = vmatpush1.msra.mxu0 %v1160
    %1464 = vmatprep.subr.mxu0 %v1165
    %1465 = vmatpush1.msra.mxu0 %v1164
    %1466 = vmatprep.subr.mxu0 %v1169
    %1467 = vmatpush1.msra.mxu0 %v1168
    %1468 = vmatprep.subr.mxu0 %v1173
    %1469 = vmatpush1.msra.mxu0 %v1172
    %1470 = vmatprep.subr.mxu0 %v1177
    %1471 = vmatpush1.msra.mxu0 %v1176
    %1472 = vmatprep.subr.mxu0 %v1181
    %1473 = vmatpush1.msra.mxu0 %v1180
    %1474 = vmatprep.subr.mxu0 %v1185
    %1475 = vmatpush1.msra.mxu0 %v1184
    %1476 = vmatprep.subr.mxu0 0.0
    %1477 = vmatpush1.msra.mxu0 0.0
    %1478 = vmatprep.subr.mxu0 0.0
    %1479 = vmatpush1.msra.mxu0 0.0
    %1480 = vmatprep.subr.mxu0 0.0
    %1481 = vmatpush1.msra.mxu0 0.0
    %1482 = vmatprep.subr.mxu0 0.0
    %1483 = vmatpush1.msra.mxu0 0.0
    %1484 = vmatprep.subr.mxu0 0.0
    %1485 = vmatpush1.msra.mxu0 0.0
    %1486 = vmatprep.subr.mxu0 0.0
    %1487 = vmatpush1.msra.mxu0 0.0
    %1488 = vmatprep.subr.mxu0 0.0
    %1489 = vmatpush1.msra.mxu0 0.0
    %1490 = vmatprep.subr.mxu0 0.0
    %1491 = vmatpush1.msra.mxu0 0.0
    %1492 = vmatprep.subr.mxu0 0.0
    %1493 = vmatpush1.msra.mxu0 0.0
    %1494 = vmatprep.subr.mxu0 0.0
    %1495 = vmatpush1.msra.mxu0 0.0
    %1496 = vmatprep.subr.mxu0 0.0
    %1497 = vmatpush1.msra.mxu0 0.0
    %1498 = vmatprep.subr.mxu0 0.0
    %1499 = vmatpush1.msra.mxu0 0.0
    %1500 = vmatprep.subr.mxu0 0.0
    %1501 = vmatpush1.msra.mxu0 0.0
    %1502 = vmatprep.subr.mxu0 0.0
    %1503 = vmatpush1.msra.mxu0 0.0
    %1504 = vmatprep.subr.mxu0 0.0
    %1505 = vmatpush1.msra.mxu0 0.0
    %1506 = vmatprep.subr.mxu0 0.0
    %1507 = vmatpush1.msra.mxu0 0.0
    %1508 = vmatprep.mubr.f32.mxu0 0.0
    %1509 = vmatmul.mubr.f32.gmra.mrb[0].mxu0 %v1380
    %v1510 = vpop.f32.mrb[0].mxu0
    %v1511 = vadd.f32 0.0, %v1510
    %v1512 = vpop.f32.mrb[0].mxu0
    %v1513 = vadd.f32 0.0, %v1512
    %1514 = vmatprep.mubr.f32.mxu0 0.0
    %1515 = vmatmul.mubr.f32.gmra.mrb[0].mxu0 %v1381
    %v1516 = vpop.f32.mrb[0].mxu0
    %v1517 = vadd.f32 0.0, %v1516
    %v1518 = vpop.f32.mrb[0].mxu0
    %v1519 = vadd.f32 0.0, %v1518
    %1520 = vmatprep.mubr.f32.mxu0 0.0
    %1521 = vmatmul.mubr.f32.gmra.mrb[0].mxu0 %v1382
    %v1522 = vpop.f32.mrb[0].mxu0
    %v1523 = vadd.f32 0.0, %v1522
    %v1524 = vpop.f32.mrb[0].mxu0
    %v1525 = vadd.f32 0.0, %v1524
    %1526 = vmatprep.mubr.f32.mxu0 0.0
    %1527 = vmatmul.mubr.f32.gmra.mrb[0].mxu0 %v1383
    %v1528 = vpop.f32.mrb[0].mxu0
    %v1529 = vadd.f32 0.0, %v1528
    %v1530 = vpop.f32.mrb[0].mxu0
    %v1531 = vadd.f32 0.0, %v1530
    %1532 = vmatprep.mubr.f32.mxu0 0.0
    %1533 = vmatmul.mubr.f32.gmra.mrb[0].mxu0 %v1384
    %v1534 = vpop.f32.mrb[0].mxu0
    %v1535 = vadd.f32 0.0, %v1534
    %v1536 = vpop.f32.mrb[0].mxu0
    %v1537 = vadd.f32 0.0, %v1536
    %1538 = vmatprep.mubr.f32.mxu0 0.0
    %1539 = vmatmul.mubr.f32.gmra.mrb[0].mxu0 %v1385
    %v1540 = vpop.f32.mrb[0].mxu0
    %v1541 = vadd.f32 0.0, %v1540
    %v1542 = vpop.f32.mrb[0].mxu0
    %v1543 = vadd.f32 0.0, %v1542
    %1544 = vmatprep.mubr.f32.mxu0 0.0
    %1545 = vmatmul.mubr.f32.gmra.mrb[0].mxu0 %v1386
    %v1546 = vpop.f32.mrb[0].mxu0
    %v1547 = vadd.f32 0.0, %v1546
    %v1548 = vpop.f32.mrb[0].mxu0
    %v1549 = vadd.f32 0.0, %v1548
    %1550 = vmatprep.mubr.f32.mxu0 0.0
    %1551 = vmatmul.mubr.f32.gmra.mrb[0].mxu0 %v1387
    %v1552 = vpop.f32.mrb[0].mxu0
    %v1553 = vadd.f32 0.0, %v1552
    %v1554 = vpop.f32.mrb[0].mxu0
    %v1555 = vadd.f32 0.0, %v1554
    %1556 = vmatprep.mubr.f32.mxu0 0.0
    %1557 = vmatmul.mubr.f32.gmra.mrb[0].mxu0 %v1388
    %v1558 = vpop.f32.mrb[0].mxu0
    %v1559 = vadd.f32 0.0, %v1558
    %v1560 = vpop.f32.mrb[0].mxu0
    %v1561 = vadd.f32 0.0, %v1560
    %1562 = vmatprep.mubr.f32.mxu0 0.0
    %1563 = vmatmul.mubr.f32.gmra.mrb[0].mxu0 %v1389
    %v1564 = vpop.f32.mrb[0].mxu0
    %v1565 = vadd.f32 0.0, %v1564
    %v1566 = vpop.f32.mrb[0].mxu0
    %v1567 = vadd.f32 0.0, %v1566
    %1568 = vmatprep.mubr.f32.mxu0 0.0
    %1569 = vmatmul.mubr.f32.gmra.mrb[0].mxu0 %v1390
    %v1570 = vpop.f32.mrb[0].mxu0
    %v1571 = vadd.f32 0.0, %v1570
    %v1572 = vpop.f32.mrb[0].mxu0
    %v1573 = vadd.f32 0.0, %v1572
    %1574 = vmatprep.mubr.f32.mxu0 0.0
    %1575 = vmatmul.mubr.f32.gmra.mrb[0].mxu0 %v1391
    %v1576 = vpop.f32.mrb[0].mxu0
    %v1577 = vadd.f32 0.0, %v1576
    %v1578 = vpop.f32.mrb[0].mxu0
    %v1579 = vadd.f32 0.0, %v1578
    %1580 = vmatprep.mubr.f32.mxu0 0.0
    %1581 = vmatmul.mubr.f32.gmra.mrb[0].mxu0 %v1392
    %v1582 = vpop.f32.mrb[0].mxu0
    %v1583 = vadd.f32 0.0, %v1582
    %v1584 = vpop.f32.mrb[0].mxu0
    %v1585 = vadd.f32 0.0, %v1584
    %1586 = vmatprep.mubr.f32.mxu0 0.0
    %1587 = vmatmul.mubr.f32.gmra.mrb[0].mxu0 %v1393
    %v1588 = vpop.f32.mrb[0].mxu0
    %v1589 = vadd.f32 0.0, %v1588
    %v1590 = vpop.f32.mrb[0].mxu0
    %v1591 = vadd.f32 0.0, %v1590
    %1592 = vmatprep.mubr.f32.mxu0 0.0
    %1593 = vmatmul.mubr.f32.gmra.mrb[0].mxu0 %v1394
    %v1594 = vpop.f32.mrb[0].mxu0
    %v1595 = vadd.f32 0.0, %v1594
    %v1596 = vpop.f32.mrb[0].mxu0
    %v1597 = vadd.f32 0.0, %v1596
    %1598 = vmatprep.mubr.f32.mxu0 0.0
    %1599 = vmatmul.mubr.f32.gmra.mrb[0].mxu0 %v1395
    %v1600 = vpop.f32.mrb[0].mxu0
    %v1601 = vadd.f32 0.0, %v1600
    %v1602 = vpop.f32.mrb[0].mxu0
    %v1603 = vadd.f32 0.0, %v1602
    %1604 = vdwg.mxu0
    %1605 = vmatprep.subr.mxu0 %v1127
    %1606 = vmatpush1.msra.mxu0 %v1126
    %1607 = vmatprep.subr.mxu0 %v1131
    %1608 = vmatpush1.msra.mxu0 %v1130
    %1609 = vmatprep.subr.mxu0 %v1135
    %1610 = vmatpush1.msra.mxu0 %v1134
    %1611 = vmatprep.subr.mxu0 %v1139
    %1612 = vmatpush1.msra.mxu0 %v1138
    %1613 = vmatprep.subr.mxu0 %v1143
    %1614 = vmatpush1.msra.mxu0 %v1142
    %1615 = vmatprep.subr.mxu0 %v1147
    %1616 = vmatpush1.msra.mxu0 %v1146
    %1617 = vmatprep.subr.mxu0 %v1151
    %1618 = vmatpush1.msra.mxu0 %v1150
    %1619 = vmatprep.subr.mxu0 %v1155
    %1620 = vmatpush1.msra.mxu0 %v1154
    %1621 = vmatprep.subr.mxu0 %v1159
    %1622 = vmatpush1.msra.mxu0 %v1158
    %1623 = vmatprep.subr.mxu0 %v1163
    %1624 = vmatpush1.msra.mxu0 %v1162
    %1625 = vmatprep.subr.mxu0 %v1167
    %1626 = vmatpush1.msra.mxu0 %v1166
    %1627 = vmatprep.subr.mxu0 %v1171
    %1628 = vmatpush1.msra.mxu0 %v1170
    %1629 = vmatprep.subr.mxu0 %v1175
    %1630 = vmatpush1.msra.mxu0 %v1174
    %1631 = vmatprep.subr.mxu0 %v1179
    %1632 = vmatpush1.msra.mxu0 %v1178
    %1633 = vmatprep.subr.mxu0 %v1183
    %1634 = vmatpush1.msra.mxu0 %v1182
    %1635 = vmatprep.subr.mxu0 %v1187
    %1636 = vmatpush1.msra.mxu0 %v1186
    %1637 = vmatprep.subr.mxu0 0.0
    %1638 = vmatpush1.msra.mxu0 0.0
    %1639 = vmatprep.subr.mxu0 0.0
    %1640 = vmatpush1.msra.mxu0 0.0
    %1641 = vmatprep.subr.mxu0 0.0
    %1642 = vmatpush1.msra.mxu0 0.0
    %1643 = vmatprep.subr.mxu0 0.0
    %1644 = vmatpush1.msra.mxu0 0.0
    %1645 = vmatprep.subr.mxu0 0.0
    %1646 = vmatpush1.msra.mxu0 0.0
    %1647 = vmatprep.subr.mxu0 0.0
    %1648 = vmatpush1.msra.mxu0 0.0
    %1649 = vmatprep.subr.mxu0 0.0
    %1650 = vmatpush1.msra.mxu0 0.0
    %1651 = vmatprep.subr.mxu0 0.0
    %1652 = vmatpush1.msra.mxu0 0.0
    %1653 = vmatprep.subr.mxu0 0.0
    %1654 = vmatpush1.msra.mxu0 0.0
    %1655 = vmatprep.subr.mxu0 0.0
    %1656 = vmatpush1.msra.mxu0 0.0
    %1657 = vmatprep.subr.mxu0 0.0
    %1658 = vmatpush1.msra.mxu0 0.0
    %1659 = vmatprep.subr.mxu0 0.0
    %1660 = vmatpush1.msra.mxu0 0.0
    %1661 = vmatprep.subr.mxu0 0.0
    %1662 = vmatpush1.msra.mxu0 0.0
    %1663 = vmatprep.subr.mxu0 0.0
    %1664 = vmatpush1.msra.mxu0 0.0
    %1665 = vmatprep.subr.mxu0 0.0
    %1666 = vmatpush1.msra.mxu0 0.0
    %1667 = vmatprep.subr.mxu0 0.0
    %1668 = vmatpush1.msra.mxu0 0.0
    %1669 = vmatprep.mubr.f32.mxu0 0.0
    %1670 = vmatmul.mubr.f32.gmra.mrb[0].mxu0 %v1380
    %v1671 = vpop.f32.mrb[0].mxu0
    %v1672 = vadd.f32 0.0, %v1671
    %v1673 = vpop.f32.mrb[0].mxu0
    %v1674 = vadd.f32 0.0, %v1673
    %1675 = vmatprep.mubr.f32.mxu0 0.0
    %1676 = vmatmul.mubr.f32.gmra.mrb[0].mxu0 %v1381
    %v1677 = vpop.f32.mrb[0].mxu0
    %v1678 = vadd.f32 0.0, %v1677
    %v1679 = vpop.f32.mrb[0].mxu0
    %v1680 = vadd.f32 0.0, %v1679
    %1681 = vmatprep.mubr.f32.mxu0 0.0
    %1682 = vmatmul.mubr.f32.gmra.mrb[0].mxu0 %v1382
    %v1683 = vpop.f32.mrb[0].mxu0
    %v1684 = vadd.f32 0.0, %v1683
    %v1685 = vpop.f32.mrb[0].mxu0
    %v1686 = vadd.f32 0.0, %v1685
    %1687 = vmatprep.mubr.f32.mxu0 0.0
    %1688 = vmatmul.mubr.f32.gmra.mrb[0].mxu0 %v1383
    %v1689 = vpop.f32.mrb[0].mxu0
    %v1690 = vadd.f32 0.0, %v1689
    %v1691 = vpop.f32.mrb[0].mxu0
    %v1692 = vadd.f32 0.0, %v1691
    %1693 = vmatprep.mubr.f32.mxu0 0.0
    %1694 = vmatmul.mubr.f32.gmra.mrb[0].mxu0 %v1384
    %v1695 = vpop.f32.mrb[0].mxu0
    %v1696 = vadd.f32 0.0, %v1695
    %v1697 = vpop.f32.mrb[0].mxu0
    %v1698 = vadd.f32 0.0, %v1697
    %1699 = vmatprep.mubr.f32.mxu0 0.0
    %1700 = vmatmul.mubr.f32.gmra.mrb[0].mxu0 %v1385
    %v1701 = vpop.f32.mrb[0].mxu0
    %v1702 = vadd.f32 0.0, %v1701
    %v1703 = vpop.f32.mrb[0].mxu0
    %v1704 = vadd.f32 0.0, %v1703
    %1705 = vmatprep.mubr.f32.mxu0 0.0
    %1706 = vmatmul.mubr.f32.gmra.mrb[0].mxu0 %v1386
    %v1707 = vpop.f32.mrb[0].mxu0
    %v1708 = vadd.f32 0.0, %v1707
    %v1709 = vpop.f32.mrb[0].mxu0
    %v1710 = vadd.f32 0.0, %v1709
    %1711 = vmatprep.mubr.f32.mxu0 0.0
    %1712 = vmatmul.mubr.f32.gmra.mrb[0].mxu0 %v1387
    %v1713 = vpop.f32.mrb[0].mxu0
    %v1714 = vadd.f32 0.0, %v1713
    %v1715 = vpop.f32.mrb[0].mxu0
    %v1716 = vadd.f32 0.0, %v1715
    %1717 = vmatprep.mubr.f32.mxu0 0.0
    %1718 = vmatmul.mubr.f32.gmra.mrb[0].mxu0 %v1388
    %v1719 = vpop.f32.mrb[0].mxu0
    %v1720 = vadd.f32 0.0, %v1719
    %v1721 = vpop.f32.mrb[0].mxu0
    %v1722 = vadd.f32 0.0, %v1721
    %1723 = vmatprep.mubr.f32.mxu0 0.0
    %1724 = vmatmul.mubr.f32.gmra.mrb[0].mxu0 %v1389
    %v1725 = vpop.f32.mrb[0].mxu0
    %v1726 = vadd.f32 0.0, %v1725
    %v1727 = vpop.f32.mrb[0].mxu0
    %v1728 = vadd.f32 0.0, %v1727
    %1729 = vmatprep.mubr.f32.mxu0 0.0
    %1730 = vmatmul.mubr.f32.gmra.mrb[0].mxu0 %v1390
    %v1731 = vpop.f32.mrb[0].mxu0
    %v1732 = vadd.f32 0.0, %v1731
    %v1733 = vpop.f32.mrb[0].mxu0
    %v1734 = vadd.f32 0.0, %v1733
    %1735 = vmatprep.mubr.f32.mxu0 0.0
    %1736 = vmatmul.mubr.f32.gmra.mrb[0].mxu0 %v1391
    %v1737 = vpop.f32.mrb[0].mxu0
    %v1738 = vadd.f32 0.0, %v1737
    %v1739 = vpop.f32.mrb[0].mxu0
    %v1740 = vadd.f32 0.0, %v1739
    %1741 = vmatprep.mubr.f32.mxu0 0.0
    %1742 = vmatmul.mubr.f32.gmra.mrb[0].mxu0 %v1392
    %v1743 = vpop.f32.mrb[0].mxu0
    %v1744 = vadd.f32 0.0, %v1743
    %v1745 = vpop.f32.mrb[0].mxu0
    %v1746 = vadd.f32 0.0, %v1745
    %1747 = vmatprep.mubr.f32.mxu0 0.0
    %1748 = vmatmul.mubr.f32.gmra.mrb[0].mxu0 %v1393
    %v1749 = vpop.f32.mrb[0].mxu0
    %v1750 = vadd.f32 0.0, %v1749
    %v1751 = vpop.f32.mrb[0].mxu0
    %v1752 = vadd.f32 0.0, %v1751
    %1753 = vmatprep.mubr.f32.mxu0 0.0
    %1754 = vmatmul.mubr.f32.gmra.mrb[0].mxu0 %v1394
    %v1755 = vpop.f32.mrb[0].mxu0
    %v1756 = vadd.f32 0.0, %v1755
    %v1757 = vpop.f32.mrb[0].mxu0
    %v1758 = vadd.f32 0.0, %v1757
    %1759 = vmatprep.mubr.f32.mxu0 0.0
    %1760 = vmatmul.mubr.f32.gmra.mrb[0].mxu0 %v1395
    %v1761 = vpop.f32.mrb[0].mxu0
    %v1762 = vadd.f32 0.0, %v1761
    %v1763 = vpop.f32.mrb[0].mxu0
    %v1764 = vadd.f32 0.0, %v1763
    %1765 = vdwg.mxu0
    %1766 = vmatprep.subr.mxu0 %v1317
    %1767 = vmatpush1.msra.mxu0 %v1316
    %1768 = vmatprep.subr.mxu0 %v1321
    %1769 = vmatpush1.msra.mxu0 %v1320
    %1770 = vmatprep.subr.mxu0 %v1325
    %1771 = vmatpush1.msra.mxu0 %v1324
    %1772 = vmatprep.subr.mxu0 %v1329
    %1773 = vmatpush1.msra.mxu0 %v1328
    %1774 = vmatprep.subr.mxu0 %v1333
    %1775 = vmatpush1.msra.mxu0 %v1332
    %1776 = vmatprep.subr.mxu0 %v1337
    %1777 = vmatpush1.msra.mxu0 %v1336
    %1778 = vmatprep.subr.mxu0 %v1341
    %1779 = vmatpush1.msra.mxu0 %v1340
    %1780 = vmatprep.subr.mxu0 %v1345
    %1781 = vmatpush1.msra.mxu0 %v1344
    %1782 = vmatprep.subr.mxu0 %v1349
    %1783 = vmatpush1.msra.mxu0 %v1348
    %1784 = vmatprep.subr.mxu0 %v1353
    %1785 = vmatpush1.msra.mxu0 %v1352
    %1786 = vmatprep.subr.mxu0 %v1357
    %1787 = vmatpush1.msra.mxu0 %v1356
    %1788 = vmatprep.subr.mxu0 %v1361
    %1789 = vmatpush1.msra.mxu0 %v1360
    %1790 = vmatprep.subr.mxu0 %v1365
    %1791 = vmatpush1.msra.mxu0 %v1364
    %1792 = vmatprep.subr.mxu0 %v1369
    %1793 = vmatpush1.msra.mxu0 %v1368
    %1794 = vmatprep.subr.mxu0 %v1373
    %1795 = vmatpush1.msra.mxu0 %v1372
    %1796 = vmatprep.subr.mxu0 %v1377
    %1797 = vmatpush1.msra.mxu0 %v1376
    %1798 = vmatprep.subr.mxu0 0.0
    %1799 = vmatpush1.msra.mxu0 0.0
    %1800 = vmatprep.subr.mxu0 0.0
    %1801 = vmatpush1.msra.mxu0 0.0
    %1802 = vmatprep.subr.mxu0 0.0
    %1803 = vmatpush1.msra.mxu0 0.0
    %1804 = vmatprep.subr.mxu0 0.0
    %1805 = vmatpush1.msra.mxu0 0.0
    %1806 = vmatprep.subr.mxu0 0.0
    %1807 = vmatpush1.msra.mxu0 0.0
    %1808 = vmatprep.subr.mxu0 0.0
    %1809 = vmatpush1.msra.mxu0 0.0
    %1810 = vmatprep.subr.mxu0 0.0
    %1811 = vmatpush1.msra.mxu0 0.0
    %1812 = vmatprep.subr.mxu0 0.0
    %1813 = vmatpush1.msra.mxu0 0.0
    %1814 = vmatprep.subr.mxu0 0.0
    %1815 = vmatpush1.msra.mxu0 0.0
    %1816 = vmatprep.subr.mxu0 0.0
    %1817 = vmatpush1.msra.mxu0 0.0
    %1818 = vmatprep.subr.mxu0 0.0
    %1819 = vmatpush1.msra.mxu0 0.0
    %1820 = vmatprep.subr.mxu0 0.0
    %1821 = vmatpush1.msra.mxu0 0.0
    %1822 = vmatprep.subr.mxu0 0.0
    %1823 = vmatpush1.msra.mxu0 0.0
    %1824 = vmatprep.subr.mxu0 0.0
    %1825 = vmatpush1.msra.mxu0 0.0
    %1826 = vmatprep.subr.mxu0 0.0
    %1827 = vmatpush1.msra.mxu0 0.0
    %1828 = vmatprep.subr.mxu0 0.0
    %1829 = vmatpush1.msra.mxu0 0.0
    %1830 = vmatprep.mubr.f32.mxu0 0.0
    %1831 = vmatmul.mubr.f32.gmra.mrb[0].mxu0 %v1396
    %v1832 = vpop.f32.mrb[0].mxu0
    %v1833 = vadd.f32 0.0, %v1832
    %v1834 = vpop.f32.mrb[0].mxu0
    %v1835 = vadd.f32 0.0, %v1834
    %1836 = vmatprep.mubr.f32.mxu0 0.0
    %1837 = vmatmul.mubr.f32.gmra.mrb[0].mxu0 %v1397
    %v1838 = vpop.f32.mrb[0].mxu0
    %v1839 = vadd.f32 0.0, %v1838
    %v1840 = vpop.f32.mrb[0].mxu0
    %v1841 = vadd.f32 0.0, %v1840
    %1842 = vmatprep.mubr.f32.mxu0 0.0
    %1843 = vmatmul.mubr.f32.gmra.mrb[0].mxu0 %v1398
    %v1844 = vpop.f32.mrb[0].mxu0
    %v1845 = vadd.f32 0.0, %v1844
    %v1846 = vpop.f32.mrb[0].mxu0
    %v1847 = vadd.f32 0.0, %v1846
    %1848 = vmatprep.mubr.f32.mxu0 0.0
    %1849 = vmatmul.mubr.f32.gmra.mrb[0].mxu0 %v1399
    %v1850 = vpop.f32.mrb[0].mxu0
    %v1851 = vadd.f32 0.0, %v1850
    %v1852 = vpop.f32.mrb[0].mxu0
    %v1853 = vadd.f32 0.0, %v1852
    %1854 = vmatprep.mubr.f32.mxu0 0.0
    %1855 = vmatmul.mubr.f32.gmra.mrb[0].mxu0 %v1400
    %v1856 = vpop.f32.mrb[0].mxu0
    %v1857 = vadd.f32 0.0, %v1856
    %v1858 = vpop.f32.mrb[0].mxu0
    %v1859 = vadd.f32 0.0, %v1858
    %1860 = vmatprep.mubr.f32.mxu0 0.0
    %1861 = vmatmul.mubr.f32.gmra.mrb[0].mxu0 %v1401
    %v1862 = vpop.f32.mrb[0].mxu0
    %v1863 = vadd.f32 0.0, %v1862
    %v1864 = vpop.f32.mrb[0].mxu0
    %v1865 = vadd.f32 0.0, %v1864
    %1866 = vmatprep.mubr.f32.mxu0 0.0
    %1867 = vmatmul.mubr.f32.gmra.mrb[0].mxu0 %v1402
    %v1868 = vpop.f32.mrb[0].mxu0
    %v1869 = vadd.f32 0.0, %v1868
    %v1870 = vpop.f32.mrb[0].mxu0
    %v1871 = vadd.f32 0.0, %v1870
    %1872 = vmatprep.mubr.f32.mxu0 0.0
    %1873 = vmatmul.mubr.f32.gmra.mrb[0].mxu0 %v1403
    %v1874 = vpop.f32.mrb[0].mxu0
    %v1875 = vadd.f32 0.0, %v1874
    %v1876 = vpop.f32.mrb[0].mxu0
    %v1877 = vadd.f32 0.0, %v1876
    %1878 = vmatprep.mubr.f32.mxu0 0.0
    %1879 = vmatmul.mubr.f32.gmra.mrb[0].mxu0 %v1404
    %v1880 = vpop.f32.mrb[0].mxu0
    %v1881 = vadd.f32 0.0, %v1880
    %v1882 = vpop.f32.mrb[0].mxu0
    %v1883 = vadd.f32 0.0, %v1882
    %1884 = vmatprep.mubr.f32.mxu0 0.0
    %1885 = vmatmul.mubr.f32.gmra.mrb[0].mxu0 %v1405
    %v1886 = vpop.f32.mrb[0].mxu0
    %v1887 = vadd.f32 0.0, %v1886
    %v1888 = vpop.f32.mrb[0].mxu0
    %v1889 = vadd.f32 0.0, %v1888
    %1890 = vmatprep.mubr.f32.mxu0 0.0
    %1891 = vmatmul.mubr.f32.gmra.mrb[0].mxu0 %v1406
    %v1892 = vpop.f32.mrb[0].mxu0
    %v1893 = vadd.f32 0.0, %v1892
    %v1894 = vpop.f32.mrb[0].mxu0
    %v1895 = vadd.f32 0.0, %v1894
    %1896 = vmatprep.mubr.f32.mxu0 0.0
    %1897 = vmatmul.mubr.f32.gmra.mrb[0].mxu0 %v1407
    %v1898 = vpop.f32.mrb[0].mxu0
    %v1899 = vadd.f32 0.0, %v1898
    %v1900 = vpop.f32.mrb[0].mxu0
    %v1901 = vadd.f32 0.0, %v1900
    %1902 = vmatprep.mubr.f32.mxu0 0.0
    %1903 = vmatmul.mubr.f32.gmra.mrb[0].mxu0 %v1408
    %v1904 = vpop.f32.mrb[0].mxu0
    %v1905 = vadd.f32 0.0, %v1904
    %v1906 = vpop.f32.mrb[0].mxu0
    %v1907 = vadd.f32 0.0, %v1906
    %1908 = vmatprep.mubr.f32.mxu0 0.0
    %1909 = vmatmul.mubr.f32.gmra.mrb[0].mxu0 %v1409
    %v1910 = vpop.f32.mrb[0].mxu0
    %v1911 = vadd.f32 0.0, %v1910
    %v1912 = vpop.f32.mrb[0].mxu0
    %v1913 = vadd.f32 0.0, %v1912
    %1914 = vmatprep.mubr.f32.mxu0 0.0
    %1915 = vmatmul.mubr.f32.gmra.mrb[0].mxu0 %v1410
    %v1916 = vpop.f32.mrb[0].mxu0
    %v1917 = vadd.f32 0.0, %v1916
    %v1918 = vpop.f32.mrb[0].mxu0
    %v1919 = vadd.f32 0.0, %v1918
    %1920 = vmatprep.mubr.f32.mxu0 0.0
    %1921 = vmatmul.mubr.f32.gmra.mrb[0].mxu0 %v1411
    %v1922 = vpop.f32.mrb[0].mxu0
    %v1923 = vadd.f32 0.0, %v1922
    %v1924 = vpop.f32.mrb[0].mxu0
    %v1925 = vadd.f32 0.0, %v1924
    %1926 = vdwg.mxu0
    %1927 = vmatprep.subr.mxu0 %v1319
    %1928 = vmatpush1.msra.mxu0 %v1318
    %1929 = vmatprep.subr.mxu0 %v1323
    %1930 = vmatpush1.msra.mxu0 %v1322
    %1931 = vmatprep.subr.mxu0 %v1327
    %1932 = vmatpush1.msra.mxu0 %v1326
    %1933 = vmatprep.subr.mxu0 %v1331
    %1934 = vmatpush1.msra.mxu0 %v1330
    %1935 = vmatprep.subr.mxu0 %v1335
    %1936 = vmatpush1.msra.mxu0 %v1334
    %1937 = vmatprep.subr.mxu0 %v1339
    %1938 = vmatpush1.msra.mxu0 %v1338
    %1939 = vmatprep.subr.mxu0 %v1343
    %1940 = vmatpush1.msra.mxu0 %v1342
    %1941 = vmatprep.subr.mxu0 %v1347
    %1942 = vmatpush1.msra.mxu0 %v1346
    %1943 = vmatprep.subr.mxu0 %v1351
    %1944 = vmatpush1.msra.mxu0 %v1350
    %1945 = vmatprep.subr.mxu0 %v1355
    %1946 = vmatpush1.msra.mxu0 %v1354
    %1947 = vmatprep.subr.mxu0 %v1359
    %1948 = vmatpush1.msra.mxu0 %v1358
    %1949 = vmatprep.subr.mxu0 %v1363
    %1950 = vmatpush1.msra.mxu0 %v1362
    %1951 = vmatprep.subr.mxu0 %v1367
    %1952 = vmatpush1.msra.mxu0 %v1366
    %1953 = vmatprep.subr.mxu0 %v1371
    %1954 = vmatpush1.msra.mxu0 %v1370
    %1955 = vmatprep.subr.mxu0 %v1375
    %1956 = vmatpush1.msra.mxu0 %v1374
    %1957 = vmatprep.subr.mxu0 %v1379
    %1958 = vmatpush1.msra.mxu0 %v1378
    %1959 = vmatprep.subr.mxu0 0.0
    %1960 = vmatpush1.msra.mxu0 0.0
    %1961 = vmatprep.subr.mxu0 0.0
    %1962 = vmatpush1.msra.mxu0 0.0
    %1963 = vmatprep.subr.mxu0 0.0
    %1964 = vmatpush1.msra.mxu0 0.0
    %1965 = vmatprep.subr.mxu0 0.0
    %1966 = vmatpush1.msra.mxu0 0.0
    %1967 = vmatprep.subr.mxu0 0.0
    %1968 = vmatpush1.msra.mxu0 0.0
    %1969 = vmatprep.subr.mxu0 0.0
    %1970 = vmatpush1.msra.mxu0 0.0
    %1971 = vmatprep.subr.mxu0 0.0
    %1972 = vmatpush1.msra.mxu0 0.0
    %1973 = vmatprep.subr.mxu0 0.0
    %1974 = vmatpush1.msra.mxu0 0.0
    %1975 = vmatprep.subr.mxu0 0.0
    %1976 = vmatpush1.msra.mxu0 0.0
    %1977 = vmatprep.subr.mxu0 0.0
    %1978 = vmatpush1.msra.mxu0 0.0
    %1979 = vmatprep.subr.mxu0 0.0
    %1980 = vmatpush1.msra.mxu0 0.0
    %1981 = vmatprep.subr.mxu0 0.0
    %1982 = vmatpush1.msra.mxu0 0.0
    %1983 = vmatprep.subr.mxu0 0.0
    %1984 = vmatpush1.msra.mxu0 0.0
    %1985 = vmatprep.subr.mxu0 0.0
    %1986 = vmatpush1.msra.mxu0 0.0
    %1987 = vmatprep.subr.mxu0 0.0
    %1988 = vmatpush1.msra.mxu0 0.0
    %1989 = vmatprep.subr.mxu0 0.0
    %1990 = vmatpush1.msra.mxu0 0.0
    %1991 = vmatprep.mubr.f32.mxu0 0.0
    %1992 = vmatmul.mubr.f32.gmra.mrb[0].mxu0 %v1396
    %v1993 = vpop.f32.mrb[0].mxu0
    %v1994 = vadd.f32 0.0, %v1993
    %v1995 = vpop.f32.mrb[0].mxu0
    %v1996 = vadd.f32 0.0, %v1995
    %1997 = vmatprep.mubr.f32.mxu0 0.0
    %1998 = vmatmul.mubr.f32.gmra.mrb[0].mxu0 %v1397
    %v1999 = vpop.f32.mrb[0].mxu0
    %v2000 = vadd.f32 0.0, %v1999
    %v2001 = vpop.f32.mrb[0].mxu0
    %v2002 = vadd.f32 0.0, %v2001
    %2003 = vmatprep.mubr.f32.mxu0 0.0
    %2004 = vmatmul.mubr.f32.gmra.mrb[0].mxu0 %v1398
    %v2005 = vpop.f32.mrb[0].mxu0
    %v2006 = vadd.f32 0.0, %v2005
    %v2007 = vpop.f32.mrb[0].mxu0
    %v2008 = vadd.f32 0.0, %v2007
    %2009 = vmatprep.mubr.f32.mxu0 0.0
    %2010 = vmatmul.mubr.f32.gmra.mrb[0].mxu0 %v1399
    %v2011 = vpop.f32.mrb[0].mxu0
    %v2012 = vadd.f32 0.0, %v2011
    %v2013 = vpop.f32.mrb[0].mxu0
    %v2014 = vadd.f32 0.0, %v2013
    %2015 = vmatprep.mubr.f32.mxu0 0.0
    %2016 = vmatmul.mubr.f32.gmra.mrb[0].mxu0 %v1400
    %v2017 = vpop.f32.mrb[0].mxu0
    %v2018 = vadd.f32 0.0, %v2017
    %v2019 = vpop.f32.mrb[0].mxu0
    %v2020 = vadd.f32 0.0, %v2019
    %2021 = vmatprep.mubr.f32.mxu0 0.0
    %2022 = vmatmul.mubr.f32.gmra.mrb[0].mxu0 %v1401
    %v2023 = vpop.f32.mrb[0].mxu0
    %v2024 = vadd.f32 0.0, %v2023
    %v2025 = vpop.f32.mrb[0].mxu0
    %v2026 = vadd.f32 0.0, %v2025
    %2027 = vmatprep.mubr.f32.mxu0 0.0
    %2028 = vmatmul.mubr.f32.gmra.mrb[0].mxu0 %v1402
    %v2029 = vpop.f32.mrb[0].mxu0
    %v2030 = vadd.f32 0.0, %v2029
    %v2031 = vpop.f32.mrb[0].mxu0
    %v2032 = vadd.f32 0.0, %v2031
    %2033 = vmatprep.mubr.f32.mxu0 0.0
    %2034 = vmatmul.mubr.f32.gmra.mrb[0].mxu0 %v1403
    %v2035 = vpop.f32.mrb[0].mxu0
    %v2036 = vadd.f32 0.0, %v2035
    %v2037 = vpop.f32.mrb[0].mxu0
    %v2038 = vadd.f32 0.0, %v2037
    %2039 = vmatprep.mubr.f32.mxu0 0.0
    %2040 = vmatmul.mubr.f32.gmra.mrb[0].mxu0 %v1404
    %v2041 = vpop.f32.mrb[0].mxu0
    %v2042 = vadd.f32 0.0, %v2041
    %v2043 = vpop.f32.mrb[0].mxu0
    %v2044 = vadd.f32 0.0, %v2043
    %2045 = vmatprep.mubr.f32.mxu0 0.0
    %2046 = vmatmul.mubr.f32.gmra.mrb[0].mxu0 %v1405
    %v2047 = vpop.f32.mrb[0].mxu0
    %v2048 = vadd.f32 0.0, %v2047
    %v2049 = vpop.f32.mrb[0].mxu0
    %v2050 = vadd.f32 0.0, %v2049
    %2051 = vmatprep.mubr.f32.mxu0 0.0
    %2052 = vmatmul.mubr.f32.gmra.mrb[0].mxu0 %v1406
    %v2053 = vpop.f32.mrb[0].mxu0
    %v2054 = vadd.f32 0.0, %v2053
    %v2055 = vpop.f32.mrb[0].mxu0
    %v2056 = vadd.f32 0.0, %v2055
    %2057 = vmatprep.mubr.f32.mxu0 0.0
    %2058 = vmatmul.mubr.f32.gmra.mrb[0].mxu0 %v1407
    %v2059 = vpop.f32.mrb[0].mxu0
    %v2060 = vadd.f32 0.0, %v2059
    %v2061 = vpop.f32.mrb[0].mxu0
    %v2062 = vadd.f32 0.0, %v2061
    %2063 = vmatprep.mubr.f32.mxu0 0.0
    %2064 = vmatmul.mubr.f32.gmra.mrb[0].mxu0 %v1408
    %v2065 = vpop.f32.mrb[0].mxu0
    %v2066 = vadd.f32 0.0, %v2065
    %v2067 = vpop.f32.mrb[0].mxu0
    %v2068 = vadd.f32 0.0, %v2067
    %2069 = vmatprep.mubr.f32.mxu0 0.0
    %2070 = vmatmul.mubr.f32.gmra.mrb[0].mxu0 %v1409
    %v2071 = vpop.f32.mrb[0].mxu0
    %v2072 = vadd.f32 0.0, %v2071
    %v2073 = vpop.f32.mrb[0].mxu0
    %v2074 = vadd.f32 0.0, %v2073
    %2075 = vmatprep.mubr.f32.mxu0 0.0
    %2076 = vmatmul.mubr.f32.gmra.mrb[0].mxu0 %v1410
    %v2077 = vpop.f32.mrb[0].mxu0
    %v2078 = vadd.f32 0.0, %v2077
    %v2079 = vpop.f32.mrb[0].mxu0
    %v2080 = vadd.f32 0.0, %v2079
    %2081 = vmatprep.mubr.f32.mxu0 0.0
    %2082 = vmatmul.mubr.f32.gmra.mrb[0].mxu0 %v1411
    %v2083 = vpop.f32.mrb[0].mxu0
    %v2084 = vadd.f32 0.0, %v2083
    %v2085 = vpop.f32.mrb[0].mxu0
    %v2086 = vadd.f32 0.0, %v2085
    %2087 = vdwg.mxu0
    %v2088 = vadd.f32 %v1380, %v1396
    %v2089 = vadd.f32 %v1381, %v1397
    %v2090 = vadd.f32 %v1382, %v1398
    %v2091 = vadd.f32 %v1383, %v1399
    %v2092 = vadd.f32 %v1384, %v1400
    %v2093 = vadd.f32 %v1385, %v1401
    %v2094 = vadd.f32 %v1386, %v1402
    %v2095 = vadd.f32 %v1387, %v1403
    %v2096 = vadd.f32 %v1388, %v1404
    %v2097 = vadd.f32 %v1389, %v1405
    %v2098 = vadd.f32 %v1390, %v1406
    %v2099 = vadd.f32 %v1391, %v1407
    %v2100 = vadd.f32 %v1392, %v1408
    %v2101 = vadd.f32 %v1393, %v1409
    %v2102 = vadd.f32 %v1394, %v1410
    %v2103 = vadd.f32 %v1395, %v1411
    %v2104 = vadd.f32 %v1124, %v1316
    %v2105 = vadd.f32 %v1125, %v1317
    %v2106 = vadd.f32 %v1126, %v1318
    %v2107 = vadd.f32 %v1127, %v1319
    %v2108 = vadd.f32 %v1128, %v1320
    %v2109 = vadd.f32 %v1129, %v1321
    %v2110 = vadd.f32 %v1130, %v1322
    %v2111 = vadd.f32 %v1131, %v1323
    %v2112 = vadd.f32 %v1132, %v1324
    %v2113 = vadd.f32 %v1133, %v1325
    %v2114 = vadd.f32 %v1134, %v1326
    %v2115 = vadd.f32 %v1135, %v1327
    %v2116 = vadd.f32 %v1136, %v1328
    %v2117 = vadd.f32 %v1137, %v1329
    %v2118 = vadd.f32 %v1138, %v1330
    %v2119 = vadd.f32 %v1139, %v1331
    %v2120 = vadd.f32 %v1140, %v1332
    %v2121 = vadd.f32 %v1141, %v1333
    %v2122 = vadd.f32 %v1142, %v1334
    %v2123 = vadd.f32 %v1143, %v1335
    %v2124 = vadd.f32 %v1144, %v1336
    %v2125 = vadd.f32 %v1145, %v1337
    %v2126 = vadd.f32 %v1146, %v1338
    %v2127 = vadd.f32 %v1147, %v1339
    %v2128 = vadd.f32 %v1148, %v1340
    %v2129 = vadd.f32 %v1149, %v1341
    %v2130 = vadd.f32 %v1150, %v1342
    %v2131 = vadd.f32 %v1151, %v1343
    %v2132 = vadd.f32 %v1152, %v1344
    %v2133 = vadd.f32 %v1153, %v1345
    %v2134 = vadd.f32 %v1154, %v1346
    %v2135 = vadd.f32 %v1155, %v1347
    %v2136 = vadd.f32 %v1156, %v1348
    %v2137 = vadd.f32 %v1157, %v1349
    %v2138 = vadd.f32 %v1158, %v1350
    %v2139 = vadd.f32 %v1159, %v1351
    %v2140 = vadd.f32 %v1160, %v1352
    %v2141 = vadd.f32 %v1161, %v1353
    %v2142 = vadd.f32 %v1162, %v1354
    %v2143 = vadd.f32 %v1163, %v1355
    %v2144 = vadd.f32 %v1164, %v1356
    %v2145 = vadd.f32 %v1165, %v1357
    %v2146 = vadd.f32 %v1166, %v1358
    %v2147 = vadd.f32 %v1167, %v1359
    %v2148 = vadd.f32 %v1168, %v1360
    %v2149 = vadd.f32 %v1169, %v1361
    %v2150 = vadd.f32 %v1170, %v1362
    %v2151 = vadd.f32 %v1171, %v1363
    %v2152 = vadd.f32 %v1172, %v1364
    %v2153 = vadd.f32 %v1173, %v1365
    %v2154 = vadd.f32 %v1174, %v1366
    %v2155 = vadd.f32 %v1175, %v1367
    %v2156 = vadd.f32 %v1176, %v1368
    %v2157 = vadd.f32 %v1177, %v1369
    %v2158 = vadd.f32 %v1178, %v1370
    %v2159 = vadd.f32 %v1179, %v1371
    %v2160 = vadd.f32 %v1180, %v1372
    %v2161 = vadd.f32 %v1181, %v1373
    %v2162 = vadd.f32 %v1182, %v1374
    %v2163 = vadd.f32 %v1183, %v1375
    %v2164 = vadd.f32 %v1184, %v1376
    %v2165 = vadd.f32 %v1185, %v1377
    %v2166 = vadd.f32 %v1186, %v1378
    %v2167 = vadd.f32 %v1187, %v1379
    %2168 = vmatprep.subr.mxu0 %v2105
    %2169 = vmatpush1.msra.mxu0 %v2104
    %2170 = vmatprep.subr.mxu0 %v2109
    %2171 = vmatpush1.msra.mxu0 %v2108
    %2172 = vmatprep.subr.mxu0 %v2113
    %2173 = vmatpush1.msra.mxu0 %v2112
    %2174 = vmatprep.subr.mxu0 %v2117
    %2175 = vmatpush1.msra.mxu0 %v2116
    %2176 = vmatprep.subr.mxu0 %v2121
    %2177 = vmatpush1.msra.mxu0 %v2120
    %2178 = vmatprep.subr.mxu0 %v2125
    %2179 = vmatpush1.msra.mxu0 %v2124
    %2180 = vmatprep.subr.mxu0 %v2129
    %2181 = vmatpush1.msra.mxu0 %v2128
    %2182 = vmatprep.subr.mxu0 %v2133
    %2183 = vmatpush1.msra.mxu0 %v2132
    %2184 = vmatprep.subr.mxu0 %v2137
    %2185 = vmatpush1.msra.mxu0 %v2136
    %2186 = vmatprep.subr.mxu0 %v2141
    %2187 = vmatpush1.msra.mxu0 %v2140
    %2188 = vmatprep.subr.mxu0 %v2145
    %2189 = vmatpush1.msra.mxu0 %v2144
    %2190 = vmatprep.subr.mxu0 %v2149
    %2191 = vmatpush1.msra.mxu0 %v2148
    %2192 = vmatprep.subr.mxu0 %v2153
    %2193 = vmatpush1.msra.mxu0 %v2152
    %2194 = vmatprep.subr.mxu0 %v2157
    %2195 = vmatpush1.msra.mxu0 %v2156
    %2196 = vmatprep.subr.mxu0 %v2161
    %2197 = vmatpush1.msra.mxu0 %v2160
    %2198 = vmatprep.subr.mxu0 %v2165
    %2199 = vmatpush1.msra.mxu0 %v2164
    %2200 = vmatprep.subr.mxu0 0.0
    %2201 = vmatpush1.msra.mxu0 0.0
    %2202 = vmatprep.subr.mxu0 0.0
    %2203 = vmatpush1.msra.mxu0 0.0
    %2204 = vmatprep.subr.mxu0 0.0
    %2205 = vmatpush1.msra.mxu0 0.0
    %2206 = vmatprep.subr.mxu0 0.0
    %2207 = vmatpush1.msra.mxu0 0.0
    %2208 = vmatprep.subr.mxu0 0.0
    %2209 = vmatpush1.msra.mxu0 0.0
    %2210 = vmatprep.subr.mxu0 0.0
    %2211 = vmatpush1.msra.mxu0 0.0
    %2212 = vmatprep.subr.mxu0 0.0
    %2213 = vmatpush1.msra.mxu0 0.0
    %2214 = vmatprep.subr.mxu0 0.0
    %2215 = vmatpush1.msra.mxu0 0.0
    %2216 = vmatprep.subr.mxu0 0.0
    %2217 = vmatpush1.msra.mxu0 0.0
    %2218 = vmatprep.subr.mxu0 0.0
    %2219 = vmatpush1.msra.mxu0 0.0
    %2220 = vmatprep.subr.mxu0 0.0
    %2221 = vmatpush1.msra.mxu0 0.0
    %2222 = vmatprep.subr.mxu0 0.0
    %2223 = vmatpush1.msra.mxu0 0.0
    %2224 = vmatprep.subr.mxu0 0.0
    %2225 = vmatpush1.msra.mxu0 0.0
    %2226 = vmatprep.subr.mxu0 0.0
    %2227 = vmatpush1.msra.mxu0 0.0
    %2228 = vmatprep.subr.mxu0 0.0
    %2229 = vmatpush1.msra.mxu0 0.0
    %2230 = vmatprep.subr.mxu0 0.0
    %2231 = vmatpush1.msra.mxu0 0.0
    %2232 = vmatprep.mubr.f32.mxu0 0.0
    %2233 = vmatmul.mubr.f32.gmra.mrb[0].mxu0 %v2088
    %v2234 = vpop.f32.mrb[0].mxu0
    %v2235 = vadd.f32 0.0, %v2234
    %v2236 = vpop.f32.mrb[0].mxu0
    %v2237 = vadd.f32 0.0, %v2236
    %2238 = vmatprep.mubr.f32.mxu0 0.0
    %2239 = vmatmul.mubr.f32.gmra.mrb[0].mxu0 %v2089
    %v2240 = vpop.f32.mrb[0].mxu0
    %v2241 = vadd.f32 0.0, %v2240
    %v2242 = vpop.f32.mrb[0].mxu0
    %v2243 = vadd.f32 0.0, %v2242
    %2244 = vmatprep.mubr.f32.mxu0 0.0
    %2245 = vmatmul.mubr.f32.gmra.mrb[0].mxu0 %v2090
    %v2246 = vpop.f32.mrb[0].mxu0
    %v2247 = vadd.f32 0.0, %v2246
    %v2248 = vpop.f32.mrb[0].mxu0
    %v2249 = vadd.f32 0.0, %v2248
    %2250 = vmatprep.mubr.f32.mxu0 0.0
    %2251 = vmatmul.mubr.f32.gmra.mrb[0].mxu0 %v2091
    %v2252 = vpop.f32.mrb[0].mxu0
    %v2253 = vadd.f32 0.0, %v2252
    %v2254 = vpop.f32.mrb[0].mxu0
    %v2255 = vadd.f32 0.0, %v2254
    %2256 = vmatprep.mubr.f32.mxu0 0.0
    %2257 = vmatmul.mubr.f32.gmra.mrb[0].mxu0 %v2092
    %v2258 = vpop.f32.mrb[0].mxu0
    %v2259 = vadd.f32 0.0, %v2258
    %v2260 = vpop.f32.mrb[0].mxu0
    %v2261 = vadd.f32 0.0, %v2260
    %2262 = vmatprep.mubr.f32.mxu0 0.0
    %2263 = vmatmul.mubr.f32.gmra.mrb[0].mxu0 %v2093
    %v2264 = vpop.f32.mrb[0].mxu0
    %v2265 = vadd.f32 0.0, %v2264
    %v2266 = vpop.f32.mrb[0].mxu0
    %v2267 = vadd.f32 0.0, %v2266
    %2268 = vmatprep.mubr.f32.mxu0 0.0
    %2269 = vmatmul.mubr.f32.gmra.mrb[0].mxu0 %v2094
    %v2270 = vpop.f32.mrb[0].mxu0
    %v2271 = vadd.f32 0.0, %v2270
    %v2272 = vpop.f32.mrb[0].mxu0
    %v2273 = vadd.f32 0.0, %v2272
    %2274 = vmatprep.mubr.f32.mxu0 0.0
    %2275 = vmatmul.mubr.f32.gmra.mrb[0].mxu0 %v2095
    %v2276 = vpop.f32.mrb[0].mxu0
    %v2277 = vadd.f32 0.0, %v2276
    %v2278 = vpop.f32.mrb[0].mxu0
    %v2279 = vadd.f32 0.0, %v2278
    %2280 = vmatprep.mubr.f32.mxu0 0.0
    %2281 = vmatmul.mubr.f32.gmra.mrb[0].mxu0 %v2096
    %v2282 = vpop.f32.mrb[0].mxu0
    %v2283 = vadd.f32 0.0, %v2282
    %v2284 = vpop.f32.mrb[0].mxu0
    %v2285 = vadd.f32 0.0, %v2284
    %2286 = vmatprep.mubr.f32.mxu0 0.0
    %2287 = vmatmul.mubr.f32.gmra.mrb[0].mxu0 %v2097
    %v2288 = vpop.f32.mrb[0].mxu0
    %v2289 = vadd.f32 0.0, %v2288
    %v2290 = vpop.f32.mrb[0].mxu0
    %v2291 = vadd.f32 0.0, %v2290
    %2292 = vmatprep.mubr.f32.mxu0 0.0
    %2293 = vmatmul.mubr.f32.gmra.mrb[0].mxu0 %v2098
    %v2294 = vpop.f32.mrb[0].mxu0
    %v2295 = vadd.f32 0.0, %v2294
    %v2296 = vpop.f32.mrb[0].mxu0
    %v2297 = vadd.f32 0.0, %v2296
    %2298 = vmatprep.mubr.f32.mxu0 0.0
    %2299 = vmatmul.mubr.f32.gmra.mrb[0].mxu0 %v2099
    %v2300 = vpop.f32.mrb[0].mxu0
    %v2301 = vadd.f32 0.0, %v2300
    %v2302 = vpop.f32.mrb[0].mxu0
    %v2303 = vadd.f32 0.0, %v2302
    %2304 = vmatprep.mubr.f32.mxu0 0.0
    %2305 = vmatmul.mubr.f32.gmra.mrb[0].mxu0 %v2100
    %v2306 = vpop.f32.mrb[0].mxu0
    %v2307 = vadd.f32 0.0, %v2306
    %v2308 = vpop.f32.mrb[0].mxu0
    %v2309 = vadd.f32 0.0, %v2308
    %2310 = vmatprep.mubr.f32.mxu0 0.0
    %2311 = vmatmul.mubr.f32.gmra.mrb[0].mxu0 %v2101
    %v2312 = vpop.f32.mrb[0].mxu0
    %v2313 = vadd.f32 0.0, %v2312
    %v2314 = vpop.f32.mrb[0].mxu0
    %v2315 = vadd.f32 0.0, %v2314
    %2316 = vmatprep.mubr.f32.mxu0 0.0
    %2317 = vmatmul.mubr.f32.gmra.mrb[0].mxu0 %v2102
    %v2318 = vpop.f32.mrb[0].mxu0
    %v2319 = vadd.f32 0.0, %v2318
    %v2320 = vpop.f32.mrb[0].mxu0
    %v2321 = vadd.f32 0.0, %v2320
    %2322 = vmatprep.mubr.f32.mxu0 0.0
    %2323 = vmatmul.mubr.f32.gmra.mrb[0].mxu0 %v2103
    %v2324 = vpop.f32.mrb[0].mxu0
    %v2325 = vadd.f32 0.0, %v2324
    %v2326 = vpop.f32.mrb[0].mxu0
    %v2327 = vadd.f32 0.0, %v2326
    %2328 = vdwg.mxu0
    %2329 = vmatprep.subr.mxu0 %v2107
    %2330 = vmatpush1.msra.mxu0 %v2106
    %2331 = vmatprep.subr.mxu0 %v2111
    %2332 = vmatpush1.msra.mxu0 %v2110
    %2333 = vmatprep.subr.mxu0 %v2115
    %2334 = vmatpush1.msra.mxu0 %v2114
    %2335 = vmatprep.subr.mxu0 %v2119
    %2336 = vmatpush1.msra.mxu0 %v2118
    %2337 = vmatprep.subr.mxu0 %v2123
    %2338 = vmatpush1.msra.mxu0 %v2122
    %2339 = vmatprep.subr.mxu0 %v2127
    %2340 = vmatpush1.msra.mxu0 %v2126
    %2341 = vmatprep.subr.mxu0 %v2131
    %2342 = vmatpush1.msra.mxu0 %v2130
    %2343 = vmatprep.subr.mxu0 %v2135
    %2344 = vmatpush1.msra.mxu0 %v2134
    %2345 = vmatprep.subr.mxu0 %v2139
    %2346 = vmatpush1.msra.mxu0 %v2138
    %2347 = vmatprep.subr.mxu0 %v2143
    %2348 = vmatpush1.msra.mxu0 %v2142
    %2349 = vmatprep.subr.mxu0 %v2147
    %2350 = vmatpush1.msra.mxu0 %v2146
    %2351 = vmatprep.subr.mxu0 %v2151
    %2352 = vmatpush1.msra.mxu0 %v2150
    %2353 = vmatprep.subr.mxu0 %v2155
    %2354 = vmatpush1.msra.mxu0 %v2154
    %2355 = vmatprep.subr.mxu0 %v2159
    %2356 = vmatpush1.msra.mxu0 %v2158
    %2357 = vmatprep.subr.mxu0 %v2163
    %2358 = vmatpush1.msra.mxu0 %v2162
    %2359 = vmatprep.subr.mxu0 %v2167
    %2360 = vmatpush1.msra.mxu0 %v2166
    %2361 = vmatprep.subr.mxu0 0.0
    %2362 = vmatpush1.msra.mxu0 0.0
    %2363 = vmatprep.subr.mxu0 0.0
    %2364 = vmatpush1.msra.mxu0 0.0
    %2365 = vmatprep.subr.mxu0 0.0
    %2366 = vmatpush1.msra.mxu0 0.0
    %2367 = vmatprep.subr.mxu0 0.0
    %2368 = vmatpush1.msra.mxu0 0.0
    %2369 = vmatprep.subr.mxu0 0.0
    %2370 = vmatpush1.msra.mxu0 0.0
    %2371 = vmatprep.subr.mxu0 0.0
    %2372 = vmatpush1.msra.mxu0 0.0
    %2373 = vmatprep.subr.mxu0 0.0
    %2374 = vmatpush1.msra.mxu0 0.0
    %2375 = vmatprep.subr.mxu0 0.0
    %2376 = vmatpush1.msra.mxu0 0.0
    %2377 = vmatprep.subr.mxu0 0.0
    %2378 = vmatpush1.msra.mxu0 0.0
    %2379 = vmatprep.subr.mxu0 0.0
    %2380 = vmatpush1.msra.mxu0 0.0
    %2381 = vmatprep.subr.mxu0 0.0
    %2382 = vmatpush1.msra.mxu0 0.0
    %2383 = vmatprep.subr.mxu0 0.0
    %2384 = vmatpush1.msra.mxu0 0.0
    %2385 = vmatprep.subr.mxu0 0.0
    %2386 = vmatpush1.msra.mxu0 0.0
    %2387 = vmatprep.subr.mxu0 0.0
    %2388 = vmatpush1.msra.mxu0 0.0
    %2389 = vmatprep.subr.mxu0 0.0
    %2390 = vmatpush1.msra.mxu0 0.0
    %2391 = vmatprep.subr.mxu0 0.0
    %2392 = vmatpush1.msra.mxu0 0.0
    %2393 = vmatprep.mubr.f32.mxu0 0.0
    %2394 = vmatmul.mubr.f32.gmra.mrb[0].mxu0 %v2088
    %v2395 = vpop.f32.mrb[0].mxu0
    %v2396 = vadd.f32 0.0, %v2395
    %v2397 = vpop.f32.mrb[0].mxu0
    %v2398 = vadd.f32 0.0, %v2397
    %2399 = vmatprep.mubr.f32.mxu0 0.0
    %2400 = vmatmul.mubr.f32.gmra.mrb[0].mxu0 %v2089
    %v2401 = vpop.f32.mrb[0].mxu0
    %v2402 = vadd.f32 0.0, %v2401
    %v2403 = vpop.f32.mrb[0].mxu0
    %v2404 = vadd.f32 0.0, %v2403
    %2405 = vmatprep.mubr.f32.mxu0 0.0
    %2406 = vmatmul.mubr.f32.gmra.mrb[0].mxu0 %v2090
    %v2407 = vpop.f32.mrb[0].mxu0
    %v2408 = vadd.f32 0.0, %v2407
    %v2409 = vpop.f32.mrb[0].mxu0
    %v2410 = vadd.f32 0.0, %v2409
    %2411 = vmatprep.mubr.f32.mxu0 0.0
    %2412 = vmatmul.mubr.f32.gmra.mrb[0].mxu0 %v2091
    %v2413 = vpop.f32.mrb[0].mxu0
    %v2414 = vadd.f32 0.0, %v2413
    %v2415 = vpop.f32.mrb[0].mxu0
    %v2416 = vadd.f32 0.0, %v2415
    %2417 = vmatprep.mubr.f32.mxu0 0.0
    %2418 = vmatmul.mubr.f32.gmra.mrb[0].mxu0 %v2092
    %v2419 = vpop.f32.mrb[0].mxu0
    %v2420 = vadd.f32 0.0, %v2419
    %v2421 = vpop.f32.mrb[0].mxu0
    %v2422 = vadd.f32 0.0, %v2421
    %2423 = vmatprep.mubr.f32.mxu0 0.0
    %2424 = vmatmul.mubr.f32.gmra.mrb[0].mxu0 %v2093
    %v2425 = vpop.f32.mrb[0].mxu0
    %v2426 = vadd.f32 0.0, %v2425
    %v2427 = vpop.f32.mrb[0].mxu0
    %v2428 = vadd.f32 0.0, %v2427
    %2429 = vmatprep.mubr.f32.mxu0 0.0
    %2430 = vmatmul.mubr.f32.gmra.mrb[0].mxu0 %v2094
    %v2431 = vpop.f32.mrb[0].mxu0
    %v2432 = vadd.f32 0.0, %v2431
    %v2433 = vpop.f32.mrb[0].mxu0
    %v2434 = vadd.f32 0.0, %v2433
    %2435 = vmatprep.mubr.f32.mxu0 0.0
    %2436 = vmatmul.mubr.f32.gmra.mrb[0].mxu0 %v2095
    %v2437 = vpop.f32.mrb[0].mxu0
    %v2438 = vadd.f32 0.0, %v2437
    %v2439 = vpop.f32.mrb[0].mxu0
    %v2440 = vadd.f32 0.0, %v2439
    %2441 = vmatprep.mubr.f32.mxu0 0.0
    %2442 = vmatmul.mubr.f32.gmra.mrb[0].mxu0 %v2096
    %v2443 = vpop.f32.mrb[0].mxu0
    %v2444 = vadd.f32 0.0, %v2443
    %v2445 = vpop.f32.mrb[0].mxu0
    %v2446 = vadd.f32 0.0, %v2445
    %2447 = vmatprep.mubr.f32.mxu0 0.0
    %2448 = vmatmul.mubr.f32.gmra.mrb[0].mxu0 %v2097
    %v2449 = vpop.f32.mrb[0].mxu0
    %v2450 = vadd.f32 0.0, %v2449
    %v2451 = vpop.f32.mrb[0].mxu0
    %v2452 = vadd.f32 0.0, %v2451
    %2453 = vmatprep.mubr.f32.mxu0 0.0
    %2454 = vmatmul.mubr.f32.gmra.mrb[0].mxu0 %v2098
    %v2455 = vpop.f32.mrb[0].mxu0
    %v2456 = vadd.f32 0.0, %v2455
    %v2457 = vpop.f32.mrb[0].mxu0
    %v2458 = vadd.f32 0.0, %v2457
    %2459 = vmatprep.mubr.f32.mxu0 0.0
    %2460 = vmatmul.mubr.f32.gmra.mrb[0].mxu0 %v2099
    %v2461 = vpop.f32.mrb[0].mxu0
    %v2462 = vadd.f32 0.0, %v2461
    %v2463 = vpop.f32.mrb[0].mxu0
    %v2464 = vadd.f32 0.0, %v2463
    %2465 = vmatprep.mubr.f32.mxu0 0.0
    %2466 = vmatmul.mubr.f32.gmra.mrb[0].mxu0 %v2100
    %v2467 = vpop.f32.mrb[0].mxu0
    %v2468 = vadd.f32 0.0, %v2467
    %v2469 = vpop.f32.mrb[0].mxu0
    %v2470 = vadd.f32 0.0, %v2469
    %2471 = vmatprep.mubr.f32.mxu0 0.0
    %2472 = vmatmul.mubr.f32.gmra.mrb[0].mxu0 %v2101
    %v2473 = vpop.f32.mrb[0].mxu0
    %v2474 = vadd.f32 0.0, %v2473
    %v2475 = vpop.f32.mrb[0].mxu0
    %v2476 = vadd.f32 0.0, %v2475
    %2477 = vmatprep.mubr.f32.mxu0 0.0
    %2478 = vmatmul.mubr.f32.gmra.mrb[0].mxu0 %v2102
    %v2479 = vpop.f32.mrb[0].mxu0
    %v2480 = vadd.f32 0.0, %v2479
    %v2481 = vpop.f32.mrb[0].mxu0
    %v2482 = vadd.f32 0.0, %v2481
    %2483 = vmatprep.mubr.f32.mxu0 0.0
    %2484 = vmatmul.mubr.f32.gmra.mrb[0].mxu0 %v2103
    %v2485 = vpop.f32.mrb[0].mxu0
    %v2486 = vadd.f32 0.0, %v2485
    %v2487 = vpop.f32.mrb[0].mxu0
    %v2488 = vadd.f32 0.0, %v2487
    %2489 = vdwg.mxu0
    %v2490 = vsub.f32 %v1511, %v1833
    %v2491 = vsub.f32 %v1513, %v1835
    %v2492 = vsub.f32 %v1672, %v1994
    %v2493 = vsub.f32 %v1674, %v1996
    %v2494 = vsub.f32 %v1517, %v1839
    %v2495 = vsub.f32 %v1519, %v1841
    %v2496 = vsub.f32 %v1678, %v2000
    %v2497 = vsub.f32 %v1680, %v2002
    %v2498 = vsub.f32 %v1523, %v1845
    %v2499 = vsub.f32 %v1525, %v1847
    %v2500 = vsub.f32 %v1684, %v2006
    %v2501 = vsub.f32 %v1686, %v2008
    %v2502 = vsub.f32 %v1529, %v1851
    %v2503 = vsub.f32 %v1531, %v1853
    %v2504 = vsub.f32 %v1690, %v2012
    %v2505 = vsub.f32 %v1692, %v2014
    %v2506 = vsub.f32 %v1535, %v1857
    %v2507 = vsub.f32 %v1537, %v1859
    %v2508 = vsub.f32 %v1696, %v2018
    %v2509 = vsub.f32 %v1698, %v2020
    %v2510 = vsub.f32 %v1541, %v1863
    %v2511 = vsub.f32 %v1543, %v1865
    %v2512 = vsub.f32 %v1702, %v2024
    %v2513 = vsub.f32 %v1704, %v2026
    %v2514 = vsub.f32 %v1547, %v1869
    %v2515 = vsub.f32 %v1549, %v1871
    %v2516 = vsub.f32 %v1708, %v2030
    %v2517 = vsub.f32 %v1710, %v2032
    %v2518 = vsub.f32 %v1553, %v1875
    %v2519 = vsub.f32 %v1555, %v1877
    %v2520 = vsub.f32 %v1714, %v2036
    %v2521 = vsub.f32 %v1716, %v2038
    %v2522 = vsub.f32 %v1559, %v1881
    %v2523 = vsub.f32 %v1561, %v1883
    %v2524 = vsub.f32 %v1720, %v2042
    %v2525 = vsub.f32 %v1722, %v2044
    %v2526 = vsub.f32 %v1565, %v1887
    %v2527 = vsub.f32 %v1567, %v1889
    %v2528 = vsub.f32 %v1726, %v2048
    %v2529 = vsub.f32 %v1728, %v2050
    %v2530 = vsub.f32 %v1571, %v1893
    %v2531 = vsub.f32 %v1573, %v1895
    %v2532 = vsub.f32 %v1732, %v2054
    %v2533 = vsub.f32 %v1734, %v2056
    %v2534 = vsub.f32 %v1577, %v1899
    %v2535 = vsub.f32 %v1579, %v1901
    %v2536 = vsub.f32 %v1738, %v2060
    %v2537 = vsub.f32 %v1740, %v2062
    %v2538 = vsub.f32 %v1583, %v1905
    %v2539 = vsub.f32 %v1585, %v1907
    %v2540 = vsub.f32 %v1744, %v2066
    %v2541 = vsub.f32 %v1746, %v2068
    %v2542 = vsub.f32 %v1589, %v1911
    %v2543 = vsub.f32 %v1591, %v1913
    %v2544 = vsub.f32 %v1750, %v2072
    %v2545 = vsub.f32 %v1752, %v2074
    %v2546 = vsub.f32 %v1595, %v1917
    %v2547 = vsub.f32 %v1597, %v1919
    %v2548 = vsub.f32 %v1756, %v2078
    %v2549 = vsub.f32 %v1758, %v2080
    %v2550 = vsub.f32 %v1601, %v1923
    %v2551 = vsub.f32 %v1603, %v1925
    %v2552 = vsub.f32 %v1762, %v2084
    %v2553 = vsub.f32 %v1764, %v2086
    %v2554 = vsub.f32 %v2235, %v1511
    %v2555 = vsub.f32 %v2237, %v1513
    %v2556 = vsub.f32 %v2396, %v1672
    %v2557 = vsub.f32 %v2398, %v1674
    %v2558 = vsub.f32 %v2241, %v1517
    %v2559 = vsub.f32 %v2243, %v1519
    %v2560 = vsub.f32 %v2402, %v1678
    %v2561 = vsub.f32 %v2404, %v1680
    %v2562 = vsub.f32 %v2247, %v1523
    %v2563 = vsub.f32 %v2249, %v1525
    %v2564 = vsub.f32 %v2408, %v1684
    %v2565 = vsub.f32 %v2410, %v1686
    %v2566 = vsub.f32 %v2253, %v1529
    %v2567 = vsub.f32 %v2255, %v1531
    %v2568 = vsub.f32 %v2414, %v1690
    %v2569 = vsub.f32 %v2416, %v1692
    %v2570 = vsub.f32 %v2259, %v1535
    %v2571 = vsub.f32 %v2261, %v1537
    %v2572 = vsub.f32 %v2420, %v1696
    %v2573 = vsub.f32 %v2422, %v1698
    %v2574 = vsub.f32 %v2265, %v1541
    %v2575 = vsub.f32 %v2267, %v1543
    %v2576 = vsub.f32 %v2426, %v1702
    %v2577 = vsub.f32 %v2428, %v1704
    %v2578 = vsub.f32 %v2271, %v1547
    %v2579 = vsub.f32 %v2273, %v1549
    %v2580 = vsub.f32 %v2432, %v1708
    %v2581 = vsub.f32 %v2434, %v1710
    %v2582 = vsub.f32 %v2277, %v1553
    %v2583 = vsub.f32 %v2279, %v1555
    %v2584 = vsub.f32 %v2438, %v1714
    %v2585 = vsub.f32 %v2440, %v1716
    %v2586 = vsub.f32 %v2283, %v1559
    %v2587 = vsub.f32 %v2285, %v1561
    %v2588 = vsub.f32 %v2444, %v1720
    %v2589 = vsub.f32 %v2446, %v1722
    %v2590 = vsub.f32 %v2289, %v1565
    %v2591 = vsub.f32 %v2291, %v1567
    %v2592 = vsub.f32 %v2450, %v1726
    %v2593 = vsub.f32 %v2452, %v1728
    %v2594 = vsub.f32 %v2295, %v1571
    %v2595 = vsub.f32 %v2297, %v1573
    %v2596 = vsub.f32 %v2456, %v1732
    %v2597 = vsub.f32 %v2458, %v1734
    %v2598 = vsub.f32 %v2301, %v1577
    %v2599 = vsub.f32 %v2303, %v1579
    %v2600 = vsub.f32 %v2462, %v1738
    %v2601 = vsub.f32 %v2464, %v1740
    %v2602 = vsub.f32 %v2307, %v1583
    %v2603 = vsub.f32 %v2309, %v1585
    %v2604 = vsub.f32 %v2468, %v1744
    %v2605 = vsub.f32 %v2470, %v1746
    %v2606 = vsub.f32 %v2313, %v1589
    %v2607 = vsub.f32 %v2315, %v1591
    %v2608 = vsub.f32 %v2474, %v1750
    %v2609 = vsub.f32 %v2476, %v1752
    %v2610 = vsub.f32 %v2319, %v1595
    %v2611 = vsub.f32 %v2321, %v1597
    %v2612 = vsub.f32 %v2480, %v1756
    %v2613 = vsub.f32 %v2482, %v1758
    %v2614 = vsub.f32 %v2325, %v1601
    %v2615 = vsub.f32 %v2327, %v1603
    %v2616 = vsub.f32 %v2486, %v1762
    %v2617 = vsub.f32 %v2488, %v1764
    %v2618 = vsub.f32 %v2554, %v1833
    %v2619 = vsub.f32 %v2555, %v1835
    %v2620 = vsub.f32 %v2556, %v1994
    %v2621 = vsub.f32 %v2557, %v1996
    %v2622 = vsub.f32 %v2558, %v1839
    %v2623 = vsub.f32 %v2559, %v1841
    %v2624 = vsub.f32 %v2560, %v2000
    %v2625 = vsub.f32 %v2561, %v2002
    %v2626 = vsub.f32 %v2562, %v1845
    %v2627 = vsub.f32 %v2563, %v1847
    %v2628 = vsub.f32 %v2564, %v2006
    %v2629 = vsub.f32 %v2565, %v2008
    %v2630 = vsub.f32 %v2566, %v1851
    %v2631 = vsub.f32 %v2567, %v1853
    %v2632 = vsub.f32 %v2568, %v2012
    %v2633 = vsub.f32 %v2569, %v2014
    %v2634 = vsub.f32 %v2570, %v1857
    %v2635 = vsub.f32 %v2571, %v1859
    %v2636 = vsub.f32 %v2572, %v2018
    %v2637 = vsub.f32 %v2573, %v2020
    %v2638 = vsub.f32 %v2574, %v1863
    %v2639 = vsub.f32 %v2575, %v1865
    %v2640 = vsub.f32 %v2576, %v2024
    %v2641 = vsub.f32 %v2577, %v2026
    %v2642 = vsub.f32 %v2578, %v1869
    %v2643 = vsub.f32 %v2579, %v1871
    %v2644 = vsub.f32 %v2580, %v2030
    %v2645 = vsub.f32 %v2581, %v2032
    %v2646 = vsub.f32 %v2582, %v1875
    %v2647 = vsub.f32 %v2583, %v1877
    %v2648 = vsub.f32 %v2584, %v2036
    %v2649 = vsub.f32 %v2585, %v2038
    %v2650 = vsub.f32 %v2586, %v1881
    %v2651 = vsub.f32 %v2587, %v1883
    %v2652 = vsub.f32 %v2588, %v2042
    %v2653 = vsub.f32 %v2589, %v2044
    %v2654 = vsub.f32 %v2590, %v1887
    %v2655 = vsub.f32 %v2591, %v1889
    %v2656 = vsub.f32 %v2592, %v2048
    %v2657 = vsub.f32 %v2593, %v2050
    %v2658 = vsub.f32 %v2594, %v1893
    %v2659 = vsub.f32 %v2595, %v1895
    %v2660 = vsub.f32 %v2596, %v2054
    %v2661 = vsub.f32 %v2597, %v2056
    %v2662 = vsub.f32 %v2598, %v1899
    %v2663 = vsub.f32 %v2599, %v1901
    %v2664 = vsub.f32 %v2600, %v2060
    %v2665 = vsub.f32 %v2601, %v2062
    %v2666 = vsub.f32 %v2602, %v1905
    %v2667 = vsub.f32 %v2603, %v1907
    %v2668 = vsub.f32 %v2604, %v2066
    %v2669 = vsub.f32 %v2605, %v2068
    %v2670 = vsub.f32 %v2606, %v1911
    %v2671 = vsub.f32 %v2607, %v1913
    %v2672 = vsub.f32 %v2608, %v2072
    %v2673 = vsub.f32 %v2609, %v2074
    %v2674 = vsub.f32 %v2610, %v1917
    %v2675 = vsub.f32 %v2611, %v1919
    %v2676 = vsub.f32 %v2612, %v2078
    %v2677 = vsub.f32 %v2613, %v2080
    %v2678 = vsub.f32 %v2614, %v1923
    %v2679 = vsub.f32 %v2615, %v1925
    %v2680 = vsub.f32 %v2616, %v2084
    %v2681 = vsub.f32 %v2617, %v2086
    %2682 = vmatprep.subr.mxu0 0.0
    %2683 = vmatpush1.msra.mxu0 %v1412
    %2684 = vmatprep.subr.mxu0 0.0
    %2685 = vmatpush1.msra.mxu0 %v1413
    %2686 = vmatprep.subr.mxu0 0.0
    %2687 = vmatpush1.msra.mxu0 %v1414
    %2688 = vmatprep.subr.mxu0 0.0
    %2689 = vmatpush1.msra.mxu0 %v1415
    %2690 = vmatprep.subr.mxu0 0.0
    %2691 = vmatpush1.msra.mxu0 %v1416
    %2692 = vmatprep.subr.mxu0 0.0
    %2693 = vmatpush1.msra.mxu0 %v1417
    %2694 = vmatprep.subr.mxu0 0.0
    %2695 = vmatpush1.msra.mxu0 %v1418
    %2696 = vmatprep.subr.mxu0 0.0
    %2697 = vmatpush1.msra.mxu0 %v1419
    %2698 = vmatprep.subr.mxu0 0.0
    %2699 = vmatpush1.msra.mxu0 %v1420
    %2700 = vmatprep.subr.mxu0 0.0
    %2701 = vmatpush1.msra.mxu0 %v1421
    %2702 = vmatprep.subr.mxu0 0.0
    %2703 = vmatpush1.msra.mxu0 %v1422
    %2704 = vmatprep.subr.mxu0 0.0
    %2705 = vmatpush1.msra.mxu0 %v1423
    %2706 = vmatprep.subr.mxu0 0.0
    %2707 = vmatpush1.msra.mxu0 %v1424
    %2708 = vmatprep.subr.mxu0 0.0
    %2709 = vmatpush1.msra.mxu0 %v1425
    %2710 = vmatprep.subr.mxu0 0.0
    %2711 = vmatpush1.msra.mxu0 %v1426
    %2712 = vmatprep.subr.mxu0 0.0
    %2713 = vmatpush1.msra.mxu0 %v1427
    %2714 = vmatprep.subr.mxu0 0.0
    %2715 = vmatpush1.msra.mxu0 0.0
    %2716 = vmatprep.subr.mxu0 0.0
    %2717 = vmatpush1.msra.mxu0 0.0
    %2718 = vmatprep.subr.mxu0 0.0
    %2719 = vmatpush1.msra.mxu0 0.0
    %2720 = vmatprep.subr.mxu0 0.0
    %2721 = vmatpush1.msra.mxu0 0.0
    %2722 = vmatprep.subr.mxu0 0.0
    %2723 = vmatpush1.msra.mxu0 0.0
    %2724 = vmatprep.subr.mxu0 0.0
    %2725 = vmatpush1.msra.mxu0 0.0
    %2726 = vmatprep.subr.mxu0 0.0
    %2727 = vmatpush1.msra.mxu0 0.0
    %2728 = vmatprep.subr.mxu0 0.0
    %2729 = vmatpush1.msra.mxu0 0.0
    %2730 = vmatprep.subr.mxu0 0.0
    %2731 = vmatpush1.msra.mxu0 0.0
    %2732 = vmatprep.subr.mxu0 0.0
    %2733 = vmatpush1.msra.mxu0 0.0
    %2734 = vmatprep.subr.mxu0 0.0
    %2735 = vmatpush1.msra.mxu0 0.0
    %2736 = vmatprep.subr.mxu0 0.0
    %2737 = vmatpush1.msra.mxu0 0.0
    %2738 = vmatprep.subr.mxu0 0.0
    %2739 = vmatpush1.msra.mxu0 0.0
    %2740 = vmatprep.subr.mxu0 0.0
    %2741 = vmatpush1.msra.mxu0 0.0
    %2742 = vmatprep.subr.mxu0 0.0
    %2743 = vmatpush1.msra.mxu0 0.0
    %2744 = vmatprep.subr.mxu0 0.0
    %2745 = vmatpush1.msra.mxu0 0.0
    %2746 = vmatprep.mubr.f32.mxu0 0.0
    %2747 = vmatmul.mubr.f32.gmra.mrb[0].mxu0 %v2490
    %v2748 = vpop.f32.mrb[0].mxu0
    %v2749 = vadd.f32 0.0, %v2748
    %v2750 = vpop.f32.mrb[0].mxu0
    %2751 = vmatprep.mubr.f32.mxu0 0.0
    %2752 = vmatmul.mubr.f32.gmra.mrb[0].mxu0 %v2494
    %v2753 = vpop.f32.mrb[0].mxu0
    %v2754 = vadd.f32 0.0, %v2753
    %v2755 = vpop.f32.mrb[0].mxu0
    %2756 = vmatprep.mubr.f32.mxu0 0.0
    %2757 = vmatmul.mubr.f32.gmra.mrb[0].mxu0 %v2498
    %v2758 = vpop.f32.mrb[0].mxu0
    %v2759 = vadd.f32 0.0, %v2758
    %v2760 = vpop.f32.mrb[0].mxu0
    %2761 = vmatprep.mubr.f32.mxu0 0.0
    %2762 = vmatmul.mubr.f32.gmra.mrb[0].mxu0 %v2502
    %v2763 = vpop.f32.mrb[0].mxu0
    %v2764 = vadd.f32 0.0, %v2763
    %v2765 = vpop.f32.mrb[0].mxu0
    %2766 = vmatprep.mubr.f32.mxu0 0.0
    %2767 = vmatmul.mubr.f32.gmra.mrb[0].mxu0 %v2506
    %v2768 = vpop.f32.mrb[0].mxu0
    %v2769 = vadd.f32 0.0, %v2768
    %v2770 = vpop.f32.mrb[0].mxu0
    %2771 = vmatprep.mubr.f32.mxu0 0.0
    %2772 = vmatmul.mubr.f32.gmra.mrb[0].mxu0 %v2510
    %v2773 = vpop.f32.mrb[0].mxu0
    %v2774 = vadd.f32 0.0, %v2773
    %v2775 = vpop.f32.mrb[0].mxu0
    %2776 = vmatprep.mubr.f32.mxu0 0.0
    %2777 = vmatmul.mubr.f32.gmra.mrb[0].mxu0 %v2514
    %v2778 = vpop.f32.mrb[0].mxu0
    %v2779 = vadd.f32 0.0, %v2778
    %v2780 = vpop.f32.mrb[0].mxu0
    %2781 = vmatprep.mubr.f32.mxu0 0.0
    %2782 = vmatmul.mubr.f32.gmra.mrb[0].mxu0 %v2518
    %v2783 = vpop.f32.mrb[0].mxu0
    %v2784 = vadd.f32 0.0, %v2783
    %v2785 = vpop.f32.mrb[0].mxu0
    %2786 = vmatprep.mubr.f32.mxu0 0.0
    %2787 = vmatmul.mubr.f32.gmra.mrb[0].mxu0 %v2522
    %v2788 = vpop.f32.mrb[0].mxu0
    %v2789 = vadd.f32 0.0, %v2788
    %v2790 = vpop.f32.mrb[0].mxu0
    %2791 = vmatprep.mubr.f32.mxu0 0.0
    %2792 = vmatmul.mubr.f32.gmra.mrb[0].mxu0 %v2526
    %v2793 = vpop.f32.mrb[0].mxu0
    %v2794 = vadd.f32 0.0, %v2793
    %v2795 = vpop.f32.mrb[0].mxu0
    %2796 = vmatprep.mubr.f32.mxu0 0.0
    %2797 = vmatmul.mubr.f32.gmra.mrb[0].mxu0 %v2530
    %v2798 = vpop.f32.mrb[0].mxu0
    %v2799 = vadd.f32 0.0, %v2798
    %v2800 = vpop.f32.mrb[0].mxu0
    %2801 = vmatprep.mubr.f32.mxu0 0.0
    %2802 = vmatmul.mubr.f32.gmra.mrb[0].mxu0 %v2534
    %v2803 = vpop.f32.mrb[0].mxu0
    %v2804 = vadd.f32 0.0, %v2803
    %v2805 = vpop.f32.mrb[0].mxu0
    %2806 = vmatprep.mubr.f32.mxu0 0.0
    %2807 = vmatmul.mubr.f32.gmra.mrb[0].mxu0 %v2538
    %v2808 = vpop.f32.mrb[0].mxu0
    %v2809 = vadd.f32 0.0, %v2808
    %v2810 = vpop.f32.mrb[0].mxu0
    %2811 = vmatprep.mubr.f32.mxu0 0.0
    %2812 = vmatmul.mubr.f32.gmra.mrb[0].mxu0 %v2542
    %v2813 = vpop.f32.mrb[0].mxu0
    %v2814 = vadd.f32 0.0, %v2813
    %v2815 = vpop.f32.mrb[0].mxu0
    %2816 = vmatprep.mubr.f32.mxu0 0.0
    %2817 = vmatmul.mubr.f32.gmra.mrb[0].mxu0 %v2546
    %v2818 = vpop.f32.mrb[0].mxu0
    %v2819 = vadd.f32 0.0, %v2818
    %v2820 = vpop.f32.mrb[0].mxu0
    %2821 = vmatprep.mubr.f32.mxu0 0.0
    %2822 = vmatmul.mubr.f32.gmra.mrb[0].mxu0 %v2550
    %v2823 = vpop.f32.mrb[0].mxu0
    %v2824 = vadd.f32 0.0, %v2823
    %v2825 = vpop.f32.mrb[0].mxu0
    %2826 = vmatprep.mubr.f32.mxu0 0.0
    %2827 = vmatmul.mubr.f32.gmra.mrb[0].mxu0 %v2491
    %v2828 = vpop.f32.mrb[0].mxu0
    %v2829 = vadd.f32 0.0, %v2828
    %v2830 = vpop.f32.mrb[0].mxu0
    %2831 = vmatprep.mubr.f32.mxu0 0.0
    %2832 = vmatmul.mubr.f32.gmra.mrb[0].mxu0 %v2495
    %v2833 = vpop.f32.mrb[0].mxu0
    %v2834 = vadd.f32 0.0, %v2833
    %v2835 = vpop.f32.mrb[0].mxu0
    %2836 = vmatprep.mubr.f32.mxu0 0.0
    %2837 = vmatmul.mubr.f32.gmra.mrb[0].mxu0 %v2499
    %v2838 = vpop.f32.mrb[0].mxu0
    %v2839 = vadd.f32 0.0, %v2838
    %v2840 = vpop.f32.mrb[0].mxu0
    %2841 = vmatprep.mubr.f32.mxu0 0.0
    %2842 = vmatmul.mubr.f32.gmra.mrb[0].mxu0 %v2503
    %v2843 = vpop.f32.mrb[0].mxu0
    %v2844 = vadd.f32 0.0, %v2843
    %v2845 = vpop.f32.mrb[0].mxu0
    %2846 = vmatprep.mubr.f32.mxu0 0.0
    %2847 = vmatmul.mubr.f32.gmra.mrb[0].mxu0 %v2507
    %v2848 = vpop.f32.mrb[0].mxu0
    %v2849 = vadd.f32 0.0, %v2848
    %v2850 = vpop.f32.mrb[0].mxu0
    %2851 = vmatprep.mubr.f32.mxu0 0.0
    %2852 = vmatmul.mubr.f32.gmra.mrb[0].mxu0 %v2511
    %v2853 = vpop.f32.mrb[0].mxu0
    %v2854 = vadd.f32 0.0, %v2853
    %v2855 = vpop.f32.mrb[0].mxu0
    %2856 = vmatprep.mubr.f32.mxu0 0.0
    %2857 = vmatmul.mubr.f32.gmra.mrb[0].mxu0 %v2515
    %v2858 = vpop.f32.mrb[0].mxu0
    %v2859 = vadd.f32 0.0, %v2858
    %v2860 = vpop.f32.mrb[0].mxu0
    %2861 = vmatprep.mubr.f32.mxu0 0.0
    %2862 = vmatmul.mubr.f32.gmra.mrb[0].mxu0 %v2519
    %v2863 = vpop.f32.mrb[0].mxu0
    %v2864 = vadd.f32 0.0, %v2863
    %v2865 = vpop.f32.mrb[0].mxu0
    %2866 = vmatprep.mubr.f32.mxu0 0.0
    %2867 = vmatmul.mubr.f32.gmra.mrb[0].mxu0 %v2523
    %v2868 = vpop.f32.mrb[0].mxu0
    %v2869 = vadd.f32 0.0, %v2868
    %v2870 = vpop.f32.mrb[0].mxu0
    %2871 = vmatprep.mubr.f32.mxu0 0.0
    %2872 = vmatmul.mubr.f32.gmra.mrb[0].mxu0 %v2527
    %v2873 = vpop.f32.mrb[0].mxu0
    %v2874 = vadd.f32 0.0, %v2873
    %v2875 = vpop.f32.mrb[0].mxu0
    %2876 = vmatprep.mubr.f32.mxu0 0.0
    %2877 = vmatmul.mubr.f32.gmra.mrb[0].mxu0 %v2531
    %v2878 = vpop.f32.mrb[0].mxu0
    %v2879 = vadd.f32 0.0, %v2878
    %v2880 = vpop.f32.mrb[0].mxu0
    %2881 = vmatprep.mubr.f32.mxu0 0.0
    %2882 = vmatmul.mubr.f32.gmra.mrb[0].mxu0 %v2535
    %v2883 = vpop.f32.mrb[0].mxu0
    %v2884 = vadd.f32 0.0, %v2883
    %v2885 = vpop.f32.mrb[0].mxu0
    %2886 = vmatprep.mubr.f32.mxu0 0.0
    %2887 = vmatmul.mubr.f32.gmra.mrb[0].mxu0 %v2539
    %v2888 = vpop.f32.mrb[0].mxu0
    %v2889 = vadd.f32 0.0, %v2888
    %v2890 = vpop.f32.mrb[0].mxu0
    %2891 = vmatprep.mubr.f32.mxu0 0.0
    %2892 = vmatmul.mubr.f32.gmra.mrb[0].mxu0 %v2543
    %v2893 = vpop.f32.mrb[0].mxu0
    %v2894 = vadd.f32 0.0, %v2893
    %v2895 = vpop.f32.mrb[0].mxu0
    %2896 = vmatprep.mubr.f32.mxu0 0.0
    %2897 = vmatmul.mubr.f32.gmra.mrb[0].mxu0 %v2547
    %v2898 = vpop.f32.mrb[0].mxu0
    %v2899 = vadd.f32 0.0, %v2898
    %v2900 = vpop.f32.mrb[0].mxu0
    %2901 = vmatprep.mubr.f32.mxu0 0.0
    %2902 = vmatmul.mubr.f32.gmra.mrb[0].mxu0 %v2551
    %v2903 = vpop.f32.mrb[0].mxu0
    %v2904 = vadd.f32 0.0, %v2903
    %v2905 = vpop.f32.mrb[0].mxu0
    %2906 = vmatprep.mubr.f32.mxu0 0.0
    %2907 = vmatmul.mubr.f32.gmra.mrb[0].mxu0 %v2492
    %v2908 = vpop.f32.mrb[0].mxu0
    %v2909 = vadd.f32 0.0, %v2908
    %v2910 = vpop.f32.mrb[0].mxu0
    %2911 = vmatprep.mubr.f32.mxu0 0.0
    %2912 = vmatmul.mubr.f32.gmra.mrb[0].mxu0 %v2496
    %v2913 = vpop.f32.mrb[0].mxu0
    %v2914 = vadd.f32 0.0, %v2913
    %v2915 = vpop.f32.mrb[0].mxu0
    %2916 = vmatprep.mubr.f32.mxu0 0.0
    %2917 = vmatmul.mubr.f32.gmra.mrb[0].mxu0 %v2500
    %v2918 = vpop.f32.mrb[0].mxu0
    %v2919 = vadd.f32 0.0, %v2918
    %v2920 = vpop.f32.mrb[0].mxu0
    %2921 = vmatprep.mubr.f32.mxu0 0.0
    %2922 = vmatmul.mubr.f32.gmra.mrb[0].mxu0 %v2504
    %v2923 = vpop.f32.mrb[0].mxu0
    %v2924 = vadd.f32 0.0, %v2923
    %v2925 = vpop.f32.mrb[0].mxu0
    %2926 = vmatprep.mubr.f32.mxu0 0.0
    %2927 = vmatmul.mubr.f32.gmra.mrb[0].mxu0 %v2508
    %v2928 = vpop.f32.mrb[0].mxu0
    %v2929 = vadd.f32 0.0, %v2928
    %v2930 = vpop.f32.mrb[0].mxu0
    %2931 = vmatprep.mubr.f32.mxu0 0.0
    %2932 = vmatmul.mubr.f32.gmra.mrb[0].mxu0 %v2512
    %v2933 = vpop.f32.mrb[0].mxu0
    %v2934 = vadd.f32 0.0, %v2933
    %v2935 = vpop.f32.mrb[0].mxu0
    %2936 = vmatprep.mubr.f32.mxu0 0.0
    %2937 = vmatmul.mubr.f32.gmra.mrb[0].mxu0 %v2516
    %v2938 = vpop.f32.mrb[0].mxu0
    %v2939 = vadd.f32 0.0, %v2938
    %v2940 = vpop.f32.mrb[0].mxu0
    %2941 = vmatprep.mubr.f32.mxu0 0.0
    %2942 = vmatmul.mubr.f32.gmra.mrb[0].mxu0 %v2520
    %v2943 = vpop.f32.mrb[0].mxu0
    %v2944 = vadd.f32 0.0, %v2943
    %v2945 = vpop.f32.mrb[0].mxu0
    %2946 = vmatprep.mubr.f32.mxu0 0.0
    %2947 = vmatmul.mubr.f32.gmra.mrb[0].mxu0 %v2524
    %v2948 = vpop.f32.mrb[0].mxu0
    %v2949 = vadd.f32 0.0, %v2948
    %v2950 = vpop.f32.mrb[0].mxu0
    %2951 = vmatprep.mubr.f32.mxu0 0.0
    %2952 = vmatmul.mubr.f32.gmra.mrb[0].mxu0 %v2528
    %v2953 = vpop.f32.mrb[0].mxu0
    %v2954 = vadd.f32 0.0, %v2953
    %v2955 = vpop.f32.mrb[0].mxu0
    %2956 = vmatprep.mubr.f32.mxu0 0.0
    %2957 = vmatmul.mubr.f32.gmra.mrb[0].mxu0 %v2532
    %v2958 = vpop.f32.mrb[0].mxu0
    %v2959 = vadd.f32 0.0, %v2958
    %v2960 = vpop.f32.mrb[0].mxu0
    %2961 = vmatprep.mubr.f32.mxu0 0.0
    %2962 = vmatmul.mubr.f32.gmra.mrb[0].mxu0 %v2536
    %v2963 = vpop.f32.mrb[0].mxu0
    %v2964 = vadd.f32 0.0, %v2963
    %v2965 = vpop.f32.mrb[0].mxu0
    %2966 = vmatprep.mubr.f32.mxu0 0.0
    %2967 = vmatmul.mubr.f32.gmra.mrb[0].mxu0 %v2540
    %v2968 = vpop.f32.mrb[0].mxu0
    %v2969 = vadd.f32 0.0, %v2968
    %v2970 = vpop.f32.mrb[0].mxu0
    %2971 = vmatprep.mubr.f32.mxu0 0.0
    %2972 = vmatmul.mubr.f32.gmra.mrb[0].mxu0 %v2544
    %v2973 = vpop.f32.mrb[0].mxu0
    %v2974 = vadd.f32 0.0, %v2973
    %v2975 = vpop.f32.mrb[0].mxu0
    %2976 = vmatprep.mubr.f32.mxu0 0.0
    %2977 = vmatmul.mubr.f32.gmra.mrb[0].mxu0 %v2548
    %v2978 = vpop.f32.mrb[0].mxu0
    %v2979 = vadd.f32 0.0, %v2978
    %v2980 = vpop.f32.mrb[0].mxu0
    %2981 = vmatprep.mubr.f32.mxu0 0.0
    %2982 = vmatmul.mubr.f32.gmra.mrb[0].mxu0 %v2552
    %v2983 = vpop.f32.mrb[0].mxu0
    %v2984 = vadd.f32 0.0, %v2983
    %v2985 = vpop.f32.mrb[0].mxu0
    %2986 = vmatprep.mubr.f32.mxu0 0.0
    %2987 = vmatmul.mubr.f32.gmra.mrb[0].mxu0 %v2493
    %v2988 = vpop.f32.mrb[0].mxu0
    %v2989 = vadd.f32 0.0, %v2988
    %v2990 = vpop.f32.mrb[0].mxu0
    %2991 = vmatprep.mubr.f32.mxu0 0.0
    %2992 = vmatmul.mubr.f32.gmra.mrb[0].mxu0 %v2497
    %v2993 = vpop.f32.mrb[0].mxu0
    %v2994 = vadd.f32 0.0, %v2993
    %v2995 = vpop.f32.mrb[0].mxu0
    %2996 = vmatprep.mubr.f32.mxu0 0.0
    %2997 = vmatmul.mubr.f32.gmra.mrb[0].mxu0 %v2501
    %v2998 = vpop.f32.mrb[0].mxu0
    %v2999 = vadd.f32 0.0, %v2998
    %v3000 = vpop.f32.mrb[0].mxu0
    %3001 = vmatprep.mubr.f32.mxu0 0.0
    %3002 = vmatmul.mubr.f32.gmra.mrb[0].mxu0 %v2505
    %v3003 = vpop.f32.mrb[0].mxu0
    %v3004 = vadd.f32 0.0, %v3003
    %v3005 = vpop.f32.mrb[0].mxu0
    %3006 = vmatprep.mubr.f32.mxu0 0.0
    %3007 = vmatmul.mubr.f32.gmra.mrb[0].mxu0 %v2509
    %v3008 = vpop.f32.mrb[0].mxu0
    %v3009 = vadd.f32 0.0, %v3008
    %v3010 = vpop.f32.mrb[0].mxu0
    %3011 = vmatprep.mubr.f32.mxu0 0.0
    %3012 = vmatmul.mubr.f32.gmra.mrb[0].mxu0 %v2513
    %v3013 = vpop.f32.mrb[0].mxu0
    %v3014 = vadd.f32 0.0, %v3013
    %v3015 = vpop.f32.mrb[0].mxu0
    %3016 = vmatprep.mubr.f32.mxu0 0.0
    %3017 = vmatmul.mubr.f32.gmra.mrb[0].mxu0 %v2517
    %v3018 = vpop.f32.mrb[0].mxu0
    %v3019 = vadd.f32 0.0, %v3018
    %v3020 = vpop.f32.mrb[0].mxu0
    %3021 = vmatprep.mubr.f32.mxu0 0.0
    %3022 = vmatmul.mubr.f32.gmra.mrb[0].mxu0 %v2521
    %v3023 = vpop.f32.mrb[0].mxu0
    %v3024 = vadd.f32 0.0, %v3023
    %v3025 = vpop.f32.mrb[0].mxu0
    %3026 = vmatprep.mubr.f32.mxu0 0.0
    %3027 = vmatmul.mubr.f32.gmra.mrb[0].mxu0 %v2525
    %v3028 = vpop.f32.mrb[0].mxu0
    %v3029 = vadd.f32 0.0, %v3028
    %v3030 = vpop.f32.mrb[0].mxu0
    %3031 = vmatprep.mubr.f32.mxu0 0.0
    %3032 = vmatmul.mubr.f32.gmra.mrb[0].mxu0 %v2529
    %v3033 = vpop.f32.mrb[0].mxu0
    %v3034 = vadd.f32 0.0, %v3033
    %v3035 = vpop.f32.mrb[0].mxu0
    %3036 = vmatprep.mubr.f32.mxu0 0.0
    %3037 = vmatmul.mubr.f32.gmra.mrb[0].mxu0 %v2533
    %v3038 = vpop.f32.mrb[0].mxu0
    %v3039 = vadd.f32 0.0, %v3038
    %v3040 = vpop.f32.mrb[0].mxu0
    %3041 = vmatprep.mubr.f32.mxu0 0.0
    %3042 = vmatmul.mubr.f32.gmra.mrb[0].mxu0 %v2537
    %v3043 = vpop.f32.mrb[0].mxu0
    %v3044 = vadd.f32 0.0, %v3043
    %v3045 = vpop.f32.mrb[0].mxu0
    %3046 = vmatprep.mubr.f32.mxu0 0.0
    %3047 = vmatmul.mubr.f32.gmra.mrb[0].mxu0 %v2541
    %v3048 = vpop.f32.mrb[0].mxu0
    %v3049 = vadd.f32 0.0, %v3048
    %v3050 = vpop.f32.mrb[0].mxu0
    %3051 = vmatprep.mubr.f32.mxu0 0.0
    %3052 = vmatmul.mubr.f32.gmra.mrb[0].mxu0 %v2545
    %v3053 = vpop.f32.mrb[0].mxu0
    %v3054 = vadd.f32 0.0, %v3053
    %v3055 = vpop.f32.mrb[0].mxu0
    %3056 = vmatprep.mubr.f32.mxu0 0.0
    %3057 = vmatmul.mubr.f32.gmra.mrb[0].mxu0 %v2549
    %v3058 = vpop.f32.mrb[0].mxu0
    %v3059 = vadd.f32 0.0, %v3058
    %v3060 = vpop.f32.mrb[0].mxu0
    %3061 = vmatprep.mubr.f32.mxu0 0.0
    %3062 = vmatmul.mubr.f32.gmra.mrb[0].mxu0 %v2553
    %v3063 = vpop.f32.mrb[0].mxu0
    %v3064 = vadd.f32 0.0, %v3063
    %v3065 = vpop.f32.mrb[0].mxu0
    %3066 = vdwg.mxu0
    %3067 = vmatprep.subr.mxu0 0.0
    %3068 = vmatpush1.msra.mxu0 %v1428
    %3069 = vmatprep.subr.mxu0 0.0
    %3070 = vmatpush1.msra.mxu0 %v1429
    %3071 = vmatprep.subr.mxu0 0.0
    %3072 = vmatpush1.msra.mxu0 %v1430
    %3073 = vmatprep.subr.mxu0 0.0
    %3074 = vmatpush1.msra.mxu0 %v1431
    %3075 = vmatprep.subr.mxu0 0.0
    %3076 = vmatpush1.msra.mxu0 %v1432
    %3077 = vmatprep.subr.mxu0 0.0
    %3078 = vmatpush1.msra.mxu0 %v1433
    %3079 = vmatprep.subr.mxu0 0.0
    %3080 = vmatpush1.msra.mxu0 %v1434
    %3081 = vmatprep.subr.mxu0 0.0
    %3082 = vmatpush1.msra.mxu0 %v1435
    %3083 = vmatprep.subr.mxu0 0.0
    %3084 = vmatpush1.msra.mxu0 %v1436
    %3085 = vmatprep.subr.mxu0 0.0
    %3086 = vmatpush1.msra.mxu0 %v1437
    %3087 = vmatprep.subr.mxu0 0.0
    %3088 = vmatpush1.msra.mxu0 %v1438
    %3089 = vmatprep.subr.mxu0 0.0
    %3090 = vmatpush1.msra.mxu0 %v1439
    %3091 = vmatprep.subr.mxu0 0.0
    %3092 = vmatpush1.msra.mxu0 %v1440
    %3093 = vmatprep.subr.mxu0 0.0
    %3094 = vmatpush1.msra.mxu0 %v1441
    %3095 = vmatprep.subr.mxu0 0.0
    %3096 = vmatpush1.msra.mxu0 %v1442
    %3097 = vmatprep.subr.mxu0 0.0
    %3098 = vmatpush1.msra.mxu0 %v1443
    %3099 = vmatprep.subr.mxu0 0.0
    %3100 = vmatpush1.msra.mxu0 0.0
    %3101 = vmatprep.subr.mxu0 0.0
    %3102 = vmatpush1.msra.mxu0 0.0
    %3103 = vmatprep.subr.mxu0 0.0
    %3104 = vmatpush1.msra.mxu0 0.0
    %3105 = vmatprep.subr.mxu0 0.0
    %3106 = vmatpush1.msra.mxu0 0.0
    %3107 = vmatprep.subr.mxu0 0.0
    %3108 = vmatpush1.msra.mxu0 0.0
    %3109 = vmatprep.subr.mxu0 0.0
    %3110 = vmatpush1.msra.mxu0 0.0
    %3111 = vmatprep.subr.mxu0 0.0
    %3112 = vmatpush1.msra.mxu0 0.0
    %3113 = vmatprep.subr.mxu0 0.0
    %3114 = vmatpush1.msra.mxu0 0.0
    %3115 = vmatprep.subr.mxu0 0.0
    %3116 = vmatpush1.msra.mxu0 0.0
    %3117 = vmatprep.subr.mxu0 0.0
    %3118 = vmatpush1.msra.mxu0 0.0
    %3119 = vmatprep.subr.mxu0 0.0
    %3120 = vmatpush1.msra.mxu0 0.0
    %3121 = vmatprep.subr.mxu0 0.0
    %3122 = vmatpush1.msra.mxu0 0.0
    %3123 = vmatprep.subr.mxu0 0.0
    %3124 = vmatpush1.msra.mxu0 0.0
    %3125 = vmatprep.subr.mxu0 0.0
    %3126 = vmatpush1.msra.mxu0 0.0
    %3127 = vmatprep.subr.mxu0 0.0
    %3128 = vmatpush1.msra.mxu0 0.0
    %3129 = vmatprep.subr.mxu0 0.0
    %3130 = vmatpush1.msra.mxu0 0.0
    %3131 = vmatprep.mubr.f32.mxu0 0.0
    %3132 = vmatmul.mubr.f32.gmra.mrb[0].mxu0 %v2618
    %v3133 = vpop.f32.mrb[0].mxu0
    %v3134 = vadd.f32 0.0, %v3133
    %v3135 = vpop.f32.mrb[0].mxu0
    %3136 = vmatprep.mubr.f32.mxu0 0.0
    %3137 = vmatmul.mubr.f32.gmra.mrb[0].mxu0 %v2622
    %v3138 = vpop.f32.mrb[0].mxu0
    %v3139 = vadd.f32 0.0, %v3138
    %v3140 = vpop.f32.mrb[0].mxu0
    %3141 = vmatprep.mubr.f32.mxu0 0.0
    %3142 = vmatmul.mubr.f32.gmra.mrb[0].mxu0 %v2626
    %v3143 = vpop.f32.mrb[0].mxu0
    %v3144 = vadd.f32 0.0, %v3143
    %v3145 = vpop.f32.mrb[0].mxu0
    %3146 = vmatprep.mubr.f32.mxu0 0.0
    %3147 = vmatmul.mubr.f32.gmra.mrb[0].mxu0 %v2630
    %v3148 = vpop.f32.mrb[0].mxu0
    %v3149 = vadd.f32 0.0, %v3148
    %v3150 = vpop.f32.mrb[0].mxu0
    %3151 = vmatprep.mubr.f32.mxu0 0.0
    %3152 = vmatmul.mubr.f32.gmra.mrb[0].mxu0 %v2634
    %v3153 = vpop.f32.mrb[0].mxu0
    %v3154 = vadd.f32 0.0, %v3153
    %v3155 = vpop.f32.mrb[0].mxu0
    %3156 = vmatprep.mubr.f32.mxu0 0.0
    %3157 = vmatmul.mubr.f32.gmra.mrb[0].mxu0 %v2638
    %v3158 = vpop.f32.mrb[0].mxu0
    %v3159 = vadd.f32 0.0, %v3158
    %v3160 = vpop.f32.mrb[0].mxu0
    %3161 = vmatprep.mubr.f32.mxu0 0.0
    %3162 = vmatmul.mubr.f32.gmra.mrb[0].mxu0 %v2642
    %v3163 = vpop.f32.mrb[0].mxu0
    %v3164 = vadd.f32 0.0, %v3163
    %v3165 = vpop.f32.mrb[0].mxu0
    %3166 = vmatprep.mubr.f32.mxu0 0.0
    %3167 = vmatmul.mubr.f32.gmra.mrb[0].mxu0 %v2646
    %v3168 = vpop.f32.mrb[0].mxu0
    %v3169 = vadd.f32 0.0, %v3168
    %v3170 = vpop.f32.mrb[0].mxu0
    %3171 = vmatprep.mubr.f32.mxu0 0.0
    %3172 = vmatmul.mubr.f32.gmra.mrb[0].mxu0 %v2650
    %v3173 = vpop.f32.mrb[0].mxu0
    %v3174 = vadd.f32 0.0, %v3173
    %v3175 = vpop.f32.mrb[0].mxu0
    %3176 = vmatprep.mubr.f32.mxu0 0.0
    %3177 = vmatmul.mubr.f32.gmra.mrb[0].mxu0 %v2654
    %v3178 = vpop.f32.mrb[0].mxu0
    %v3179 = vadd.f32 0.0, %v3178
    %v3180 = vpop.f32.mrb[0].mxu0
    %3181 = vmatprep.mubr.f32.mxu0 0.0
    %3182 = vmatmul.mubr.f32.gmra.mrb[0].mxu0 %v2658
    %v3183 = vpop.f32.mrb[0].mxu0
    %v3184 = vadd.f32 0.0, %v3183
    %v3185 = vpop.f32.mrb[0].mxu0
    %3186 = vmatprep.mubr.f32.mxu0 0.0
    %3187 = vmatmul.mubr.f32.gmra.mrb[0].mxu0 %v2662
    %v3188 = vpop.f32.mrb[0].mxu0
    %v3189 = vadd.f32 0.0, %v3188
    %v3190 = vpop.f32.mrb[0].mxu0
    %3191 = vmatprep.mubr.f32.mxu0 0.0
    %3192 = vmatmul.mubr.f32.gmra.mrb[0].mxu0 %v2666
    %v3193 = vpop.f32.mrb[0].mxu0
    %v3194 = vadd.f32 0.0, %v3193
    %v3195 = vpop.f32.mrb[0].mxu0
    %3196 = vmatprep.mubr.f32.mxu0 0.0
    %3197 = vmatmul.mubr.f32.gmra.mrb[0].mxu0 %v2670
    %v3198 = vpop.f32.mrb[0].mxu0
    %v3199 = vadd.f32 0.0, %v3198
    %v3200 = vpop.f32.mrb[0].mxu0
    %3201 = vmatprep.mubr.f32.mxu0 0.0
    %3202 = vmatmul.mubr.f32.gmra.mrb[0].mxu0 %v2674
    %v3203 = vpop.f32.mrb[0].mxu0
    %v3204 = vadd.f32 0.0, %v3203
    %v3205 = vpop.f32.mrb[0].mxu0
    %3206 = vmatprep.mubr.f32.mxu0 0.0
    %3207 = vmatmul.mubr.f32.gmra.mrb[0].mxu0 %v2678
    %v3208 = vpop.f32.mrb[0].mxu0
    %v3209 = vadd.f32 0.0, %v3208
    %v3210 = vpop.f32.mrb[0].mxu0
    %3211 = vmatprep.mubr.f32.mxu0 0.0
    %3212 = vmatmul.mubr.f32.gmra.mrb[0].mxu0 %v2619
    %v3213 = vpop.f32.mrb[0].mxu0
    %v3214 = vadd.f32 0.0, %v3213
    %v3215 = vpop.f32.mrb[0].mxu0
    %3216 = vmatprep.mubr.f32.mxu0 0.0
    %3217 = vmatmul.mubr.f32.gmra.mrb[0].mxu0 %v2623
    %v3218 = vpop.f32.mrb[0].mxu0
    %v3219 = vadd.f32 0.0, %v3218
    %v3220 = vpop.f32.mrb[0].mxu0
    %3221 = vmatprep.mubr.f32.mxu0 0.0
    %3222 = vmatmul.mubr.f32.gmra.mrb[0].mxu0 %v2627
    %v3223 = vpop.f32.mrb[0].mxu0
    %v3224 = vadd.f32 0.0, %v3223
    %v3225 = vpop.f32.mrb[0].mxu0
    %3226 = vmatprep.mubr.f32.mxu0 0.0
    %3227 = vmatmul.mubr.f32.gmra.mrb[0].mxu0 %v2631
    %v3228 = vpop.f32.mrb[0].mxu0
    %v3229 = vadd.f32 0.0, %v3228
    %v3230 = vpop.f32.mrb[0].mxu0
    %3231 = vmatprep.mubr.f32.mxu0 0.0
    %3232 = vmatmul.mubr.f32.gmra.mrb[0].mxu0 %v2635
    %v3233 = vpop.f32.mrb[0].mxu0
    %v3234 = vadd.f32 0.0, %v3233
    %v3235 = vpop.f32.mrb[0].mxu0
    %3236 = vmatprep.mubr.f32.mxu0 0.0
    %3237 = vmatmul.mubr.f32.gmra.mrb[0].mxu0 %v2639
    %v3238 = vpop.f32.mrb[0].mxu0
    %v3239 = vadd.f32 0.0, %v3238
    %v3240 = vpop.f32.mrb[0].mxu0
    %3241 = vmatprep.mubr.f32.mxu0 0.0
    %3242 = vmatmul.mubr.f32.gmra.mrb[0].mxu0 %v2643
    %v3243 = vpop.f32.mrb[0].mxu0
    %v3244 = vadd.f32 0.0, %v3243
    %v3245 = vpop.f32.mrb[0].mxu0
    %3246 = vmatprep.mubr.f32.mxu0 0.0
    %3247 = vmatmul.mubr.f32.gmra.mrb[0].mxu0 %v2647
    %v3248 = vpop.f32.mrb[0].mxu0
    %v3249 = vadd.f32 0.0, %v3248
    %v3250 = vpop.f32.mrb[0].mxu0
    %3251 = vmatprep.mubr.f32.mxu0 0.0
    %3252 = vmatmul.mubr.f32.gmra.mrb[0].mxu0 %v2651
    %v3253 = vpop.f32.mrb[0].mxu0
    %v3254 = vadd.f32 0.0, %v3253
    %v3255 = vpop.f32.mrb[0].mxu0
    %3256 = vmatprep.mubr.f32.mxu0 0.0
    %3257 = vmatmul.mubr.f32.gmra.mrb[0].mxu0 %v2655
    %v3258 = vpop.f32.mrb[0].mxu0
    %v3259 = vadd.f32 0.0, %v3258
    %v3260 = vpop.f32.mrb[0].mxu0
    %3261 = vmatprep.mubr.f32.mxu0 0.0
    %3262 = vmatmul.mubr.f32.gmra.mrb[0].mxu0 %v2659
    %v3263 = vpop.f32.mrb[0].mxu0
    %v3264 = vadd.f32 0.0, %v3263
    %v3265 = vpop.f32.mrb[0].mxu0
    %3266 = vmatprep.mubr.f32.mxu0 0.0
    %3267 = vmatmul.mubr.f32.gmra.mrb[0].mxu0 %v2663
    %v3268 = vpop.f32.mrb[0].mxu0
    %v3269 = vadd.f32 0.0, %v3268
    %v3270 = vpop.f32.mrb[0].mxu0
    %3271 = vmatprep.mubr.f32.mxu0 0.0
    %3272 = vmatmul.mubr.f32.gmra.mrb[0].mxu0 %v2667
    %v3273 = vpop.f32.mrb[0].mxu0
    %v3274 = vadd.f32 0.0, %v3273
    %v3275 = vpop.f32.mrb[0].mxu0
    %3276 = vmatprep.mubr.f32.mxu0 0.0
    %3277 = vmatmul.mubr.f32.gmra.mrb[0].mxu0 %v2671
    %v3278 = vpop.f32.mrb[0].mxu0
    %v3279 = vadd.f32 0.0, %v3278
    %v3280 = vpop.f32.mrb[0].mxu0
    %3281 = vmatprep.mubr.f32.mxu0 0.0
    %3282 = vmatmul.mubr.f32.gmra.mrb[0].mxu0 %v2675
    %v3283 = vpop.f32.mrb[0].mxu0
    %v3284 = vadd.f32 0.0, %v3283
    %v3285 = vpop.f32.mrb[0].mxu0
    %3286 = vmatprep.mubr.f32.mxu0 0.0
    %3287 = vmatmul.mubr.f32.gmra.mrb[0].mxu0 %v2679
    %v3288 = vpop.f32.mrb[0].mxu0
    %v3289 = vadd.f32 0.0, %v3288
    %v3290 = vpop.f32.mrb[0].mxu0
    %3291 = vmatprep.mubr.f32.mxu0 0.0
    %3292 = vmatmul.mubr.f32.gmra.mrb[0].mxu0 %v2620
    %v3293 = vpop.f32.mrb[0].mxu0
    %v3294 = vadd.f32 0.0, %v3293
    %v3295 = vpop.f32.mrb[0].mxu0
    %3296 = vmatprep.mubr.f32.mxu0 0.0
    %3297 = vmatmul.mubr.f32.gmra.mrb[0].mxu0 %v2624
    %v3298 = vpop.f32.mrb[0].mxu0
    %v3299 = vadd.f32 0.0, %v3298
    %v3300 = vpop.f32.mrb[0].mxu0
    %3301 = vmatprep.mubr.f32.mxu0 0.0
    %3302 = vmatmul.mubr.f32.gmra.mrb[0].mxu0 %v2628
    %v3303 = vpop.f32.mrb[0].mxu0
    %v3304 = vadd.f32 0.0, %v3303
    %v3305 = vpop.f32.mrb[0].mxu0
    %3306 = vmatprep.mubr.f32.mxu0 0.0
    %3307 = vmatmul.mubr.f32.gmra.mrb[0].mxu0 %v2632
    %v3308 = vpop.f32.mrb[0].mxu0
    %v3309 = vadd.f32 0.0, %v3308
    %v3310 = vpop.f32.mrb[0].mxu0
    %3311 = vmatprep.mubr.f32.mxu0 0.0
    %3312 = vmatmul.mubr.f32.gmra.mrb[0].mxu0 %v2636
    %v3313 = vpop.f32.mrb[0].mxu0
    %v3314 = vadd.f32 0.0, %v3313
    %v3315 = vpop.f32.mrb[0].mxu0
    %3316 = vmatprep.mubr.f32.mxu0 0.0
    %3317 = vmatmul.mubr.f32.gmra.mrb[0].mxu0 %v2640
    %v3318 = vpop.f32.mrb[0].mxu0
    %v3319 = vadd.f32 0.0, %v3318
    %v3320 = vpop.f32.mrb[0].mxu0
    %3321 = vmatprep.mubr.f32.mxu0 0.0
    %3322 = vmatmul.mubr.f32.gmra.mrb[0].mxu0 %v2644
    %v3323 = vpop.f32.mrb[0].mxu0
    %v3324 = vadd.f32 0.0, %v3323
    %v3325 = vpop.f32.mrb[0].mxu0
    %3326 = vmatprep.mubr.f32.mxu0 0.0
    %3327 = vmatmul.mubr.f32.gmra.mrb[0].mxu0 %v2648
    %v3328 = vpop.f32.mrb[0].mxu0
    %v3329 = vadd.f32 0.0, %v3328
    %v3330 = vpop.f32.mrb[0].mxu0
    %3331 = vmatprep.mubr.f32.mxu0 0.0
    %3332 = vmatmul.mubr.f32.gmra.mrb[0].mxu0 %v2652
    %v3333 = vpop.f32.mrb[0].mxu0
    %v3334 = vadd.f32 0.0, %v3333
    %v3335 = vpop.f32.mrb[0].mxu0
    %3336 = vmatprep.mubr.f32.mxu0 0.0
    %3337 = vmatmul.mubr.f32.gmra.mrb[0].mxu0 %v2656
    %v3338 = vpop.f32.mrb[0].mxu0
    %v3339 = vadd.f32 0.0, %v3338
    %v3340 = vpop.f32.mrb[0].mxu0
    %3341 = vmatprep.mubr.f32.mxu0 0.0
    %3342 = vmatmul.mubr.f32.gmra.mrb[0].mxu0 %v2660
    %v3343 = vpop.f32.mrb[0].mxu0
    %v3344 = vadd.f32 0.0, %v3343
    %v3345 = vpop.f32.mrb[0].mxu0
    %3346 = vmatprep.mubr.f32.mxu0 0.0
    %3347 = vmatmul.mubr.f32.gmra.mrb[0].mxu0 %v2664
    %v3348 = vpop.f32.mrb[0].mxu0
    %v3349 = vadd.f32 0.0, %v3348
    %v3350 = vpop.f32.mrb[0].mxu0
    %3351 = vmatprep.mubr.f32.mxu0 0.0
    %3352 = vmatmul.mubr.f32.gmra.mrb[0].mxu0 %v2668
    %v3353 = vpop.f32.mrb[0].mxu0
    %v3354 = vadd.f32 0.0, %v3353
    %v3355 = vpop.f32.mrb[0].mxu0
    %3356 = vmatprep.mubr.f32.mxu0 0.0
    %3357 = vmatmul.mubr.f32.gmra.mrb[0].mxu0 %v2672
    %v3358 = vpop.f32.mrb[0].mxu0
    %v3359 = vadd.f32 0.0, %v3358
    %v3360 = vpop.f32.mrb[0].mxu0
    %3361 = vmatprep.mubr.f32.mxu0 0.0
    %3362 = vmatmul.mubr.f32.gmra.mrb[0].mxu0 %v2676
    %v3363 = vpop.f32.mrb[0].mxu0
    %v3364 = vadd.f32 0.0, %v3363
    %v3365 = vpop.f32.mrb[0].mxu0
    %3366 = vmatprep.mubr.f32.mxu0 0.0
    %3367 = vmatmul.mubr.f32.gmra.mrb[0].mxu0 %v2680
    %v3368 = vpop.f32.mrb[0].mxu0
    %v3369 = vadd.f32 0.0, %v3368
    %v3370 = vpop.f32.mrb[0].mxu0
    %3371 = vmatprep.mubr.f32.mxu0 0.0
    %3372 = vmatmul.mubr.f32.gmra.mrb[0].mxu0 %v2621
    %v3373 = vpop.f32.mrb[0].mxu0
    %v3374 = vadd.f32 0.0, %v3373
    %v3375 = vpop.f32.mrb[0].mxu0
    %3376 = vmatprep.mubr.f32.mxu0 0.0
    %3377 = vmatmul.mubr.f32.gmra.mrb[0].mxu0 %v2625
    %v3378 = vpop.f32.mrb[0].mxu0
    %v3379 = vadd.f32 0.0, %v3378
    %v3380 = vpop.f32.mrb[0].mxu0
    %3381 = vmatprep.mubr.f32.mxu0 0.0
    %3382 = vmatmul.mubr.f32.gmra.mrb[0].mxu0 %v2629
    %v3383 = vpop.f32.mrb[0].mxu0
    %v3384 = vadd.f32 0.0, %v3383
    %v3385 = vpop.f32.mrb[0].mxu0
    %3386 = vmatprep.mubr.f32.mxu0 0.0
    %3387 = vmatmul.mubr.f32.gmra.mrb[0].mxu0 %v2633
    %v3388 = vpop.f32.mrb[0].mxu0
    %v3389 = vadd.f32 0.0, %v3388
    %v3390 = vpop.f32.mrb[0].mxu0
    %3391 = vmatprep.mubr.f32.mxu0 0.0
    %3392 = vmatmul.mubr.f32.gmra.mrb[0].mxu0 %v2637
    %v3393 = vpop.f32.mrb[0].mxu0
    %v3394 = vadd.f32 0.0, %v3393
    %v3395 = vpop.f32.mrb[0].mxu0
    %3396 = vmatprep.mubr.f32.mxu0 0.0
    %3397 = vmatmul.mubr.f32.gmra.mrb[0].mxu0 %v2641
    %v3398 = vpop.f32.mrb[0].mxu0
    %v3399 = vadd.f32 0.0, %v3398
    %v3400 = vpop.f32.mrb[0].mxu0
    %3401 = vmatprep.mubr.f32.mxu0 0.0
    %3402 = vmatmul.mubr.f32.gmra.mrb[0].mxu0 %v2645
    %v3403 = vpop.f32.mrb[0].mxu0
    %v3404 = vadd.f32 0.0, %v3403
    %v3405 = vpop.f32.mrb[0].mxu0
    %3406 = vmatprep.mubr.f32.mxu0 0.0
    %3407 = vmatmul.mubr.f32.gmra.mrb[0].mxu0 %v2649
    %v3408 = vpop.f32.mrb[0].mxu0
    %v3409 = vadd.f32 0.0, %v3408
    %v3410 = vpop.f32.mrb[0].mxu0
    %3411 = vmatprep.mubr.f32.mxu0 0.0
    %3412 = vmatmul.mubr.f32.gmra.mrb[0].mxu0 %v2653
    %v3413 = vpop.f32.mrb[0].mxu0
    %v3414 = vadd.f32 0.0, %v3413
    %v3415 = vpop.f32.mrb[0].mxu0
    %3416 = vmatprep.mubr.f32.mxu0 0.0
    %3417 = vmatmul.mubr.f32.gmra.mrb[0].mxu0 %v2657
    %v3418 = vpop.f32.mrb[0].mxu0
    %v3419 = vadd.f32 0.0, %v3418
    %v3420 = vpop.f32.mrb[0].mxu0
    %3421 = vmatprep.mubr.f32.mxu0 0.0
    %3422 = vmatmul.mubr.f32.gmra.mrb[0].mxu0 %v2661
    %v3423 = vpop.f32.mrb[0].mxu0
    %v3424 = vadd.f32 0.0, %v3423
    %v3425 = vpop.f32.mrb[0].mxu0
    %3426 = vmatprep.mubr.f32.mxu0 0.0
    %3427 = vmatmul.mubr.f32.gmra.mrb[0].mxu0 %v2665
    %v3428 = vpop.f32.mrb[0].mxu0
    %v3429 = vadd.f32 0.0, %v3428
    %v3430 = vpop.f32.mrb[0].mxu0
    %3431 = vmatprep.mubr.f32.mxu0 0.0
    %3432 = vmatmul.mubr.f32.gmra.mrb[0].mxu0 %v2669
    %v3433 = vpop.f32.mrb[0].mxu0
    %v3434 = vadd.f32 0.0, %v3433
    %v3435 = vpop.f32.mrb[0].mxu0
    %3436 = vmatprep.mubr.f32.mxu0 0.0
    %3437 = vmatmul.mubr.f32.gmra.mrb[0].mxu0 %v2673
    %v3438 = vpop.f32.mrb[0].mxu0
    %v3439 = vadd.f32 0.0, %v3438
    %v3440 = vpop.f32.mrb[0].mxu0
    %3441 = vmatprep.mubr.f32.mxu0 0.0
    %3442 = vmatmul.mubr.f32.gmra.mrb[0].mxu0 %v2677
    %v3443 = vpop.f32.mrb[0].mxu0
    %v3444 = vadd.f32 0.0, %v3443
    %v3445 = vpop.f32.mrb[0].mxu0
    %3446 = vmatprep.mubr.f32.mxu0 0.0
    %3447 = vmatmul.mubr.f32.gmra.mrb[0].mxu0 %v2681
    %v3448 = vpop.f32.mrb[0].mxu0
    %v3449 = vadd.f32 0.0, %v3448
    %v3450 = vpop.f32.mrb[0].mxu0
    %3451 = vdwg.mxu0
    %v3452 = vadd.f32 %v2490, %v2618
    %v3453 = vadd.f32 %v2494, %v2622
    %v3454 = vadd.f32 %v2498, %v2626
    %v3455 = vadd.f32 %v2502, %v2630
    %v3456 = vadd.f32 %v2506, %v2634
    %v3457 = vadd.f32 %v2510, %v2638
    %v3458 = vadd.f32 %v2514, %v2642
    %v3459 = vadd.f32 %v2518, %v2646
    %v3460 = vadd.f32 %v2522, %v2650
    %v3461 = vadd.f32 %v2526, %v2654
    %v3462 = vadd.f32 %v2530, %v2658
    %v3463 = vadd.f32 %v2534, %v2662
    %v3464 = vadd.f32 %v2538, %v2666
    %v3465 = vadd.f32 %v2542, %v2670
    %v3466 = vadd.f32 %v2546, %v2674
    %v3467 = vadd.f32 %v2550, %v2678
    %v3468 = vadd.f32 %v2491, %v2619
    %v3469 = vadd.f32 %v2495, %v2623
    %v3470 = vadd.f32 %v2499, %v2627
    %v3471 = vadd.f32 %v2503, %v2631
    %v3472 = vadd.f32 %v2507, %v2635
    %v3473 = vadd.f32 %v2511, %v2639
    %v3474 = vadd.f32 %v2515, %v2643
    %v3475 = vadd.f32 %v2519, %v2647
    %v3476 = vadd.f32 %v2523, %v2651
    %v3477 = vadd.f32 %v2527, %v2655
    %v3478 = vadd.f32 %v2531, %v2659
    %v3479 = vadd.f32 %v2535, %v2663
    %v3480 = vadd.f32 %v2539, %v2667
    %v3481 = vadd.f32 %v2543, %v2671
    %v3482 = vadd.f32 %v2547, %v2675
    %v3483 = vadd.f32 %v2551, %v2679
    %v3484 = vadd.f32 %v2492, %v2620
    %v3485 = vadd.f32 %v2496, %v2624
    %v3486 = vadd.f32 %v2500, %v2628
    %v3487 = vadd.f32 %v2504, %v2632
    %v3488 = vadd.f32 %v2508, %v2636
    %v3489 = vadd.f32 %v2512, %v2640
    %v3490 = vadd.f32 %v2516, %v2644
    %v3491 = vadd.f32 %v2520, %v2648
    %v3492 = vadd.f32 %v2524, %v2652
    %v3493 = vadd.f32 %v2528, %v2656
    %v3494 = vadd.f32 %v2532, %v2660
    %v3495 = vadd.f32 %v2536, %v2664
    %v3496 = vadd.f32 %v2540, %v2668
    %v3497 = vadd.f32 %v2544, %v2672
    %v3498 = vadd.f32 %v2548, %v2676
    %v3499 = vadd.f32 %v2552, %v2680
    %v3500 = vadd.f32 %v2493, %v2621
    %v3501 = vadd.f32 %v2497, %v2625
    %v3502 = vadd.f32 %v2501, %v2629
    %v3503 = vadd.f32 %v2505, %v2633
    %v3504 = vadd.f32 %v2509, %v2637
    %v3505 = vadd.f32 %v2513, %v2641
    %v3506 = vadd.f32 %v2517, %v2645
    %v3507 = vadd.f32 %v2521, %v2649
    %v3508 = vadd.f32 %v2525, %v2653
    %v3509 = vadd.f32 %v2529, %v2657
    %v3510 = vadd.f32 %v2533, %v2661
    %v3511 = vadd.f32 %v2537, %v2665
    %v3512 = vadd.f32 %v2541, %v2669
    %v3513 = vadd.f32 %v2545, %v2673
    %v3514 = vadd.f32 %v2549, %v2677
    %v3515 = vadd.f32 %v2553, %v2681
    %v3516 = vadd.f32 %v1412, %v1428
    %v3517 = vadd.f32 %v1413, %v1429
    %v3518 = vadd.f32 %v1414, %v1430
    %v3519 = vadd.f32 %v1415, %v1431
    %v3520 = vadd.f32 %v1416, %v1432
    %v3521 = vadd.f32 %v1417, %v1433
    %v3522 = vadd.f32 %v1418, %v1434
    %v3523 = vadd.f32 %v1419, %v1435
    %v3524 = vadd.f32 %v1420, %v1436
    %v3525 = vadd.f32 %v1421, %v1437
    %v3526 = vadd.f32 %v1422, %v1438
    %v3527 = vadd.f32 %v1423, %v1439
    %v3528 = vadd.f32 %v1424, %v1440
    %v3529 = vadd.f32 %v1425, %v1441
    %v3530 = vadd.f32 %v1426, %v1442
    %v3531 = vadd.f32 %v1427, %v1443
    %3532 = vmatprep.subr.mxu0 0.0
    %3533 = vmatpush1.msra.mxu0 %v3516
    %3534 = vmatprep.subr.mxu0 0.0
    %3535 = vmatpush1.msra.mxu0 %v3517
    %3536 = vmatprep.subr.mxu0 0.0
    %3537 = vmatpush1.msra.mxu0 %v3518
    %3538 = vmatprep.subr.mxu0 0.0
    %3539 = vmatpush1.msra.mxu0 %v3519
    %3540 = vmatprep.subr.mxu0 0.0
    %3541 = vmatpush1.msra.mxu0 %v3520
    %3542 = vmatprep.subr.mxu0 0.0
    %3543 = vmatpush1.msra.mxu0 %v3521
    %3544 = vmatprep.subr.mxu0 0.0
    %3545 = vmatpush1.msra.mxu0 %v3522
    %3546 = vmatprep.subr.mxu0 0.0
    %3547 = vmatpush1.msra.mxu0 %v3523
    %3548 = vmatprep.subr.mxu0 0.0
    %3549 = vmatpush1.msra.mxu0 %v3524
    %3550 = vmatprep.subr.mxu0 0.0
    %3551 = vmatpush1.msra.mxu0 %v3525
    %3552 = vmatprep.subr.mxu0 0.0
    %3553 = vmatpush1.msra.mxu0 %v3526
    %3554 = vmatprep.subr.mxu0 0.0
    %3555 = vmatpush1.msra.mxu0 %v3527
    %3556 = vmatprep.subr.mxu0 0.0
    %3557 = vmatpush1.msra.mxu0 %v3528
    %3558 = vmatprep.subr.mxu0 0.0
    %3559 = vmatpush1.msra.mxu0 %v3529
    %3560 = vmatprep.subr.mxu0 0.0
    %3561 = vmatpush1.msra.mxu0 %v3530
    %3562 = vmatprep.subr.mxu0 0.0
    %3563 = vmatpush1.msra.mxu0 %v3531
    %3564 = vmatprep.subr.mxu0 0.0
    %3565 = vmatpush1.msra.mxu0 0.0
    %3566 = vmatprep.subr.mxu0 0.0
    %3567 = vmatpush1.msra.mxu0 0.0
    %3568 = vmatprep.subr.mxu0 0.0
    %3569 = vmatpush1.msra.mxu0 0.0
    %3570 = vmatprep.subr.mxu0 0.0
    %3571 = vmatpush1.msra.mxu0 0.0
    %3572 = vmatprep.subr.mxu0 0.0
    %3573 = vmatpush1.msra.mxu0 0.0
    %3574 = vmatprep.subr.mxu0 0.0
    %3575 = vmatpush1.msra.mxu0 0.0
    %3576 = vmatprep.subr.mxu0 0.0
    %3577 = vmatpush1.msra.mxu0 0.0
    %3578 = vmatprep.subr.mxu0 0.0
    %3579 = vmatpush1.msra.mxu0 0.0
    %3580 = vmatprep.subr.mxu0 0.0
    %3581 = vmatpush1.msra.mxu0 0.0
    %3582 = vmatprep.subr.mxu0 0.0
    %3583 = vmatpush1.msra.mxu0 0.0
    %3584 = vmatprep.subr.mxu0 0.0
    %3585 = vmatpush1.msra.mxu0 0.0
    %3586 = vmatprep.subr.mxu0 0.0
    %3587 = vmatpush1.msra.mxu0 0.0
    %3588 = vmatprep.subr.mxu0 0.0
    %3589 = vmatpush1.msra.mxu0 0.0
    %3590 = vmatprep.subr.mxu0 0.0
    %3591 = vmatpush1.msra.mxu0 0.0
    %3592 = vmatprep.subr.mxu0 0.0
    %3593 = vmatpush1.msra.mxu0 0.0
    %3594 = vmatprep.subr.mxu0 0.0
    %3595 = vmatpush1.msra.mxu0 0.0
    %3596 = vmatprep.mubr.f32.mxu0 0.0
    %3597 = vmatmul.mubr.f32.gmra.mrb[0].mxu0 %v3452
    %v3598 = vpop.f32.mrb[0].mxu0
    %v3599 = vadd.f32 0.0, %v3598
    %v3600 = vpop.f32.mrb[0].mxu0
    %3601 = vmatprep.mubr.f32.mxu0 0.0
    %3602 = vmatmul.mubr.f32.gmra.mrb[0].mxu0 %v3453
    %v3603 = vpop.f32.mrb[0].mxu0
    %v3604 = vadd.f32 0.0, %v3603
    %v3605 = vpop.f32.mrb[0].mxu0
    %3606 = vmatprep.mubr.f32.mxu0 0.0
    %3607 = vmatmul.mubr.f32.gmra.mrb[0].mxu0 %v3454
    %v3608 = vpop.f32.mrb[0].mxu0
    %v3609 = vadd.f32 0.0, %v3608
    %v3610 = vpop.f32.mrb[0].mxu0
    %3611 = vmatprep.mubr.f32.mxu0 0.0
    %3612 = vmatmul.mubr.f32.gmra.mrb[0].mxu0 %v3455
    %v3613 = vpop.f32.mrb[0].mxu0
    %v3614 = vadd.f32 0.0, %v3613
    %v3615 = vpop.f32.mrb[0].mxu0
    %3616 = vmatprep.mubr.f32.mxu0 0.0
    %3617 = vmatmul.mubr.f32.gmra.mrb[0].mxu0 %v3456
    %v3618 = vpop.f32.mrb[0].mxu0
    %v3619 = vadd.f32 0.0, %v3618
    %v3620 = vpop.f32.mrb[0].mxu0
    %3621 = vmatprep.mubr.f32.mxu0 0.0
    %3622 = vmatmul.mubr.f32.gmra.mrb[0].mxu0 %v3457
    %v3623 = vpop.f32.mrb[0].mxu0
    %v3624 = vadd.f32 0.0, %v3623
    %v3625 = vpop.f32.mrb[0].mxu0
    %3626 = vmatprep.mubr.f32.mxu0 0.0
    %3627 = vmatmul.mubr.f32.gmra.mrb[0].mxu0 %v3458
    %v3628 = vpop.f32.mrb[0].mxu0
    %v3629 = vadd.f32 0.0, %v3628
    %v3630 = vpop.f32.mrb[0].mxu0
    %3631 = vmatprep.mubr.f32.mxu0 0.0
    %3632 = vmatmul.mubr.f32.gmra.mrb[0].mxu0 %v3459
    %v3633 = vpop.f32.mrb[0].mxu0
    %v3634 = vadd.f32 0.0, %v3633
    %v3635 = vpop.f32.mrb[0].mxu0
    %3636 = vmatprep.mubr.f32.mxu0 0.0
    %3637 = vmatmul.mubr.f32.gmra.mrb[0].mxu0 %v3460
    %v3638 = vpop.f32.mrb[0].mxu0
    %v3639 = vadd.f32 0.0, %v3638
    %v3640 = vpop.f32.mrb[0].mxu0
    %3641 = vmatprep.mubr.f32.mxu0 0.0
    %3642 = vmatmul.mubr.f32.gmra.mrb[0].mxu0 %v3461
    %v3643 = vpop.f32.mrb[0].mxu0
    %v3644 = vadd.f32 0.0, %v3643
    %v3645 = vpop.f32.mrb[0].mxu0
    %3646 = vmatprep.mubr.f32.mxu0 0.0
    %3647 = vmatmul.mubr.f32.gmra.mrb[0].mxu0 %v3462
    %v3648 = vpop.f32.mrb[0].mxu0
    %v3649 = vadd.f32 0.0, %v3648
    %v3650 = vpop.f32.mrb[0].mxu0
    %3651 = vmatprep.mubr.f32.mxu0 0.0
    %3652 = vmatmul.mubr.f32.gmra.mrb[0].mxu0 %v3463
    %v3653 = vpop.f32.mrb[0].mxu0
    %v3654 = vadd.f32 0.0, %v3653
    %v3655 = vpop.f32.mrb[0].mxu0
    %3656 = vmatprep.mubr.f32.mxu0 0.0
    %3657 = vmatmul.mubr.f32.gmra.mrb[0].mxu0 %v3464
    %v3658 = vpop.f32.mrb[0].mxu0
    %v3659 = vadd.f32 0.0, %v3658
    %v3660 = vpop.f32.mrb[0].mxu0
    %3661 = vmatprep.mubr.f32.mxu0 0.0
    %3662 = vmatmul.mubr.f32.gmra.mrb[0].mxu0 %v3465
    %v3663 = vpop.f32.mrb[0].mxu0
    %v3664 = vadd.f32 0.0, %v3663
    %v3665 = vpop.f32.mrb[0].mxu0
    %3666 = vmatprep.mubr.f32.mxu0 0.0
    %3667 = vmatmul.mubr.f32.gmra.mrb[0].mxu0 %v3466
    %v3668 = vpop.f32.mrb[0].mxu0
    %v3669 = vadd.f32 0.0, %v3668
    %v3670 = vpop.f32.mrb[0].mxu0
    %3671 = vmatprep.mubr.f32.mxu0 0.0
    %3672 = vmatmul.mubr.f32.gmra.mrb[0].mxu0 %v3467
    %v3673 = vpop.f32.mrb[0].mxu0
    %v3674 = vadd.f32 0.0, %v3673
    %v3675 = vpop.f32.mrb[0].mxu0
    %3676 = vmatprep.mubr.f32.mxu0 0.0
    %3677 = vmatmul.mubr.f32.gmra.mrb[0].mxu0 %v3468
    %v3678 = vpop.f32.mrb[0].mxu0
    %v3679 = vadd.f32 0.0, %v3678
    %v3680 = vpop.f32.mrb[0].mxu0
    %3681 = vmatprep.mubr.f32.mxu0 0.0
    %3682 = vmatmul.mubr.f32.gmra.mrb[0].mxu0 %v3469
    %v3683 = vpop.f32.mrb[0].mxu0
    %v3684 = vadd.f32 0.0, %v3683
    %v3685 = vpop.f32.mrb[0].mxu0
    %3686 = vmatprep.mubr.f32.mxu0 0.0
    %3687 = vmatmul.mubr.f32.gmra.mrb[0].mxu0 %v3470
    %v3688 = vpop.f32.mrb[0].mxu0
    %v3689 = vadd.f32 0.0, %v3688
    %v3690 = vpop.f32.mrb[0].mxu0
    %3691 = vmatprep.mubr.f32.mxu0 0.0
    %3692 = vmatmul.mubr.f32.gmra.mrb[0].mxu0 %v3471
    %v3693 = vpop.f32.mrb[0].mxu0
    %v3694 = vadd.f32 0.0, %v3693
    %v3695 = vpop.f32.mrb[0].mxu0
    %3696 = vmatprep.mubr.f32.mxu0 0.0
    %3697 = vmatmul.mubr.f32.gmra.mrb[0].mxu0 %v3472
    %v3698 = vpop.f32.mrb[0].mxu0
    %v3699 = vadd.f32 0.0, %v3698
    %v3700 = vpop.f32.mrb[0].mxu0
    %3701 = vmatprep.mubr.f32.mxu0 0.0
    %3702 = vmatmul.mubr.f32.gmra.mrb[0].mxu0 %v3473
    %v3703 = vpop.f32.mrb[0].mxu0
    %v3704 = vadd.f32 0.0, %v3703
    %v3705 = vpop.f32.mrb[0].mxu0
    %3706 = vmatprep.mubr.f32.mxu0 0.0
    %3707 = vmatmul.mubr.f32.gmra.mrb[0].mxu0 %v3474
    %v3708 = vpop.f32.mrb[0].mxu0
    %v3709 = vadd.f32 0.0, %v3708
    %v3710 = vpop.f32.mrb[0].mxu0
    %3711 = vmatprep.mubr.f32.mxu0 0.0
    %3712 = vmatmul.mubr.f32.gmra.mrb[0].mxu0 %v3475
    %v3713 = vpop.f32.mrb[0].mxu0
    %v3714 = vadd.f32 0.0, %v3713
    %v3715 = vpop.f32.mrb[0].mxu0
    %3716 = vmatprep.mubr.f32.mxu0 0.0
    %3717 = vmatmul.mubr.f32.gmra.mrb[0].mxu0 %v3476
    %v3718 = vpop.f32.mrb[0].mxu0
    %v3719 = vadd.f32 0.0, %v3718
    %v3720 = vpop.f32.mrb[0].mxu0
    %3721 = vmatprep.mubr.f32.mxu0 0.0
    %3722 = vmatmul.mubr.f32.gmra.mrb[0].mxu0 %v3477
    %v3723 = vpop.f32.mrb[0].mxu0
    %v3724 = vadd.f32 0.0, %v3723
    %v3725 = vpop.f32.mrb[0].mxu0
    %3726 = vmatprep.mubr.f32.mxu0 0.0
    %3727 = vmatmul.mubr.f32.gmra.mrb[0].mxu0 %v3478
    %v3728 = vpop.f32.mrb[0].mxu0
    %v3729 = vadd.f32 0.0, %v3728
    %v3730 = vpop.f32.mrb[0].mxu0
    %3731 = vmatprep.mubr.f32.mxu0 0.0
    %3732 = vmatmul.mubr.f32.gmra.mrb[0].mxu0 %v3479
    %v3733 = vpop.f32.mrb[0].mxu0
    %v3734 = vadd.f32 0.0, %v3733
    %v3735 = vpop.f32.mrb[0].mxu0
    %3736 = vmatprep.mubr.f32.mxu0 0.0
    %3737 = vmatmul.mubr.f32.gmra.mrb[0].mxu0 %v3480
    %v3738 = vpop.f32.mrb[0].mxu0
    %v3739 = vadd.f32 0.0, %v3738
    %v3740 = vpop.f32.mrb[0].mxu0
    %3741 = vmatprep.mubr.f32.mxu0 0.0
    %3742 = vmatmul.mubr.f32.gmra.mrb[0].mxu0 %v3481
    %v3743 = vpop.f32.mrb[0].mxu0
    %v3744 = vadd.f32 0.0, %v3743
    %v3745 = vpop.f32.mrb[0].mxu0
    %3746 = vmatprep.mubr.f32.mxu0 0.0
    %3747 = vmatmul.mubr.f32.gmra.mrb[0].mxu0 %v3482
    %v3748 = vpop.f32.mrb[0].mxu0
    %v3749 = vadd.f32 0.0, %v3748
    %v3750 = vpop.f32.mrb[0].mxu0
    %3751 = vmatprep.mubr.f32.mxu0 0.0
    %3752 = vmatmul.mubr.f32.gmra.mrb[0].mxu0 %v3483
    %v3753 = vpop.f32.mrb[0].mxu0
    %v3754 = vadd.f32 0.0, %v3753
    %v3755 = vpop.f32.mrb[0].mxu0
    %3756 = vmatprep.mubr.f32.mxu0 0.0
    %3757 = vmatmul.mubr.f32.gmra.mrb[0].mxu0 %v3484
    %v3758 = vpop.f32.mrb[0].mxu0
    %v3759 = vadd.f32 0.0, %v3758
    %v3760 = vpop.f32.mrb[0].mxu0
    %3761 = vmatprep.mubr.f32.mxu0 0.0
    %3762 = vmatmul.mubr.f32.gmra.mrb[0].mxu0 %v3485
    %v3763 = vpop.f32.mrb[0].mxu0
    %v3764 = vadd.f32 0.0, %v3763
    %v3765 = vpop.f32.mrb[0].mxu0
    %3766 = vmatprep.mubr.f32.mxu0 0.0
    %3767 = vmatmul.mubr.f32.gmra.mrb[0].mxu0 %v3486
    %v3768 = vpop.f32.mrb[0].mxu0
    %v3769 = vadd.f32 0.0, %v3768
    %v3770 = vpop.f32.mrb[0].mxu0
    %3771 = vmatprep.mubr.f32.mxu0 0.0
    %3772 = vmatmul.mubr.f32.gmra.mrb[0].mxu0 %v3487
    %v3773 = vpop.f32.mrb[0].mxu0
    %v3774 = vadd.f32 0.0, %v3773
    %v3775 = vpop.f32.mrb[0].mxu0
    %3776 = vmatprep.mubr.f32.mxu0 0.0
    %3777 = vmatmul.mubr.f32.gmra.mrb[0].mxu0 %v3488
    %v3778 = vpop.f32.mrb[0].mxu0
    %v3779 = vadd.f32 0.0, %v3778
    %v3780 = vpop.f32.mrb[0].mxu0
    %3781 = vmatprep.mubr.f32.mxu0 0.0
    %3782 = vmatmul.mubr.f32.gmra.mrb[0].mxu0 %v3489
    %v3783 = vpop.f32.mrb[0].mxu0
    %v3784 = vadd.f32 0.0, %v3783
    %v3785 = vpop.f32.mrb[0].mxu0
    %3786 = vmatprep.mubr.f32.mxu0 0.0
    %3787 = vmatmul.mubr.f32.gmra.mrb[0].mxu0 %v3490
    %v3788 = vpop.f32.mrb[0].mxu0
    %v3789 = vadd.f32 0.0, %v3788
    %v3790 = vpop.f32.mrb[0].mxu0
    %3791 = vmatprep.mubr.f32.mxu0 0.0
    %3792 = vmatmul.mubr.f32.gmra.mrb[0].mxu0 %v3491
    %v3793 = vpop.f32.mrb[0].mxu0
    %v3794 = vadd.f32 0.0, %v3793
    %v3795 = vpop.f32.mrb[0].mxu0
    %3796 = vmatprep.mubr.f32.mxu0 0.0
    %3797 = vmatmul.mubr.f32.gmra.mrb[0].mxu0 %v3492
    %v3798 = vpop.f32.mrb[0].mxu0
    %v3799 = vadd.f32 0.0, %v3798
    %v3800 = vpop.f32.mrb[0].mxu0
    %3801 = vmatprep.mubr.f32.mxu0 0.0
    %3802 = vmatmul.mubr.f32.gmra.mrb[0].mxu0 %v3493
    %v3803 = vpop.f32.mrb[0].mxu0
    %v3804 = vadd.f32 0.0, %v3803
    %v3805 = vpop.f32.mrb[0].mxu0
    %3806 = vmatprep.mubr.f32.mxu0 0.0
    %3807 = vmatmul.mubr.f32.gmra.mrb[0].mxu0 %v3494
    %v3808 = vpop.f32.mrb[0].mxu0
    %v3809 = vadd.f32 0.0, %v3808
    %v3810 = vpop.f32.mrb[0].mxu0
    %3811 = vmatprep.mubr.f32.mxu0 0.0
    %3812 = vmatmul.mubr.f32.gmra.mrb[0].mxu0 %v3495
    %v3813 = vpop.f32.mrb[0].mxu0
    %v3814 = vadd.f32 0.0, %v3813
    %v3815 = vpop.f32.mrb[0].mxu0
    %3816 = vmatprep.mubr.f32.mxu0 0.0
    %3817 = vmatmul.mubr.f32.gmra.mrb[0].mxu0 %v3496
    %v3818 = vpop.f32.mrb[0].mxu0
    %v3819 = vadd.f32 0.0, %v3818
    %v3820 = vpop.f32.mrb[0].mxu0
    %3821 = vmatprep.mubr.f32.mxu0 0.0
    %3822 = vmatmul.mubr.f32.gmra.mrb[0].mxu0 %v3497
    %v3823 = vpop.f32.mrb[0].mxu0
    %v3824 = vadd.f32 0.0, %v3823
    %v3825 = vpop.f32.mrb[0].mxu0
    %3826 = vmatprep.mubr.f32.mxu0 0.0
    %3827 = vmatmul.mubr.f32.gmra.mrb[0].mxu0 %v3498
    %v3828 = vpop.f32.mrb[0].mxu0
    %v3829 = vadd.f32 0.0, %v3828
    %v3830 = vpop.f32.mrb[0].mxu0
    %3831 = vmatprep.mubr.f32.mxu0 0.0
    %3832 = vmatmul.mubr.f32.gmra.mrb[0].mxu0 %v3499
    %v3833 = vpop.f32.mrb[0].mxu0
    %v3834 = vadd.f32 0.0, %v3833
    %v3835 = vpop.f32.mrb[0].mxu0
    %3836 = vmatprep.mubr.f32.mxu0 0.0
    %3837 = vmatmul.mubr.f32.gmra.mrb[0].mxu0 %v3500
    %v3838 = vpop.f32.mrb[0].mxu0
    %v3839 = vadd.f32 0.0, %v3838
    %v3840 = vpop.f32.mrb[0].mxu0
    %3841 = vmatprep.mubr.f32.mxu0 0.0
    %3842 = vmatmul.mubr.f32.gmra.mrb[0].mxu0 %v3501
    %v3843 = vpop.f32.mrb[0].mxu0
    %v3844 = vadd.f32 0.0, %v3843
    %v3845 = vpop.f32.mrb[0].mxu0
    %3846 = vmatprep.mubr.f32.mxu0 0.0
    %3847 = vmatmul.mubr.f32.gmra.mrb[0].mxu0 %v3502
    %v3848 = vpop.f32.mrb[0].mxu0
    %v3849 = vadd.f32 0.0, %v3848
    %v3850 = vpop.f32.mrb[0].mxu0
    %3851 = vmatprep.mubr.f32.mxu0 0.0
    %3852 = vmatmul.mubr.f32.gmra.mrb[0].mxu0 %v3503
    %v3853 = vpop.f32.mrb[0].mxu0
    %v3854 = vadd.f32 0.0, %v3853
    %v3855 = vpop.f32.mrb[0].mxu0
    %3856 = vmatprep.mubr.f32.mxu0 0.0
    %3857 = vmatmul.mubr.f32.gmra.mrb[0].mxu0 %v3504
    %v3858 = vpop.f32.mrb[0].mxu0
    %v3859 = vadd.f32 0.0, %v3858
    %v3860 = vpop.f32.mrb[0].mxu0
    %3861 = vmatprep.mubr.f32.mxu0 0.0
    %3862 = vmatmul.mubr.f32.gmra.mrb[0].mxu0 %v3505
    %v3863 = vpop.f32.mrb[0].mxu0
    %v3864 = vadd.f32 0.0, %v3863
    %v3865 = vpop.f32.mrb[0].mxu0
    %3866 = vmatprep.mubr.f32.mxu0 0.0
    %3867 = vmatmul.mubr.f32.gmra.mrb[0].mxu0 %v3506
    %v3868 = vpop.f32.mrb[0].mxu0
    %v3869 = vadd.f32 0.0, %v3868
    %v3870 = vpop.f32.mrb[0].mxu0
    %3871 = vmatprep.mubr.f32.mxu0 0.0
    %3872 = vmatmul.mubr.f32.gmra.mrb[0].mxu0 %v3507
    %v3873 = vpop.f32.mrb[0].mxu0
    %v3874 = vadd.f32 0.0, %v3873
    %v3875 = vpop.f32.mrb[0].mxu0
    %3876 = vmatprep.mubr.f32.mxu0 0.0
    %3877 = vmatmul.mubr.f32.gmra.mrb[0].mxu0 %v3508
    %v3878 = vpop.f32.mrb[0].mxu0
    %v3879 = vadd.f32 0.0, %v3878
    %v3880 = vpop.f32.mrb[0].mxu0
    %3881 = vmatprep.mubr.f32.mxu0 0.0
    %3882 = vmatmul.mubr.f32.gmra.mrb[0].mxu0 %v3509
    %v3883 = vpop.f32.mrb[0].mxu0
    %v3884 = vadd.f32 0.0, %v3883
    %v3885 = vpop.f32.mrb[0].mxu0
    %3886 = vmatprep.mubr.f32.mxu0 0.0
    %3887 = vmatmul.mubr.f32.gmra.mrb[0].mxu0 %v3510
    %v3888 = vpop.f32.mrb[0].mxu0
    %v3889 = vadd.f32 0.0, %v3888
    %v3890 = vpop.f32.mrb[0].mxu0
    %3891 = vmatprep.mubr.f32.mxu0 0.0
    %3892 = vmatmul.mubr.f32.gmra.mrb[0].mxu0 %v3511
    %v3893 = vpop.f32.mrb[0].mxu0
    %v3894 = vadd.f32 0.0, %v3893
    %v3895 = vpop.f32.mrb[0].mxu0
    %3896 = vmatprep.mubr.f32.mxu0 0.0
    %3897 = vmatmul.mubr.f32.gmra.mrb[0].mxu0 %v3512
    %v3898 = vpop.f32.mrb[0].mxu0
    %v3899 = vadd.f32 0.0, %v3898
    %v3900 = vpop.f32.mrb[0].mxu0
    %3901 = vmatprep.mubr.f32.mxu0 0.0
    %3902 = vmatmul.mubr.f32.gmra.mrb[0].mxu0 %v3513
    %v3903 = vpop.f32.mrb[0].mxu0
    %v3904 = vadd.f32 0.0, %v3903
    %v3905 = vpop.f32.mrb[0].mxu0
    %3906 = vmatprep.mubr.f32.mxu0 0.0
    %3907 = vmatmul.mubr.f32.gmra.mrb[0].mxu0 %v3514
    %v3908 = vpop.f32.mrb[0].mxu0
    %v3909 = vadd.f32 0.0, %v3908
    %v3910 = vpop.f32.mrb[0].mxu0
    %3911 = vmatprep.mubr.f32.mxu0 0.0
    %3912 = vmatmul.mubr.f32.gmra.mrb[0].mxu0 %v3515
    %v3913 = vpop.f32.mrb[0].mxu0
    %v3914 = vadd.f32 0.0, %v3913
    %v3915 = vpop.f32.mrb[0].mxu0
    %3916 = vdwg.mxu0
    %v3917 = vsub.f32 %v2749, %v3134
    %v3918 = vsub.f32 %v2754, %v3139
    %v3919 = vsub.f32 %v2759, %v3144
    %v3920 = vsub.f32 %v2764, %v3149
    %v3921 = vsub.f32 %v2769, %v3154
    %v3922 = vsub.f32 %v2774, %v3159
    %v3923 = vsub.f32 %v2779, %v3164
    %v3924 = vsub.f32 %v2784, %v3169
    %v3925 = vsub.f32 %v2789, %v3174
    %v3926 = vsub.f32 %v2794, %v3179
    %v3927 = vsub.f32 %v2799, %v3184
    %v3928 = vsub.f32 %v2804, %v3189
    %v3929 = vsub.f32 %v2809, %v3194
    %v3930 = vsub.f32 %v2814, %v3199
    %v3931 = vsub.f32 %v2819, %v3204
    %v3932 = vsub.f32 %v2824, %v3209
    %v3933 = vsub.f32 %v2829, %v3214
    %v3934 = vsub.f32 %v2834, %v3219
    %v3935 = vsub.f32 %v2839, %v3224
    %v3936 = vsub.f32 %v2844, %v3229
    %v3937 = vsub.f32 %v2849, %v3234
    %v3938 = vsub.f32 %v2854, %v3239
    %v3939 = vsub.f32 %v2859, %v3244
    %v3940 = vsub.f32 %v2864, %v3249
    %v3941 = vsub.f32 %v2869, %v3254
    %v3942 = vsub.f32 %v2874, %v3259
    %v3943 = vsub.f32 %v2879, %v3264
    %v3944 = vsub.f32 %v2884, %v3269
    %v3945 = vsub.f32 %v2889, %v3274
    %v3946 = vsub.f32 %v2894, %v3279
    %v3947 = vsub.f32 %v2899, %v3284
    %v3948 = vsub.f32 %v2904, %v3289
    %v3949 = vsub.f32 %v2909, %v3294
    %v3950 = vsub.f32 %v2914, %v3299
    %v3951 = vsub.f32 %v2919, %v3304
    %v3952 = vsub.f32 %v2924, %v3309
    %v3953 = vsub.f32 %v2929, %v3314
    %v3954 = vsub.f32 %v2934, %v3319
    %v3955 = vsub.f32 %v2939, %v3324
    %v3956 = vsub.f32 %v2944, %v3329
    %v3957 = vsub.f32 %v2949, %v3334
    %v3958 = vsub.f32 %v2954, %v3339
    %v3959 = vsub.f32 %v2959, %v3344
    %v3960 = vsub.f32 %v2964, %v3349
    %v3961 = vsub.f32 %v2969, %v3354
    %v3962 = vsub.f32 %v2974, %v3359
    %v3963 = vsub.f32 %v2979, %v3364
    %v3964 = vsub.f32 %v2984, %v3369
    %v3965 = vsub.f32 %v2989, %v3374
    %v3966 = vsub.f32 %v2994, %v3379
    %v3967 = vsub.f32 %v2999, %v3384
    %v3968 = vsub.f32 %v3004, %v3389
    %v3969 = vsub.f32 %v3009, %v3394
    %v3970 = vsub.f32 %v3014, %v3399
    %v3971 = vsub.f32 %v3019, %v3404
    %v3972 = vsub.f32 %v3024, %v3409
    %v3973 = vsub.f32 %v3029, %v3414
    %v3974 = vsub.f32 %v3034, %v3419
    %v3975 = vsub.f32 %v3039, %v3424
    %v3976 = vsub.f32 %v3044, %v3429
    %v3977 = vsub.f32 %v3049, %v3434
    %v3978 = vsub.f32 %v3054, %v3439
    %v3979 = vsub.f32 %v3059, %v3444
    %v3980 = vsub.f32 %v3064, %v3449
    %v3981 = vsub.f32 %v3599, %v2749
    %v3982 = vsub.f32 %v3604, %v2754
    %v3983 = vsub.f32 %v3609, %v2759
    %v3984 = vsub.f32 %v3614, %v2764
    %v3985 = vsub.f32 %v3619, %v2769
    %v3986 = vsub.f32 %v3624, %v2774
    %v3987 = vsub.f32 %v3629, %v2779
    %v3988 = vsub.f32 %v3634, %v2784
    %v3989 = vsub.f32 %v3639, %v2789
    %v3990 = vsub.f32 %v3644, %v2794
    %v3991 = vsub.f32 %v3649, %v2799
    %v3992 = vsub.f32 %v3654, %v2804
    %v3993 = vsub.f32 %v3659, %v2809
    %v3994 = vsub.f32 %v3664, %v2814
    %v3995 = vsub.f32 %v3669, %v2819
    %v3996 = vsub.f32 %v3674, %v2824
    %v3997 = vsub.f32 %v3679, %v2829
    %v3998 = vsub.f32 %v3684, %v2834
    %v3999 = vsub.f32 %v3689, %v2839
    %v4000 = vsub.f32 %v3694, %v2844
    %v4001 = vsub.f32 %v3699, %v2849
    %v4002 = vsub.f32 %v3704, %v2854
    %v4003 = vsub.f32 %v3709, %v2859
    %v4004 = vsub.f32 %v3714, %v2864
    %v4005 = vsub.f32 %v3719, %v2869
    %v4006 = vsub.f32 %v3724, %v2874
    %v4007 = vsub.f32 %v3729, %v2879
    %v4008 = vsub.f32 %v3734, %v2884
    %v4009 = vsub.f32 %v3739, %v2889
    %v4010 = vsub.f32 %v3744, %v2894
    %v4011 = vsub.f32 %v3749, %v2899
    %v4012 = vsub.f32 %v3754, %v2904
    %v4013 = vsub.f32 %v3759, %v2909
    %v4014 = vsub.f32 %v3764, %v2914
    %v4015 = vsub.f32 %v3769, %v2919
    %v4016 = vsub.f32 %v3774, %v2924
    %v4017 = vsub.f32 %v3779, %v2929
    %v4018 = vsub.f32 %v3784, %v2934
    %v4019 = vsub.f32 %v3789, %v2939
    %v4020 = vsub.f32 %v3794, %v2944
    %v4021 = vsub.f32 %v3799, %v2949
    %v4022 = vsub.f32 %v3804, %v2954
    %v4023 = vsub.f32 %v3809, %v2959
    %v4024 = vsub.f32 %v3814, %v2964
    %v4025 = vsub.f32 %v3819, %v2969
    %v4026 = vsub.f32 %v3824, %v2974
    %v4027 = vsub.f32 %v3829, %v2979
    %v4028 = vsub.f32 %v3834, %v2984
    %v4029 = vsub.f32 %v3839, %v2989
    %v4030 = vsub.f32 %v3844, %v2994
    %v4031 = vsub.f32 %v3849, %v2999
    %v4032 = vsub.f32 %v3854, %v3004
    %v4033 = vsub.f32 %v3859, %v3009
    %v4034 = vsub.f32 %v3864, %v3014
    %v4035 = vsub.f32 %v3869, %v3019
    %v4036 = vsub.f32 %v3874, %v3024
    %v4037 = vsub.f32 %v3879, %v3029
    %v4038 = vsub.f32 %v3884, %v3034
    %v4039 = vsub.f32 %v3889, %v3039
    %v4040 = vsub.f32 %v3894, %v3044
    %v4041 = vsub.f32 %v3899, %v3049
    %v4042 = vsub.f32 %v3904, %v3054
    %v4043 = vsub.f32 %v3909, %v3059
    %v4044 = vsub.f32 %v3914, %v3064
    %v4045 = vsub.f32 %v3981, %v3134
    %v4046 = vsub.f32 %v3982, %v3139
    %v4047 = vsub.f32 %v3983, %v3144
    %v4048 = vsub.f32 %v3984, %v3149
    %v4049 = vsub.f32 %v3985, %v3154
    %v4050 = vsub.f32 %v3986, %v3159
    %v4051 = vsub.f32 %v3987, %v3164
    %v4052 = vsub.f32 %v3988, %v3169
    %v4053 = vsub.f32 %v3989, %v3174
    %v4054 = vsub.f32 %v3990, %v3179
    %v4055 = vsub.f32 %v3991, %v3184
    %v4056 = vsub.f32 %v3992, %v3189
    %v4057 = vsub.f32 %v3993, %v3194
    %v4058 = vsub.f32 %v3994, %v3199
    %v4059 = vsub.f32 %v3995, %v3204
    %v4060 = vsub.f32 %v3996, %v3209
    %v4061 = vsub.f32 %v3997, %v3214
    %v4062 = vsub.f32 %v3998, %v3219
    %v4063 = vsub.f32 %v3999, %v3224
    %v4064 = vsub.f32 %v4000, %v3229
    %v4065 = vsub.f32 %v4001, %v3234
    %v4066 = vsub.f32 %v4002, %v3239
    %v4067 = vsub.f32 %v4003, %v3244
    %v4068 = vsub.f32 %v4004, %v3249
    %v4069 = vsub.f32 %v4005, %v3254
    %v4070 = vsub.f32 %v4006, %v3259
    %v4071 = vsub.f32 %v4007, %v3264
    %v4072 = vsub.f32 %v4008, %v3269
    %v4073 = vsub.f32 %v4009, %v3274
    %v4074 = vsub.f32 %v4010, %v3279
    %v4075 = vsub.f32 %v4011, %v3284
    %v4076 = vsub.f32 %v4012, %v3289
    %v4077 = vsub.f32 %v4013, %v3294
    %v4078 = vsub.f32 %v4014, %v3299
    %v4079 = vsub.f32 %v4015, %v3304
    %v4080 = vsub.f32 %v4016, %v3309
    %v4081 = vsub.f32 %v4017, %v3314
    %v4082 = vsub.f32 %v4018, %v3319
    %v4083 = vsub.f32 %v4019, %v3324
    %v4084 = vsub.f32 %v4020, %v3329
    %v4085 = vsub.f32 %v4021, %v3334
    %v4086 = vsub.f32 %v4022, %v3339
    %v4087 = vsub.f32 %v4023, %v3344
    %v4088 = vsub.f32 %v4024, %v3349
    %v4089 = vsub.f32 %v4025, %v3354
    %v4090 = vsub.f32 %v4026, %v3359
    %v4091 = vsub.f32 %v4027, %v3364
    %v4092 = vsub.f32 %v4028, %v3369
    %v4093 = vsub.f32 %v4029, %v3374
    %v4094 = vsub.f32 %v4030, %v3379
    %v4095 = vsub.f32 %v4031, %v3384
    %v4096 = vsub.f32 %v4032, %v3389
    %v4097 = vsub.f32 %v4033, %v3394
    %v4098 = vsub.f32 %v4034, %v3399
    %v4099 = vsub.f32 %v4035, %v3404
    %v4100 = vsub.f32 %v4036, %v3409
    %v4101 = vsub.f32 %v4037, %v3414
    %v4102 = vsub.f32 %v4038, %v3419
    %v4103 = vsub.f32 %v4039, %v3424
    %v4104 = vsub.f32 %v4040, %v3429
    %v4105 = vsub.f32 %v4041, %v3434
    %v4106 = vsub.f32 %v4042, %v3439
    %v4107 = vsub.f32 %v4043, %v3444
    %v4108 = vsub.f32 %v4044, %v3449
    %v4109 = vld [vmem:[#allocation16] sm:$0xff]
    %v4110 = vld [vmem:[#allocation16 + $0x8] sm:$0xff]
    %v4111 = vld [vmem:[#allocation16 + $0x10] sm:$0xff]
    %v4112 = vld [vmem:[#allocation16 + $0x18] sm:$0xff]
    %v4113 = vld [vmem:[#allocation16 + $0x20] sm:$0xff]
    %v4114 = vld [vmem:[#allocation16 + $0x28] sm:$0xff]
    %v4115 = vld [vmem:[#allocation16 + $0x30] sm:$0xff]
    %v4116 = vld [vmem:[#allocation16 + $0x38] sm:$0xff]
    %v4117 = vld [vmem:[#allocation16 + $0x40] sm:$0xff]
    %v4118 = vld [vmem:[#allocation16 + $0x48] sm:$0xff]
    %v4119 = vld [vmem:[#allocation16 + $0x50] sm:$0xff]
    %v4120 = vld [vmem:[#allocation16 + $0x58] sm:$0xff]
    %v4121 = vld [vmem:[#allocation16 + $0x60] sm:$0xff]
    %v4122 = vld [vmem:[#allocation16 + $0x68] sm:$0xff]
    %v4123 = vld [vmem:[#allocation16 + $0x70] sm:$0xff]
    %v4124 = vld [vmem:[#allocation16 + $0x78] sm:$0xff]
    %v4125 = vunpack.c.0.s8 %v4109
    %v4126 = vunpack.c.1.s8 %v4109
    %v4127 = vunpack.c.2.s8 %v4109
    %v4128 = vunpack.c.3.s8 %v4109
    %v4129 = vunpack.c.0.s8 %v4110
    %v4130 = vunpack.c.1.s8 %v4110
    %v4131 = vunpack.c.2.s8 %v4110
    %v4132 = vunpack.c.3.s8 %v4110
    %v4133 = vunpack.c.0.s8 %v4111
    %v4134 = vunpack.c.1.s8 %v4111
    %v4135 = vunpack.c.2.s8 %v4111
    %v4136 = vunpack.c.3.s8 %v4111
    %v4137 = vunpack.c.0.s8 %v4112
    %v4138 = vunpack.c.1.s8 %v4112
    %v4139 = vunpack.c.2.s8 %v4112
    %v4140 = vunpack.c.3.s8 %v4112
    %v4141 = vunpack.c.0.s8 %v4113
    %v4142 = vunpack.c.1.s8 %v4113
    %v4143 = vunpack.c.2.s8 %v4113
    %v4144 = vunpack.c.3.s8 %v4113
    %v4145 = vunpack.c.0.s8 %v4114
    %v4146 = vunpack.c.1.s8 %v4114
    %v4147 = vunpack.c.2.s8 %v4114
    %v4148 = vunpack.c.3.s8 %v4114
    %v4149 = vunpack.c.0.s8 %v4115
    %v4150 = vunpack.c.1.s8 %v4115
    %v4151 = vunpack.c.2.s8 %v4115
    %v4152 = vunpack.c.3.s8 %v4115
    %v4153 = vunpack.c.0.s8 %v4116
    %v4154 = vunpack.c.1.s8 %v4116
    %v4155 = vunpack.c.2.s8 %v4116
    %v4156 = vunpack.c.3.s8 %v4116
    %v4157 = vunpack.c.0.s8 %v4117
    %v4158 = vunpack.c.1.s8 %v4117
    %v4159 = vunpack.c.2.s8 %v4117
    %v4160 = vunpack.c.3.s8 %v4117
    %v4161 = vunpack.c.0.s8 %v4118
    %v4162 = vunpack.c.1.s8 %v4118
    %v4163 = vunpack.c.2.s8 %v4118
    %v4164 = vunpack.c.3.s8 %v4118
    %v4165 = vunpack.c.0.s8 %v4119
    %v4166 = vunpack.c.1.s8 %v4119
    %v4167 = vunpack.c.2.s8 %v4119
    %v4168 = vunpack.c.3.s8 %v4119
    %v4169 = vunpack.c.0.s8 %v4120
    %v4170 = vunpack.c.1.s8 %v4120
    %v4171 = vunpack.c.2.s8 %v4120
    %v4172 = vunpack.c.3.s8 %v4120
    %v4173 = vunpack.c.0.s8 %v4121
    %v4174 = vunpack.c.1.s8 %v4121
    %v4175 = vunpack.c.2.s8 %v4121
    %v4176 = vunpack.c.3.s8 %v4121
    %v4177 = vunpack.c.0.s8 %v4122
    %v4178 = vunpack.c.1.s8 %v4122
    %v4179 = vunpack.c.2.s8 %v4122
    %v4180 = vunpack.c.3.s8 %v4122
    %v4181 = vunpack.c.0.s8 %v4123
    %v4182 = vunpack.c.1.s8 %v4123
    %v4183 = vunpack.c.2.s8 %v4123
    %v4184 = vunpack.c.3.s8 %v4123
    %v4185 = vunpack.c.0.s8 %v4124
    %v4186 = vunpack.c.1.s8 %v4124
    %v4187 = vunpack.c.2.s8 %v4124
    %v4188 = vunpack.c.3.s8 %v4124
    %v4189 = vcvt.s32.f32 %v4125
    %v4190 = vcvt.s32.f32 %v4126
    %v4191 = vcvt.s32.f32 %v4127
    %v4192 = vcvt.s32.f32 %v4128
    %v4193 = vcvt.s32.f32 %v4129
    %v4194 = vcvt.s32.f32 %v4130
    %v4195 = vcvt.s32.f32 %v4131
    %v4196 = vcvt.s32.f32 %v4132
    %v4197 = vcvt.s32.f32 %v4133
    %v4198 = vcvt.s32.f32 %v4134
    %v4199 = vcvt.s32.f32 %v4135
    %v4200 = vcvt.s32.f32 %v4136
    %v4201 = vcvt.s32.f32 %v4137
    %v4202 = vcvt.s32.f32 %v4138
    %v4203 = vcvt.s32.f32 %v4139
    %v4204 = vcvt.s32.f32 %v4140
    %v4205 = vcvt.s32.f32 %v4141
    %v4206 = vcvt.s32.f32 %v4142
    %v4207 = vcvt.s32.f32 %v4143
    %v4208 = vcvt.s32.f32 %v4144
    %v4209 = vcvt.s32.f32 %v4145
    %v4210 = vcvt.s32.f32 %v4146
    %v4211 = vcvt.s32.f32 %v4147
    %v4212 = vcvt.s32.f32 %v4148
    %v4213 = vcvt.s32.f32 %v4149
    %v4214 = vcvt.s32.f32 %v4150
    %v4215 = vcvt.s32.f32 %v4151
    %v4216 = vcvt.s32.f32 %v4152
    %v4217 = vcvt.s32.f32 %v4153
    %v4218 = vcvt.s32.f32 %v4154
    %v4219 = vcvt.s32.f32 %v4155
    %v4220 = vcvt.s32.f32 %v4156
    %v4221 = vcvt.s32.f32 %v4157
    %v4222 = vcvt.s32.f32 %v4158
    %v4223 = vcvt.s32.f32 %v4159
    %v4224 = vcvt.s32.f32 %v4160
    %v4225 = vcvt.s32.f32 %v4161
    %v4226 = vcvt.s32.f32 %v4162
    %v4227 = vcvt.s32.f32 %v4163
    %v4228 = vcvt.s32.f32 %v4164
    %v4229 = vcvt.s32.f32 %v4165
    %v4230 = vcvt.s32.f32 %v4166
    %v4231 = vcvt.s32.f32 %v4167
    %v4232 = vcvt.s32.f32 %v4168
    %v4233 = vcvt.s32.f32 %v4169
    %v4234 = vcvt.s32.f32 %v4170
    %v4235 = vcvt.s32.f32 %v4171
    %v4236 = vcvt.s32.f32 %v4172
    %v4237 = vcvt.s32.f32 %v4173
    %v4238 = vcvt.s32.f32 %v4174
    %v4239 = vcvt.s32.f32 %v4175
    %v4240 = vcvt.s32.f32 %v4176
    %v4241 = vcvt.s32.f32 %v4177
    %v4242 = vcvt.s32.f32 %v4178
    %v4243 = vcvt.s32.f32 %v4179
    %v4244 = vcvt.s32.f32 %v4180
    %v4245 = vcvt.s32.f32 %v4181
    %v4246 = vcvt.s32.f32 %v4182
    %v4247 = vcvt.s32.f32 %v4183
    %v4248 = vcvt.s32.f32 %v4184
    %v4249 = vcvt.s32.f32 %v4185
    %v4250 = vcvt.s32.f32 %v4186
    %v4251 = vcvt.s32.f32 %v4187
    %v4252 = vcvt.s32.f32 %v4188
    %vm4253 = vcmp.ne.f32.partialorder %v4189, 0.0
    %vm4254 = vcmp.ne.f32.partialorder %v4190, 0.0
    %vm4255 = vcmp.ne.f32.partialorder %v4191, 0.0
    %vm4256 = vcmp.ne.f32.partialorder %v4192, 0.0
    %vm4257 = vcmp.ne.f32.partialorder %v4193, 0.0
    %vm4258 = vcmp.ne.f32.partialorder %v4194, 0.0
    %vm4259 = vcmp.ne.f32.partialorder %v4195, 0.0
    %vm4260 = vcmp.ne.f32.partialorder %v4196, 0.0
    %vm4261 = vcmp.ne.f32.partialorder %v4197, 0.0
    %vm4262 = vcmp.ne.f32.partialorder %v4198, 0.0
    %vm4263 = vcmp.ne.f32.partialorder %v4199, 0.0
    %vm4264 = vcmp.ne.f32.partialorder %v4200, 0.0
    %vm4265 = vcmp.ne.f32.partialorder %v4201, 0.0
    %vm4266 = vcmp.ne.f32.partialorder %v4202, 0.0
    %vm4267 = vcmp.ne.f32.partialorder %v4203, 0.0
    %vm4268 = vcmp.ne.f32.partialorder %v4204, 0.0
    %vm4269 = vcmp.ne.f32.partialorder %v4205, 0.0
    %vm4270 = vcmp.ne.f32.partialorder %v4206, 0.0
    %vm4271 = vcmp.ne.f32.partialorder %v4207, 0.0
    %vm4272 = vcmp.ne.f32.partialorder %v4208, 0.0
    %vm4273 = vcmp.ne.f32.partialorder %v4209, 0.0
    %vm4274 = vcmp.ne.f32.partialorder %v4210, 0.0
    %vm4275 = vcmp.ne.f32.partialorder %v4211, 0.0
    %vm4276 = vcmp.ne.f32.partialorder %v4212, 0.0
    %vm4277 = vcmp.ne.f32.partialorder %v4213, 0.0
    %vm4278 = vcmp.ne.f32.partialorder %v4214, 0.0
    %vm4279 = vcmp.ne.f32.partialorder %v4215, 0.0
    %vm4280 = vcmp.ne.f32.partialorder %v4216, 0.0
    %vm4281 = vcmp.ne.f32.partialorder %v4217, 0.0
    %vm4282 = vcmp.ne.f32.partialorder %v4218, 0.0
    %vm4283 = vcmp.ne.f32.partialorder %v4219, 0.0
    %vm4284 = vcmp.ne.f32.partialorder %v4220, 0.0
    %vm4285 = vcmp.ne.f32.partialorder %v4221, 0.0
    %vm4286 = vcmp.ne.f32.partialorder %v4222, 0.0
    %vm4287 = vcmp.ne.f32.partialorder %v4223, 0.0
    %vm4288 = vcmp.ne.f32.partialorder %v4224, 0.0
    %vm4289 = vcmp.ne.f32.partialorder %v4225, 0.0
    %vm4290 = vcmp.ne.f32.partialorder %v4226, 0.0
    %vm4291 = vcmp.ne.f32.partialorder %v4227, 0.0
    %vm4292 = vcmp.ne.f32.partialorder %v4228, 0.0
    %vm4293 = vcmp.ne.f32.partialorder %v4229, 0.0
    %vm4294 = vcmp.ne.f32.partialorder %v4230, 0.0
    %vm4295 = vcmp.ne.f32.partialorder %v4231, 0.0
    %vm4296 = vcmp.ne.f32.partialorder %v4232, 0.0
    %vm4297 = vcmp.ne.f32.partialorder %v4233, 0.0
    %vm4298 = vcmp.ne.f32.partialorder %v4234, 0.0
    %vm4299 = vcmp.ne.f32.partialorder %v4235, 0.0
    %vm4300 = vcmp.ne.f32.partialorder %v4236, 0.0
    %vm4301 = vcmp.ne.f32.partialorder %v4237, 0.0
    %vm4302 = vcmp.ne.f32.partialorder %v4238, 0.0
    %vm4303 = vcmp.ne.f32.partialorder %v4239, 0.0
    %vm4304 = vcmp.ne.f32.partialorder %v4240, 0.0
    %vm4305 = vcmp.ne.f32.partialorder %v4241, 0.0
    %vm4306 = vcmp.ne.f32.partialorder %v4242, 0.0
    %vm4307 = vcmp.ne.f32.partialorder %v4243, 0.0
    %vm4308 = vcmp.ne.f32.partialorder %v4244, 0.0
    %vm4309 = vcmp.ne.f32.partialorder %v4245, 0.0
    %vm4310 = vcmp.ne.f32.partialorder %v4246, 0.0
    %vm4311 = vcmp.ne.f32.partialorder %v4247, 0.0
    %vm4312 = vcmp.ne.f32.partialorder %v4248, 0.0
    %vm4313 = vcmp.ne.f32.partialorder %v4249, 0.0
    %vm4314 = vcmp.ne.f32.partialorder %v4250, 0.0
    %vm4315 = vcmp.ne.f32.partialorder %v4251, 0.0
    %vm4316 = vcmp.ne.f32.partialorder %v4252, 0.0
    %v4317 = vld [vmem:[#allocation20] sm:$0xff]
    %v4318 = vld [vmem:[#allocation20 + $0x8] sm:$0xff]
    %v4319 = vld [vmem:[#allocation20 + $0x10] sm:$0xff]
    %v4320 = vld [vmem:[#allocation20 + $0x18] sm:$0xff]
    %v4321 = vld [vmem:[#allocation20 + $0x20] sm:$0xff]
    %v4322 = vld [vmem:[#allocation20 + $0x28] sm:$0xff]
    %v4323 = vld [vmem:[#allocation20 + $0x30] sm:$0xff]
    %v4324 = vld [vmem:[#allocation20 + $0x38] sm:$0xff]
    %v4325 = vld [vmem:[#allocation20 + $0x40] sm:$0xff]
    %v4326 = vld [vmem:[#allocation20 + $0x48] sm:$0xff]
    %v4327 = vld [vmem:[#allocation20 + $0x50] sm:$0xff]
    %v4328 = vld [vmem:[#allocation20 + $0x58] sm:$0xff]
    %v4329 = vld [vmem:[#allocation20 + $0x60] sm:$0xff]
    %v4330 = vld [vmem:[#allocation20 + $0x68] sm:$0xff]
    %v4331 = vld [vmem:[#allocation20 + $0x70] sm:$0xff]
    %v4332 = vld [vmem:[#allocation20 + $0x78] sm:$0xff]
    %v4333 = vld [vmem:[#allocation20 + $0x80] sm:$0xff]
    %v4334 = vld [vmem:[#allocation20 + $0x88] sm:$0xff]
    %v4335 = vld [vmem:[#allocation20 + $0x90] sm:$0xff]
    %v4336 = vld [vmem:[#allocation20 + $0x98] sm:$0xff]
    %v4337 = vld [vmem:[#allocation20 + $0xa0] sm:$0xff]
    %v4338 = vld [vmem:[#allocation20 + $0xa8] sm:$0xff]
    %v4339 = vld [vmem:[#allocation20 + $0xb0] sm:$0xff]
    %v4340 = vld [vmem:[#allocation20 + $0xb8] sm:$0xff]
    %v4341 = vld [vmem:[#allocation20 + $0xc0] sm:$0xff]
    %v4342 = vld [vmem:[#allocation20 + $0xc8] sm:$0xff]
    %v4343 = vld [vmem:[#allocation20 + $0xd0] sm:$0xff]
    %v4344 = vld [vmem:[#allocation20 + $0xd8] sm:$0xff]
    %v4345 = vld [vmem:[#allocation20 + $0xe0] sm:$0xff]
    %v4346 = vld [vmem:[#allocation20 + $0xe8] sm:$0xff]
    %v4347 = vld [vmem:[#allocation20 + $0xf0] sm:$0xff]
    %v4348 = vld [vmem:[#allocation20 + $0xf8] sm:$0xff]
    %v4349 = vld [vmem:[#allocation20 + $0x100] sm:$0xff]
    %v4350 = vld [vmem:[#allocation20 + $0x108] sm:$0xff]
    %v4351 = vld [vmem:[#allocation20 + $0x110] sm:$0xff]
    %v4352 = vld [vmem:[#allocation20 + $0x118] sm:$0xff]
    %v4353 = vld [vmem:[#allocation20 + $0x120] sm:$0xff]
    %v4354 = vld [vmem:[#allocation20 + $0x128] sm:$0xff]
    %v4355 = vld [vmem:[#allocation20 + $0x130] sm:$0xff]
    %v4356 = vld [vmem:[#allocation20 + $0x138] sm:$0xff]
    %v4357 = vld [vmem:[#allocation20 + $0x140] sm:$0xff]
    %v4358 = vld [vmem:[#allocation20 + $0x148] sm:$0xff]
    %v4359 = vld [vmem:[#allocation20 + $0x150] sm:$0xff]
    %v4360 = vld [vmem:[#allocation20 + $0x158] sm:$0xff]
    %v4361 = vld [vmem:[#allocation20 + $0x160] sm:$0xff]
    %v4362 = vld [vmem:[#allocation20 + $0x168] sm:$0xff]
    %v4363 = vld [vmem:[#allocation20 + $0x170] sm:$0xff]
    %v4364 = vld [vmem:[#allocation20 + $0x178] sm:$0xff]
    %v4365 = vld [vmem:[#allocation20 + $0x180] sm:$0xff]
    %v4366 = vld [vmem:[#allocation20 + $0x188] sm:$0xff]
    %v4367 = vld [vmem:[#allocation20 + $0x190] sm:$0xff]
    %v4368 = vld [vmem:[#allocation20 + $0x198] sm:$0xff]
    %v4369 = vld [vmem:[#allocation20 + $0x1a0] sm:$0xff]
    %v4370 = vld [vmem:[#allocation20 + $0x1a8] sm:$0xff]
    %v4371 = vld [vmem:[#allocation20 + $0x1b0] sm:$0xff]
    %v4372 = vld [vmem:[#allocation20 + $0x1b8] sm:$0xff]
    %v4373 = vld [vmem:[#allocation20 + $0x1c0] sm:$0xff]
    %v4374 = vld [vmem:[#allocation20 + $0x1c8] sm:$0xff]
    %v4375 = vld [vmem:[#allocation20 + $0x1d0] sm:$0xff]
    %v4376 = vld [vmem:[#allocation20 + $0x1d8] sm:$0xff]
    %v4377 = vld [vmem:[#allocation20 + $0x1e0] sm:$0xff]
    %v4378 = vld [vmem:[#allocation20 + $0x1e8] sm:$0xff]
    %v4379 = vld [vmem:[#allocation20 + $0x1f0] sm:$0xff]
    %v4380 = vld [vmem:[#allocation20 + $0x1f8] sm:$0xff]
    %v4381 = vsel %vm4253, %v4317, %v3917
    %v4382 = vsel %vm4254, %v4318, %v3918
    %v4383 = vsel %vm4255, %v4319, %v3919
    %v4384 = vsel %vm4256, %v4320, %v3920
    %v4385 = vsel %vm4257, %v4321, %v3921
    %v4386 = vsel %vm4258, %v4322, %v3922
    %v4387 = vsel %vm4259, %v4323, %v3923
    %v4388 = vsel %vm4260, %v4324, %v3924
    %v4389 = vsel %vm4261, %v4325, %v3925
    %v4390 = vsel %vm4262, %v4326, %v3926
    %v4391 = vsel %vm4263, %v4327, %v3927
    %v4392 = vsel %vm4264, %v4328, %v3928
    %v4393 = vsel %vm4265, %v4329, %v3929
    %v4394 = vsel %vm4266, %v4330, %v3930
    %v4395 = vsel %vm4267, %v4331, %v3931
    %v4396 = vsel %vm4268, %v4332, %v3932
    %v4397 = vsel %vm4269, %v4333, %v3933
    %v4398 = vsel %vm4270, %v4334, %v3934
    %v4399 = vsel %vm4271, %v4335, %v3935
    %v4400 = vsel %vm4272, %v4336, %v3936
    %v4401 = vsel %vm4273, %v4337, %v3937
    %v4402 = vsel %vm4274, %v4338, %v3938
    %v4403 = vsel %vm4275, %v4339, %v3939
    %v4404 = vsel %vm4276, %v4340, %v3940
    %v4405 = vsel %vm4277, %v4341, %v3941
    %v4406 = vsel %vm4278, %v4342, %v3942
    %v4407 = vsel %vm4279, %v4343, %v3943
    %v4408 = vsel %vm4280, %v4344, %v3944
    %v4409 = vsel %vm4281, %v4345, %v3945
    %v4410 = vsel %vm4282, %v4346, %v3946
    %v4411 = vsel %vm4283, %v4347, %v3947
    %v4412 = vsel %vm4284, %v4348, %v3948
    %v4413 = vsel %vm4285, %v4349, %v3949
    %v4414 = vsel %vm4286, %v4350, %v3950
    %v4415 = vsel %vm4287, %v4351, %v3951
    %v4416 = vsel %vm4288, %v4352, %v3952
    %v4417 = vsel %vm4289, %v4353, %v3953
    %v4418 = vsel %vm4290, %v4354, %v3954
    %v4419 = vsel %vm4291, %v4355, %v3955
    %v4420 = vsel %vm4292, %v4356, %v3956
    %v4421 = vsel %vm4293, %v4357, %v3957
    %v4422 = vsel %vm4294, %v4358, %v3958
    %v4423 = vsel %vm4295, %v4359, %v3959
    %v4424 = vsel %vm4296, %v4360, %v3960
    %v4425 = vsel %vm4297, %v4361, %v3961
    %v4426 = vsel %vm4298, %v4362, %v3962
    %v4427 = vsel %vm4299, %v4363, %v3963
    %v4428 = vsel %vm4300, %v4364, %v3964
    %v4429 = vsel %vm4301, %v4365, %v3965
    %v4430 = vsel %vm4302, %v4366, %v3966
    %v4431 = vsel %vm4303, %v4367, %v3967
    %v4432 = vsel %vm4304, %v4368, %v3968
    %v4433 = vsel %vm4305, %v4369, %v3969
    %v4434 = vsel %vm4306, %v4370, %v3970
    %v4435 = vsel %vm4307, %v4371, %v3971
    %v4436 = vsel %vm4308, %v4372, %v3972
    %v4437 = vsel %vm4309, %v4373, %v3973
    %v4438 = vsel %vm4310, %v4374, %v3974
    %v4439 = vsel %vm4311, %v4375, %v3975
    %v4440 = vsel %vm4312, %v4376, %v3976
    %v4441 = vsel %vm4313, %v4377, %v3977
    %v4442 = vsel %vm4314, %v4378, %v3978
    %v4443 = vsel %vm4315, %v4379, %v3979
    %v4444 = vsel %vm4316, %v4380, %v3980
    %v4445 = vld [vmem:[#allocation22] sm:$0xff]
    %v4446 = vld [vmem:[#allocation22 + $0x8] sm:$0xff]
    %v4447 = vld [vmem:[#allocation22 + $0x10] sm:$0xff]
    %v4448 = vld [vmem:[#allocation22 + $0x18] sm:$0xff]
    %v4449 = vld [vmem:[#allocation22 + $0x20] sm:$0xff]
    %v4450 = vld [vmem:[#allocation22 + $0x28] sm:$0xff]
    %v4451 = vld [vmem:[#allocation22 + $0x30] sm:$0xff]
    %v4452 = vld [vmem:[#allocation22 + $0x38] sm:$0xff]
    %v4453 = vld [vmem:[#allocation22 + $0x40] sm:$0xff]
    %v4454 = vld [vmem:[#allocation22 + $0x48] sm:$0xff]
    %v4455 = vld [vmem:[#allocation22 + $0x50] sm:$0xff]
    %v4456 = vld [vmem:[#allocation22 + $0x58] sm:$0xff]
    %v4457 = vld [vmem:[#allocation22 + $0x60] sm:$0xff]
    %v4458 = vld [vmem:[#allocation22 + $0x68] sm:$0xff]
    %v4459 = vld [vmem:[#allocation22 + $0x70] sm:$0xff]
    %v4460 = vld [vmem:[#allocation22 + $0x78] sm:$0xff]
    %v4461 = vld [vmem:[#allocation22 + $0x80] sm:$0xff]
    %v4462 = vld [vmem:[#allocation22 + $0x88] sm:$0xff]
    %v4463 = vld [vmem:[#allocation22 + $0x90] sm:$0xff]
    %v4464 = vld [vmem:[#allocation22 + $0x98] sm:$0xff]
    %v4465 = vld [vmem:[#allocation22 + $0xa0] sm:$0xff]
    %v4466 = vld [vmem:[#allocation22 + $0xa8] sm:$0xff]
    %v4467 = vld [vmem:[#allocation22 + $0xb0] sm:$0xff]
    %v4468 = vld [vmem:[#allocation22 + $0xb8] sm:$0xff]
    %v4469 = vld [vmem:[#allocation22 + $0xc0] sm:$0xff]
    %v4470 = vld [vmem:[#allocation22 + $0xc8] sm:$0xff]
    %v4471 = vld [vmem:[#allocation22 + $0xd0] sm:$0xff]
    %v4472 = vld [vmem:[#allocation22 + $0xd8] sm:$0xff]
    %v4473 = vld [vmem:[#allocation22 + $0xe0] sm:$0xff]
    %v4474 = vld [vmem:[#allocation22 + $0xe8] sm:$0xff]
    %v4475 = vld [vmem:[#allocation22 + $0xf0] sm:$0xff]
    %v4476 = vld [vmem:[#allocation22 + $0xf8] sm:$0xff]
    %v4477 = vld [vmem:[#allocation22 + $0x100] sm:$0xff]
    %v4478 = vld [vmem:[#allocation22 + $0x108] sm:$0xff]
    %v4479 = vld [vmem:[#allocation22 + $0x110] sm:$0xff]
    %v4480 = vld [vmem:[#allocation22 + $0x118] sm:$0xff]
    %v4481 = vld [vmem:[#allocation22 + $0x120] sm:$0xff]
    %v4482 = vld [vmem:[#allocation22 + $0x128] sm:$0xff]
    %v4483 = vld [vmem:[#allocation22 + $0x130] sm:$0xff]
    %v4484 = vld [vmem:[#allocation22 + $0x138] sm:$0xff]
    %v4485 = vld [vmem:[#allocation22 + $0x140] sm:$0xff]
    %v4486 = vld [vmem:[#allocation22 + $0x148] sm:$0xff]
    %v4487 = vld [vmem:[#allocation22 + $0x150] sm:$0xff]
    %v4488 = vld [vmem:[#allocation22 + $0x158] sm:$0xff]
    %v4489 = vld [vmem:[#allocation22 + $0x160] sm:$0xff]
    %v4490 = vld [vmem:[#allocation22 + $0x168] sm:$0xff]
    %v4491 = vld [vmem:[#allocation22 + $0x170] sm:$0xff]
    %v4492 = vld [vmem:[#allocation22 + $0x178] sm:$0xff]
    %v4493 = vld [vmem:[#allocation22 + $0x180] sm:$0xff]
    %v4494 = vld [vmem:[#allocation22 + $0x188] sm:$0xff]
    %v4495 = vld [vmem:[#allocation22 + $0x190] sm:$0xff]
    %v4496 = vld [vmem:[#allocation22 + $0x198] sm:$0xff]
    %v4497 = vld [vmem:[#allocation22 + $0x1a0] sm:$0xff]
    %v4498 = vld [vmem:[#allocation22 + $0x1a8] sm:$0xff]
    %v4499 = vld [vmem:[#allocation22 + $0x1b0] sm:$0xff]
    %v4500 = vld [vmem:[#allocation22 + $0x1b8] sm:$0xff]
    %v4501 = vld [vmem:[#allocation22 + $0x1c0] sm:$0xff]
    %v4502 = vld [vmem:[#allocation22 + $0x1c8] sm:$0xff]
    %v4503 = vld [vmem:[#allocation22 + $0x1d0] sm:$0xff]
    %v4504 = vld [vmem:[#allocation22 + $0x1d8] sm:$0xff]
    %v4505 = vld [vmem:[#allocation22 + $0x1e0] sm:$0xff]
    %v4506 = vld [vmem:[#allocation22 + $0x1e8] sm:$0xff]
    %v4507 = vld [vmem:[#allocation22 + $0x1f0] sm:$0xff]
    %v4508 = vld [vmem:[#allocation22 + $0x1f8] sm:$0xff]
    %v4509 = vsel %vm4253, %v4445, %v4045
    %v4510 = vsel %vm4254, %v4446, %v4046
    %v4511 = vsel %vm4255, %v4447, %v4047
    %v4512 = vsel %vm4256, %v4448, %v4048
    %v4513 = vsel %vm4257, %v4449, %v4049
    %v4514 = vsel %vm4258, %v4450, %v4050
    %v4515 = vsel %vm4259, %v4451, %v4051
    %v4516 = vsel %vm4260, %v4452, %v4052
    %v4517 = vsel %vm4261, %v4453, %v4053
    %v4518 = vsel %vm4262, %v4454, %v4054
    %v4519 = vsel %vm4263, %v4455, %v4055
    %v4520 = vsel %vm4264, %v4456, %v4056
    %v4521 = vsel %vm4265, %v4457, %v4057
    %v4522 = vsel %vm4266, %v4458, %v4058
    %v4523 = vsel %vm4267, %v4459, %v4059
    %v4524 = vsel %vm4268, %v4460, %v4060
    %v4525 = vsel %vm4269, %v4461, %v4061
    %v4526 = vsel %vm4270, %v4462, %v4062
    %v4527 = vsel %vm4271, %v4463, %v4063
    %v4528 = vsel %vm4272, %v4464, %v4064
    %v4529 = vsel %vm4273, %v4465, %v4065
    %v4530 = vsel %vm4274, %v4466, %v4066
    %v4531 = vsel %vm4275, %v4467, %v4067
    %v4532 = vsel %vm4276, %v4468, %v4068
    %v4533 = vsel %vm4277, %v4469, %v4069
    %v4534 = vsel %vm4278, %v4470, %v4070
    %v4535 = vsel %vm4279, %v4471, %v4071
    %v4536 = vsel %vm4280, %v4472, %v4072
    %v4537 = vsel %vm4281, %v4473, %v4073
    %v4538 = vsel %vm4282, %v4474, %v4074
    %v4539 = vsel %vm4283, %v4475, %v4075
    %v4540 = vsel %vm4284, %v4476, %v4076
    %v4541 = vsel %vm4285, %v4477, %v4077
    %v4542 = vsel %vm4286, %v4478, %v4078
    %v4543 = vsel %vm4287, %v4479, %v4079
    %v4544 = vsel %vm4288, %v4480, %v4080
    %v4545 = vsel %vm4289, %v4481, %v4081
    %v4546 = vsel %vm4290, %v4482, %v4082
    %v4547 = vsel %vm4291, %v4483, %v4083
    %v4548 = vsel %vm4292, %v4484, %v4084
    %v4549 = vsel %vm4293, %v4485, %v4085
    %v4550 = vsel %vm4294, %v4486, %v4086
    %v4551 = vsel %vm4295, %v4487, %v4087
    %v4552 = vsel %vm4296, %v4488, %v4088
    %v4553 = vsel %vm4297, %v4489, %v4089
    %v4554 = vsel %vm4298, %v4490, %v4090
    %v4555 = vsel %vm4299, %v4491, %v4091
    %v4556 = vsel %vm4300, %v4492, %v4092
    %v4557 = vsel %vm4301, %v4493, %v4093
    %v4558 = vsel %vm4302, %v4494, %v4094
    %v4559 = vsel %vm4303, %v4495, %v4095
    %v4560 = vsel %vm4304, %v4496, %v4096
    %v4561 = vsel %vm4305, %v4497, %v4097
    %v4562 = vsel %vm4306, %v4498, %v4098
    %v4563 = vsel %vm4307, %v4499, %v4099
    %v4564 = vsel %vm4308, %v4500, %v4100
    %v4565 = vsel %vm4309, %v4501, %v4101
    %v4566 = vsel %vm4310, %v4502, %v4102
    %v4567 = vsel %vm4311, %v4503, %v4103
    %v4568 = vsel %vm4312, %v4504, %v4104
    %v4569 = vsel %vm4313, %v4505, %v4105
    %v4570 = vsel %vm4314, %v4506, %v4106
    %v4571 = vsel %vm4315, %v4507, %v4107
    %v4572 = vsel %vm4316, %v4508, %v4108
    %v4573 = vsub.f32 0.0, %v1428
    %v4574 = vsub.f32 0.0, %v1429
    %v4575 = vsub.f32 0.0, %v1430
    %v4576 = vsub.f32 0.0, %v1431
    %v4577 = vsub.f32 0.0, %v1432
    %v4578 = vsub.f32 0.0, %v1433
    %v4579 = vsub.f32 0.0, %v1434
    %v4580 = vsub.f32 0.0, %v1435
    %v4581 = vsub.f32 0.0, %v1436
    %v4582 = vsub.f32 0.0, %v1437
    %v4583 = vsub.f32 0.0, %v1438
    %v4584 = vsub.f32 0.0, %v1439
    %v4585 = vsub.f32 0.0, %v1440
    %v4586 = vsub.f32 0.0, %v1441
    %v4587 = vsub.f32 0.0, %v1442
    %v4588 = vsub.f32 0.0, %v1443
    %4589 = vmatprep.subr.mxu0 0.0
    %4590 = vmatpush1.msra.mxu0 %v1412
    %4591 = vmatprep.subr.mxu0 0.0
    %4592 = vmatpush1.msra.mxu0 %v1413
    %4593 = vmatprep.subr.mxu0 0.0
    %4594 = vmatpush1.msra.mxu0 %v1414
    %4595 = vmatprep.subr.mxu0 0.0
    %4596 = vmatpush1.msra.mxu0 %v1415
    %4597 = vmatprep.subr.mxu0 0.0
    %4598 = vmatpush1.msra.mxu0 %v1416
    %4599 = vmatprep.subr.mxu0 0.0
    %4600 = vmatpush1.msra.mxu0 %v1417
    %4601 = vmatprep.subr.mxu0 0.0
    %4602 = vmatpush1.msra.mxu0 %v1418
    %4603 = vmatprep.subr.mxu0 0.0
    %4604 = vmatpush1.msra.mxu0 %v1419
    %4605 = vmatprep.subr.mxu0 0.0
    %4606 = vmatpush1.msra.mxu0 %v1420
    %4607 = vmatprep.subr.mxu0 0.0
    %4608 = vmatpush1.msra.mxu0 %v1421
    %4609 = vmatprep.subr.mxu0 0.0
    %4610 = vmatpush1.msra.mxu0 %v1422
    %4611 = vmatprep.subr.mxu0 0.0
    %4612 = vmatpush1.msra.mxu0 %v1423
    %4613 = vmatprep.subr.mxu0 0.0
    %4614 = vmatpush1.msra.mxu0 %v1424
    %4615 = vmatprep.subr.mxu0 0.0
    %4616 = vmatpush1.msra.mxu0 %v1425
    %4617 = vmatprep.subr.mxu0 0.0
    %4618 = vmatpush1.msra.mxu0 %v1426
    %4619 = vmatprep.subr.mxu0 0.0
    %4620 = vmatpush1.msra.mxu0 %v1427
    %4621 = vmatprep.subr.mxu0 0.0
    %4622 = vmatpush1.msra.mxu0 0.0
    %4623 = vmatprep.subr.mxu0 0.0
    %4624 = vmatpush1.msra.mxu0 0.0
    %4625 = vmatprep.subr.mxu0 0.0
    %4626 = vmatpush1.msra.mxu0 0.0
    %4627 = vmatprep.subr.mxu0 0.0
    %4628 = vmatpush1.msra.mxu0 0.0
    %4629 = vmatprep.subr.mxu0 0.0
    %4630 = vmatpush1.msra.mxu0 0.0
    %4631 = vmatprep.subr.mxu0 0.0
    %4632 = vmatpush1.msra.mxu0 0.0
    %4633 = vmatprep.subr.mxu0 0.0
    %4634 = vmatpush1.msra.mxu0 0.0
    %4635 = vmatprep.subr.mxu0 0.0
    %4636 = vmatpush1.msra.mxu0 0.0
    %4637 = vmatprep.subr.mxu0 0.0
    %4638 = vmatpush1.msra.mxu0 0.0
    %4639 = vmatprep.subr.mxu0 0.0
    %4640 = vmatpush1.msra.mxu0 0.0
    %4641 = vmatprep.subr.mxu0 0.0
    %4642 = vmatpush1.msra.mxu0 0.0
    %4643 = vmatprep.subr.mxu0 0.0
    %4644 = vmatpush1.msra.mxu0 0.0
    %4645 = vmatprep.subr.mxu0 0.0
    %4646 = vmatpush1.msra.mxu0 0.0
    %4647 = vmatprep.subr.mxu0 0.0
    %4648 = vmatpush1.msra.mxu0 0.0
    %4649 = vmatprep.subr.mxu0 0.0
    %4650 = vmatpush1.msra.mxu0 0.0
    %4651 = vmatprep.subr.mxu0 0.0
    %4652 = vmatpush1.msra.mxu0 0.0
    %4653 = vmatprep.mubr.f32.mxu0 0.0
    %4654 = vmatmul.mubr.f32.gmra.mrb[0].mxu0 %v4381
    %v4655 = vpop.f32.mrb[0].mxu0
    %v4656 = vadd.f32 0.0, %v4655
    %v4657 = vpop.f32.mrb[0].mxu0
    %4658 = vmatprep.mubr.f32.mxu0 0.0
    %4659 = vmatmul.mubr.f32.gmra.mrb[0].mxu0 %v4382
    %v4660 = vpop.f32.mrb[0].mxu0
    %v4661 = vadd.f32 0.0, %v4660
    %v4662 = vpop.f32.mrb[0].mxu0
    %4663 = vmatprep.mubr.f32.mxu0 0.0
    %4664 = vmatmul.mubr.f32.gmra.mrb[0].mxu0 %v4383
    %v4665 = vpop.f32.mrb[0].mxu0
    %v4666 = vadd.f32 0.0, %v4665
    %v4667 = vpop.f32.mrb[0].mxu0
    %4668 = vmatprep.mubr.f32.mxu0 0.0
    %4669 = vmatmul.mubr.f32.gmra.mrb[0].mxu0 %v4384
    %v4670 = vpop.f32.mrb[0].mxu0
    %v4671 = vadd.f32 0.0, %v4670
    %v4672 = vpop.f32.mrb[0].mxu0
    %4673 = vmatprep.mubr.f32.mxu0 0.0
    %4674 = vmatmul.mubr.f32.gmra.mrb[0].mxu0 %v4385
    %v4675 = vpop.f32.mrb[0].mxu0
    %v4676 = vadd.f32 0.0, %v4675
    %v4677 = vpop.f32.mrb[0].mxu0
    %4678 = vmatprep.mubr.f32.mxu0 0.0
    %4679 = vmatmul.mubr.f32.gmra.mrb[0].mxu0 %v4386
    %v4680 = vpop.f32.mrb[0].mxu0
    %v4681 = vadd.f32 0.0, %v4680
    %v4682 = vpop.f32.mrb[0].mxu0
    %4683 = vmatprep.mubr.f32.mxu0 0.0
    %4684 = vmatmul.mubr.f32.gmra.mrb[0].mxu0 %v4387
    %v4685 = vpop.f32.mrb[0].mxu0
    %v4686 = vadd.f32 0.0, %v4685
    %v4687 = vpop.f32.mrb[0].mxu0
    %4688 = vmatprep.mubr.f32.mxu0 0.0
    %4689 = vmatmul.mubr.f32.gmra.mrb[0].mxu0 %v4388
    %v4690 = vpop.f32.mrb[0].mxu0
    %v4691 = vadd.f32 0.0, %v4690
    %v4692 = vpop.f32.mrb[0].mxu0
    %4693 = vmatprep.mubr.f32.mxu0 0.0
    %4694 = vmatmul.mubr.f32.gmra.mrb[0].mxu0 %v4389
    %v4695 = vpop.f32.mrb[0].mxu0
    %v4696 = vadd.f32 0.0, %v4695
    %v4697 = vpop.f32.mrb[0].mxu0
    %4698 = vmatprep.mubr.f32.mxu0 0.0
    %4699 = vmatmul.mubr.f32.gmra.mrb[0].mxu0 %v4390
    %v4700 = vpop.f32.mrb[0].mxu0
    %v4701 = vadd.f32 0.0, %v4700
    %v4702 = vpop.f32.mrb[0].mxu0
    %4703 = vmatprep.mubr.f32.mxu0 0.0
    %4704 = vmatmul.mubr.f32.gmra.mrb[0].mxu0 %v4391
    %v4705 = vpop.f32.mrb[0].mxu0
    %v4706 = vadd.f32 0.0, %v4705
    %v4707 = vpop.f32.mrb[0].mxu0
    %4708 = vmatprep.mubr.f32.mxu0 0.0
    %4709 = vmatmul.mubr.f32.gmra.mrb[0].mxu0 %v4392
    %v4710 = vpop.f32.mrb[0].mxu0
    %v4711 = vadd.f32 0.0, %v4710
    %v4712 = vpop.f32.mrb[0].mxu0
    %4713 = vmatprep.mubr.f32.mxu0 0.0
    %4714 = vmatmul.mubr.f32.gmra.mrb[0].mxu0 %v4393
    %v4715 = vpop.f32.mrb[0].mxu0
    %v4716 = vadd.f32 0.0, %v4715
    %v4717 = vpop.f32.mrb[0].mxu0
    %4718 = vmatprep.mubr.f32.mxu0 0.0
    %4719 = vmatmul.mubr.f32.gmra.mrb[0].mxu0 %v4394
    %v4720 = vpop.f32.mrb[0].mxu0
    %v4721 = vadd.f32 0.0, %v4720
    %v4722 = vpop.f32.mrb[0].mxu0
    %4723 = vmatprep.mubr.f32.mxu0 0.0
    %4724 = vmatmul.mubr.f32.gmra.mrb[0].mxu0 %v4395
    %v4725 = vpop.f32.mrb[0].mxu0
    %v4726 = vadd.f32 0.0, %v4725
    %v4727 = vpop.f32.mrb[0].mxu0
    %4728 = vmatprep.mubr.f32.mxu0 0.0
    %4729 = vmatmul.mubr.f32.gmra.mrb[0].mxu0 %v4396
    %v4730 = vpop.f32.mrb[0].mxu0
    %v4731 = vadd.f32 0.0, %v4730
    %v4732 = vpop.f32.mrb[0].mxu0
    %4733 = vmatprep.mubr.f32.mxu0 0.0
    %4734 = vmatmul.mubr.f32.gmra.mrb[0].mxu0 %v4397
    %v4735 = vpop.f32.mrb[0].mxu0
    %v4736 = vadd.f32 0.0, %v4735
    %v4737 = vpop.f32.mrb[0].mxu0
    %4738 = vmatprep.mubr.f32.mxu0 0.0
    %4739 = vmatmul.mubr.f32.gmra.mrb[0].mxu0 %v4398
    %v4740 = vpop.f32.mrb[0].mxu0
    %v4741 = vadd.f32 0.0, %v4740
    %v4742 = vpop.f32.mrb[0].mxu0
    %4743 = vmatprep.mubr.f32.mxu0 0.0
    %4744 = vmatmul.mubr.f32.gmra.mrb[0].mxu0 %v4399
    %v4745 = vpop.f32.mrb[0].mxu0
    %v4746 = vadd.f32 0.0, %v4745
    %v4747 = vpop.f32.mrb[0].mxu0
    %4748 = vmatprep.mubr.f32.mxu0 0.0
    %4749 = vmatmul.mubr.f32.gmra.mrb[0].mxu0 %v4400
    %v4750 = vpop.f32.mrb[0].mxu0
    %v4751 = vadd.f32 0.0, %v4750
    %v4752 = vpop.f32.mrb[0].mxu0
    %4753 = vmatprep.mubr.f32.mxu0 0.0
    %4754 = vmatmul.mubr.f32.gmra.mrb[0].mxu0 %v4401
    %v4755 = vpop.f32.mrb[0].mxu0
    %v4756 = vadd.f32 0.0, %v4755
    %v4757 = vpop.f32.mrb[0].mxu0
    %4758 = vmatprep.mubr.f32.mxu0 0.0
    %4759 = vmatmul.mubr.f32.gmra.mrb[0].mxu0 %v4402
    %v4760 = vpop.f32.mrb[0].mxu0
    %v4761 = vadd.f32 0.0, %v4760
    %v4762 = vpop.f32.mrb[0].mxu0
    %4763 = vmatprep.mubr.f32.mxu0 0.0
    %4764 = vmatmul.mubr.f32.gmra.mrb[0].mxu0 %v4403
    %v4765 = vpop.f32.mrb[0].mxu0
    %v4766 = vadd.f32 0.0, %v4765
    %v4767 = vpop.f32.mrb[0].mxu0
    %4768 = vmatprep.mubr.f32.mxu0 0.0
    %4769 = vmatmul.mubr.f32.gmra.mrb[0].mxu0 %v4404
    %v4770 = vpop.f32.mrb[0].mxu0
    %v4771 = vadd.f32 0.0, %v4770
    %v4772 = vpop.f32.mrb[0].mxu0
    %4773 = vmatprep.mubr.f32.mxu0 0.0
    %4774 = vmatmul.mubr.f32.gmra.mrb[0].mxu0 %v4405
    %v4775 = vpop.f32.mrb[0].mxu0
    %v4776 = vadd.f32 0.0, %v4775
    %v4777 = vpop.f32.mrb[0].mxu0
    %4778 = vmatprep.mubr.f32.mxu0 0.0
    %4779 = vmatmul.mubr.f32.gmra.mrb[0].mxu0 %v4406
    %v4780 = vpop.f32.mrb[0].mxu0
    %v4781 = vadd.f32 0.0, %v4780
    %v4782 = vpop.f32.mrb[0].mxu0
    %4783 = vmatprep.mubr.f32.mxu0 0.0
    %4784 = vmatmul.mubr.f32.gmra.mrb[0].mxu0 %v4407
    %v4785 = vpop.f32.mrb[0].mxu0
    %v4786 = vadd.f32 0.0, %v4785
    %v4787 = vpop.f32.mrb[0].mxu0
    %4788 = vmatprep.mubr.f32.mxu0 0.0
    %4789 = vmatmul.mubr.f32.gmra.mrb[0].mxu0 %v4408
    %v4790 = vpop.f32.mrb[0].mxu0
    %v4791 = vadd.f32 0.0, %v4790
    %v4792 = vpop.f32.mrb[0].mxu0
    %4793 = vmatprep.mubr.f32.mxu0 0.0
    %4794 = vmatmul.mubr.f32.gmra.mrb[0].mxu0 %v4409
    %v4795 = vpop.f32.mrb[0].mxu0
    %v4796 = vadd.f32 0.0, %v4795
    %v4797 = vpop.f32.mrb[0].mxu0
    %4798 = vmatprep.mubr.f32.mxu0 0.0
    %4799 = vmatmul.mubr.f32.gmra.mrb[0].mxu0 %v4410
    %v4800 = vpop.f32.mrb[0].mxu0
    %v4801 = vadd.f32 0.0, %v4800
    %v4802 = vpop.f32.mrb[0].mxu0
    %4803 = vmatprep.mubr.f32.mxu0 0.0
    %4804 = vmatmul.mubr.f32.gmra.mrb[0].mxu0 %v4411
    %v4805 = vpop.f32.mrb[0].mxu0
    %v4806 = vadd.f32 0.0, %v4805
    %v4807 = vpop.f32.mrb[0].mxu0
    %4808 = vmatprep.mubr.f32.mxu0 0.0
    %4809 = vmatmul.mubr.f32.gmra.mrb[0].mxu0 %v4412
    %v4810 = vpop.f32.mrb[0].mxu0
    %v4811 = vadd.f32 0.0, %v4810
    %v4812 = vpop.f32.mrb[0].mxu0
    %4813 = vmatprep.mubr.f32.mxu0 0.0
    %4814 = vmatmul.mubr.f32.gmra.mrb[0].mxu0 %v4413
    %v4815 = vpop.f32.mrb[0].mxu0
    %v4816 = vadd.f32 0.0, %v4815
    %v4817 = vpop.f32.mrb[0].mxu0
    %4818 = vmatprep.mubr.f32.mxu0 0.0
    %4819 = vmatmul.mubr.f32.gmra.mrb[0].mxu0 %v4414
    %v4820 = vpop.f32.mrb[0].mxu0
    %v4821 = vadd.f32 0.0, %v4820
    %v4822 = vpop.f32.mrb[0].mxu0
    %4823 = vmatprep.mubr.f32.mxu0 0.0
    %4824 = vmatmul.mubr.f32.gmra.mrb[0].mxu0 %v4415
    %v4825 = vpop.f32.mrb[0].mxu0
    %v4826 = vadd.f32 0.0, %v4825
    %v4827 = vpop.f32.mrb[0].mxu0
    %4828 = vmatprep.mubr.f32.mxu0 0.0
    %4829 = vmatmul.mubr.f32.gmra.mrb[0].mxu0 %v4416
    %v4830 = vpop.f32.mrb[0].mxu0
    %v4831 = vadd.f32 0.0, %v4830
    %v4832 = vpop.f32.mrb[0].mxu0
    %4833 = vmatprep.mubr.f32.mxu0 0.0
    %4834 = vmatmul.mubr.f32.gmra.mrb[0].mxu0 %v4417
    %v4835 = vpop.f32.mrb[0].mxu0
    %v4836 = vadd.f32 0.0, %v4835
    %v4837 = vpop.f32.mrb[0].mxu0
    %4838 = vmatprep.mubr.f32.mxu0 0.0
    %4839 = vmatmul.mubr.f32.gmra.mrb[0].mxu0 %v4418
    %v4840 = vpop.f32.mrb[0].mxu0
    %v4841 = vadd.f32 0.0, %v4840
    %v4842 = vpop.f32.mrb[0].mxu0
    %4843 = vmatprep.mubr.f32.mxu0 0.0
    %4844 = vmatmul.mubr.f32.gmra.mrb[0].mxu0 %v4419
    %v4845 = vpop.f32.mrb[0].mxu0
    %v4846 = vadd.f32 0.0, %v4845
    %v4847 = vpop.f32.mrb[0].mxu0
    %4848 = vmatprep.mubr.f32.mxu0 0.0
    %4849 = vmatmul.mubr.f32.gmra.mrb[0].mxu0 %v4420
    %v4850 = vpop.f32.mrb[0].mxu0
    %v4851 = vadd.f32 0.0, %v4850
    %v4852 = vpop.f32.mrb[0].mxu0
    %4853 = vmatprep.mubr.f32.mxu0 0.0
    %4854 = vmatmul.mubr.f32.gmra.mrb[0].mxu0 %v4421
    %v4855 = vpop.f32.mrb[0].mxu0
    %v4856 = vadd.f32 0.0, %v4855
    %v4857 = vpop.f32.mrb[0].mxu0
    %4858 = vmatprep.mubr.f32.mxu0 0.0
    %4859 = vmatmul.mubr.f32.gmra.mrb[0].mxu0 %v4422
    %v4860 = vpop.f32.mrb[0].mxu0
    %v4861 = vadd.f32 0.0, %v4860
    %v4862 = vpop.f32.mrb[0].mxu0
    %4863 = vmatprep.mubr.f32.mxu0 0.0
    %4864 = vmatmul.mubr.f32.gmra.mrb[0].mxu0 %v4423
    %v4865 = vpop.f32.mrb[0].mxu0
    %v4866 = vadd.f32 0.0, %v4865
    %v4867 = vpop.f32.mrb[0].mxu0
    %4868 = vmatprep.mubr.f32.mxu0 0.0
    %4869 = vmatmul.mubr.f32.gmra.mrb[0].mxu0 %v4424
    %v4870 = vpop.f32.mrb[0].mxu0
    %v4871 = vadd.f32 0.0, %v4870
    %v4872 = vpop.f32.mrb[0].mxu0
    %4873 = vmatprep.mubr.f32.mxu0 0.0
    %4874 = vmatmul.mubr.f32.gmra.mrb[0].mxu0 %v4425
    %v4875 = vpop.f32.mrb[0].mxu0
    %v4876 = vadd.f32 0.0, %v4875
    %v4877 = vpop.f32.mrb[0].mxu0
    %4878 = vmatprep.mubr.f32.mxu0 0.0
    %4879 = vmatmul.mubr.f32.gmra.mrb[0].mxu0 %v4426
    %v4880 = vpop.f32.mrb[0].mxu0
    %v4881 = vadd.f32 0.0, %v4880
    %v4882 = vpop.f32.mrb[0].mxu0
    %4883 = vmatprep.mubr.f32.mxu0 0.0
    %4884 = vmatmul.mubr.f32.gmra.mrb[0].mxu0 %v4427
    %v4885 = vpop.f32.mrb[0].mxu0
    %v4886 = vadd.f32 0.0, %v4885
    %v4887 = vpop.f32.mrb[0].mxu0
    %4888 = vmatprep.mubr.f32.mxu0 0.0
    %4889 = vmatmul.mubr.f32.gmra.mrb[0].mxu0 %v4428
    %v4890 = vpop.f32.mrb[0].mxu0
    %v4891 = vadd.f32 0.0, %v4890
    %v4892 = vpop.f32.mrb[0].mxu0
    %4893 = vmatprep.mubr.f32.mxu0 0.0
    %4894 = vmatmul.mubr.f32.gmra.mrb[0].mxu0 %v4429
    %v4895 = vpop.f32.mrb[0].mxu0
    %v4896 = vadd.f32 0.0, %v4895
    %v4897 = vpop.f32.mrb[0].mxu0
    %4898 = vmatprep.mubr.f32.mxu0 0.0
    %4899 = vmatmul.mubr.f32.gmra.mrb[0].mxu0 %v4430
    %v4900 = vpop.f32.mrb[0].mxu0
    %v4901 = vadd.f32 0.0, %v4900
    %v4902 = vpop.f32.mrb[0].mxu0
    %4903 = vmatprep.mubr.f32.mxu0 0.0
    %4904 = vmatmul.mubr.f32.gmra.mrb[0].mxu0 %v4431
    %v4905 = vpop.f32.mrb[0].mxu0
    %v4906 = vadd.f32 0.0, %v4905
    %v4907 = vpop.f32.mrb[0].mxu0
    %4908 = vmatprep.mubr.f32.mxu0 0.0
    %4909 = vmatmul.mubr.f32.gmra.mrb[0].mxu0 %v4432
    %v4910 = vpop.f32.mrb[0].mxu0
    %v4911 = vadd.f32 0.0, %v4910
    %v4912 = vpop.f32.mrb[0].mxu0
    %4913 = vmatprep.mubr.f32.mxu0 0.0
    %4914 = vmatmul.mubr.f32.gmra.mrb[0].mxu0 %v4433
    %v4915 = vpop.f32.mrb[0].mxu0
    %v4916 = vadd.f32 0.0, %v4915
    %v4917 = vpop.f32.mrb[0].mxu0
    %4918 = vmatprep.mubr.f32.mxu0 0.0
    %4919 = vmatmul.mubr.f32.gmra.mrb[0].mxu0 %v4434
    %v4920 = vpop.f32.mrb[0].mxu0
    %v4921 = vadd.f32 0.0, %v4920
    %v4922 = vpop.f32.mrb[0].mxu0
    %4923 = vmatprep.mubr.f32.mxu0 0.0
    %4924 = vmatmul.mubr.f32.gmra.mrb[0].mxu0 %v4435
    %v4925 = vpop.f32.mrb[0].mxu0
    %v4926 = vadd.f32 0.0, %v4925
    %v4927 = vpop.f32.mrb[0].mxu0
    %4928 = vmatprep.mubr.f32.mxu0 0.0
    %4929 = vmatmul.mubr.f32.gmra.mrb[0].mxu0 %v4436
    %v4930 = vpop.f32.mrb[0].mxu0
    %v4931 = vadd.f32 0.0, %v4930
    %v4932 = vpop.f32.mrb[0].mxu0
    %4933 = vmatprep.mubr.f32.mxu0 0.0
    %4934 = vmatmul.mubr.f32.gmra.mrb[0].mxu0 %v4437
    %v4935 = vpop.f32.mrb[0].mxu0
    %v4936 = vadd.f32 0.0, %v4935
    %v4937 = vpop.f32.mrb[0].mxu0
    %4938 = vmatprep.mubr.f32.mxu0 0.0
    %4939 = vmatmul.mubr.f32.gmra.mrb[0].mxu0 %v4438
    %v4940 = vpop.f32.mrb[0].mxu0
    %v4941 = vadd.f32 0.0, %v4940
    %v4942 = vpop.f32.mrb[0].mxu0
    %4943 = vmatprep.mubr.f32.mxu0 0.0
    %4944 = vmatmul.mubr.f32.gmra.mrb[0].mxu0 %v4439
    %v4945 = vpop.f32.mrb[0].mxu0
    %v4946 = vadd.f32 0.0, %v4945
    %v4947 = vpop.f32.mrb[0].mxu0
    %4948 = vmatprep.mubr.f32.mxu0 0.0
    %4949 = vmatmul.mubr.f32.gmra.mrb[0].mxu0 %v4440
    %v4950 = vpop.f32.mrb[0].mxu0
    %v4951 = vadd.f32 0.0, %v4950
    %v4952 = vpop.f32.mrb[0].mxu0
    %4953 = vmatprep.mubr.f32.mxu0 0.0
    %4954 = vmatmul.mubr.f32.gmra.mrb[0].mxu0 %v4441
    %v4955 = vpop.f32.mrb[0].mxu0
    %v4956 = vadd.f32 0.0, %v4955
    %v4957 = vpop.f32.mrb[0].mxu0
    %4958 = vmatprep.mubr.f32.mxu0 0.0
    %4959 = vmatmul.mubr.f32.gmra.mrb[0].mxu0 %v4442
    %v4960 = vpop.f32.mrb[0].mxu0
    %v4961 = vadd.f32 0.0, %v4960
    %v4962 = vpop.f32.mrb[0].mxu0
    %4963 = vmatprep.mubr.f32.mxu0 0.0
    %4964 = vmatmul.mubr.f32.gmra.mrb[0].mxu0 %v4443
    %v4965 = vpop.f32.mrb[0].mxu0
    %v4966 = vadd.f32 0.0, %v4965
    %v4967 = vpop.f32.mrb[0].mxu0
    %4968 = vmatprep.mubr.f32.mxu0 0.0
    %4969 = vmatmul.mubr.f32.gmra.mrb[0].mxu0 %v4444
    %v4970 = vpop.f32.mrb[0].mxu0
    %v4971 = vadd.f32 0.0, %v4970
    %v4972 = vpop.f32.mrb[0].mxu0
    %4973 = vdwg.mxu0
    %4974 = vmatprep.subr.mxu0 0.0
    %4975 = vmatpush1.msra.mxu0 %v4573
    %4976 = vmatprep.subr.mxu0 0.0
    %4977 = vmatpush1.msra.mxu0 %v4574
    %4978 = vmatprep.subr.mxu0 0.0
    %4979 = vmatpush1.msra.mxu0 %v4575
    %4980 = vmatprep.subr.mxu0 0.0
    %4981 = vmatpush1.msra.mxu0 %v4576
    %4982 = vmatprep.subr.mxu0 0.0
    %4983 = vmatpush1.msra.mxu0 %v4577
    %4984 = vmatprep.subr.mxu0 0.0
    %4985 = vmatpush1.msra.mxu0 %v4578
    %4986 = vmatprep.subr.mxu0 0.0
    %4987 = vmatpush1.msra.mxu0 %v4579
    %4988 = vmatprep.subr.mxu0 0.0
    %4989 = vmatpush1.msra.mxu0 %v4580
    %4990 = vmatprep.subr.mxu0 0.0
    %4991 = vmatpush1.msra.mxu0 %v4581
    %4992 = vmatprep.subr.mxu0 0.0
    %4993 = vmatpush1.msra.mxu0 %v4582
    %4994 = vmatprep.subr.mxu0 0.0
    %4995 = vmatpush1.msra.mxu0 %v4583
    %4996 = vmatprep.subr.mxu0 0.0
    %4997 = vmatpush1.msra.mxu0 %v4584
    %4998 = vmatprep.subr.mxu0 0.0
    %4999 = vmatpush1.msra.mxu0 %v4585
    %5000 = vmatprep.subr.mxu0 0.0
    %5001 = vmatpush1.msra.mxu0 %v4586
    %5002 = vmatprep.subr.mxu0 0.0
    %5003 = vmatpush1.msra.mxu0 %v4587
    %5004 = vmatprep.subr.mxu0 0.0
    %5005 = vmatpush1.msra.mxu0 %v4588
    %5006 = vmatprep.subr.mxu0 0.0
    %5007 = vmatpush1.msra.mxu0 0.0
    %5008 = vmatprep.subr.mxu0 0.0
    %5009 = vmatpush1.msra.mxu0 0.0
    %5010 = vmatprep.subr.mxu0 0.0
    %5011 = vmatpush1.msra.mxu0 0.0
    %5012 = vmatprep.subr.mxu0 0.0
    %5013 = vmatpush1.msra.mxu0 0.0
    %5014 = vmatprep.subr.mxu0 0.0
    %5015 = vmatpush1.msra.mxu0 0.0
    %5016 = vmatprep.subr.mxu0 0.0
    %5017 = vmatpush1.msra.mxu0 0.0
    %5018 = vmatprep.subr.mxu0 0.0
    %5019 = vmatpush1.msra.mxu0 0.0
    %5020 = vmatprep.subr.mxu0 0.0
    %5021 = vmatpush1.msra.mxu0 0.0
    %5022 = vmatprep.subr.mxu0 0.0
    %5023 = vmatpush1.msra.mxu0 0.0
    %5024 = vmatprep.subr.mxu0 0.0
    %5025 = vmatpush1.msra.mxu0 0.0
    %5026 = vmatprep.subr.mxu0 0.0
    %5027 = vmatpush1.msra.mxu0 0.0
    %5028 = vmatprep.subr.mxu0 0.0
    %5029 = vmatpush1.msra.mxu0 0.0
    %5030 = vmatprep.subr.mxu0 0.0
    %5031 = vmatpush1.msra.mxu0 0.0
    %5032 = vmatprep.subr.mxu0 0.0
    %5033 = vmatpush1.msra.mxu0 0.0
    %5034 = vmatprep.subr.mxu0 0.0
    %5035 = vmatpush1.msra.mxu0 0.0
    %5036 = vmatprep.subr.mxu0 0.0
    %5037 = vmatpush1.msra.mxu0 0.0
    %5038 = vmatprep.mubr.f32.mxu0 0.0
    %5039 = vmatmul.mubr.f32.gmra.mrb[0].mxu0 %v4509
    %v5040 = vpop.f32.mrb[0].mxu0
    %v5041 = vadd.f32 0.0, %v5040
    %v5042 = vpop.f32.mrb[0].mxu0
    %5043 = vmatprep.mubr.f32.mxu0 0.0
    %5044 = vmatmul.mubr.f32.gmra.mrb[0].mxu0 %v4510
    %v5045 = vpop.f32.mrb[0].mxu0
    %v5046 = vadd.f32 0.0, %v5045
    %v5047 = vpop.f32.mrb[0].mxu0
    %5048 = vmatprep.mubr.f32.mxu0 0.0
    %5049 = vmatmul.mubr.f32.gmra.mrb[0].mxu0 %v4511
    %v5050 = vpop.f32.mrb[0].mxu0
    %v5051 = vadd.f32 0.0, %v5050
    %v5052 = vpop.f32.mrb[0].mxu0
    %5053 = vmatprep.mubr.f32.mxu0 0.0
    %5054 = vmatmul.mubr.f32.gmra.mrb[0].mxu0 %v4512
    %v5055 = vpop.f32.mrb[0].mxu0
    %v5056 = vadd.f32 0.0, %v5055
    %v5057 = vpop.f32.mrb[0].mxu0
    %5058 = vmatprep.mubr.f32.mxu0 0.0
    %5059 = vmatmul.mubr.f32.gmra.mrb[0].mxu0 %v4513
    %v5060 = vpop.f32.mrb[0].mxu0
    %v5061 = vadd.f32 0.0, %v5060
    %v5062 = vpop.f32.mrb[0].mxu0
    %5063 = vmatprep.mubr.f32.mxu0 0.0
    %5064 = vmatmul.mubr.f32.gmra.mrb[0].mxu0 %v4514
    %v5065 = vpop.f32.mrb[0].mxu0
    %v5066 = vadd.f32 0.0, %v5065
    %v5067 = vpop.f32.mrb[0].mxu0
    %5068 = vmatprep.mubr.f32.mxu0 0.0
    %5069 = vmatmul.mubr.f32.gmra.mrb[0].mxu0 %v4515
    %v5070 = vpop.f32.mrb[0].mxu0
    %v5071 = vadd.f32 0.0, %v5070
    %v5072 = vpop.f32.mrb[0].mxu0
    %5073 = vmatprep.mubr.f32.mxu0 0.0
    %5074 = vmatmul.mubr.f32.gmra.mrb[0].mxu0 %v4516
    %v5075 = vpop.f32.mrb[0].mxu0
    %v5076 = vadd.f32 0.0, %v5075
    %v5077 = vpop.f32.mrb[0].mxu0
    %5078 = vmatprep.mubr.f32.mxu0 0.0
    %5079 = vmatmul.mubr.f32.gmra.mrb[0].mxu0 %v4517
    %v5080 = vpop.f32.mrb[0].mxu0
    %v5081 = vadd.f32 0.0, %v5080
    %v5082 = vpop.f32.mrb[0].mxu0
    %5083 = vmatprep.mubr.f32.mxu0 0.0
    %5084 = vmatmul.mubr.f32.gmra.mrb[0].mxu0 %v4518
    %v5085 = vpop.f32.mrb[0].mxu0
    %v5086 = vadd.f32 0.0, %v5085
    %v5087 = vpop.f32.mrb[0].mxu0
    %5088 = vmatprep.mubr.f32.mxu0 0.0
    %5089 = vmatmul.mubr.f32.gmra.mrb[0].mxu0 %v4519
    %v5090 = vpop.f32.mrb[0].mxu0
    %v5091 = vadd.f32 0.0, %v5090
    %v5092 = vpop.f32.mrb[0].mxu0
    %5093 = vmatprep.mubr.f32.mxu0 0.0
    %5094 = vmatmul.mubr.f32.gmra.mrb[0].mxu0 %v4520
    %v5095 = vpop.f32.mrb[0].mxu0
    %v5096 = vadd.f32 0.0, %v5095
    %v5097 = vpop.f32.mrb[0].mxu0
    %5098 = vmatprep.mubr.f32.mxu0 0.0
    %5099 = vmatmul.mubr.f32.gmra.mrb[0].mxu0 %v4521
    %v5100 = vpop.f32.mrb[0].mxu0
    %v5101 = vadd.f32 0.0, %v5100
    %v5102 = vpop.f32.mrb[0].mxu0
    %5103 = vmatprep.mubr.f32.mxu0 0.0
    %5104 = vmatmul.mubr.f32.gmra.mrb[0].mxu0 %v4522
    %v5105 = vpop.f32.mrb[0].mxu0
    %v5106 = vadd.f32 0.0, %v5105
    %v5107 = vpop.f32.mrb[0].mxu0
    %5108 = vmatprep.mubr.f32.mxu0 0.0
    %5109 = vmatmul.mubr.f32.gmra.mrb[0].mxu0 %v4523
    %v5110 = vpop.f32.mrb[0].mxu0
    %v5111 = vadd.f32 0.0, %v5110
    %v5112 = vpop.f32.mrb[0].mxu0
    %5113 = vmatprep.mubr.f32.mxu0 0.0
    %5114 = vmatmul.mubr.f32.gmra.mrb[0].mxu0 %v4524
    %v5115 = vpop.f32.mrb[0].mxu0
    %v5116 = vadd.f32 0.0, %v5115
    %v5117 = vpop.f32.mrb[0].mxu0
    %5118 = vmatprep.mubr.f32.mxu0 0.0
    %5119 = vmatmul.mubr.f32.gmra.mrb[0].mxu0 %v4525
    %v5120 = vpop.f32.mrb[0].mxu0
    %v5121 = vadd.f32 0.0, %v5120
    %v5122 = vpop.f32.mrb[0].mxu0
    %5123 = vmatprep.mubr.f32.mxu0 0.0
    %5124 = vmatmul.mubr.f32.gmra.mrb[0].mxu0 %v4526
    %v5125 = vpop.f32.mrb[0].mxu0
    %v5126 = vadd.f32 0.0, %v5125
    %v5127 = vpop.f32.mrb[0].mxu0
    %5128 = vmatprep.mubr.f32.mxu0 0.0
    %5129 = vmatmul.mubr.f32.gmra.mrb[0].mxu0 %v4527
    %v5130 = vpop.f32.mrb[0].mxu0
    %v5131 = vadd.f32 0.0, %v5130
    %v5132 = vpop.f32.mrb[0].mxu0
    %5133 = vmatprep.mubr.f32.mxu0 0.0
    %5134 = vmatmul.mubr.f32.gmra.mrb[0].mxu0 %v4528
    %v5135 = vpop.f32.mrb[0].mxu0
    %v5136 = vadd.f32 0.0, %v5135
    %v5137 = vpop.f32.mrb[0].mxu0
    %5138 = vmatprep.mubr.f32.mxu0 0.0
    %5139 = vmatmul.mubr.f32.gmra.mrb[0].mxu0 %v4529
    %v5140 = vpop.f32.mrb[0].mxu0
    %v5141 = vadd.f32 0.0, %v5140
    %v5142 = vpop.f32.mrb[0].mxu0
    %5143 = vmatprep.mubr.f32.mxu0 0.0
    %5144 = vmatmul.mubr.f32.gmra.mrb[0].mxu0 %v4530
    %v5145 = vpop.f32.mrb[0].mxu0
    %v5146 = vadd.f32 0.0, %v5145
    %v5147 = vpop.f32.mrb[0].mxu0
    %5148 = vmatprep.mubr.f32.mxu0 0.0
    %5149 = vmatmul.mubr.f32.gmra.mrb[0].mxu0 %v4531
    %v5150 = vpop.f32.mrb[0].mxu0
    %v5151 = vadd.f32 0.0, %v5150
    %v5152 = vpop.f32.mrb[0].mxu0
    %5153 = vmatprep.mubr.f32.mxu0 0.0
    %5154 = vmatmul.mubr.f32.gmra.mrb[0].mxu0 %v4532
    %v5155 = vpop.f32.mrb[0].mxu0
    %v5156 = vadd.f32 0.0, %v5155
    %v5157 = vpop.f32.mrb[0].mxu0
    %5158 = vmatprep.mubr.f32.mxu0 0.0
    %5159 = vmatmul.mubr.f32.gmra.mrb[0].mxu0 %v4533
    %v5160 = vpop.f32.mrb[0].mxu0
    %v5161 = vadd.f32 0.0, %v5160
    %v5162 = vpop.f32.mrb[0].mxu0
    %5163 = vmatprep.mubr.f32.mxu0 0.0
    %5164 = vmatmul.mubr.f32.gmra.mrb[0].mxu0 %v4534
    %v5165 = vpop.f32.mrb[0].mxu0
    %v5166 = vadd.f32 0.0, %v5165
    %v5167 = vpop.f32.mrb[0].mxu0
    %5168 = vmatprep.mubr.f32.mxu0 0.0
    %5169 = vmatmul.mubr.f32.gmra.mrb[0].mxu0 %v4535
    %v5170 = vpop.f32.mrb[0].mxu0
    %v5171 = vadd.f32 0.0, %v5170
    %v5172 = vpop.f32.mrb[0].mxu0
    %5173 = vmatprep.mubr.f32.mxu0 0.0
    %5174 = vmatmul.mubr.f32.gmra.mrb[0].mxu0 %v4536
    %v5175 = vpop.f32.mrb[0].mxu0
    %v5176 = vadd.f32 0.0, %v5175
    %v5177 = vpop.f32.mrb[0].mxu0
    %5178 = vmatprep.mubr.f32.mxu0 0.0
    %5179 = vmatmul.mubr.f32.gmra.mrb[0].mxu0 %v4537
    %v5180 = vpop.f32.mrb[0].mxu0
    %v5181 = vadd.f32 0.0, %v5180
    %v5182 = vpop.f32.mrb[0].mxu0
    %5183 = vmatprep.mubr.f32.mxu0 0.0
    %5184 = vmatmul.mubr.f32.gmra.mrb[0].mxu0 %v4538
    %v5185 = vpop.f32.mrb[0].mxu0
    %v5186 = vadd.f32 0.0, %v5185
    %v5187 = vpop.f32.mrb[0].mxu0
    %5188 = vmatprep.mubr.f32.mxu0 0.0
    %5189 = vmatmul.mubr.f32.gmra.mrb[0].mxu0 %v4539
    %v5190 = vpop.f32.mrb[0].mxu0
    %v5191 = vadd.f32 0.0, %v5190
    %v5192 = vpop.f32.mrb[0].mxu0
    %5193 = vmatprep.mubr.f32.mxu0 0.0
    %5194 = vmatmul.mubr.f32.gmra.mrb[0].mxu0 %v4540
    %v5195 = vpop.f32.mrb[0].mxu0
    %v5196 = vadd.f32 0.0, %v5195
    %v5197 = vpop.f32.mrb[0].mxu0
    %5198 = vmatprep.mubr.f32.mxu0 0.0
    %5199 = vmatmul.mubr.f32.gmra.mrb[0].mxu0 %v4541
    %v5200 = vpop.f32.mrb[0].mxu0
    %v5201 = vadd.f32 0.0, %v5200
    %v5202 = vpop.f32.mrb[0].mxu0
    %5203 = vmatprep.mubr.f32.mxu0 0.0
    %5204 = vmatmul.mubr.f32.gmra.mrb[0].mxu0 %v4542
    %v5205 = vpop.f32.mrb[0].mxu0
    %v5206 = vadd.f32 0.0, %v5205
    %v5207 = vpop.f32.mrb[0].mxu0
    %5208 = vmatprep.mubr.f32.mxu0 0.0
    %5209 = vmatmul.mubr.f32.gmra.mrb[0].mxu0 %v4543
    %v5210 = vpop.f32.mrb[0].mxu0
    %v5211 = vadd.f32 0.0, %v5210
    %v5212 = vpop.f32.mrb[0].mxu0
    %5213 = vmatprep.mubr.f32.mxu0 0.0
    %5214 = vmatmul.mubr.f32.gmra.mrb[0].mxu0 %v4544
    %v5215 = vpop.f32.mrb[0].mxu0
    %v5216 = vadd.f32 0.0, %v5215
    %v5217 = vpop.f32.mrb[0].mxu0
    %5218 = vmatprep.mubr.f32.mxu0 0.0
    %5219 = vmatmul.mubr.f32.gmra.mrb[0].mxu0 %v4545
    %v5220 = vpop.f32.mrb[0].mxu0
    %v5221 = vadd.f32 0.0, %v5220
    %v5222 = vpop.f32.mrb[0].mxu0
    %5223 = vmatprep.mubr.f32.mxu0 0.0
    %5224 = vmatmul.mubr.f32.gmra.mrb[0].mxu0 %v4546
    %v5225 = vpop.f32.mrb[0].mxu0
    %v5226 = vadd.f32 0.0, %v5225
    %v5227 = vpop.f32.mrb[0].mxu0
    %5228 = vmatprep.mubr.f32.mxu0 0.0
    %5229 = vmatmul.mubr.f32.gmra.mrb[0].mxu0 %v4547
    %v5230 = vpop.f32.mrb[0].mxu0
    %v5231 = vadd.f32 0.0, %v5230
    %v5232 = vpop.f32.mrb[0].mxu0
    %5233 = vmatprep.mubr.f32.mxu0 0.0
    %5234 = vmatmul.mubr.f32.gmra.mrb[0].mxu0 %v4548
    %v5235 = vpop.f32.mrb[0].mxu0
    %v5236 = vadd.f32 0.0, %v5235
    %v5237 = vpop.f32.mrb[0].mxu0
    %5238 = vmatprep.mubr.f32.mxu0 0.0
    %5239 = vmatmul.mubr.f32.gmra.mrb[0].mxu0 %v4549
    %v5240 = vpop.f32.mrb[0].mxu0
    %v5241 = vadd.f32 0.0, %v5240
    %v5242 = vpop.f32.mrb[0].mxu0
    %5243 = vmatprep.mubr.f32.mxu0 0.0
    %5244 = vmatmul.mubr.f32.gmra.mrb[0].mxu0 %v4550
    %v5245 = vpop.f32.mrb[0].mxu0
    %v5246 = vadd.f32 0.0, %v5245
    %v5247 = vpop.f32.mrb[0].mxu0
    %5248 = vmatprep.mubr.f32.mxu0 0.0
    %5249 = vmatmul.mubr.f32.gmra.mrb[0].mxu0 %v4551
    %v5250 = vpop.f32.mrb[0].mxu0
    %v5251 = vadd.f32 0.0, %v5250
    %v5252 = vpop.f32.mrb[0].mxu0
    %5253 = vmatprep.mubr.f32.mxu0 0.0
    %5254 = vmatmul.mubr.f32.gmra.mrb[0].mxu0 %v4552
    %v5255 = vpop.f32.mrb[0].mxu0
    %v5256 = vadd.f32 0.0, %v5255
    %v5257 = vpop.f32.mrb[0].mxu0
    %5258 = vmatprep.mubr.f32.mxu0 0.0
    %5259 = vmatmul.mubr.f32.gmra.mrb[0].mxu0 %v4553
    %v5260 = vpop.f32.mrb[0].mxu0
    %v5261 = vadd.f32 0.0, %v5260
    %v5262 = vpop.f32.mrb[0].mxu0
    %5263 = vmatprep.mubr.f32.mxu0 0.0
    %5264 = vmatmul.mubr.f32.gmra.mrb[0].mxu0 %v4554
    %v5265 = vpop.f32.mrb[0].mxu0
    %v5266 = vadd.f32 0.0, %v5265
    %v5267 = vpop.f32.mrb[0].mxu0
    %5268 = vmatprep.mubr.f32.mxu0 0.0
    %5269 = vmatmul.mubr.f32.gmra.mrb[0].mxu0 %v4555
    %v5270 = vpop.f32.mrb[0].mxu0
    %v5271 = vadd.f32 0.0, %v5270
    %v5272 = vpop.f32.mrb[0].mxu0
    %5273 = vmatprep.mubr.f32.mxu0 0.0
    %5274 = vmatmul.mubr.f32.gmra.mrb[0].mxu0 %v4556
    %v5275 = vpop.f32.mrb[0].mxu0
    %v5276 = vadd.f32 0.0, %v5275
    %v5277 = vpop.f32.mrb[0].mxu0
    %5278 = vmatprep.mubr.f32.mxu0 0.0
    %5279 = vmatmul.mubr.f32.gmra.mrb[0].mxu0 %v4557
    %v5280 = vpop.f32.mrb[0].mxu0
    %v5281 = vadd.f32 0.0, %v5280
    %v5282 = vpop.f32.mrb[0].mxu0
    %5283 = vmatprep.mubr.f32.mxu0 0.0
    %5284 = vmatmul.mubr.f32.gmra.mrb[0].mxu0 %v4558
    %v5285 = vpop.f32.mrb[0].mxu0
    %v5286 = vadd.f32 0.0, %v5285
    %v5287 = vpop.f32.mrb[0].mxu0
    %5288 = vmatprep.mubr.f32.mxu0 0.0
    %5289 = vmatmul.mubr.f32.gmra.mrb[0].mxu0 %v4559
    %v5290 = vpop.f32.mrb[0].mxu0
    %v5291 = vadd.f32 0.0, %v5290
    %v5292 = vpop.f32.mrb[0].mxu0
    %5293 = vmatprep.mubr.f32.mxu0 0.0
    %5294 = vmatmul.mubr.f32.gmra.mrb[0].mxu0 %v4560
    %v5295 = vpop.f32.mrb[0].mxu0
    %v5296 = vadd.f32 0.0, %v5295
    %v5297 = vpop.f32.mrb[0].mxu0
    %5298 = vmatprep.mubr.f32.mxu0 0.0
    %5299 = vmatmul.mubr.f32.gmra.mrb[0].mxu0 %v4561
    %v5300 = vpop.f32.mrb[0].mxu0
    %v5301 = vadd.f32 0.0, %v5300
    %v5302 = vpop.f32.mrb[0].mxu0
    %5303 = vmatprep.mubr.f32.mxu0 0.0
    %5304 = vmatmul.mubr.f32.gmra.mrb[0].mxu0 %v4562
    %v5305 = vpop.f32.mrb[0].mxu0
    %v5306 = vadd.f32 0.0, %v5305
    %v5307 = vpop.f32.mrb[0].mxu0
    %5308 = vmatprep.mubr.f32.mxu0 0.0
    %5309 = vmatmul.mubr.f32.gmra.mrb[0].mxu0 %v4563
    %v5310 = vpop.f32.mrb[0].mxu0
    %v5311 = vadd.f32 0.0, %v5310
    %v5312 = vpop.f32.mrb[0].mxu0
    %5313 = vmatprep.mubr.f32.mxu0 0.0
    %5314 = vmatmul.mubr.f32.gmra.mrb[0].mxu0 %v4564
    %v5315 = vpop.f32.mrb[0].mxu0
    %v5316 = vadd.f32 0.0, %v5315
    %v5317 = vpop.f32.mrb[0].mxu0
    %5318 = vmatprep.mubr.f32.mxu0 0.0
    %5319 = vmatmul.mubr.f32.gmra.mrb[0].mxu0 %v4565
    %v5320 = vpop.f32.mrb[0].mxu0
    %v5321 = vadd.f32 0.0, %v5320
    %v5322 = vpop.f32.mrb[0].mxu0
    %5323 = vmatprep.mubr.f32.mxu0 0.0
    %5324 = vmatmul.mubr.f32.gmra.mrb[0].mxu0 %v4566
    %v5325 = vpop.f32.mrb[0].mxu0
    %v5326 = vadd.f32 0.0, %v5325
    %v5327 = vpop.f32.mrb[0].mxu0
    %5328 = vmatprep.mubr.f32.mxu0 0.0
    %5329 = vmatmul.mubr.f32.gmra.mrb[0].mxu0 %v4567
    %v5330 = vpop.f32.mrb[0].mxu0
    %v5331 = vadd.f32 0.0, %v5330
    %v5332 = vpop.f32.mrb[0].mxu0
    %5333 = vmatprep.mubr.f32.mxu0 0.0
    %5334 = vmatmul.mubr.f32.gmra.mrb[0].mxu0 %v4568
    %v5335 = vpop.f32.mrb[0].mxu0
    %v5336 = vadd.f32 0.0, %v5335
    %v5337 = vpop.f32.mrb[0].mxu0
    %5338 = vmatprep.mubr.f32.mxu0 0.0
    %5339 = vmatmul.mubr.f32.gmra.mrb[0].mxu0 %v4569
    %v5340 = vpop.f32.mrb[0].mxu0
    %v5341 = vadd.f32 0.0, %v5340
    %v5342 = vpop.f32.mrb[0].mxu0
    %5343 = vmatprep.mubr.f32.mxu0 0.0
    %5344 = vmatmul.mubr.f32.gmra.mrb[0].mxu0 %v4570
    %v5345 = vpop.f32.mrb[0].mxu0
    %v5346 = vadd.f32 0.0, %v5345
    %v5347 = vpop.f32.mrb[0].mxu0
    %5348 = vmatprep.mubr.f32.mxu0 0.0
    %5349 = vmatmul.mubr.f32.gmra.mrb[0].mxu0 %v4571
    %v5350 = vpop.f32.mrb[0].mxu0
    %v5351 = vadd.f32 0.0, %v5350
    %v5352 = vpop.f32.mrb[0].mxu0
    %5353 = vmatprep.mubr.f32.mxu0 0.0
    %5354 = vmatmul.mubr.f32.gmra.mrb[0].mxu0 %v4572
    %v5355 = vpop.f32.mrb[0].mxu0
    %v5356 = vadd.f32 0.0, %v5355
    %v5357 = vpop.f32.mrb[0].mxu0
    %5358 = vdwg.mxu0
    %v5359 = vadd.f32 %v4381, %v4509
    %v5360 = vadd.f32 %v4382, %v4510
    %v5361 = vadd.f32 %v4383, %v4511
    %v5362 = vadd.f32 %v4384, %v4512
    %v5363 = vadd.f32 %v4385, %v4513
    %v5364 = vadd.f32 %v4386, %v4514
    %v5365 = vadd.f32 %v4387, %v4515
    %v5366 = vadd.f32 %v4388, %v4516
    %v5367 = vadd.f32 %v4389, %v4517
    %v5368 = vadd.f32 %v4390, %v4518
    %v5369 = vadd.f32 %v4391, %v4519
    %v5370 = vadd.f32 %v4392, %v4520
    %v5371 = vadd.f32 %v4393, %v4521
    %v5372 = vadd.f32 %v4394, %v4522
    %v5373 = vadd.f32 %v4395, %v4523
    %v5374 = vadd.f32 %v4396, %v4524
    %v5375 = vadd.f32 %v4397, %v4525
    %v5376 = vadd.f32 %v4398, %v4526
    %v5377 = vadd.f32 %v4399, %v4527
    %v5378 = vadd.f32 %v4400, %v4528
    %v5379 = vadd.f32 %v4401, %v4529
    %v5380 = vadd.f32 %v4402, %v4530
    %v5381 = vadd.f32 %v4403, %v4531
    %v5382 = vadd.f32 %v4404, %v4532
    %v5383 = vadd.f32 %v4405, %v4533
    %v5384 = vadd.f32 %v4406, %v4534
    %v5385 = vadd.f32 %v4407, %v4535
    %v5386 = vadd.f32 %v4408, %v4536
    %v5387 = vadd.f32 %v4409, %v4537
    %v5388 = vadd.f32 %v4410, %v4538
    %v5389 = vadd.f32 %v4411, %v4539
    %v5390 = vadd.f32 %v4412, %v4540
    %v5391 = vadd.f32 %v4413, %v4541
    %v5392 = vadd.f32 %v4414, %v4542
    %v5393 = vadd.f32 %v4415, %v4543
    %v5394 = vadd.f32 %v4416, %v4544
    %v5395 = vadd.f32 %v4417, %v4545
    %v5396 = vadd.f32 %v4418, %v4546
    %v5397 = vadd.f32 %v4419, %v4547
    %v5398 = vadd.f32 %v4420, %v4548
    %v5399 = vadd.f32 %v4421, %v4549
    %v5400 = vadd.f32 %v4422, %v4550
    %v5401 = vadd.f32 %v4423, %v4551
    %v5402 = vadd.f32 %v4424, %v4552
    %v5403 = vadd.f32 %v4425, %v4553
    %v5404 = vadd.f32 %v4426, %v4554
    %v5405 = vadd.f32 %v4427, %v4555
    %v5406 = vadd.f32 %v4428, %v4556
    %v5407 = vadd.f32 %v4429, %v4557
    %v5408 = vadd.f32 %v4430, %v4558
    %v5409 = vadd.f32 %v4431, %v4559
    %v5410 = vadd.f32 %v4432, %v4560
    %v5411 = vadd.f32 %v4433, %v4561
    %v5412 = vadd.f32 %v4434, %v4562
    %v5413 = vadd.f32 %v4435, %v4563
    %v5414 = vadd.f32 %v4436, %v4564
    %v5415 = vadd.f32 %v4437, %v4565
    %v5416 = vadd.f32 %v4438, %v4566
    %v5417 = vadd.f32 %v4439, %v4567
    %v5418 = vadd.f32 %v4440, %v4568
    %v5419 = vadd.f32 %v4441, %v4569
    %v5420 = vadd.f32 %v4442, %v4570
    %v5421 = vadd.f32 %v4443, %v4571
    %v5422 = vadd.f32 %v4444, %v4572
    %v5423 = vadd.f32 %v1412, %v4573
    %v5424 = vadd.f32 %v1413, %v4574
    %v5425 = vadd.f32 %v1414, %v4575
    %v5426 = vadd.f32 %v1415, %v4576
    %v5427 = vadd.f32 %v1416, %v4577
    %v5428 = vadd.f32 %v1417, %v4578
    %v5429 = vadd.f32 %v1418, %v4579
    %v5430 = vadd.f32 %v1419, %v4580
    %v5431 = vadd.f32 %v1420, %v4581
    %v5432 = vadd.f32 %v1421, %v4582
    %v5433 = vadd.f32 %v1422, %v4583
    %v5434 = vadd.f32 %v1423, %v4584
    %v5435 = vadd.f32 %v1424, %v4585
    %v5436 = vadd.f32 %v1425, %v4586
    %v5437 = vadd.f32 %v1426, %v4587
    %v5438 = vadd.f32 %v1427, %v4588
    %5439 = vmatprep.subr.mxu0 0.0
    %5440 = vmatpush1.msra.mxu0 %v5423
    %5441 = vmatprep.subr.mxu0 0.0
    %5442 = vmatpush1.msra.mxu0 %v5424
    %5443 = vmatprep.subr.mxu0 0.0
    %5444 = vmatpush1.msra.mxu0 %v5425
    %5445 = vmatprep.subr.mxu0 0.0
    %5446 = vmatpush1.msra.mxu0 %v5426
    %5447 = vmatprep.subr.mxu0 0.0
    %5448 = vmatpush1.msra.mxu0 %v5427
    %5449 = vmatprep.subr.mxu0 0.0
    %5450 = vmatpush1.msra.mxu0 %v5428
    %5451 = vmatprep.subr.mxu0 0.0
    %5452 = vmatpush1.msra.mxu0 %v5429
    %5453 = vmatprep.subr.mxu0 0.0
    %5454 = vmatpush1.msra.mxu0 %v5430
    %5455 = vmatprep.subr.mxu0 0.0
    %5456 = vmatpush1.msra.mxu0 %v5431
    %5457 = vmatprep.subr.mxu0 0.0
    %5458 = vmatpush1.msra.mxu0 %v5432
    %5459 = vmatprep.subr.mxu0 0.0
    %5460 = vmatpush1.msra.mxu0 %v5433
    %5461 = vmatprep.subr.mxu0 0.0
    %5462 = vmatpush1.msra.mxu0 %v5434
    %5463 = vmatprep.subr.mxu0 0.0
    %5464 = vmatpush1.msra.mxu0 %v5435
    %5465 = vmatprep.subr.mxu0 0.0
    %5466 = vmatpush1.msra.mxu0 %v5436
    %5467 = vmatprep.subr.mxu0 0.0
    %5468 = vmatpush1.msra.mxu0 %v5437
    %5469 = vmatprep.subr.mxu0 0.0
    %5470 = vmatpush1.msra.mxu0 %v5438
    %5471 = vmatprep.subr.mxu0 0.0
    %5472 = vmatpush1.msra.mxu0 0.0
    %5473 = vmatprep.subr.mxu0 0.0
    %5474 = vmatpush1.msra.mxu0 0.0
    %5475 = vmatprep.subr.mxu0 0.0
    %5476 = vmatpush1.msra.mxu0 0.0
    %5477 = vmatprep.subr.mxu0 0.0
    %5478 = vmatpush1.msra.mxu0 0.0
    %5479 = vmatprep.subr.mxu0 0.0
    %5480 = vmatpush1.msra.mxu0 0.0
    %5481 = vmatprep.subr.mxu0 0.0
    %5482 = vmatpush1.msra.mxu0 0.0
    %5483 = vmatprep.subr.mxu0 0.0
    %5484 = vmatpush1.msra.mxu0 0.0
    %5485 = vmatprep.subr.mxu0 0.0
    %5486 = vmatpush1.msra.mxu0 0.0
    %5487 = vmatprep.subr.mxu0 0.0
    %5488 = vmatpush1.msra.mxu0 0.0
    %5489 = vmatprep.subr.mxu0 0.0
    %5490 = vmatpush1.msra.mxu0 0.0
    %5491 = vmatprep.subr.mxu0 0.0
    %5492 = vmatpush1.msra.mxu0 0.0
    %5493 = vmatprep.subr.mxu0 0.0
    %5494 = vmatpush1.msra.mxu0 0.0
    %5495 = vmatprep.subr.mxu0 0.0
    %5496 = vmatpush1.msra.mxu0 0.0
    %5497 = vmatprep.subr.mxu0 0.0
    %5498 = vmatpush1.msra.mxu0 0.0
    %5499 = vmatprep.subr.mxu0 0.0
    %5500 = vmatpush1.msra.mxu0 0.0
    %5501 = vmatprep.subr.mxu0 0.0
    %5502 = vmatpush1.msra.mxu0 0.0
    %5503 = vmatprep.mubr.f32.mxu0 0.0
    %5504 = vmatmul.mubr.f32.gmra.mrb[0].mxu0 %v5359
    %v5505 = vpop.f32.mrb[0].mxu0
    %v5506 = vadd.f32 0.0, %v5505
    %v5507 = vpop.f32.mrb[0].mxu0
    %5508 = vmatprep.mubr.f32.mxu0 0.0
    %5509 = vmatmul.mubr.f32.gmra.mrb[0].mxu0 %v5360
    %v5510 = vpop.f32.mrb[0].mxu0
    %v5511 = vadd.f32 0.0, %v5510
    %v5512 = vpop.f32.mrb[0].mxu0
    %5513 = vmatprep.mubr.f32.mxu0 0.0
    %5514 = vmatmul.mubr.f32.gmra.mrb[0].mxu0 %v5361
    %v5515 = vpop.f32.mrb[0].mxu0
    %v5516 = vadd.f32 0.0, %v5515
    %v5517 = vpop.f32.mrb[0].mxu0
    %5518 = vmatprep.mubr.f32.mxu0 0.0
    %5519 = vmatmul.mubr.f32.gmra.mrb[0].mxu0 %v5362
    %v5520 = vpop.f32.mrb[0].mxu0
    %v5521 = vadd.f32 0.0, %v5520
    %v5522 = vpop.f32.mrb[0].mxu0
    %5523 = vmatprep.mubr.f32.mxu0 0.0
    %5524 = vmatmul.mubr.f32.gmra.mrb[0].mxu0 %v5363
    %v5525 = vpop.f32.mrb[0].mxu0
    %v5526 = vadd.f32 0.0, %v5525
    %v5527 = vpop.f32.mrb[0].mxu0
    %5528 = vmatprep.mubr.f32.mxu0 0.0
    %5529 = vmatmul.mubr.f32.gmra.mrb[0].mxu0 %v5364
    %v5530 = vpop.f32.mrb[0].mxu0
    %v5531 = vadd.f32 0.0, %v5530
    %v5532 = vpop.f32.mrb[0].mxu0
    %5533 = vmatprep.mubr.f32.mxu0 0.0
    %5534 = vmatmul.mubr.f32.gmra.mrb[0].mxu0 %v5365
    %v5535 = vpop.f32.mrb[0].mxu0
    %v5536 = vadd.f32 0.0, %v5535
    %v5537 = vpop.f32.mrb[0].mxu0
    %5538 = vmatprep.mubr.f32.mxu0 0.0
    %5539 = vmatmul.mubr.f32.gmra.mrb[0].mxu0 %v5366
    %v5540 = vpop.f32.mrb[0].mxu0
    %v5541 = vadd.f32 0.0, %v5540
    %v5542 = vpop.f32.mrb[0].mxu0
    %5543 = vmatprep.mubr.f32.mxu0 0.0
    %5544 = vmatmul.mubr.f32.gmra.mrb[0].mxu0 %v5367
    %v5545 = vpop.f32.mrb[0].mxu0
    %v5546 = vadd.f32 0.0, %v5545
    %v5547 = vpop.f32.mrb[0].mxu0
    %5548 = vmatprep.mubr.f32.mxu0 0.0
    %5549 = vmatmul.mubr.f32.gmra.mrb[0].mxu0 %v5368
    %v5550 = vpop.f32.mrb[0].mxu0
    %v5551 = vadd.f32 0.0, %v5550
    %v5552 = vpop.f32.mrb[0].mxu0
    %5553 = vmatprep.mubr.f32.mxu0 0.0
    %5554 = vmatmul.mubr.f32.gmra.mrb[0].mxu0 %v5369
    %v5555 = vpop.f32.mrb[0].mxu0
    %v5556 = vadd.f32 0.0, %v5555
    %v5557 = vpop.f32.mrb[0].mxu0
    %5558 = vmatprep.mubr.f32.mxu0 0.0
    %5559 = vmatmul.mubr.f32.gmra.mrb[0].mxu0 %v5370
    %v5560 = vpop.f32.mrb[0].mxu0
    %v5561 = vadd.f32 0.0, %v5560
    %v5562 = vpop.f32.mrb[0].mxu0
    %5563 = vmatprep.mubr.f32.mxu0 0.0
    %5564 = vmatmul.mubr.f32.gmra.mrb[0].mxu0 %v5371
    %v5565 = vpop.f32.mrb[0].mxu0
    %v5566 = vadd.f32 0.0, %v5565
    %v5567 = vpop.f32.mrb[0].mxu0
    %5568 = vmatprep.mubr.f32.mxu0 0.0
    %5569 = vmatmul.mubr.f32.gmra.mrb[0].mxu0 %v5372
    %v5570 = vpop.f32.mrb[0].mxu0
    %v5571 = vadd.f32 0.0, %v5570
    %v5572 = vpop.f32.mrb[0].mxu0
    %5573 = vmatprep.mubr.f32.mxu0 0.0
    %5574 = vmatmul.mubr.f32.gmra.mrb[0].mxu0 %v5373
    %v5575 = vpop.f32.mrb[0].mxu0
    %v5576 = vadd.f32 0.0, %v5575
    %v5577 = vpop.f32.mrb[0].mxu0
    %5578 = vmatprep.mubr.f32.mxu0 0.0
    %5579 = vmatmul.mubr.f32.gmra.mrb[0].mxu0 %v5374
    %v5580 = vpop.f32.mrb[0].mxu0
    %v5581 = vadd.f32 0.0, %v5580
    %v5582 = vpop.f32.mrb[0].mxu0
    %5583 = vmatprep.mubr.f32.mxu0 0.0
    %5584 = vmatmul.mubr.f32.gmra.mrb[0].mxu0 %v5375
    %v5585 = vpop.f32.mrb[0].mxu0
    %v5586 = vadd.f32 0.0, %v5585
    %v5587 = vpop.f32.mrb[0].mxu0
    %5588 = vmatprep.mubr.f32.mxu0 0.0
    %5589 = vmatmul.mubr.f32.gmra.mrb[0].mxu0 %v5376
    %v5590 = vpop.f32.mrb[0].mxu0
    %v5591 = vadd.f32 0.0, %v5590
    %v5592 = vpop.f32.mrb[0].mxu0
    %5593 = vmatprep.mubr.f32.mxu0 0.0
    %5594 = vmatmul.mubr.f32.gmra.mrb[0].mxu0 %v5377
    %v5595 = vpop.f32.mrb[0].mxu0
    %v5596 = vadd.f32 0.0, %v5595
    %v5597 = vpop.f32.mrb[0].mxu0
    %5598 = vmatprep.mubr.f32.mxu0 0.0
    %5599 = vmatmul.mubr.f32.gmra.mrb[0].mxu0 %v5378
    %v5600 = vpop.f32.mrb[0].mxu0
    %v5601 = vadd.f32 0.0, %v5600
    %v5602 = vpop.f32.mrb[0].mxu0
    %5603 = vmatprep.mubr.f32.mxu0 0.0
    %5604 = vmatmul.mubr.f32.gmra.mrb[0].mxu0 %v5379
    %v5605 = vpop.f32.mrb[0].mxu0
    %v5606 = vadd.f32 0.0, %v5605
    %v5607 = vpop.f32.mrb[0].mxu0
    %5608 = vmatprep.mubr.f32.mxu0 0.0
    %5609 = vmatmul.mubr.f32.gmra.mrb[0].mxu0 %v5380
    %v5610 = vpop.f32.mrb[0].mxu0
    %v5611 = vadd.f32 0.0, %v5610
    %v5612 = vpop.f32.mrb[0].mxu0
    %5613 = vmatprep.mubr.f32.mxu0 0.0
    %5614 = vmatmul.mubr.f32.gmra.mrb[0].mxu0 %v5381
    %v5615 = vpop.f32.mrb[0].mxu0
    %v5616 = vadd.f32 0.0, %v5615
    %v5617 = vpop.f32.mrb[0].mxu0
    %5618 = vmatprep.mubr.f32.mxu0 0.0
    %5619 = vmatmul.mubr.f32.gmra.mrb[0].mxu0 %v5382
    %v5620 = vpop.f32.mrb[0].mxu0
    %v5621 = vadd.f32 0.0, %v5620
    %v5622 = vpop.f32.mrb[0].mxu0
    %5623 = vmatprep.mubr.f32.mxu0 0.0
    %5624 = vmatmul.mubr.f32.gmra.mrb[0].mxu0 %v5383
    %v5625 = vpop.f32.mrb[0].mxu0
    %v5626 = vadd.f32 0.0, %v5625
    %v5627 = vpop.f32.mrb[0].mxu0
    %5628 = vmatprep.mubr.f32.mxu0 0.0
    %5629 = vmatmul.mubr.f32.gmra.mrb[0].mxu0 %v5384
    %v5630 = vpop.f32.mrb[0].mxu0
    %v5631 = vadd.f32 0.0, %v5630
    %v5632 = vpop.f32.mrb[0].mxu0
    %5633 = vmatprep.mubr.f32.mxu0 0.0
    %5634 = vmatmul.mubr.f32.gmra.mrb[0].mxu0 %v5385
    %v5635 = vpop.f32.mrb[0].mxu0
    %v5636 = vadd.f32 0.0, %v5635
    %v5637 = vpop.f32.mrb[0].mxu0
    %5638 = vmatprep.mubr.f32.mxu0 0.0
    %5639 = vmatmul.mubr.f32.gmra.mrb[0].mxu0 %v5386
    %v5640 = vpop.f32.mrb[0].mxu0
    %v5641 = vadd.f32 0.0, %v5640
    %v5642 = vpop.f32.mrb[0].mxu0
    %5643 = vmatprep.mubr.f32.mxu0 0.0
    %5644 = vmatmul.mubr.f32.gmra.mrb[0].mxu0 %v5387
    %v5645 = vpop.f32.mrb[0].mxu0
    %v5646 = vadd.f32 0.0, %v5645
    %v5647 = vpop.f32.mrb[0].mxu0
    %5648 = vmatprep.mubr.f32.mxu0 0.0
    %5649 = vmatmul.mubr.f32.gmra.mrb[0].mxu0 %v5388
    %v5650 = vpop.f32.mrb[0].mxu0
    %v5651 = vadd.f32 0.0, %v5650
    %v5652 = vpop.f32.mrb[0].mxu0
    %5653 = vmatprep.mubr.f32.mxu0 0.0
    %5654 = vmatmul.mubr.f32.gmra.mrb[0].mxu0 %v5389
    %v5655 = vpop.f32.mrb[0].mxu0
    %v5656 = vadd.f32 0.0, %v5655
    %v5657 = vpop.f32.mrb[0].mxu0
    %5658 = vmatprep.mubr.f32.mxu0 0.0
    %5659 = vmatmul.mubr.f32.gmra.mrb[0].mxu0 %v5390
    %v5660 = vpop.f32.mrb[0].mxu0
    %v5661 = vadd.f32 0.0, %v5660
    %v5662 = vpop.f32.mrb[0].mxu0
    %5663 = vmatprep.mubr.f32.mxu0 0.0
    %5664 = vmatmul.mubr.f32.gmra.mrb[0].mxu0 %v5391
    %v5665 = vpop.f32.mrb[0].mxu0
    %v5666 = vadd.f32 0.0, %v5665
    %v5667 = vpop.f32.mrb[0].mxu0
    %5668 = vmatprep.mubr.f32.mxu0 0.0
    %5669 = vmatmul.mubr.f32.gmra.mrb[0].mxu0 %v5392
    %v5670 = vpop.f32.mrb[0].mxu0
    %v5671 = vadd.f32 0.0, %v5670
    %v5672 = vpop.f32.mrb[0].mxu0
    %5673 = vmatprep.mubr.f32.mxu0 0.0
    %5674 = vmatmul.mubr.f32.gmra.mrb[0].mxu0 %v5393
    %v5675 = vpop.f32.mrb[0].mxu0
    %v5676 = vadd.f32 0.0, %v5675
    %v5677 = vpop.f32.mrb[0].mxu0
    %5678 = vmatprep.mubr.f32.mxu0 0.0
    %5679 = vmatmul.mubr.f32.gmra.mrb[0].mxu0 %v5394
    %v5680 = vpop.f32.mrb[0].mxu0
    %v5681 = vadd.f32 0.0, %v5680
    %v5682 = vpop.f32.mrb[0].mxu0
    %5683 = vmatprep.mubr.f32.mxu0 0.0
    %5684 = vmatmul.mubr.f32.gmra.mrb[0].mxu0 %v5395
    %v5685 = vpop.f32.mrb[0].mxu0
    %v5686 = vadd.f32 0.0, %v5685
    %v5687 = vpop.f32.mrb[0].mxu0
    %5688 = vmatprep.mubr.f32.mxu0 0.0
    %5689 = vmatmul.mubr.f32.gmra.mrb[0].mxu0 %v5396
    %v5690 = vpop.f32.mrb[0].mxu0
    %v5691 = vadd.f32 0.0, %v5690
    %v5692 = vpop.f32.mrb[0].mxu0
    %5693 = vmatprep.mubr.f32.mxu0 0.0
    %5694 = vmatmul.mubr.f32.gmra.mrb[0].mxu0 %v5397
    %v5695 = vpop.f32.mrb[0].mxu0
    %v5696 = vadd.f32 0.0, %v5695
    %v5697 = vpop.f32.mrb[0].mxu0
    %5698 = vmatprep.mubr.f32.mxu0 0.0
    %5699 = vmatmul.mubr.f32.gmra.mrb[0].mxu0 %v5398
    %v5700 = vpop.f32.mrb[0].mxu0
    %v5701 = vadd.f32 0.0, %v5700
    %v5702 = vpop.f32.mrb[0].mxu0
    %5703 = vmatprep.mubr.f32.mxu0 0.0
    %5704 = vmatmul.mubr.f32.gmra.mrb[0].mxu0 %v5399
    %v5705 = vpop.f32.mrb[0].mxu0
    %v5706 = vadd.f32 0.0, %v5705
    %v5707 = vpop.f32.mrb[0].mxu0
    %5708 = vmatprep.mubr.f32.mxu0 0.0
    %5709 = vmatmul.mubr.f32.gmra.mrb[0].mxu0 %v5400
    %v5710 = vpop.f32.mrb[0].mxu0
    %v5711 = vadd.f32 0.0, %v5710
    %v5712 = vpop.f32.mrb[0].mxu0
    %5713 = vmatprep.mubr.f32.mxu0 0.0
    %5714 = vmatmul.mubr.f32.gmra.mrb[0].mxu0 %v5401
    %v5715 = vpop.f32.mrb[0].mxu0
    %v5716 = vadd.f32 0.0, %v5715
    %v5717 = vpop.f32.mrb[0].mxu0
    %5718 = vmatprep.mubr.f32.mxu0 0.0
    %5719 = vmatmul.mubr.f32.gmra.mrb[0].mxu0 %v5402
    %v5720 = vpop.f32.mrb[0].mxu0
    %v5721 = vadd.f32 0.0, %v5720
    %v5722 = vpop.f32.mrb[0].mxu0
    %5723 = vmatprep.mubr.f32.mxu0 0.0
    %5724 = vmatmul.mubr.f32.gmra.mrb[0].mxu0 %v5403
    %v5725 = vpop.f32.mrb[0].mxu0
    %v5726 = vadd.f32 0.0, %v5725
    %v5727 = vpop.f32.mrb[0].mxu0
    %5728 = vmatprep.mubr.f32.mxu0 0.0
    %5729 = vmatmul.mubr.f32.gmra.mrb[0].mxu0 %v5404
    %v5730 = vpop.f32.mrb[0].mxu0
    %v5731 = vadd.f32 0.0, %v5730
    %v5732 = vpop.f32.mrb[0].mxu0
    %5733 = vmatprep.mubr.f32.mxu0 0.0
    %5734 = vmatmul.mubr.f32.gmra.mrb[0].mxu0 %v5405
    %v5735 = vpop.f32.mrb[0].mxu0
    %v5736 = vadd.f32 0.0, %v5735
    %v5737 = vpop.f32.mrb[0].mxu0
    %5738 = vmatprep.mubr.f32.mxu0 0.0
    %5739 = vmatmul.mubr.f32.gmra.mrb[0].mxu0 %v5406
    %v5740 = vpop.f32.mrb[0].mxu0
    %v5741 = vadd.f32 0.0, %v5740
    %v5742 = vpop.f32.mrb[0].mxu0
    %5743 = vmatprep.mubr.f32.mxu0 0.0
    %5744 = vmatmul.mubr.f32.gmra.mrb[0].mxu0 %v5407
    %v5745 = vpop.f32.mrb[0].mxu0
    %v5746 = vadd.f32 0.0, %v5745
    %v5747 = vpop.f32.mrb[0].mxu0
    %5748 = vmatprep.mubr.f32.mxu0 0.0
    %5749 = vmatmul.mubr.f32.gmra.mrb[0].mxu0 %v5408
    %v5750 = vpop.f32.mrb[0].mxu0
    %v5751 = vadd.f32 0.0, %v5750
    %v5752 = vpop.f32.mrb[0].mxu0
    %5753 = vmatprep.mubr.f32.mxu0 0.0
    %5754 = vmatmul.mubr.f32.gmra.mrb[0].mxu0 %v5409
    %v5755 = vpop.f32.mrb[0].mxu0
    %v5756 = vadd.f32 0.0, %v5755
    %v5757 = vpop.f32.mrb[0].mxu0
    %5758 = vmatprep.mubr.f32.mxu0 0.0
    %5759 = vmatmul.mubr.f32.gmra.mrb[0].mxu0 %v5410
    %v5760 = vpop.f32.mrb[0].mxu0
    %v5761 = vadd.f32 0.0, %v5760
    %v5762 = vpop.f32.mrb[0].mxu0
    %5763 = vmatprep.mubr.f32.mxu0 0.0
    %5764 = vmatmul.mubr.f32.gmra.mrb[0].mxu0 %v5411
    %v5765 = vpop.f32.mrb[0].mxu0
    %v5766 = vadd.f32 0.0, %v5765
    %v5767 = vpop.f32.mrb[0].mxu0
    %5768 = vmatprep.mubr.f32.mxu0 0.0
    %5769 = vmatmul.mubr.f32.gmra.mrb[0].mxu0 %v5412
    %v5770 = vpop.f32.mrb[0].mxu0
    %v5771 = vadd.f32 0.0, %v5770
    %v5772 = vpop.f32.mrb[0].mxu0
    %5773 = vmatprep.mubr.f32.mxu0 0.0
    %5774 = vmatmul.mubr.f32.gmra.mrb[0].mxu0 %v5413
    %v5775 = vpop.f32.mrb[0].mxu0
    %v5776 = vadd.f32 0.0, %v5775
    %v5777 = vpop.f32.mrb[0].mxu0
    %5778 = vmatprep.mubr.f32.mxu0 0.0
    %5779 = vmatmul.mubr.f32.gmra.mrb[0].mxu0 %v5414
    %v5780 = vpop.f32.mrb[0].mxu0
    %v5781 = vadd.f32 0.0, %v5780
    %v5782 = vpop.f32.mrb[0].mxu0
    %5783 = vmatprep.mubr.f32.mxu0 0.0
    %5784 = vmatmul.mubr.f32.gmra.mrb[0].mxu0 %v5415
    %v5785 = vpop.f32.mrb[0].mxu0
    %v5786 = vadd.f32 0.0, %v5785
    %v5787 = vpop.f32.mrb[0].mxu0
    %5788 = vmatprep.mubr.f32.mxu0 0.0
    %5789 = vmatmul.mubr.f32.gmra.mrb[0].mxu0 %v5416
    %v5790 = vpop.f32.mrb[0].mxu0
    %v5791 = vadd.f32 0.0, %v5790
    %v5792 = vpop.f32.mrb[0].mxu0
    %5793 = vmatprep.mubr.f32.mxu0 0.0
    %5794 = vmatmul.mubr.f32.gmra.mrb[0].mxu0 %v5417
    %v5795 = vpop.f32.mrb[0].mxu0
    %v5796 = vadd.f32 0.0, %v5795
    %v5797 = vpop.f32.mrb[0].mxu0
    %5798 = vmatprep.mubr.f32.mxu0 0.0
    %5799 = vmatmul.mubr.f32.gmra.mrb[0].mxu0 %v5418
    %v5800 = vpop.f32.mrb[0].mxu0
    %v5801 = vadd.f32 0.0, %v5800
    %v5802 = vpop.f32.mrb[0].mxu0
    %5803 = vmatprep.mubr.f32.mxu0 0.0
    %5804 = vmatmul.mubr.f32.gmra.mrb[0].mxu0 %v5419
    %v5805 = vpop.f32.mrb[0].mxu0
    %v5806 = vadd.f32 0.0, %v5805
    %v5807 = vpop.f32.mrb[0].mxu0
    %5808 = vmatprep.mubr.f32.mxu0 0.0
    %5809 = vmatmul.mubr.f32.gmra.mrb[0].mxu0 %v5420
    %v5810 = vpop.f32.mrb[0].mxu0
    %v5811 = vadd.f32 0.0, %v5810
    %v5812 = vpop.f32.mrb[0].mxu0
    %5813 = vmatprep.mubr.f32.mxu0 0.0
    %5814 = vmatmul.mubr.f32.gmra.mrb[0].mxu0 %v5421
    %v5815 = vpop.f32.mrb[0].mxu0
    %v5816 = vadd.f32 0.0, %v5815
    %v5817 = vpop.f32.mrb[0].mxu0
    %5818 = vmatprep.mubr.f32.mxu0 0.0
    %5819 = vmatmul.mubr.f32.gmra.mrb[0].mxu0 %v5422
    %v5820 = vpop.f32.mrb[0].mxu0
    %v5821 = vadd.f32 0.0, %v5820
    %v5822 = vpop.f32.mrb[0].mxu0
    %5823 = vdwg.mxu0
    %v5824 = vsub.f32 %v4656, %v5041
    %v5825 = vsub.f32 %v4661, %v5046
    %v5826 = vsub.f32 %v4666, %v5051
    %v5827 = vsub.f32 %v4671, %v5056
    %v5828 = vsub.f32 %v4676, %v5061
    %v5829 = vsub.f32 %v4681, %v5066
    %v5830 = vsub.f32 %v4686, %v5071
    %v5831 = vsub.f32 %v4691, %v5076
    %v5832 = vsub.f32 %v4696, %v5081
    %v5833 = vsub.f32 %v4701, %v5086
    %v5834 = vsub.f32 %v4706, %v5091
    %v5835 = vsub.f32 %v4711, %v5096
    %v5836 = vsub.f32 %v4716, %v5101
    %v5837 = vsub.f32 %v4721, %v5106
    %v5838 = vsub.f32 %v4726, %v5111
    %v5839 = vsub.f32 %v4731, %v5116
    %v5840 = vsub.f32 %v4736, %v5121
    %v5841 = vsub.f32 %v4741, %v5126
    %v5842 = vsub.f32 %v4746, %v5131
    %v5843 = vsub.f32 %v4751, %v5136
    %v5844 = vsub.f32 %v4756, %v5141
    %v5845 = vsub.f32 %v4761, %v5146
    %v5846 = vsub.f32 %v4766, %v5151
    %v5847 = vsub.f32 %v4771, %v5156
    %v5848 = vsub.f32 %v4776, %v5161
    %v5849 = vsub.f32 %v4781, %v5166
    %v5850 = vsub.f32 %v4786, %v5171
    %v5851 = vsub.f32 %v4791, %v5176
    %v5852 = vsub.f32 %v4796, %v5181
    %v5853 = vsub.f32 %v4801, %v5186
    %v5854 = vsub.f32 %v4806, %v5191
    %v5855 = vsub.f32 %v4811, %v5196
    %v5856 = vsub.f32 %v4816, %v5201
    %v5857 = vsub.f32 %v4821, %v5206
    %v5858 = vsub.f32 %v4826, %v5211
    %v5859 = vsub.f32 %v4831, %v5216
    %v5860 = vsub.f32 %v4836, %v5221
    %v5861 = vsub.f32 %v4841, %v5226
    %v5862 = vsub.f32 %v4846, %v5231
    %v5863 = vsub.f32 %v4851, %v5236
    %v5864 = vsub.f32 %v4856, %v5241
    %v5865 = vsub.f32 %v4861, %v5246
    %v5866 = vsub.f32 %v4866, %v5251
    %v5867 = vsub.f32 %v4871, %v5256
    %v5868 = vsub.f32 %v4876, %v5261
    %v5869 = vsub.f32 %v4881, %v5266
    %v5870 = vsub.f32 %v4886, %v5271
    %v5871 = vsub.f32 %v4891, %v5276
    %v5872 = vsub.f32 %v4896, %v5281
    %v5873 = vsub.f32 %v4901, %v5286
    %v5874 = vsub.f32 %v4906, %v5291
    %v5875 = vsub.f32 %v4911, %v5296
    %v5876 = vsub.f32 %v4916, %v5301
    %v5877 = vsub.f32 %v4921, %v5306
    %v5878 = vsub.f32 %v4926, %v5311
    %v5879 = vsub.f32 %v4931, %v5316
    %v5880 = vsub.f32 %v4936, %v5321
    %v5881 = vsub.f32 %v4941, %v5326
    %v5882 = vsub.f32 %v4946, %v5331
    %v5883 = vsub.f32 %v4951, %v5336
    %v5884 = vsub.f32 %v4956, %v5341
    %v5885 = vsub.f32 %v4961, %v5346
    %v5886 = vsub.f32 %v4966, %v5351
    %v5887 = vsub.f32 %v4971, %v5356
    %v5888 = vsub.f32 %v5506, %v4656
    %v5889 = vsub.f32 %v5511, %v4661
    %v5890 = vsub.f32 %v5516, %v4666
    %v5891 = vsub.f32 %v5521, %v4671
    %v5892 = vsub.f32 %v5526, %v4676
    %v5893 = vsub.f32 %v5531, %v4681
    %v5894 = vsub.f32 %v5536, %v4686
    %v5895 = vsub.f32 %v5541, %v4691
    %v5896 = vsub.f32 %v5546, %v4696
    %v5897 = vsub.f32 %v5551, %v4701
    %v5898 = vsub.f32 %v5556, %v4706
    %v5899 = vsub.f32 %v5561, %v4711
    %v5900 = vsub.f32 %v5566, %v4716
    %v5901 = vsub.f32 %v5571, %v4721
    %v5902 = vsub.f32 %v5576, %v4726
    %v5903 = vsub.f32 %v5581, %v4731
    %v5904 = vsub.f32 %v5586, %v4736
    %v5905 = vsub.f32 %v5591, %v4741
    %v5906 = vsub.f32 %v5596, %v4746
    %v5907 = vsub.f32 %v5601, %v4751
    %v5908 = vsub.f32 %v5606, %v4756
    %v5909 = vsub.f32 %v5611, %v4761
    %v5910 = vsub.f32 %v5616, %v4766
    %v5911 = vsub.f32 %v5621, %v4771
    %v5912 = vsub.f32 %v5626, %v4776
    %v5913 = vsub.f32 %v5631, %v4781
    %v5914 = vsub.f32 %v5636, %v4786
    %v5915 = vsub.f32 %v5641, %v4791
    %v5916 = vsub.f32 %v5646, %v4796
    %v5917 = vsub.f32 %v5651, %v4801
    %v5918 = vsub.f32 %v5656, %v4806
    %v5919 = vsub.f32 %v5661, %v4811
    %v5920 = vsub.f32 %v5666, %v4816
    %v5921 = vsub.f32 %v5671, %v4821
    %v5922 = vsub.f32 %v5676, %v4826
    %v5923 = vsub.f32 %v5681, %v4831
    %v5924 = vsub.f32 %v5686, %v4836
    %v5925 = vsub.f32 %v5691, %v4841
    %v5926 = vsub.f32 %v5696, %v4846
    %v5927 = vsub.f32 %v5701, %v4851
    %v5928 = vsub.f32 %v5706, %v4856
    %v5929 = vsub.f32 %v5711, %v4861
    %v5930 = vsub.f32 %v5716, %v4866
    %v5931 = vsub.f32 %v5721, %v4871
    %v5932 = vsub.f32 %v5726, %v4876
    %v5933 = vsub.f32 %v5731, %v4881
    %v5934 = vsub.f32 %v5736, %v4886
    %v5935 = vsub.f32 %v5741, %v4891
    %v5936 = vsub.f32 %v5746, %v4896
    %v5937 = vsub.f32 %v5751, %v4901
    %v5938 = vsub.f32 %v5756, %v4906
    %v5939 = vsub.f32 %v5761, %v4911
    %v5940 = vsub.f32 %v5766, %v4916
    %v5941 = vsub.f32 %v5771, %v4921
    %v5942 = vsub.f32 %v5776, %v4926
    %v5943 = vsub.f32 %v5781, %v4931
    %v5944 = vsub.f32 %v5786, %v4936
    %v5945 = vsub.f32 %v5791, %v4941
    %v5946 = vsub.f32 %v5796, %v4946
    %v5947 = vsub.f32 %v5801, %v4951
    %v5948 = vsub.f32 %v5806, %v4956
    %v5949 = vsub.f32 %v5811, %v4961
    %v5950 = vsub.f32 %v5816, %v4966
    %v5951 = vsub.f32 %v5821, %v4971
    %v5952 = vsub.f32 %v5888, %v5041
    %v5953 = vsub.f32 %v5889, %v5046
    %v5954 = vsub.f32 %v5890, %v5051
    %v5955 = vsub.f32 %v5891, %v5056
    %v5956 = vsub.f32 %v5892, %v5061
    %v5957 = vsub.f32 %v5893, %v5066
    %v5958 = vsub.f32 %v5894, %v5071
    %v5959 = vsub.f32 %v5895, %v5076
    %v5960 = vsub.f32 %v5896, %v5081
    %v5961 = vsub.f32 %v5897, %v5086
    %v5962 = vsub.f32 %v5898, %v5091
    %v5963 = vsub.f32 %v5899, %v5096
    %v5964 = vsub.f32 %v5900, %v5101
    %v5965 = vsub.f32 %v5901, %v5106
    %v5966 = vsub.f32 %v5902, %v5111
    %v5967 = vsub.f32 %v5903, %v5116
    %v5968 = vsub.f32 %v5904, %v5121
    %v5969 = vsub.f32 %v5905, %v5126
    %v5970 = vsub.f32 %v5906, %v5131
    %v5971 = vsub.f32 %v5907, %v5136
    %v5972 = vsub.f32 %v5908, %v5141
    %v5973 = vsub.f32 %v5909, %v5146
    %v5974 = vsub.f32 %v5910, %v5151
    %v5975 = vsub.f32 %v5911, %v5156
    %v5976 = vsub.f32 %v5912, %v5161
    %v5977 = vsub.f32 %v5913, %v5166
    %v5978 = vsub.f32 %v5914, %v5171
    %v5979 = vsub.f32 %v5915, %v5176
    %v5980 = vsub.f32 %v5916, %v5181
    %v5981 = vsub.f32 %v5917, %v5186
    %v5982 = vsub.f32 %v5918, %v5191
    %v5983 = vsub.f32 %v5919, %v5196
    %v5984 = vsub.f32 %v5920, %v5201
    %v5985 = vsub.f32 %v5921, %v5206
    %v5986 = vsub.f32 %v5922, %v5211
    %v5987 = vsub.f32 %v5923, %v5216
    %v5988 = vsub.f32 %v5924, %v5221
    %v5989 = vsub.f32 %v5925, %v5226
    %v5990 = vsub.f32 %v5926, %v5231
    %v5991 = vsub.f32 %v5927, %v5236
    %v5992 = vsub.f32 %v5928, %v5241
    %v5993 = vsub.f32 %v5929, %v5246
    %v5994 = vsub.f32 %v5930, %v5251
    %v5995 = vsub.f32 %v5931, %v5256
    %v5996 = vsub.f32 %v5932, %v5261
    %v5997 = vsub.f32 %v5933, %v5266
    %v5998 = vsub.f32 %v5934, %v5271
    %v5999 = vsub.f32 %v5935, %v5276
    %v6000 = vsub.f32 %v5936, %v5281
    %v6001 = vsub.f32 %v5937, %v5286
    %v6002 = vsub.f32 %v5938, %v5291
    %v6003 = vsub.f32 %v5939, %v5296
    %v6004 = vsub.f32 %v5940, %v5301
    %v6005 = vsub.f32 %v5941, %v5306
    %v6006 = vsub.f32 %v5942, %v5311
    %v6007 = vsub.f32 %v5943, %v5316
    %v6008 = vsub.f32 %v5944, %v5321
    %v6009 = vsub.f32 %v5945, %v5326
    %v6010 = vsub.f32 %v5946, %v5331
    %v6011 = vsub.f32 %v5947, %v5336
    %v6012 = vsub.f32 %v5948, %v5341
    %v6013 = vsub.f32 %v5949, %v5346
    %v6014 = vsub.f32 %v5950, %v5351
    %v6015 = vsub.f32 %v5951, %v5356
    %v6016 = vsub.f32 0.0, %v1396
    %v6017 = vsub.f32 0.0, %v1397
    %v6018 = vsub.f32 0.0, %v1398
    %v6019 = vsub.f32 0.0, %v1399
    %v6020 = vsub.f32 0.0, %v1400
    %v6021 = vsub.f32 0.0, %v1401
    %v6022 = vsub.f32 0.0, %v1402
    %v6023 = vsub.f32 0.0, %v1403
    %v6024 = vsub.f32 0.0, %v1404
    %v6025 = vsub.f32 0.0, %v1405
    %v6026 = vsub.f32 0.0, %v1406
    %v6027 = vsub.f32 0.0, %v1407
    %v6028 = vsub.f32 0.0, %v1408
    %v6029 = vsub.f32 0.0, %v1409
    %v6030 = vsub.f32 0.0, %v1410
    %v6031 = vsub.f32 0.0, %v1411
    %6032 = vmatprep.subr.mxu0 %v5840
    %6033 = vmatpush1.msra.mxu0 %v5824
    %6034 = vmatprep.subr.mxu0 %v5841
    %6035 = vmatpush1.msra.mxu0 %v5825
    %6036 = vmatprep.subr.mxu0 %v5842
    %6037 = vmatpush1.msra.mxu0 %v5826
    %6038 = vmatprep.subr.mxu0 %v5843
    %6039 = vmatpush1.msra.mxu0 %v5827
    %6040 = vmatprep.subr.mxu0 %v5844
    %6041 = vmatpush1.msra.mxu0 %v5828
    %6042 = vmatprep.subr.mxu0 %v5845
    %6043 = vmatpush1.msra.mxu0 %v5829
    %6044 = vmatprep.subr.mxu0 %v5846
    %6045 = vmatpush1.msra.mxu0 %v5830
    %6046 = vmatprep.subr.mxu0 %v5847
    %6047 = vmatpush1.msra.mxu0 %v5831
    %6048 = vmatprep.subr.mxu0 %v5848
    %6049 = vmatpush1.msra.mxu0 %v5832
    %6050 = vmatprep.subr.mxu0 %v5849
    %6051 = vmatpush1.msra.mxu0 %v5833
    %6052 = vmatprep.subr.mxu0 %v5850
    %6053 = vmatpush1.msra.mxu0 %v5834
    %6054 = vmatprep.subr.mxu0 %v5851
    %6055 = vmatpush1.msra.mxu0 %v5835
    %6056 = vmatprep.subr.mxu0 %v5852
    %6057 = vmatpush1.msra.mxu0 %v5836
    %6058 = vmatprep.subr.mxu0 %v5853
    %6059 = vmatpush1.msra.mxu0 %v5837
    %6060 = vmatprep.subr.mxu0 %v5854
    %6061 = vmatpush1.msra.mxu0 %v5838
    %6062 = vmatprep.subr.mxu0 %v5855
    %6063 = vmatpush1.msra.mxu0 %v5839
    %6064 = vmatprep.subr.mxu0 0.0
    %6065 = vmatpush1.msra.mxu0 0.0
    %6066 = vmatprep.subr.mxu0 0.0
    %6067 = vmatpush1.msra.mxu0 0.0
    %6068 = vmatprep.subr.mxu0 0.0
    %6069 = vmatpush1.msra.mxu0 0.0
    %6070 = vmatprep.subr.mxu0 0.0
    %6071 = vmatpush1.msra.mxu0 0.0
    %6072 = vmatprep.subr.mxu0 0.0
    %6073 = vmatpush1.msra.mxu0 0.0
    %6074 = vmatprep.subr.mxu0 0.0
    %6075 = vmatpush1.msra.mxu0 0.0
    %6076 = vmatprep.subr.mxu0 0.0
    %6077 = vmatpush1.msra.mxu0 0.0
    %6078 = vmatprep.subr.mxu0 0.0
    %6079 = vmatpush1.msra.mxu0 0.0
    %6080 = vmatprep.subr.mxu0 0.0
    %6081 = vmatpush1.msra.mxu0 0.0
    %6082 = vmatprep.subr.mxu0 0.0
    %6083 = vmatpush1.msra.mxu0 0.0
    %6084 = vmatprep.subr.mxu0 0.0
    %6085 = vmatpush1.msra.mxu0 0.0
    %6086 = vmatprep.subr.mxu0 0.0
    %6087 = vmatpush1.msra.mxu0 0.0
    %6088 = vmatprep.subr.mxu0 0.0
    %6089 = vmatpush1.msra.mxu0 0.0
    %6090 = vmatprep.subr.mxu0 0.0
    %6091 = vmatpush1.msra.mxu0 0.0
    %6092 = vmatprep.subr.mxu0 0.0
    %6093 = vmatpush1.msra.mxu0 0.0
    %6094 = vmatprep.subr.mxu0 0.0
    %6095 = vmatpush1.msra.mxu0 0.0
    %6096 = vmatprep.mubr.f32.mxu0 0.0
    %6097 = vmatmul.mubr.f32.gmra.mrb[0].mxu0 %v1380
    %v6098 = vpop.f32.mrb[0].mxu0
    %v6099 = vadd.f32 0.0, %v6098
    %v6100 = vpop.f32.mrb[0].mxu0
    %v6101 = vadd.f32 0.0, %v6100
    %6102 = vmatprep.mubr.f32.mxu0 0.0
    %6103 = vmatmul.mubr.f32.gmra.mrb[0].mxu0 %v1381
    %v6104 = vpop.f32.mrb[0].mxu0
    %v6105 = vadd.f32 0.0, %v6104
    %v6106 = vpop.f32.mrb[0].mxu0
    %v6107 = vadd.f32 0.0, %v6106
    %6108 = vmatprep.mubr.f32.mxu0 0.0
    %6109 = vmatmul.mubr.f32.gmra.mrb[0].mxu0 %v1382
    %v6110 = vpop.f32.mrb[0].mxu0
    %v6111 = vadd.f32 0.0, %v6110
    %v6112 = vpop.f32.mrb[0].mxu0
    %v6113 = vadd.f32 0.0, %v6112
    %6114 = vmatprep.mubr.f32.mxu0 0.0
    %6115 = vmatmul.mubr.f32.gmra.mrb[0].mxu0 %v1383
    %v6116 = vpop.f32.mrb[0].mxu0
    %v6117 = vadd.f32 0.0, %v6116
    %v6118 = vpop.f32.mrb[0].mxu0
    %v6119 = vadd.f32 0.0, %v6118
    %6120 = vmatprep.mubr.f32.mxu0 0.0
    %6121 = vmatmul.mubr.f32.gmra.mrb[0].mxu0 %v1384
    %v6122 = vpop.f32.mrb[0].mxu0
    %v6123 = vadd.f32 0.0, %v6122
    %v6124 = vpop.f32.mrb[0].mxu0
    %v6125 = vadd.f32 0.0, %v6124
    %6126 = vmatprep.mubr.f32.mxu0 0.0
    %6127 = vmatmul.mubr.f32.gmra.mrb[0].mxu0 %v1385
    %v6128 = vpop.f32.mrb[0].mxu0
    %v6129 = vadd.f32 0.0, %v6128
    %v6130 = vpop.f32.mrb[0].mxu0
    %v6131 = vadd.f32 0.0, %v6130
    %6132 = vmatprep.mubr.f32.mxu0 0.0
    %6133 = vmatmul.mubr.f32.gmra.mrb[0].mxu0 %v1386
    %v6134 = vpop.f32.mrb[0].mxu0
    %v6135 = vadd.f32 0.0, %v6134
    %v6136 = vpop.f32.mrb[0].mxu0
    %v6137 = vadd.f32 0.0, %v6136
    %6138 = vmatprep.mubr.f32.mxu0 0.0
    %6139 = vmatmul.mubr.f32.gmra.mrb[0].mxu0 %v1387
    %v6140 = vpop.f32.mrb[0].mxu0
    %v6141 = vadd.f32 0.0, %v6140
    %v6142 = vpop.f32.mrb[0].mxu0
    %v6143 = vadd.f32 0.0, %v6142
    %6144 = vmatprep.mubr.f32.mxu0 0.0
    %6145 = vmatmul.mubr.f32.gmra.mrb[0].mxu0 %v1388
    %v6146 = vpop.f32.mrb[0].mxu0
    %v6147 = vadd.f32 0.0, %v6146
    %v6148 = vpop.f32.mrb[0].mxu0
    %v6149 = vadd.f32 0.0, %v6148
    %6150 = vmatprep.mubr.f32.mxu0 0.0
    %6151 = vmatmul.mubr.f32.gmra.mrb[0].mxu0 %v1389
    %v6152 = vpop.f32.mrb[0].mxu0
    %v6153 = vadd.f32 0.0, %v6152
    %v6154 = vpop.f32.mrb[0].mxu0
    %v6155 = vadd.f32 0.0, %v6154
    %6156 = vmatprep.mubr.f32.mxu0 0.0
    %6157 = vmatmul.mubr.f32.gmra.mrb[0].mxu0 %v1390
    %v6158 = vpop.f32.mrb[0].mxu0
    %v6159 = vadd.f32 0.0, %v6158
    %v6160 = vpop.f32.mrb[0].mxu0
    %v6161 = vadd.f32 0.0, %v6160
    %6162 = vmatprep.mubr.f32.mxu0 0.0
    %6163 = vmatmul.mubr.f32.gmra.mrb[0].mxu0 %v1391
    %v6164 = vpop.f32.mrb[0].mxu0
    %v6165 = vadd.f32 0.0, %v6164
    %v6166 = vpop.f32.mrb[0].mxu0
    %v6167 = vadd.f32 0.0, %v6166
    %6168 = vmatprep.mubr.f32.mxu0 0.0
    %6169 = vmatmul.mubr.f32.gmra.mrb[0].mxu0 %v1392
    %v6170 = vpop.f32.mrb[0].mxu0
    %v6171 = vadd.f32 0.0, %v6170
    %v6172 = vpop.f32.mrb[0].mxu0
    %v6173 = vadd.f32 0.0, %v6172
    %6174 = vmatprep.mubr.f32.mxu0 0.0
    %6175 = vmatmul.mubr.f32.gmra.mrb[0].mxu0 %v1393
    %v6176 = vpop.f32.mrb[0].mxu0
    %v6177 = vadd.f32 0.0, %v6176
    %v6178 = vpop.f32.mrb[0].mxu0
    %v6179 = vadd.f32 0.0, %v6178
    %6180 = vmatprep.mubr.f32.mxu0 0.0
    %6181 = vmatmul.mubr.f32.gmra.mrb[0].mxu0 %v1394
    %v6182 = vpop.f32.mrb[0].mxu0
    %v6183 = vadd.f32 0.0, %v6182
    %v6184 = vpop.f32.mrb[0].mxu0
    %v6185 = vadd.f32 0.0, %v6184
    %6186 = vmatprep.mubr.f32.mxu0 0.0
    %6187 = vmatmul.mubr.f32.gmra.mrb[0].mxu0 %v1395
    %v6188 = vpop.f32.mrb[0].mxu0
    %v6189 = vadd.f32 0.0, %v6188
    %v6190 = vpop.f32.mrb[0].mxu0
    %v6191 = vadd.f32 0.0, %v6190
    %6192 = vdwg.mxu0
    %6193 = vmatprep.subr.mxu0 %v5872
    %6194 = vmatpush1.msra.mxu0 %v5856
    %6195 = vmatprep.subr.mxu0 %v5873
    %6196 = vmatpush1.msra.mxu0 %v5857
    %6197 = vmatprep.subr.mxu0 %v5874
    %6198 = vmatpush1.msra.mxu0 %v5858
    %6199 = vmatprep.subr.mxu0 %v5875
    %6200 = vmatpush1.msra.mxu0 %v5859
    %6201 = vmatprep.subr.mxu0 %v5876
    %6202 = vmatpush1.msra.mxu0 %v5860
    %6203 = vmatprep.subr.mxu0 %v5877
    %6204 = vmatpush1.msra.mxu0 %v5861
    %6205 = vmatprep.subr.mxu0 %v5878
    %6206 = vmatpush1.msra.mxu0 %v5862
    %6207 = vmatprep.subr.mxu0 %v5879
    %6208 = vmatpush1.msra.mxu0 %v5863
    %6209 = vmatprep.subr.mxu0 %v5880
    %6210 = vmatpush1.msra.mxu0 %v5864
    %6211 = vmatprep.subr.mxu0 %v5881
    %6212 = vmatpush1.msra.mxu0 %v5865
    %6213 = vmatprep.subr.mxu0 %v5882
    %6214 = vmatpush1.msra.mxu0 %v5866
    %6215 = vmatprep.subr.mxu0 %v5883
    %6216 = vmatpush1.msra.mxu0 %v5867
    %6217 = vmatprep.subr.mxu0 %v5884
    %6218 = vmatpush1.msra.mxu0 %v5868
    %6219 = vmatprep.subr.mxu0 %v5885
    %6220 = vmatpush1.msra.mxu0 %v5869
    %6221 = vmatprep.subr.mxu0 %v5886
    %6222 = vmatpush1.msra.mxu0 %v5870
    %6223 = vmatprep.subr.mxu0 %v5887
    %6224 = vmatpush1.msra.mxu0 %v5871
    %6225 = vmatprep.subr.mxu0 0.0
    %6226 = vmatpush1.msra.mxu0 0.0
    %6227 = vmatprep.subr.mxu0 0.0
    %6228 = vmatpush1.msra.mxu0 0.0
    %6229 = vmatprep.subr.mxu0 0.0
    %6230 = vmatpush1.msra.mxu0 0.0
    %6231 = vmatprep.subr.mxu0 0.0
    %6232 = vmatpush1.msra.mxu0 0.0
    %6233 = vmatprep.subr.mxu0 0.0
    %6234 = vmatpush1.msra.mxu0 0.0
    %6235 = vmatprep.subr.mxu0 0.0
    %6236 = vmatpush1.msra.mxu0 0.0
    %6237 = vmatprep.subr.mxu0 0.0
    %6238 = vmatpush1.msra.mxu0 0.0
    %6239 = vmatprep.subr.mxu0 0.0
    %6240 = vmatpush1.msra.mxu0 0.0
    %6241 = vmatprep.subr.mxu0 0.0
    %6242 = vmatpush1.msra.mxu0 0.0
    %6243 = vmatprep.subr.mxu0 0.0
    %6244 = vmatpush1.msra.mxu0 0.0
    %6245 = vmatprep.subr.mxu0 0.0
    %6246 = vmatpush1.msra.mxu0 0.0
    %6247 = vmatprep.subr.mxu0 0.0
    %6248 = vmatpush1.msra.mxu0 0.0
    %6249 = vmatprep.subr.mxu0 0.0
    %6250 = vmatpush1.msra.mxu0 0.0
    %6251 = vmatprep.subr.mxu0 0.0
    %6252 = vmatpush1.msra.mxu0 0.0
    %6253 = vmatprep.subr.mxu0 0.0
    %6254 = vmatpush1.msra.mxu0 0.0
    %6255 = vmatprep.subr.mxu0 0.0
    %6256 = vmatpush1.msra.mxu0 0.0
    %6257 = vmatprep.mubr.f32.mxu0 0.0
    %6258 = vmatmul.mubr.f32.gmra.mrb[0].mxu0 %v1380
    %v6259 = vpop.f32.mrb[0].mxu0
    %v6260 = vadd.f32 0.0, %v6259
    %v6261 = vpop.f32.mrb[0].mxu0
    %v6262 = vadd.f32 0.0, %v6261
    %6263 = vmatprep.mubr.f32.mxu0 0.0
    %6264 = vmatmul.mubr.f32.gmra.mrb[0].mxu0 %v1381
    %v6265 = vpop.f32.mrb[0].mxu0
    %v6266 = vadd.f32 0.0, %v6265
    %v6267 = vpop.f32.mrb[0].mxu0
    %v6268 = vadd.f32 0.0, %v6267
    %6269 = vmatprep.mubr.f32.mxu0 0.0
    %6270 = vmatmul.mubr.f32.gmra.mrb[0].mxu0 %v1382
    %v6271 = vpop.f32.mrb[0].mxu0
    %v6272 = vadd.f32 0.0, %v6271
    %v6273 = vpop.f32.mrb[0].mxu0
    %v6274 = vadd.f32 0.0, %v6273
    %6275 = vmatprep.mubr.f32.mxu0 0.0
    %6276 = vmatmul.mubr.f32.gmra.mrb[0].mxu0 %v1383
    %v6277 = vpop.f32.mrb[0].mxu0
    %v6278 = vadd.f32 0.0, %v6277
    %v6279 = vpop.f32.mrb[0].mxu0
    %v6280 = vadd.f32 0.0, %v6279
    %6281 = vmatprep.mubr.f32.mxu0 0.0
    %6282 = vmatmul.mubr.f32.gmra.mrb[0].mxu0 %v1384
    %v6283 = vpop.f32.mrb[0].mxu0
    %v6284 = vadd.f32 0.0, %v6283
    %v6285 = vpop.f32.mrb[0].mxu0
    %v6286 = vadd.f32 0.0, %v6285
    %6287 = vmatprep.mubr.f32.mxu0 0.0
    %6288 = vmatmul.mubr.f32.gmra.mrb[0].mxu0 %v1385
    %v6289 = vpop.f32.mrb[0].mxu0
    %v6290 = vadd.f32 0.0, %v6289
    %v6291 = vpop.f32.mrb[0].mxu0
    %v6292 = vadd.f32 0.0, %v6291
    %6293 = vmatprep.mubr.f32.mxu0 0.0
    %6294 = vmatmul.mubr.f32.gmra.mrb[0].mxu0 %v1386
    %v6295 = vpop.f32.mrb[0].mxu0
    %v6296 = vadd.f32 0.0, %v6295
    %v6297 = vpop.f32.mrb[0].mxu0
    %v6298 = vadd.f32 0.0, %v6297
    %6299 = vmatprep.mubr.f32.mxu0 0.0
    %6300 = vmatmul.mubr.f32.gmra.mrb[0].mxu0 %v1387
    %v6301 = vpop.f32.mrb[0].mxu0
    %v6302 = vadd.f32 0.0, %v6301
    %v6303 = vpop.f32.mrb[0].mxu0
    %v6304 = vadd.f32 0.0, %v6303
    %6305 = vmatprep.mubr.f32.mxu0 0.0
    %6306 = vmatmul.mubr.f32.gmra.mrb[0].mxu0 %v1388
    %v6307 = vpop.f32.mrb[0].mxu0
    %v6308 = vadd.f32 0.0, %v6307
    %v6309 = vpop.f32.mrb[0].mxu0
    %v6310 = vadd.f32 0.0, %v6309
    %6311 = vmatprep.mubr.f32.mxu0 0.0
    %6312 = vmatmul.mubr.f32.gmra.mrb[0].mxu0 %v1389
    %v6313 = vpop.f32.mrb[0].mxu0
    %v6314 = vadd.f32 0.0, %v6313
    %v6315 = vpop.f32.mrb[0].mxu0
    %v6316 = vadd.f32 0.0, %v6315
    %6317 = vmatprep.mubr.f32.mxu0 0.0
    %6318 = vmatmul.mubr.f32.gmra.mrb[0].mxu0 %v1390
    %v6319 = vpop.f32.mrb[0].mxu0
    %v6320 = vadd.f32 0.0, %v6319
    %v6321 = vpop.f32.mrb[0].mxu0
    %v6322 = vadd.f32 0.0, %v6321
    %6323 = vmatprep.mubr.f32.mxu0 0.0
    %6324 = vmatmul.mubr.f32.gmra.mrb[0].mxu0 %v1391
    %v6325 = vpop.f32.mrb[0].mxu0
    %v6326 = vadd.f32 0.0, %v6325
    %v6327 = vpop.f32.mrb[0].mxu0
    %v6328 = vadd.f32 0.0, %v6327
    %6329 = vmatprep.mubr.f32.mxu0 0.0
    %6330 = vmatmul.mubr.f32.gmra.mrb[0].mxu0 %v1392
    %v6331 = vpop.f32.mrb[0].mxu0
    %v6332 = vadd.f32 0.0, %v6331
    %v6333 = vpop.f32.mrb[0].mxu0
    %v6334 = vadd.f32 0.0, %v6333
    %6335 = vmatprep.mubr.f32.mxu0 0.0
    %6336 = vmatmul.mubr.f32.gmra.mrb[0].mxu0 %v1393
    %v6337 = vpop.f32.mrb[0].mxu0
    %v6338 = vadd.f32 0.0, %v6337
    %v6339 = vpop.f32.mrb[0].mxu0
    %v6340 = vadd.f32 0.0, %v6339
    %6341 = vmatprep.mubr.f32.mxu0 0.0
    %6342 = vmatmul.mubr.f32.gmra.mrb[0].mxu0 %v1394
    %v6343 = vpop.f32.mrb[0].mxu0
    %v6344 = vadd.f32 0.0, %v6343
    %v6345 = vpop.f32.mrb[0].mxu0
    %v6346 = vadd.f32 0.0, %v6345
    %6347 = vmatprep.mubr.f32.mxu0 0.0
    %6348 = vmatmul.mubr.f32.gmra.mrb[0].mxu0 %v1395
    %v6349 = vpop.f32.mrb[0].mxu0
    %v6350 = vadd.f32 0.0, %v6349
    %v6351 = vpop.f32.mrb[0].mxu0
    %v6352 = vadd.f32 0.0, %v6351
    %6353 = vdwg.mxu0
    %6354 = vmatprep.subr.mxu0 %v5968
    %6355 = vmatpush1.msra.mxu0 %v5952
    %6356 = vmatprep.subr.mxu0 %v5969
    %6357 = vmatpush1.msra.mxu0 %v5953
    %6358 = vmatprep.subr.mxu0 %v5970
    %6359 = vmatpush1.msra.mxu0 %v5954
    %6360 = vmatprep.subr.mxu0 %v5971
    %6361 = vmatpush1.msra.mxu0 %v5955
    %6362 = vmatprep.subr.mxu0 %v5972
    %6363 = vmatpush1.msra.mxu0 %v5956
    %6364 = vmatprep.subr.mxu0 %v5973
    %6365 = vmatpush1.msra.mxu0 %v5957
    %6366 = vmatprep.subr.mxu0 %v5974
    %6367 = vmatpush1.msra.mxu0 %v5958
    %6368 = vmatprep.subr.mxu0 %v5975
    %6369 = vmatpush1.msra.mxu0 %v5959
    %6370 = vmatprep.subr.mxu0 %v5976
    %6371 = vmatpush1.msra.mxu0 %v5960
    %6372 = vmatprep.subr.mxu0 %v5977
    %6373 = vmatpush1.msra.mxu0 %v5961
    %6374 = vmatprep.subr.mxu0 %v5978
    %6375 = vmatpush1.msra.mxu0 %v5962
    %6376 = vmatprep.subr.mxu0 %v5979
    %6377 = vmatpush1.msra.mxu0 %v5963
    %6378 = vmatprep.subr.mxu0 %v5980
    %6379 = vmatpush1.msra.mxu0 %v5964
    %6380 = vmatprep.subr.mxu0 %v5981
    %6381 = vmatpush1.msra.mxu0 %v5965
    %6382 = vmatprep.subr.mxu0 %v5982
    %6383 = vmatpush1.msra.mxu0 %v5966
    %6384 = vmatprep.subr.mxu0 %v5983
    %6385 = vmatpush1.msra.mxu0 %v5967
    %6386 = vmatprep.subr.mxu0 0.0
    %6387 = vmatpush1.msra.mxu0 0.0
    %6388 = vmatprep.subr.mxu0 0.0
    %6389 = vmatpush1.msra.mxu0 0.0
    %6390 = vmatprep.subr.mxu0 0.0
    %6391 = vmatpush1.msra.mxu0 0.0
    %6392 = vmatprep.subr.mxu0 0.0
    %6393 = vmatpush1.msra.mxu0 0.0
    %6394 = vmatprep.subr.mxu0 0.0
    %6395 = vmatpush1.msra.mxu0 0.0
    %6396 = vmatprep.subr.mxu0 0.0
    %6397 = vmatpush1.msra.mxu0 0.0
    %6398 = vmatprep.subr.mxu0 0.0
    %6399 = vmatpush1.msra.mxu0 0.0
    %6400 = vmatprep.subr.mxu0 0.0
    %6401 = vmatpush1.msra.mxu0 0.0
    %6402 = vmatprep.subr.mxu0 0.0
    %6403 = vmatpush1.msra.mxu0 0.0
    %6404 = vmatprep.subr.mxu0 0.0
    %6405 = vmatpush1.msra.mxu0 0.0
    %6406 = vmatprep.subr.mxu0 0.0
    %6407 = vmatpush1.msra.mxu0 0.0
    %6408 = vmatprep.subr.mxu0 0.0
    %6409 = vmatpush1.msra.mxu0 0.0
    %6410 = vmatprep.subr.mxu0 0.0
    %6411 = vmatpush1.msra.mxu0 0.0
    %6412 = vmatprep.subr.mxu0 0.0
    %6413 = vmatpush1.msra.mxu0 0.0
    %6414 = vmatprep.subr.mxu0 0.0
    %6415 = vmatpush1.msra.mxu0 0.0
    %6416 = vmatprep.subr.mxu0 0.0
    %6417 = vmatpush1.msra.mxu0 0.0
    %6418 = vmatprep.mubr.f32.mxu0 0.0
    %6419 = vmatmul.mubr.f32.gmra.mrb[0].mxu0 %v6016
    %v6420 = vpop.f32.mrb[0].mxu0
    %v6421 = vadd.f32 0.0, %v6420
    %v6422 = vpop.f32.mrb[0].mxu0
    %v6423 = vadd.f32 0.0, %v6422
    %6424 = vmatprep.mubr.f32.mxu0 0.0
    %6425 = vmatmul.mubr.f32.gmra.mrb[0].mxu0 %v6017
    %v6426 = vpop.f32.mrb[0].mxu0
    %v6427 = vadd.f32 0.0, %v6426
    %v6428 = vpop.f32.mrb[0].mxu0
    %v6429 = vadd.f32 0.0, %v6428
    %6430 = vmatprep.mubr.f32.mxu0 0.0
    %6431 = vmatmul.mubr.f32.gmra.mrb[0].mxu0 %v6018
    %v6432 = vpop.f32.mrb[0].mxu0
    %v6433 = vadd.f32 0.0, %v6432
    %v6434 = vpop.f32.mrb[0].mxu0
    %v6435 = vadd.f32 0.0, %v6434
    %6436 = vmatprep.mubr.f32.mxu0 0.0
    %6437 = vmatmul.mubr.f32.gmra.mrb[0].mxu0 %v6019
    %v6438 = vpop.f32.mrb[0].mxu0
    %v6439 = vadd.f32 0.0, %v6438
    %v6440 = vpop.f32.mrb[0].mxu0
    %v6441 = vadd.f32 0.0, %v6440
    %6442 = vmatprep.mubr.f32.mxu0 0.0
    %6443 = vmatmul.mubr.f32.gmra.mrb[0].mxu0 %v6020
    %v6444 = vpop.f32.mrb[0].mxu0
    %v6445 = vadd.f32 0.0, %v6444
    %v6446 = vpop.f32.mrb[0].mxu0
    %v6447 = vadd.f32 0.0, %v6446
    %6448 = vmatprep.mubr.f32.mxu0 0.0
    %6449 = vmatmul.mubr.f32.gmra.mrb[0].mxu0 %v6021
    %v6450 = vpop.f32.mrb[0].mxu0
    %v6451 = vadd.f32 0.0, %v6450
    %v6452 = vpop.f32.mrb[0].mxu0
    %v6453 = vadd.f32 0.0, %v6452
    %6454 = vmatprep.mubr.f32.mxu0 0.0
    %6455 = vmatmul.mubr.f32.gmra.mrb[0].mxu0 %v6022
    %v6456 = vpop.f32.mrb[0].mxu0
    %v6457 = vadd.f32 0.0, %v6456
    %v6458 = vpop.f32.mrb[0].mxu0
    %v6459 = vadd.f32 0.0, %v6458
    %6460 = vmatprep.mubr.f32.mxu0 0.0
    %6461 = vmatmul.mubr.f32.gmra.mrb[0].mxu0 %v6023
    %v6462 = vpop.f32.mrb[0].mxu0
    %v6463 = vadd.f32 0.0, %v6462
    %v6464 = vpop.f32.mrb[0].mxu0
    %v6465 = vadd.f32 0.0, %v6464
    %6466 = vmatprep.mubr.f32.mxu0 0.0
    %6467 = vmatmul.mubr.f32.gmra.mrb[0].mxu0 %v6024
    %v6468 = vpop.f32.mrb[0].mxu0
    %v6469 = vadd.f32 0.0, %v6468
    %v6470 = vpop.f32.mrb[0].mxu0
    %v6471 = vadd.f32 0.0, %v6470
    %6472 = vmatprep.mubr.f32.mxu0 0.0
    %6473 = vmatmul.mubr.f32.gmra.mrb[0].mxu0 %v6025
    %v6474 = vpop.f32.mrb[0].mxu0
    %v6475 = vadd.f32 0.0, %v6474
    %v6476 = vpop.f32.mrb[0].mxu0
    %v6477 = vadd.f32 0.0, %v6476
    %6478 = vmatprep.mubr.f32.mxu0 0.0
    %6479 = vmatmul.mubr.f32.gmra.mrb[0].mxu0 %v6026
    %v6480 = vpop.f32.mrb[0].mxu0
    %v6481 = vadd.f32 0.0, %v6480
    %v6482 = vpop.f32.mrb[0].mxu0
    %v6483 = vadd.f32 0.0, %v6482
    %6484 = vmatprep.mubr.f32.mxu0 0.0
    %6485 = vmatmul.mubr.f32.gmra.mrb[0].mxu0 %v6027
    %v6486 = vpop.f32.mrb[0].mxu0
    %v6487 = vadd.f32 0.0, %v6486
    %v6488 = vpop.f32.mrb[0].mxu0
    %v6489 = vadd.f32 0.0, %v6488
    %6490 = vmatprep.mubr.f32.mxu0 0.0
    %6491 = vmatmul.mubr.f32.gmra.mrb[0].mxu0 %v6028
    %v6492 = vpop.f32.mrb[0].mxu0
    %v6493 = vadd.f32 0.0, %v6492
    %v6494 = vpop.f32.mrb[0].mxu0
    %v6495 = vadd.f32 0.0, %v6494
    %6496 = vmatprep.mubr.f32.mxu0 0.0
    %6497 = vmatmul.mubr.f32.gmra.mrb[0].mxu0 %v6029
    %v6498 = vpop.f32.mrb[0].mxu0
    %v6499 = vadd.f32 0.0, %v6498
    %v6500 = vpop.f32.mrb[0].mxu0
    %v6501 = vadd.f32 0.0, %v6500
    %6502 = vmatprep.mubr.f32.mxu0 0.0
    %6503 = vmatmul.mubr.f32.gmra.mrb[0].mxu0 %v6030
    %v6504 = vpop.f32.mrb[0].mxu0
    %v6505 = vadd.f32 0.0, %v6504
    %v6506 = vpop.f32.mrb[0].mxu0
    %v6507 = vadd.f32 0.0, %v6506
    %6508 = vmatprep.mubr.f32.mxu0 0.0
    %6509 = vmatmul.mubr.f32.gmra.mrb[0].mxu0 %v6031
    %v6510 = vpop.f32.mrb[0].mxu0
    %v6511 = vadd.f32 0.0, %v6510
    %v6512 = vpop.f32.mrb[0].mxu0
    %v6513 = vadd.f32 0.0, %v6512
    %6514 = vdwg.mxu0
    %6515 = vmatprep.subr.mxu0 %v6000
    %6516 = vmatpush1.msra.mxu0 %v5984
    %6517 = vmatprep.subr.mxu0 %v6001
    %6518 = vmatpush1.msra.mxu0 %v5985
    %6519 = vmatprep.subr.mxu0 %v6002
    %6520 = vmatpush1.msra.mxu0 %v5986
    %6521 = vmatprep.subr.mxu0 %v6003
    %6522 = vmatpush1.msra.mxu0 %v5987
    %6523 = vmatprep.subr.mxu0 %v6004
    %6524 = vmatpush1.msra.mxu0 %v5988
    %6525 = vmatprep.subr.mxu0 %v6005
    %6526 = vmatpush1.msra.mxu0 %v5989
    %6527 = vmatprep.subr.mxu0 %v6006
    %6528 = vmatpush1.msra.mxu0 %v5990
    %6529 = vmatprep.subr.mxu0 %v6007
    %6530 = vmatpush1.msra.mxu0 %v5991
    %6531 = vmatprep.subr.mxu0 %v6008
    %6532 = vmatpush1.msra.mxu0 %v5992
    %6533 = vmatprep.subr.mxu0 %v6009
    %6534 = vmatpush1.msra.mxu0 %v5993
    %6535 = vmatprep.subr.mxu0 %v6010
    %6536 = vmatpush1.msra.mxu0 %v5994
    %6537 = vmatprep.subr.mxu0 %v6011
    %6538 = vmatpush1.msra.mxu0 %v5995
    %6539 = vmatprep.subr.mxu0 %v6012
    %6540 = vmatpush1.msra.mxu0 %v5996
    %6541 = vmatprep.subr.mxu0 %v6013
    %6542 = vmatpush1.msra.mxu0 %v5997
    %6543 = vmatprep.subr.mxu0 %v6014
    %6544 = vmatpush1.msra.mxu0 %v5998
    %6545 = vmatprep.subr.mxu0 %v6015
    %6546 = vmatpush1.msra.mxu0 %v5999
    %6547 = vmatprep.subr.mxu0 0.0
    %6548 = vmatpush1.msra.mxu0 0.0
    %6549 = vmatprep.subr.mxu0 0.0
    %6550 = vmatpush1.msra.mxu0 0.0
    %6551 = vmatprep.subr.mxu0 0.0
    %6552 = vmatpush1.msra.mxu0 0.0
    %6553 = vmatprep.subr.mxu0 0.0
    %6554 = vmatpush1.msra.mxu0 0.0
    %6555 = vmatprep.subr.mxu0 0.0
    %6556 = vmatpush1.msra.mxu0 0.0
    %6557 = vmatprep.subr.mxu0 0.0
    %6558 = vmatpush1.msra.mxu0 0.0
    %6559 = vmatprep.subr.mxu0 0.0
    %6560 = vmatpush1.msra.mxu0 0.0
    %6561 = vmatprep.subr.mxu0 0.0
    %6562 = vmatpush1.msra.mxu0 0.0
    %6563 = vmatprep.subr.mxu0 0.0
    %6564 = vmatpush1.msra.mxu0 0.0
    %6565 = vmatprep.subr.mxu0 0.0
    %6566 = vmatpush1.msra.mxu0 0.0
    %6567 = vmatprep.subr.mxu0 0.0
    %6568 = vmatpush1.msra.mxu0 0.0
    %6569 = vmatprep.subr.mxu0 0.0
    %6570 = vmatpush1.msra.mxu0 0.0
    %6571 = vmatprep.subr.mxu0 0.0
    %6572 = vmatpush1.msra.mxu0 0.0
    %6573 = vmatprep.subr.mxu0 0.0
    %6574 = vmatpush1.msra.mxu0 0.0
    %6575 = vmatprep.subr.mxu0 0.0
    %6576 = vmatpush1.msra.mxu0 0.0
    %6577 = vmatprep.subr.mxu0 0.0
    %6578 = vmatpush1.msra.mxu0 0.0
    %6579 = vmatprep.mubr.f32.mxu0 0.0
    %6580 = vmatmul.mubr.f32.gmra.mrb[0].mxu0 %v6016
    %v6581 = vpop.f32.mrb[0].mxu0
    %v6582 = vadd.f32 0.0, %v6581
    %v6583 = vpop.f32.mrb[0].mxu0
    %v6584 = vadd.f32 0.0, %v6583
    %6585 = vmatprep.mubr.f32.mxu0 0.0
    %6586 = vmatmul.mubr.f32.gmra.mrb[0].mxu0 %v6017
    %v6587 = vpop.f32.mrb[0].mxu0
    %v6588 = vadd.f32 0.0, %v6587
    %v6589 = vpop.f32.mrb[0].mxu0
    %v6590 = vadd.f32 0.0, %v6589
    %6591 = vmatprep.mubr.f32.mxu0 0.0
    %6592 = vmatmul.mubr.f32.gmra.mrb[0].mxu0 %v6018
    %v6593 = vpop.f32.mrb[0].mxu0
    %v6594 = vadd.f32 0.0, %v6593
    %v6595 = vpop.f32.mrb[0].mxu0
    %v6596 = vadd.f32 0.0, %v6595
    %6597 = vmatprep.mubr.f32.mxu0 0.0
    %6598 = vmatmul.mubr.f32.gmra.mrb[0].mxu0 %v6019
    %v6599 = vpop.f32.mrb[0].mxu0
    %v6600 = vadd.f32 0.0, %v6599
    %v6601 = vpop.f32.mrb[0].mxu0
    %v6602 = vadd.f32 0.0, %v6601
    %6603 = vmatprep.mubr.f32.mxu0 0.0
    %6604 = vmatmul.mubr.f32.gmra.mrb[0].mxu0 %v6020
    %v6605 = vpop.f32.mrb[0].mxu0
    %v6606 = vadd.f32 0.0, %v6605
    %v6607 = vpop.f32.mrb[0].mxu0
    %v6608 = vadd.f32 0.0, %v6607
    %6609 = vmatprep.mubr.f32.mxu0 0.0
    %6610 = vmatmul.mubr.f32.gmra.mrb[0].mxu0 %v6021
    %v6611 = vpop.f32.mrb[0].mxu0
    %v6612 = vadd.f32 0.0, %v6611
    %v6613 = vpop.f32.mrb[0].mxu0
    %v6614 = vadd.f32 0.0, %v6613
    %6615 = vmatprep.mubr.f32.mxu0 0.0
    %6616 = vmatmul.mubr.f32.gmra.mrb[0].mxu0 %v6022
    %v6617 = vpop.f32.mrb[0].mxu0
    %v6618 = vadd.f32 0.0, %v6617
    %v6619 = vpop.f32.mrb[0].mxu0
    %v6620 = vadd.f32 0.0, %v6619
    %6621 = vmatprep.mubr.f32.mxu0 0.0
    %6622 = vmatmul.mubr.f32.gmra.mrb[0].mxu0 %v6023
    %v6623 = vpop.f32.mrb[0].mxu0
    %v6624 = vadd.f32 0.0, %v6623
    %v6625 = vpop.f32.mrb[0].mxu0
    %v6626 = vadd.f32 0.0, %v6625
    %6627 = vmatprep.mubr.f32.mxu0 0.0
    %6628 = vmatmul.mubr.f32.gmra.mrb[0].mxu0 %v6024
    %v6629 = vpop.f32.mrb[0].mxu0
    %v6630 = vadd.f32 0.0, %v6629
    %v6631 = vpop.f32.mrb[0].mxu0
    %v6632 = vadd.f32 0.0, %v6631
    %6633 = vmatprep.mubr.f32.mxu0 0.0
    %6634 = vmatmul.mubr.f32.gmra.mrb[0].mxu0 %v6025
    %v6635 = vpop.f32.mrb[0].mxu0
    %v6636 = vadd.f32 0.0, %v6635
    %v6637 = vpop.f32.mrb[0].mxu0
    %v6638 = vadd.f32 0.0, %v6637
    %6639 = vmatprep.mubr.f32.mxu0 0.0
    %6640 = vmatmul.mubr.f32.gmra.mrb[0].mxu0 %v6026
    %v6641 = vpop.f32.mrb[0].mxu0
    %v6642 = vadd.f32 0.0, %v6641
    %v6643 = vpop.f32.mrb[0].mxu0
    %v6644 = vadd.f32 0.0, %v6643
    %6645 = vmatprep.mubr.f32.mxu0 0.0
    %6646 = vmatmul.mubr.f32.gmra.mrb[0].mxu0 %v6027
    %v6647 = vpop.f32.mrb[0].mxu0
    %v6648 = vadd.f32 0.0, %v6647
    %v6649 = vpop.f32.mrb[0].mxu0
    %v6650 = vadd.f32 0.0, %v6649
    %6651 = vmatprep.mubr.f32.mxu0 0.0
    %6652 = vmatmul.mubr.f32.gmra.mrb[0].mxu0 %v6028
    %v6653 = vpop.f32.mrb[0].mxu0
    %v6654 = vadd.f32 0.0, %v6653
    %v6655 = vpop.f32.mrb[0].mxu0
    %v6656 = vadd.f32 0.0, %v6655
    %6657 = vmatprep.mubr.f32.mxu0 0.0
    %6658 = vmatmul.mubr.f32.gmra.mrb[0].mxu0 %v6029
    %v6659 = vpop.f32.mrb[0].mxu0
    %v6660 = vadd.f32 0.0, %v6659
    %v6661 = vpop.f32.mrb[0].mxu0
    %v6662 = vadd.f32 0.0, %v6661
    %6663 = vmatprep.mubr.f32.mxu0 0.0
    %6664 = vmatmul.mubr.f32.gmra.mrb[0].mxu0 %v6030
    %v6665 = vpop.f32.mrb[0].mxu0
    %v6666 = vadd.f32 0.0, %v6665
    %v6667 = vpop.f32.mrb[0].mxu0
    %v6668 = vadd.f32 0.0, %v6667
    %6669 = vmatprep.mubr.f32.mxu0 0.0
    %6670 = vmatmul.mubr.f32.gmra.mrb[0].mxu0 %v6031
    %v6671 = vpop.f32.mrb[0].mxu0
    %v6672 = vadd.f32 0.0, %v6671
    %v6673 = vpop.f32.mrb[0].mxu0
    %v6674 = vadd.f32 0.0, %v6673
    %6675 = vdwg.mxu0
    %v6676 = vadd.f32 %v1380, %v6016
    %v6677 = vadd.f32 %v1381, %v6017
    %v6678 = vadd.f32 %v1382, %v6018
    %v6679 = vadd.f32 %v1383, %v6019
    %v6680 = vadd.f32 %v1384, %v6020
    %v6681 = vadd.f32 %v1385, %v6021
    %v6682 = vadd.f32 %v1386, %v6022
    %v6683 = vadd.f32 %v1387, %v6023
    %v6684 = vadd.f32 %v1388, %v6024
    %v6685 = vadd.f32 %v1389, %v6025
    %v6686 = vadd.f32 %v1390, %v6026
    %v6687 = vadd.f32 %v1391, %v6027
    %v6688 = vadd.f32 %v1392, %v6028
    %v6689 = vadd.f32 %v1393, %v6029
    %v6690 = vadd.f32 %v1394, %v6030
    %v6691 = vadd.f32 %v1395, %v6031
    %v6692 = vadd.f32 %v5824, %v5952
    %v6693 = vadd.f32 %v5840, %v5968
    %v6694 = vadd.f32 %v5856, %v5984
    %v6695 = vadd.f32 %v5872, %v6000
    %v6696 = vadd.f32 %v5825, %v5953
    %v6697 = vadd.f32 %v5841, %v5969
    %v6698 = vadd.f32 %v5857, %v5985
    %v6699 = vadd.f32 %v5873, %v6001
    %v6700 = vadd.f32 %v5826, %v5954
    %v6701 = vadd.f32 %v5842, %v5970
    %v6702 = vadd.f32 %v5858, %v5986
    %v6703 = vadd.f32 %v5874, %v6002
    %v6704 = vadd.f32 %v5827, %v5955
    %v6705 = vadd.f32 %v5843, %v5971
    %v6706 = vadd.f32 %v5859, %v5987
    %v6707 = vadd.f32 %v5875, %v6003
    %v6708 = vadd.f32 %v5828, %v5956
    %v6709 = vadd.f32 %v5844, %v5972
    %v6710 = vadd.f32 %v5860, %v5988
    %v6711 = vadd.f32 %v5876, %v6004
    %v6712 = vadd.f32 %v5829, %v5957
    %v6713 = vadd.f32 %v5845, %v5973
    %v6714 = vadd.f32 %v5861, %v5989
    %v6715 = vadd.f32 %v5877, %v6005
    %v6716 = vadd.f32 %v5830, %v5958
    %v6717 = vadd.f32 %v5846, %v5974
    %v6718 = vadd.f32 %v5862, %v5990
    %v6719 = vadd.f32 %v5878, %v6006
    %v6720 = vadd.f32 %v5831, %v5959
    %v6721 = vadd.f32 %v5847, %v5975
    %v6722 = vadd.f32 %v5863, %v5991
    %v6723 = vadd.f32 %v5879, %v6007
    %v6724 = vadd.f32 %v5832, %v5960
    %v6725 = vadd.f32 %v5848, %v5976
    %v6726 = vadd.f32 %v5864, %v5992
    %v6727 = vadd.f32 %v5880, %v6008
    %v6728 = vadd.f32 %v5833, %v5961
    %v6729 = vadd.f32 %v5849, %v5977
    %v6730 = vadd.f32 %v5865, %v5993
    %v6731 = vadd.f32 %v5881, %v6009
    %v6732 = vadd.f32 %v5834, %v5962
    %v6733 = vadd.f32 %v5850, %v5978
    %v6734 = vadd.f32 %v5866, %v5994
    %v6735 = vadd.f32 %v5882, %v6010
    %v6736 = vadd.f32 %v5835, %v5963
    %v6737 = vadd.f32 %v5851, %v5979
    %v6738 = vadd.f32 %v5867, %v5995
    %v6739 = vadd.f32 %v5883, %v6011
    %v6740 = vadd.f32 %v5836, %v5964
    %v6741 = vadd.f32 %v5852, %v5980
    %v6742 = vadd.f32 %v5868, %v5996
    %v6743 = vadd.f32 %v5884, %v6012
    %v6744 = vadd.f32 %v5837, %v5965
    %v6745 = vadd.f32 %v5853, %v5981
    %v6746 = vadd.f32 %v5869, %v5997
    %v6747 = vadd.f32 %v5885, %v6013
    %v6748 = vadd.f32 %v5838, %v5966
    %v6749 = vadd.f32 %v5854, %v5982
    %v6750 = vadd.f32 %v5870, %v5998
    %v6751 = vadd.f32 %v5886, %v6014
    %v6752 = vadd.f32 %v5839, %v5967
    %v6753 = vadd.f32 %v5855, %v5983
    %v6754 = vadd.f32 %v5871, %v5999
    %v6755 = vadd.f32 %v5887, %v6015
    %6756 = vmatprep.subr.mxu0 %v6693
    %6757 = vmatpush1.msra.mxu0 %v6692
    %6758 = vmatprep.subr.mxu0 %v6697
    %6759 = vmatpush1.msra.mxu0 %v6696
    %6760 = vmatprep.subr.mxu0 %v6701
    %6761 = vmatpush1.msra.mxu0 %v6700
    %6762 = vmatprep.subr.mxu0 %v6705
    %6763 = vmatpush1.msra.mxu0 %v6704
    %6764 = vmatprep.subr.mxu0 %v6709
    %6765 = vmatpush1.msra.mxu0 %v6708
    %6766 = vmatprep.subr.mxu0 %v6713
    %6767 = vmatpush1.msra.mxu0 %v6712
    %6768 = vmatprep.subr.mxu0 %v6717
    %6769 = vmatpush1.msra.mxu0 %v6716
    %6770 = vmatprep.subr.mxu0 %v6721
    %6771 = vmatpush1.msra.mxu0 %v6720
    %6772 = vmatprep.subr.mxu0 %v6725
    %6773 = vmatpush1.msra.mxu0 %v6724
    %6774 = vmatprep.subr.mxu0 %v6729
    %6775 = vmatpush1.msra.mxu0 %v6728
    %6776 = vmatprep.subr.mxu0 %v6733
    %6777 = vmatpush1.msra.mxu0 %v6732
    %6778 = vmatprep.subr.mxu0 %v6737
    %6779 = vmatpush1.msra.mxu0 %v6736
    %6780 = vmatprep.subr.mxu0 %v6741
    %6781 = vmatpush1.msra.mxu0 %v6740
    %6782 = vmatprep.subr.mxu0 %v6745
    %6783 = vmatpush1.msra.mxu0 %v6744
    %6784 = vmatprep.subr.mxu0 %v6749
    %6785 = vmatpush1.msra.mxu0 %v6748
    %6786 = vmatprep.subr.mxu0 %v6753
    %6787 = vmatpush1.msra.mxu0 %v6752
    %6788 = vmatprep.subr.mxu0 0.0
    %6789 = vmatpush1.msra.mxu0 0.0
    %6790 = vmatprep.subr.mxu0 0.0
    %6791 = vmatpush1.msra.mxu0 0.0
    %6792 = vmatprep.subr.mxu0 0.0
    %6793 = vmatpush1.msra.mxu0 0.0
    %6794 = vmatprep.subr.mxu0 0.0
    %6795 = vmatpush1.msra.mxu0 0.0
    %6796 = vmatprep.subr.mxu0 0.0
    %6797 = vmatpush1.msra.mxu0 0.0
    %6798 = vmatprep.subr.mxu0 0.0
    %6799 = vmatpush1.msra.mxu0 0.0
    %6800 = vmatprep.subr.mxu0 0.0
    %6801 = vmatpush1.msra.mxu0 0.0
    %6802 = vmatprep.subr.mxu0 0.0
    %6803 = vmatpush1.msra.mxu0 0.0
    %6804 = vmatprep.subr.mxu0 0.0
    %6805 = vmatpush1.msra.mxu0 0.0
    %6806 = vmatprep.subr.mxu0 0.0
    %6807 = vmatpush1.msra.mxu0 0.0
    %6808 = vmatprep.subr.mxu0 0.0
    %6809 = vmatpush1.msra.mxu0 0.0
    %6810 = vmatprep.subr.mxu0 0.0
    %6811 = vmatpush1.msra.mxu0 0.0
    %6812 = vmatprep.subr.mxu0 0.0
    %6813 = vmatpush1.msra.mxu0 0.0
    %6814 = vmatprep.subr.mxu0 0.0
    %6815 = vmatpush1.msra.mxu0 0.0
    %6816 = vmatprep.subr.mxu0 0.0
    %6817 = vmatpush1.msra.mxu0 0.0
    %6818 = vmatprep.subr.mxu0 0.0
    %6819 = vmatpush1.msra.mxu0 0.0
    %6820 = vmatprep.mubr.f32.mxu0 0.0
    %6821 = vmatmul.mubr.f32.gmra.mrb[0].mxu0 %v6676
    %v6822 = vpop.f32.mrb[0].mxu0
    %v6823 = vadd.f32 0.0, %v6822
    %v6824 = vpop.f32.mrb[0].mxu0
    %v6825 = vadd.f32 0.0, %v6824
    %6826 = vmatprep.mubr.f32.mxu0 0.0
    %6827 = vmatmul.mubr.f32.gmra.mrb[0].mxu0 %v6677
    %v6828 = vpop.f32.mrb[0].mxu0
    %v6829 = vadd.f32 0.0, %v6828
    %v6830 = vpop.f32.mrb[0].mxu0
    %v6831 = vadd.f32 0.0, %v6830
    %6832 = vmatprep.mubr.f32.mxu0 0.0
    %6833 = vmatmul.mubr.f32.gmra.mrb[0].mxu0 %v6678
    %v6834 = vpop.f32.mrb[0].mxu0
    %v6835 = vadd.f32 0.0, %v6834
    %v6836 = vpop.f32.mrb[0].mxu0
    %v6837 = vadd.f32 0.0, %v6836
    %6838 = vmatprep.mubr.f32.mxu0 0.0
    %6839 = vmatmul.mubr.f32.gmra.mrb[0].mxu0 %v6679
    %v6840 = vpop.f32.mrb[0].mxu0
    %v6841 = vadd.f32 0.0, %v6840
    %v6842 = vpop.f32.mrb[0].mxu0
    %v6843 = vadd.f32 0.0, %v6842
    %6844 = vmatprep.mubr.f32.mxu0 0.0
    %6845 = vmatmul.mubr.f32.gmra.mrb[0].mxu0 %v6680
    %v6846 = vpop.f32.mrb[0].mxu0
    %v6847 = vadd.f32 0.0, %v6846
    %v6848 = vpop.f32.mrb[0].mxu0
    %v6849 = vadd.f32 0.0, %v6848
    %6850 = vmatprep.mubr.f32.mxu0 0.0
    %6851 = vmatmul.mubr.f32.gmra.mrb[0].mxu0 %v6681
    %v6852 = vpop.f32.mrb[0].mxu0
    %v6853 = vadd.f32 0.0, %v6852
    %v6854 = vpop.f32.mrb[0].mxu0
    %v6855 = vadd.f32 0.0, %v6854
    %6856 = vmatprep.mubr.f32.mxu0 0.0
    %6857 = vmatmul.mubr.f32.gmra.mrb[0].mxu0 %v6682
    %v6858 = vpop.f32.mrb[0].mxu0
    %v6859 = vadd.f32 0.0, %v6858
    %v6860 = vpop.f32.mrb[0].mxu0
    %v6861 = vadd.f32 0.0, %v6860
    %6862 = vmatprep.mubr.f32.mxu0 0.0
    %6863 = vmatmul.mubr.f32.gmra.mrb[0].mxu0 %v6683
    %v6864 = vpop.f32.mrb[0].mxu0
    %v6865 = vadd.f32 0.0, %v6864
    %v6866 = vpop.f32.mrb[0].mxu0
    %v6867 = vadd.f32 0.0, %v6866
    %6868 = vmatprep.mubr.f32.mxu0 0.0
    %6869 = vmatmul.mubr.f32.gmra.mrb[0].mxu0 %v6684
    %v6870 = vpop.f32.mrb[0].mxu0
    %v6871 = vadd.f32 0.0, %v6870
    %v6872 = vpop.f32.mrb[0].mxu0
    %v6873 = vadd.f32 0.0, %v6872
    %6874 = vmatprep.mubr.f32.mxu0 0.0
    %6875 = vmatmul.mubr.f32.gmra.mrb[0].mxu0 %v6685
    %v6876 = vpop.f32.mrb[0].mxu0
    %v6877 = vadd.f32 0.0, %v6876
    %v6878 = vpop.f32.mrb[0].mxu0
    %v6879 = vadd.f32 0.0, %v6878
    %6880 = vmatprep.mubr.f32.mxu0 0.0
    %6881 = vmatmul.mubr.f32.gmra.mrb[0].mxu0 %v6686
    %v6882 = vpop.f32.mrb[0].mxu0
    %v6883 = vadd.f32 0.0, %v6882
    %v6884 = vpop.f32.mrb[0].mxu0
    %v6885 = vadd.f32 0.0, %v6884
    %6886 = vmatprep.mubr.f32.mxu0 0.0
    %6887 = vmatmul.mubr.f32.gmra.mrb[0].mxu0 %v6687
    %v6888 = vpop.f32.mrb[0].mxu0
    %v6889 = vadd.f32 0.0, %v6888
    %v6890 = vpop.f32.mrb[0].mxu0
    %v6891 = vadd.f32 0.0, %v6890
    %6892 = vmatprep.mubr.f32.mxu0 0.0
    %6893 = vmatmul.mubr.f32.gmra.mrb[0].mxu0 %v6688
    %v6894 = vpop.f32.mrb[0].mxu0
    %v6895 = vadd.f32 0.0, %v6894
    %v6896 = vpop.f32.mrb[0].mxu0
    %v6897 = vadd.f32 0.0, %v6896
    %6898 = vmatprep.mubr.f32.mxu0 0.0
    %6899 = vmatmul.mubr.f32.gmra.mrb[0].mxu0 %v6689
    %v6900 = vpop.f32.mrb[0].mxu0
    %v6901 = vadd.f32 0.0, %v6900
    %v6902 = vpop.f32.mrb[0].mxu0
    %v6903 = vadd.f32 0.0, %v6902
    %6904 = vmatprep.mubr.f32.mxu0 0.0
    %6905 = vmatmul.mubr.f32.gmra.mrb[0].mxu0 %v6690
    %v6906 = vpop.f32.mrb[0].mxu0
    %v6907 = vadd.f32 0.0, %v6906
    %v6908 = vpop.f32.mrb[0].mxu0
    %v6909 = vadd.f32 0.0, %v6908
    %6910 = vmatprep.mubr.f32.mxu0 0.0
    %6911 = vmatmul.mubr.f32.gmra.mrb[0].mxu0 %v6691
    %v6912 = vpop.f32.mrb[0].mxu0
    %v6913 = vadd.f32 0.0, %v6912
    %v6914 = vpop.f32.mrb[0].mxu0
    %v6915 = vadd.f32 0.0, %v6914
    %6916 = vdwg.mxu0
    %6917 = vmatprep.subr.mxu0 %v6695
    %6918 = vmatpush1.msra.mxu0 %v6694
    %6919 = vmatprep.subr.mxu0 %v6699
    %6920 = vmatpush1.msra.mxu0 %v6698
    %6921 = vmatprep.subr.mxu0 %v6703
    %6922 = vmatpush1.msra.mxu0 %v6702
    %6923 = vmatprep.subr.mxu0 %v6707
    %6924 = vmatpush1.msra.mxu0 %v6706
    %6925 = vmatprep.subr.mxu0 %v6711
    %6926 = vmatpush1.msra.mxu0 %v6710
    %6927 = vmatprep.subr.mxu0 %v6715
    %6928 = vmatpush1.msra.mxu0 %v6714
    %6929 = vmatprep.subr.mxu0 %v6719
    %6930 = vmatpush1.msra.mxu0 %v6718
    %6931 = vmatprep.subr.mxu0 %v6723
    %6932 = vmatpush1.msra.mxu0 %v6722
    %6933 = vmatprep.subr.mxu0 %v6727
    %6934 = vmatpush1.msra.mxu0 %v6726
    %6935 = vmatprep.subr.mxu0 %v6731
    %6936 = vmatpush1.msra.mxu0 %v6730
    %6937 = vmatprep.subr.mxu0 %v6735
    %6938 = vmatpush1.msra.mxu0 %v6734
    %6939 = vmatprep.subr.mxu0 %v6739
    %6940 = vmatpush1.msra.mxu0 %v6738
    %6941 = vmatprep.subr.mxu0 %v6743
    %6942 = vmatpush1.msra.mxu0 %v6742
    %6943 = vmatprep.subr.mxu0 %v6747
    %6944 = vmatpush1.msra.mxu0 %v6746
    %6945 = vmatprep.subr.mxu0 %v6751
    %6946 = vmatpush1.msra.mxu0 %v6750
    %6947 = vmatprep.subr.mxu0 %v6755
    %6948 = vmatpush1.msra.mxu0 %v6754
    %6949 = vmatprep.subr.mxu0 0.0
    %6950 = vmatpush1.msra.mxu0 0.0
    %6951 = vmatprep.subr.mxu0 0.0
    %6952 = vmatpush1.msra.mxu0 0.0
    %6953 = vmatprep.subr.mxu0 0.0
    %6954 = vmatpush1.msra.mxu0 0.0
    %6955 = vmatprep.subr.mxu0 0.0
    %6956 = vmatpush1.msra.mxu0 0.0
    %6957 = vmatprep.subr.mxu0 0.0
    %6958 = vmatpush1.msra.mxu0 0.0
    %6959 = vmatprep.subr.mxu0 0.0
    %6960 = vmatpush1.msra.mxu0 0.0
    %6961 = vmatprep.subr.mxu0 0.0
    %6962 = vmatpush1.msra.mxu0 0.0
    %6963 = vmatprep.subr.mxu0 0.0
    %6964 = vmatpush1.msra.mxu0 0.0
    %6965 = vmatprep.subr.mxu0 0.0
    %6966 = vmatpush1.msra.mxu0 0.0
    %6967 = vmatprep.subr.mxu0 0.0
    %6968 = vmatpush1.msra.mxu0 0.0
    %6969 = vmatprep.subr.mxu0 0.0
    %6970 = vmatpush1.msra.mxu0 0.0
    %6971 = vmatprep.subr.mxu0 0.0
    %6972 = vmatpush1.msra.mxu0 0.0
    %6973 = vmatprep.subr.mxu0 0.0
    %6974 = vmatpush1.msra.mxu0 0.0
    %6975 = vmatprep.subr.mxu0 0.0
    %6976 = vmatpush1.msra.mxu0 0.0
    %6977 = vmatprep.subr.mxu0 0.0
    %6978 = vmatpush1.msra.mxu0 0.0
    %6979 = vmatprep.subr.mxu0 0.0
    %6980 = vmatpush1.msra.mxu0 0.0
    %6981 = vmatprep.mubr.f32.mxu0 0.0
    %6982 = vmatmul.mubr.f32.gmra.mrb[0].mxu0 %v6676
    %v6983 = vpop.f32.mrb[0].mxu0
    %v6984 = vadd.f32 0.0, %v6983
    %v6985 = vpop.f32.mrb[0].mxu0
    %v6986 = vadd.f32 0.0, %v6985
    %6987 = vmatprep.mubr.f32.mxu0 0.0
    %6988 = vmatmul.mubr.f32.gmra.mrb[0].mxu0 %v6677
    %v6989 = vpop.f32.mrb[0].mxu0
    %v6990 = vadd.f32 0.0, %v6989
    %v6991 = vpop.f32.mrb[0].mxu0
    %v6992 = vadd.f32 0.0, %v6991
    %6993 = vmatprep.mubr.f32.mxu0 0.0
    %6994 = vmatmul.mubr.f32.gmra.mrb[0].mxu0 %v6678
    %v6995 = vpop.f32.mrb[0].mxu0
    %v6996 = vadd.f32 0.0, %v6995
    %v6997 = vpop.f32.mrb[0].mxu0
    %v6998 = vadd.f32 0.0, %v6997
    %6999 = vmatprep.mubr.f32.mxu0 0.0
    %7000 = vmatmul.mubr.f32.gmra.mrb[0].mxu0 %v6679
    %v7001 = vpop.f32.mrb[0].mxu0
    %v7002 = vadd.f32 0.0, %v7001
    %v7003 = vpop.f32.mrb[0].mxu0
    %v7004 = vadd.f32 0.0, %v7003
    %7005 = vmatprep.mubr.f32.mxu0 0.0
    %7006 = vmatmul.mubr.f32.gmra.mrb[0].mxu0 %v6680
    %v7007 = vpop.f32.mrb[0].mxu0
    %v7008 = vadd.f32 0.0, %v7007
    %v7009 = vpop.f32.mrb[0].mxu0
    %v7010 = vadd.f32 0.0, %v7009
    %7011 = vmatprep.mubr.f32.mxu0 0.0
    %7012 = vmatmul.mubr.f32.gmra.mrb[0].mxu0 %v6681
    %v7013 = vpop.f32.mrb[0].mxu0
    %v7014 = vadd.f32 0.0, %v7013
    %v7015 = vpop.f32.mrb[0].mxu0
    %v7016 = vadd.f32 0.0, %v7015
    %7017 = vmatprep.mubr.f32.mxu0 0.0
    %7018 = vmatmul.mubr.f32.gmra.mrb[0].mxu0 %v6682
    %v7019 = vpop.f32.mrb[0].mxu0
    %v7020 = vadd.f32 0.0, %v7019
    %v7021 = vpop.f32.mrb[0].mxu0
    %v7022 = vadd.f32 0.0, %v7021
    %7023 = vmatprep.mubr.f32.mxu0 0.0
    %7024 = vmatmul.mubr.f32.gmra.mrb[0].mxu0 %v6683
    %v7025 = vpop.f32.mrb[0].mxu0
    %v7026 = vadd.f32 0.0, %v7025
    %v7027 = vpop.f32.mrb[0].mxu0
    %v7028 = vadd.f32 0.0, %v7027
    %7029 = vmatprep.mubr.f32.mxu0 0.0
    %7030 = vmatmul.mubr.f32.gmra.mrb[0].mxu0 %v6684
    %v7031 = vpop.f32.mrb[0].mxu0
    %v7032 = vadd.f32 0.0, %v7031
    %v7033 = vpop.f32.mrb[0].mxu0
    %v7034 = vadd.f32 0.0, %v7033
    %7035 = vmatprep.mubr.f32.mxu0 0.0
    %7036 = vmatmul.mubr.f32.gmra.mrb[0].mxu0 %v6685
    %v7037 = vpop.f32.mrb[0].mxu0
    %v7038 = vadd.f32 0.0, %v7037
    %v7039 = vpop.f32.mrb[0].mxu0
    %v7040 = vadd.f32 0.0, %v7039
    %7041 = vmatprep.mubr.f32.mxu0 0.0
    %7042 = vmatmul.mubr.f32.gmra.mrb[0].mxu0 %v6686
    %v7043 = vpop.f32.mrb[0].mxu0
    %v7044 = vadd.f32 0.0, %v7043
    %v7045 = vpop.f32.mrb[0].mxu0
    %v7046 = vadd.f32 0.0, %v7045
    %7047 = vmatprep.mubr.f32.mxu0 0.0
    %7048 = vmatmul.mubr.f32.gmra.mrb[0].mxu0 %v6687
    %v7049 = vpop.f32.mrb[0].mxu0
    %v7050 = vadd.f32 0.0, %v7049
    %v7051 = vpop.f32.mrb[0].mxu0
    %v7052 = vadd.f32 0.0, %v7051
    %7053 = vmatprep.mubr.f32.mxu0 0.0
    %7054 = vmatmul.mubr.f32.gmra.mrb[0].mxu0 %v6688
    %v7055 = vpop.f32.mrb[0].mxu0
    %v7056 = vadd.f32 0.0, %v7055
    %v7057 = vpop.f32.mrb[0].mxu0
    %v7058 = vadd.f32 0.0, %v7057
    %7059 = vmatprep.mubr.f32.mxu0 0.0
    %7060 = vmatmul.mubr.f32.gmra.mrb[0].mxu0 %v6689
    %v7061 = vpop.f32.mrb[0].mxu0
    %v7062 = vadd.f32 0.0, %v7061
    %v7063 = vpop.f32.mrb[0].mxu0
    %v7064 = vadd.f32 0.0, %v7063
    %7065 = vmatprep.mubr.f32.mxu0 0.0
    %7066 = vmatmul.mubr.f32.gmra.mrb[0].mxu0 %v6690
    %v7067 = vpop.f32.mrb[0].mxu0
    %v7068 = vadd.f32 0.0, %v7067
    %v7069 = vpop.f32.mrb[0].mxu0
    %v7070 = vadd.f32 0.0, %v7069
    %7071 = vmatprep.mubr.f32.mxu0 0.0
    %7072 = vmatmul.mubr.f32.gmra.mrb[0].mxu0 %v6691
    %v7073 = vpop.f32.mrb[0].mxu0
    %v7074 = vadd.f32 0.0, %v7073
    %v7075 = vpop.f32.mrb[0].mxu0
    %v7076 = vadd.f32 0.0, %v7075
    %7077 = vdwg.mxu0
    %v7078 = vsub.f32 %v6099, %v6421
    %v7079 = vsub.f32 %v6101, %v6423
    %v7080 = vsub.f32 %v6260, %v6582
    %v7081 = vsub.f32 %v6262, %v6584
    %v7082 = vsub.f32 %v6105, %v6427
    %v7083 = vsub.f32 %v6107, %v6429
    %v7084 = vsub.f32 %v6266, %v6588
    %v7085 = vsub.f32 %v6268, %v6590
    %v7086 = vsub.f32 %v6111, %v6433
    %v7087 = vsub.f32 %v6113, %v6435
    %v7088 = vsub.f32 %v6272, %v6594
    %v7089 = vsub.f32 %v6274, %v6596
    %v7090 = vsub.f32 %v6117, %v6439
    %v7091 = vsub.f32 %v6119, %v6441
    %v7092 = vsub.f32 %v6278, %v6600
    %v7093 = vsub.f32 %v6280, %v6602
    %v7094 = vsub.f32 %v6123, %v6445
    %v7095 = vsub.f32 %v6125, %v6447
    %v7096 = vsub.f32 %v6284, %v6606
    %v7097 = vsub.f32 %v6286, %v6608
    %v7098 = vsub.f32 %v6129, %v6451
    %v7099 = vsub.f32 %v6131, %v6453
    %v7100 = vsub.f32 %v6290, %v6612
    %v7101 = vsub.f32 %v6292, %v6614
    %v7102 = vsub.f32 %v6135, %v6457
    %v7103 = vsub.f32 %v6137, %v6459
    %v7104 = vsub.f32 %v6296, %v6618
    %v7105 = vsub.f32 %v6298, %v6620
    %v7106 = vsub.f32 %v6141, %v6463
    %v7107 = vsub.f32 %v6143, %v6465
    %v7108 = vsub.f32 %v6302, %v6624
    %v7109 = vsub.f32 %v6304, %v6626
    %v7110 = vsub.f32 %v6147, %v6469
    %v7111 = vsub.f32 %v6149, %v6471
    %v7112 = vsub.f32 %v6308, %v6630
    %v7113 = vsub.f32 %v6310, %v6632
    %v7114 = vsub.f32 %v6153, %v6475
    %v7115 = vsub.f32 %v6155, %v6477
    %v7116 = vsub.f32 %v6314, %v6636
    %v7117 = vsub.f32 %v6316, %v6638
    %v7118 = vsub.f32 %v6159, %v6481
    %v7119 = vsub.f32 %v6161, %v6483
    %v7120 = vsub.f32 %v6320, %v6642
    %v7121 = vsub.f32 %v6322, %v6644
    %v7122 = vsub.f32 %v6165, %v6487
    %v7123 = vsub.f32 %v6167, %v6489
    %v7124 = vsub.f32 %v6326, %v6648
    %v7125 = vsub.f32 %v6328, %v6650
    %v7126 = vsub.f32 %v6171, %v6493
    %v7127 = vsub.f32 %v6173, %v6495
    %v7128 = vsub.f32 %v6332, %v6654
    %v7129 = vsub.f32 %v6334, %v6656
    %v7130 = vsub.f32 %v6177, %v6499
    %v7131 = vsub.f32 %v6179, %v6501
    %v7132 = vsub.f32 %v6338, %v6660
    %v7133 = vsub.f32 %v6340, %v6662
    %v7134 = vsub.f32 %v6183, %v6505
    %v7135 = vsub.f32 %v6185, %v6507
    %v7136 = vsub.f32 %v6344, %v6666
    %v7137 = vsub.f32 %v6346, %v6668
    %v7138 = vsub.f32 %v6189, %v6511
    %v7139 = vsub.f32 %v6191, %v6513
    %v7140 = vsub.f32 %v6350, %v6672
    %v7141 = vsub.f32 %v6352, %v6674
    %v7142 = vsub.f32 %v6823, %v6099
    %v7143 = vsub.f32 %v6825, %v6101
    %v7144 = vsub.f32 %v6984, %v6260
    %v7145 = vsub.f32 %v6986, %v6262
    %v7146 = vsub.f32 %v6829, %v6105
    %v7147 = vsub.f32 %v6831, %v6107
    %v7148 = vsub.f32 %v6990, %v6266
    %v7149 = vsub.f32 %v6992, %v6268
    %v7150 = vsub.f32 %v6835, %v6111
    %v7151 = vsub.f32 %v6837, %v6113
    %v7152 = vsub.f32 %v6996, %v6272
    %v7153 = vsub.f32 %v6998, %v6274
    %v7154 = vsub.f32 %v6841, %v6117
    %v7155 = vsub.f32 %v6843, %v6119
    %v7156 = vsub.f32 %v7002, %v6278
    %v7157 = vsub.f32 %v7004, %v6280
    %v7158 = vsub.f32 %v6847, %v6123
    %v7159 = vsub.f32 %v6849, %v6125
    %v7160 = vsub.f32 %v7008, %v6284
    %v7161 = vsub.f32 %v7010, %v6286
    %v7162 = vsub.f32 %v6853, %v6129
    %v7163 = vsub.f32 %v6855, %v6131
    %v7164 = vsub.f32 %v7014, %v6290
    %v7165 = vsub.f32 %v7016, %v6292
    %v7166 = vsub.f32 %v6859, %v6135
    %v7167 = vsub.f32 %v6861, %v6137
    %v7168 = vsub.f32 %v7020, %v6296
    %v7169 = vsub.f32 %v7022, %v6298
    %v7170 = vsub.f32 %v6865, %v6141
    %v7171 = vsub.f32 %v6867, %v6143
    %v7172 = vsub.f32 %v7026, %v6302
    %v7173 = vsub.f32 %v7028, %v6304
    %v7174 = vsub.f32 %v6871, %v6147
    %v7175 = vsub.f32 %v6873, %v6149
    %v7176 = vsub.f32 %v7032, %v6308
    %v7177 = vsub.f32 %v7034, %v6310
    %v7178 = vsub.f32 %v6877, %v6153
    %v7179 = vsub.f32 %v6879, %v6155
    %v7180 = vsub.f32 %v7038, %v6314
    %v7181 = vsub.f32 %v7040, %v6316
    %v7182 = vsub.f32 %v6883, %v6159
    %v7183 = vsub.f32 %v6885, %v6161
    %v7184 = vsub.f32 %v7044, %v6320
    %v7185 = vsub.f32 %v7046, %v6322
    %v7186 = vsub.f32 %v6889, %v6165
    %v7187 = vsub.f32 %v6891, %v6167
    %v7188 = vsub.f32 %v7050, %v6326
    %v7189 = vsub.f32 %v7052, %v6328
    %v7190 = vsub.f32 %v6895, %v6171
    %v7191 = vsub.f32 %v6897, %v6173
    %v7192 = vsub.f32 %v7056, %v6332
    %v7193 = vsub.f32 %v7058, %v6334
    %v7194 = vsub.f32 %v6901, %v6177
    %v7195 = vsub.f32 %v6903, %v6179
    %v7196 = vsub.f32 %v7062, %v6338
    %v7197 = vsub.f32 %v7064, %v6340
    %v7198 = vsub.f32 %v6907, %v6183
    %v7199 = vsub.f32 %v6909, %v6185
    %v7200 = vsub.f32 %v7068, %v6344
    %v7201 = vsub.f32 %v7070, %v6346
    %v7202 = vsub.f32 %v6913, %v6189
    %v7203 = vsub.f32 %v6915, %v6191
    %v7204 = vsub.f32 %v7074, %v6350
    %v7205 = vsub.f32 %v7076, %v6352
    %v7206 = vsub.f32 %v7142, %v6421
    %v7207 = vsub.f32 %v7143, %v6423
    %v7208 = vsub.f32 %v7144, %v6582
    %v7209 = vsub.f32 %v7145, %v6584
    %v7210 = vsub.f32 %v7146, %v6427
    %v7211 = vsub.f32 %v7147, %v6429
    %v7212 = vsub.f32 %v7148, %v6588
    %v7213 = vsub.f32 %v7149, %v6590
    %v7214 = vsub.f32 %v7150, %v6433
    %v7215 = vsub.f32 %v7151, %v6435
    %v7216 = vsub.f32 %v7152, %v6594
    %v7217 = vsub.f32 %v7153, %v6596
    %v7218 = vsub.f32 %v7154, %v6439
    %v7219 = vsub.f32 %v7155, %v6441
    %v7220 = vsub.f32 %v7156, %v6600
    %v7221 = vsub.f32 %v7157, %v6602
    %v7222 = vsub.f32 %v7158, %v6445
    %v7223 = vsub.f32 %v7159, %v6447
    %v7224 = vsub.f32 %v7160, %v6606
    %v7225 = vsub.f32 %v7161, %v6608
    %v7226 = vsub.f32 %v7162, %v6451
    %v7227 = vsub.f32 %v7163, %v6453
    %v7228 = vsub.f32 %v7164, %v6612
    %v7229 = vsub.f32 %v7165, %v6614
    %v7230 = vsub.f32 %v7166, %v6457
    %v7231 = vsub.f32 %v7167, %v6459
    %v7232 = vsub.f32 %v7168, %v6618
    %v7233 = vsub.f32 %v7169, %v6620
    %v7234 = vsub.f32 %v7170, %v6463
    %v7235 = vsub.f32 %v7171, %v6465
    %v7236 = vsub.f32 %v7172, %v6624
    %v7237 = vsub.f32 %v7173, %v6626
    %v7238 = vsub.f32 %v7174, %v6469
    %v7239 = vsub.f32 %v7175, %v6471
    %v7240 = vsub.f32 %v7176, %v6630
    %v7241 = vsub.f32 %v7177, %v6632
    %v7242 = vsub.f32 %v7178, %v6475
    %v7243 = vsub.f32 %v7179, %v6477
    %v7244 = vsub.f32 %v7180, %v6636
    %v7245 = vsub.f32 %v7181, %v6638
    %v7246 = vsub.f32 %v7182, %v6481
    %v7247 = vsub.f32 %v7183, %v6483
    %v7248 = vsub.f32 %v7184, %v6642
    %v7249 = vsub.f32 %v7185, %v6644
    %v7250 = vsub.f32 %v7186, %v6487
    %v7251 = vsub.f32 %v7187, %v6489
    %v7252 = vsub.f32 %v7188, %v6648
    %v7253 = vsub.f32 %v7189, %v6650
    %v7254 = vsub.f32 %v7190, %v6493
    %v7255 = vsub.f32 %v7191, %v6495
    %v7256 = vsub.f32 %v7192, %v6654
    %v7257 = vsub.f32 %v7193, %v6656
    %v7258 = vsub.f32 %v7194, %v6499
    %v7259 = vsub.f32 %v7195, %v6501
    %v7260 = vsub.f32 %v7196, %v6660
    %v7261 = vsub.f32 %v7197, %v6662
    %v7262 = vsub.f32 %v7198, %v6505
    %v7263 = vsub.f32 %v7199, %v6507
    %v7264 = vsub.f32 %v7200, %v6666
    %v7265 = vsub.f32 %v7201, %v6668
    %v7266 = vsub.f32 %v7202, %v6511
    %v7267 = vsub.f32 %v7203, %v6513
    %v7268 = vsub.f32 %v7204, %v6672
    %v7269 = vsub.f32 %v7205, %v6674
    %v7270 = vmul.f32 %v868, %v7078
    %v7271 = vmul.f32 %v869, %v7079
    %v7272 = vmul.f32 %v870, %v7080
    %v7273 = vmul.f32 %v871, %v7081
    %v7274 = vmul.f32 %v872, %v7082
    %v7275 = vmul.f32 %v873, %v7083
    %v7276 = vmul.f32 %v874, %v7084
    %v7277 = vmul.f32 %v875, %v7085
    %v7278 = vmul.f32 %v876, %v7086
    %v7279 = vmul.f32 %v877, %v7087
    %v7280 = vmul.f32 %v878, %v7088
    %v7281 = vmul.f32 %v879, %v7089
    %v7282 = vmul.f32 %v880, %v7090
    %v7283 = vmul.f32 %v881, %v7091
    %v7284 = vmul.f32 %v882, %v7092
    %v7285 = vmul.f32 %v883, %v7093
    %v7286 = vmul.f32 %v884, %v7094
    %v7287 = vmul.f32 %v885, %v7095
    %v7288 = vmul.f32 %v886, %v7096
    %v7289 = vmul.f32 %v887, %v7097
    %v7290 = vmul.f32 %v888, %v7098
    %v7291 = vmul.f32 %v889, %v7099
    %v7292 = vmul.f32 %v890, %v7100
    %v7293 = vmul.f32 %v891, %v7101
    %v7294 = vmul.f32 %v892, %v7102
    %v7295 = vmul.f32 %v893, %v7103
    %v7296 = vmul.f32 %v894, %v7104
    %v7297 = vmul.f32 %v895, %v7105
    %v7298 = vmul.f32 %v896, %v7106
    %v7299 = vmul.f32 %v897, %v7107
    %v7300 = vmul.f32 %v898, %v7108
    %v7301 = vmul.f32 %v899, %v7109
    %v7302 = vmul.f32 %v900, %v7110
    %v7303 = vmul.f32 %v901, %v7111
    %v7304 = vmul.f32 %v902, %v7112
    %v7305 = vmul.f32 %v903, %v7113
    %v7306 = vmul.f32 %v904, %v7114
    %v7307 = vmul.f32 %v905, %v7115
    %v7308 = vmul.f32 %v906, %v7116
    %v7309 = vmul.f32 %v907, %v7117
    %v7310 = vmul.f32 %v908, %v7118
    %v7311 = vmul.f32 %v909, %v7119
    %v7312 = vmul.f32 %v910, %v7120
    %v7313 = vmul.f32 %v911, %v7121
    %v7314 = vmul.f32 %v912, %v7122
    %v7315 = vmul.f32 %v913, %v7123
    %v7316 = vmul.f32 %v914, %v7124
    %v7317 = vmul.f32 %v915, %v7125
    %v7318 = vmul.f32 %v916, %v7126
    %v7319 = vmul.f32 %v917, %v7127
    %v7320 = vmul.f32 %v918, %v7128
    %v7321 = vmul.f32 %v919, %v7129
    %v7322 = vmul.f32 %v920, %v7130
    %v7323 = vmul.f32 %v921, %v7131
    %v7324 = vmul.f32 %v922, %v7132
    %v7325 = vmul.f32 %v923, %v7133
    %v7326 = vmul.f32 %v924, %v7134
    %v7327 = vmul.f32 %v925, %v7135
    %v7328 = vmul.f32 %v926, %v7136
    %v7329 = vmul.f32 %v927, %v7137
    %v7330 = vmul.f32 %v928, %v7138
    %v7331 = vmul.f32 %v929, %v7139
    %v7332 = vmul.f32 %v930, %v7140
    %v7333 = vmul.f32 %v931, %v7141
    %v7334 = vmul.f32 %v932, %v7206
    %v7335 = vmul.f32 %v933, %v7207
    %v7336 = vmul.f32 %v934, %v7208
    %v7337 = vmul.f32 %v935, %v7209
    %v7338 = vmul.f32 %v936, %v7210
    %v7339 = vmul.f32 %v937, %v7211
    %v7340 = vmul.f32 %v938, %v7212
    %v7341 = vmul.f32 %v939, %v7213
    %v7342 = vmul.f32 %v940, %v7214
    %v7343 = vmul.f32 %v941, %v7215
    %v7344 = vmul.f32 %v942, %v7216
    %v7345 = vmul.f32 %v943, %v7217
    %v7346 = vmul.f32 %v944, %v7218
    %v7347 = vmul.f32 %v945, %v7219
    %v7348 = vmul.f32 %v946, %v7220
    %v7349 = vmul.f32 %v947, %v7221
    %v7350 = vmul.f32 %v948, %v7222
    %v7351 = vmul.f32 %v949, %v7223
    %v7352 = vmul.f32 %v950, %v7224
    %v7353 = vmul.f32 %v951, %v7225
    %v7354 = vmul.f32 %v952, %v7226
    %v7355 = vmul.f32 %v953, %v7227
    %v7356 = vmul.f32 %v954, %v7228
    %v7357 = vmul.f32 %v955, %v7229
    %v7358 = vmul.f32 %v956, %v7230
    %v7359 = vmul.f32 %v957, %v7231
    %v7360 = vmul.f32 %v958, %v7232
    %v7361 = vmul.f32 %v959, %v7233
    %v7362 = vmul.f32 %v960, %v7234
    %v7363 = vmul.f32 %v961, %v7235
    %v7364 = vmul.f32 %v962, %v7236
    %v7365 = vmul.f32 %v963, %v7237
    %v7366 = vmul.f32 %v964, %v7238
    %v7367 = vmul.f32 %v965, %v7239
    %v7368 = vmul.f32 %v966, %v7240
    %v7369 = vmul.f32 %v967, %v7241
    %v7370 = vmul.f32 %v968, %v7242
    %v7371 = vmul.f32 %v969, %v7243
    %v7372 = vmul.f32 %v970, %v7244
    %v7373 = vmul.f32 %v971, %v7245
    %v7374 = vmul.f32 %v972, %v7246
    %v7375 = vmul.f32 %v973, %v7247
    %v7376 = vmul.f32 %v974, %v7248
    %v7377 = vmul.f32 %v975, %v7249
    %v7378 = vmul.f32 %v976, %v7250
    %v7379 = vmul.f32 %v977, %v7251
    %v7380 = vmul.f32 %v978, %v7252
    %v7381 = vmul.f32 %v979, %v7253
    %v7382 = vmul.f32 %v980, %v7254
    %v7383 = vmul.f32 %v981, %v7255
    %v7384 = vmul.f32 %v982, %v7256
    %v7385 = vmul.f32 %v983, %v7257
    %v7386 = vmul.f32 %v984, %v7258
    %v7387 = vmul.f32 %v985, %v7259
    %v7388 = vmul.f32 %v986, %v7260
    %v7389 = vmul.f32 %v987, %v7261
    %v7390 = vmul.f32 %v988, %v7262
    %v7391 = vmul.f32 %v989, %v7263
    %v7392 = vmul.f32 %v990, %v7264
    %v7393 = vmul.f32 %v991, %v7265
    %v7394 = vmul.f32 %v992, %v7266
    %v7395 = vmul.f32 %v993, %v7267
    %v7396 = vmul.f32 %v994, %v7268
    %v7397 = vmul.f32 %v995, %v7269
    %v7398 = vadd.f32 %v7270, %v7334
    %v7399 = vadd.f32 %v7271, %v7335
    %v7400 = vadd.f32 %v7272, %v7336
    %v7401 = vadd.f32 %v7273, %v7337
    %v7402 = vadd.f32 %v7274, %v7338
    %v7403 = vadd.f32 %v7275, %v7339
    %v7404 = vadd.f32 %v7276, %v7340
    %v7405 = vadd.f32 %v7277, %v7341
    %v7406 = vadd.f32 %v7278, %v7342
    %v7407 = vadd.f32 %v7279, %v7343
    %v7408 = vadd.f32 %v7280, %v7344
    %v7409 = vadd.f32 %v7281, %v7345
    %v7410 = vadd.f32 %v7282, %v7346
    %v7411 = vadd.f32 %v7283, %v7347
    %v7412 = vadd.f32 %v7284, %v7348
    %v7413 = vadd.f32 %v7285, %v7349
    %v7414 = vadd.f32 %v7286, %v7350
    %v7415 = vadd.f32 %v7287, %v7351
    %v7416 = vadd.f32 %v7288, %v7352
    %v7417 = vadd.f32 %v7289, %v7353
    %v7418 = vadd.f32 %v7290, %v7354
    %v7419 = vadd.f32 %v7291, %v7355
    %v7420 = vadd.f32 %v7292, %v7356
    %v7421 = vadd.f32 %v7293, %v7357
    %v7422 = vadd.f32 %v7294, %v7358
    %v7423 = vadd.f32 %v7295, %v7359
    %v7424 = vadd.f32 %v7296, %v7360
    %v7425 = vadd.f32 %v7297, %v7361
    %v7426 = vadd.f32 %v7298, %v7362
    %v7427 = vadd.f32 %v7299, %v7363
    %v7428 = vadd.f32 %v7300, %v7364
    %v7429 = vadd.f32 %v7301, %v7365
    %v7430 = vadd.f32 %v7302, %v7366
    %v7431 = vadd.f32 %v7303, %v7367
    %v7432 = vadd.f32 %v7304, %v7368
    %v7433 = vadd.f32 %v7305, %v7369
    %v7434 = vadd.f32 %v7306, %v7370
    %v7435 = vadd.f32 %v7307, %v7371
    %v7436 = vadd.f32 %v7308, %v7372
    %v7437 = vadd.f32 %v7309, %v7373
    %v7438 = vadd.f32 %v7310, %v7374
    %v7439 = vadd.f32 %v7311, %v7375
    %v7440 = vadd.f32 %v7312, %v7376
    %v7441 = vadd.f32 %v7313, %v7377
    %v7442 = vadd.f32 %v7314, %v7378
    %v7443 = vadd.f32 %v7315, %v7379
    %v7444 = vadd.f32 %v7316, %v7380
    %v7445 = vadd.f32 %v7317, %v7381
    %v7446 = vadd.f32 %v7318, %v7382
    %v7447 = vadd.f32 %v7319, %v7383
    %v7448 = vadd.f32 %v7320, %v7384
    %v7449 = vadd.f32 %v7321, %v7385
    %v7450 = vadd.f32 %v7322, %v7386
    %v7451 = vadd.f32 %v7323, %v7387
    %v7452 = vadd.f32 %v7324, %v7388
    %v7453 = vadd.f32 %v7325, %v7389
    %v7454 = vadd.f32 %v7326, %v7390
    %v7455 = vadd.f32 %v7327, %v7391
    %v7456 = vadd.f32 %v7328, %v7392
    %v7457 = vadd.f32 %v7329, %v7393
    %v7458 = vadd.f32 %v7330, %v7394
    %v7459 = vadd.f32 %v7331, %v7395
    %v7460 = vadd.f32 %v7332, %v7396
    %v7461 = vadd.f32 %v7333, %v7397
    %v7462 = vmul.f32 %v868, %v7206
    %v7463 = vmul.f32 %v869, %v7207
    %v7464 = vmul.f32 %v870, %v7208
    %v7465 = vmul.f32 %v871, %v7209
    %v7466 = vmul.f32 %v872, %v7210
    %v7467 = vmul.f32 %v873, %v7211
    %v7468 = vmul.f32 %v874, %v7212
    %v7469 = vmul.f32 %v875, %v7213
    %v7470 = vmul.f32 %v876, %v7214
    %v7471 = vmul.f32 %v877, %v7215
    %v7472 = vmul.f32 %v878, %v7216
    %v7473 = vmul.f32 %v879, %v7217
    %v7474 = vmul.f32 %v880, %v7218
    %v7475 = vmul.f32 %v881, %v7219
    %v7476 = vmul.f32 %v882, %v7220
    %v7477 = vmul.f32 %v883, %v7221
    %v7478 = vmul.f32 %v884, %v7222
    %v7479 = vmul.f32 %v885, %v7223
    %v7480 = vmul.f32 %v886, %v7224
    %v7481 = vmul.f32 %v887, %v7225
    %v7482 = vmul.f32 %v888, %v7226
    %v7483 = vmul.f32 %v889, %v7227
    %v7484 = vmul.f32 %v890, %v7228
    %v7485 = vmul.f32 %v891, %v7229
    %v7486 = vmul.f32 %v892, %v7230
    %v7487 = vmul.f32 %v893, %v7231
    %v7488 = vmul.f32 %v894, %v7232
    %v7489 = vmul.f32 %v895, %v7233
    %v7490 = vmul.f32 %v896, %v7234
    %v7491 = vmul.f32 %v897, %v7235
    %v7492 = vmul.f32 %v898, %v7236
    %v7493 = vmul.f32 %v899, %v7237
    %v7494 = vmul.f32 %v900, %v7238
    %v7495 = vmul.f32 %v901, %v7239
    %v7496 = vmul.f32 %v902, %v7240
    %v7497 = vmul.f32 %v903, %v7241
    %v7498 = vmul.f32 %v904, %v7242
    %v7499 = vmul.f32 %v905, %v7243
    %v7500 = vmul.f32 %v906, %v7244
    %v7501 = vmul.f32 %v907, %v7245
    %v7502 = vmul.f32 %v908, %v7246
    %v7503 = vmul.f32 %v909, %v7247
    %v7504 = vmul.f32 %v910, %v7248
    %v7505 = vmul.f32 %v911, %v7249
    %v7506 = vmul.f32 %v912, %v7250
    %v7507 = vmul.f32 %v913, %v7251
    %v7508 = vmul.f32 %v914, %v7252
    %v7509 = vmul.f32 %v915, %v7253
    %v7510 = vmul.f32 %v916, %v7254
    %v7511 = vmul.f32 %v917, %v7255
    %v7512 = vmul.f32 %v918, %v7256
    %v7513 = vmul.f32 %v919, %v7257
    %v7514 = vmul.f32 %v920, %v7258
    %v7515 = vmul.f32 %v921, %v7259
    %v7516 = vmul.f32 %v922, %v7260
    %v7517 = vmul.f32 %v923, %v7261
    %v7518 = vmul.f32 %v924, %v7262
    %v7519 = vmul.f32 %v925, %v7263
    %v7520 = vmul.f32 %v926, %v7264
    %v7521 = vmul.f32 %v927, %v7265
    %v7522 = vmul.f32 %v928, %v7266
    %v7523 = vmul.f32 %v929, %v7267
    %v7524 = vmul.f32 %v930, %v7268
    %v7525 = vmul.f32 %v931, %v7269
    %v7526 = vmul.f32 %v932, %v7078
    %v7527 = vmul.f32 %v933, %v7079
    %v7528 = vmul.f32 %v934, %v7080
    %v7529 = vmul.f32 %v935, %v7081
    %v7530 = vmul.f32 %v936, %v7082
    %v7531 = vmul.f32 %v937, %v7083
    %v7532 = vmul.f32 %v938, %v7084
    %v7533 = vmul.f32 %v939, %v7085
    %v7534 = vmul.f32 %v940, %v7086
    %v7535 = vmul.f32 %v941, %v7087
    %v7536 = vmul.f32 %v942, %v7088
    %v7537 = vmul.f32 %v943, %v7089
    %v7538 = vmul.f32 %v944, %v7090
    %v7539 = vmul.f32 %v945, %v7091
    %v7540 = vmul.f32 %v946, %v7092
    %v7541 = vmul.f32 %v947, %v7093
    %v7542 = vmul.f32 %v948, %v7094
    %v7543 = vmul.f32 %v949, %v7095
    %v7544 = vmul.f32 %v950, %v7096
    %v7545 = vmul.f32 %v951, %v7097
    %v7546 = vmul.f32 %v952, %v7098
    %v7547 = vmul.f32 %v953, %v7099
    %v7548 = vmul.f32 %v954, %v7100
    %v7549 = vmul.f32 %v955, %v7101
    %v7550 = vmul.f32 %v956, %v7102
    %v7551 = vmul.f32 %v957, %v7103
    %v7552 = vmul.f32 %v958, %v7104
    %v7553 = vmul.f32 %v959, %v7105
    %v7554 = vmul.f32 %v960, %v7106
    %v7555 = vmul.f32 %v961, %v7107
    %v7556 = vmul.f32 %v962, %v7108
    %v7557 = vmul.f32 %v963, %v7109
    %v7558 = vmul.f32 %v964, %v7110
    %v7559 = vmul.f32 %v965, %v7111
    %v7560 = vmul.f32 %v966, %v7112
    %v7561 = vmul.f32 %v967, %v7113
    %v7562 = vmul.f32 %v968, %v7114
    %v7563 = vmul.f32 %v969, %v7115
    %v7564 = vmul.f32 %v970, %v7116
    %v7565 = vmul.f32 %v971, %v7117
    %v7566 = vmul.f32 %v972, %v7118
    %v7567 = vmul.f32 %v973, %v7119
    %v7568 = vmul.f32 %v974, %v7120
    %v7569 = vmul.f32 %v975, %v7121
    %v7570 = vmul.f32 %v976, %v7122
    %v7571 = vmul.f32 %v977, %v7123
    %v7572 = vmul.f32 %v978, %v7124
    %v7573 = vmul.f32 %v979, %v7125
    %v7574 = vmul.f32 %v980, %v7126
    %v7575 = vmul.f32 %v981, %v7127
    %v7576 = vmul.f32 %v982, %v7128
    %v7577 = vmul.f32 %v983, %v7129
    %v7578 = vmul.f32 %v984, %v7130
    %v7579 = vmul.f32 %v985, %v7131
    %v7580 = vmul.f32 %v986, %v7132
    %v7581 = vmul.f32 %v987, %v7133
    %v7582 = vmul.f32 %v988, %v7134
    %v7583 = vmul.f32 %v989, %v7135
    %v7584 = vmul.f32 %v990, %v7136
    %v7585 = vmul.f32 %v991, %v7137
    %v7586 = vmul.f32 %v992, %v7138
    %v7587 = vmul.f32 %v993, %v7139
    %v7588 = vmul.f32 %v994, %v7140
    %v7589 = vmul.f32 %v995, %v7141
    %v7590 = vsub.f32 %v7462, %v7526
    %v7591 = vsub.f32 %v7463, %v7527
    %v7592 = vsub.f32 %v7464, %v7528
    %v7593 = vsub.f32 %v7465, %v7529
    %v7594 = vsub.f32 %v7466, %v7530
    %v7595 = vsub.f32 %v7467, %v7531
    %v7596 = vsub.f32 %v7468, %v7532
    %v7597 = vsub.f32 %v7469, %v7533
    %v7598 = vsub.f32 %v7470, %v7534
    %v7599 = vsub.f32 %v7471, %v7535
    %v7600 = vsub.f32 %v7472, %v7536
    %v7601 = vsub.f32 %v7473, %v7537
    %v7602 = vsub.f32 %v7474, %v7538
    %v7603 = vsub.f32 %v7475, %v7539
    %v7604 = vsub.f32 %v7476, %v7540
    %v7605 = vsub.f32 %v7477, %v7541
    %v7606 = vsub.f32 %v7478, %v7542
    %v7607 = vsub.f32 %v7479, %v7543
    %v7608 = vsub.f32 %v7480, %v7544
    %v7609 = vsub.f32 %v7481, %v7545
    %v7610 = vsub.f32 %v7482, %v7546
    %v7611 = vsub.f32 %v7483, %v7547
    %v7612 = vsub.f32 %v7484, %v7548
    %v7613 = vsub.f32 %v7485, %v7549
    %v7614 = vsub.f32 %v7486, %v7550
    %v7615 = vsub.f32 %v7487, %v7551
    %v7616 = vsub.f32 %v7488, %v7552
    %v7617 = vsub.f32 %v7489, %v7553
    %v7618 = vsub.f32 %v7490, %v7554
    %v7619 = vsub.f32 %v7491, %v7555
    %v7620 = vsub.f32 %v7492, %v7556
    %v7621 = vsub.f32 %v7493, %v7557
    %v7622 = vsub.f32 %v7494, %v7558
    %v7623 = vsub.f32 %v7495, %v7559
    %v7624 = vsub.f32 %v7496, %v7560
    %v7625 = vsub.f32 %v7497, %v7561
    %v7626 = vsub.f32 %v7498, %v7562
    %v7627 = vsub.f32 %v7499, %v7563
    %v7628 = vsub.f32 %v7500, %v7564
    %v7629 = vsub.f32 %v7501, %v7565
    %v7630 = vsub.f32 %v7502, %v7566
    %v7631 = vsub.f32 %v7503, %v7567
    %v7632 = vsub.f32 %v7504, %v7568
    %v7633 = vsub.f32 %v7505, %v7569
    %v7634 = vsub.f32 %v7506, %v7570
    %v7635 = vsub.f32 %v7507, %v7571
    %v7636 = vsub.f32 %v7508, %v7572
    %v7637 = vsub.f32 %v7509, %v7573
    %v7638 = vsub.f32 %v7510, %v7574
    %v7639 = vsub.f32 %v7511, %v7575
    %v7640 = vsub.f32 %v7512, %v7576
    %v7641 = vsub.f32 %v7513, %v7577
    %v7642 = vsub.f32 %v7514, %v7578
    %v7643 = vsub.f32 %v7515, %v7579
    %v7644 = vsub.f32 %v7516, %v7580
    %v7645 = vsub.f32 %v7517, %v7581
    %v7646 = vsub.f32 %v7518, %v7582
    %v7647 = vsub.f32 %v7519, %v7583
    %v7648 = vsub.f32 %v7520, %v7584
    %v7649 = vsub.f32 %v7521, %v7585
    %v7650 = vsub.f32 %v7522, %v7586
    %v7651 = vsub.f32 %v7523, %v7587
    %v7652 = vsub.f32 %v7524, %v7588
    %v7653 = vsub.f32 %v7525, %v7589
    %v7654 = vadd.f32 %v7398, %v7399
    %v7655 = vadd.f32 %v7402, %v7403
    %v7656 = vadd.f32 %v7406, %v7407
    %v7657 = vadd.f32 %v7410, %v7411
    %v7658 = vadd.f32 %v7414, %v7415
    %v7659 = vadd.f32 %v7418, %v7419
    %v7660 = vadd.f32 %v7422, %v7423
    %v7661 = vadd.f32 %v7426, %v7427
    %v7662 = vadd.f32 %v7430, %v7431
    %v7663 = vadd.f32 %v7434, %v7435
    %v7664 = vadd.f32 %v7438, %v7439
    %v7665 = vadd.f32 %v7442, %v7443
    %v7666 = vadd.f32 %v7446, %v7447
    %v7667 = vadd.f32 %v7450, %v7451
    %v7668 = vadd.f32 %v7454, %v7455
    %v7669 = vadd.f32 %v7458, %v7459
    %v7670 = vadd.f32 %v7590, %v7591
    %v7671 = vadd.f32 %v7594, %v7595
    %v7672 = vadd.f32 %v7598, %v7599
    %v7673 = vadd.f32 %v7602, %v7603
    %v7674 = vadd.f32 %v7606, %v7607
    %v7675 = vadd.f32 %v7610, %v7611
    %v7676 = vadd.f32 %v7614, %v7615
    %v7677 = vadd.f32 %v7618, %v7619
    %v7678 = vadd.f32 %v7622, %v7623
    %v7679 = vadd.f32 %v7626, %v7627
    %v7680 = vadd.f32 %v7630, %v7631
    %v7681 = vadd.f32 %v7634, %v7635
    %v7682 = vadd.f32 %v7638, %v7639
    %v7683 = vadd.f32 %v7642, %v7643
    %v7684 = vadd.f32 %v7646, %v7647
    %v7685 = vadd.f32 %v7650, %v7651
    %v7686 = vadd.f32 %v7654, %v7400
    %v7687 = vadd.f32 %v7655, %v7404
    %v7688 = vadd.f32 %v7656, %v7408
    %v7689 = vadd.f32 %v7657, %v7412
    %v7690 = vadd.f32 %v7658, %v7416
    %v7691 = vadd.f32 %v7659, %v7420
    %v7692 = vadd.f32 %v7660, %v7424
    %v7693 = vadd.f32 %v7661, %v7428
    %v7694 = vadd.f32 %v7662, %v7432
    %v7695 = vadd.f32 %v7663, %v7436
    %v7696 = vadd.f32 %v7664, %v7440
    %v7697 = vadd.f32 %v7665, %v7444
    %v7698 = vadd.f32 %v7666, %v7448
    %v7699 = vadd.f32 %v7667, %v7452
    %v7700 = vadd.f32 %v7668, %v7456
    %v7701 = vadd.f32 %v7669, %v7460
    %v7702 = vadd.f32 %v7670, %v7592
    %v7703 = vadd.f32 %v7671, %v7596
    %v7704 = vadd.f32 %v7672, %v7600
    %v7705 = vadd.f32 %v7673, %v7604
    %v7706 = vadd.f32 %v7674, %v7608
    %v7707 = vadd.f32 %v7675, %v7612
    %v7708 = vadd.f32 %v7676, %v7616
    %v7709 = vadd.f32 %v7677, %v7620
    %v7710 = vadd.f32 %v7678, %v7624
    %v7711 = vadd.f32 %v7679, %v7628
    %v7712 = vadd.f32 %v7680, %v7632
    %v7713 = vadd.f32 %v7681, %v7636
    %v7714 = vadd.f32 %v7682, %v7640
    %v7715 = vadd.f32 %v7683, %v7644
    %v7716 = vadd.f32 %v7684, %v7648
    %v7717 = vadd.f32 %v7685, %v7652
    %v7718 = vadd.f32 %v7686, %v7401
    %v7719 = vadd.f32 %v7687, %v7405
    %v7720 = vadd.f32 %v7688, %v7409
    %v7721 = vadd.f32 %v7689, %v7413
    %v7722 = vadd.f32 %v7690, %v7417
    %v7723 = vadd.f32 %v7691, %v7421
    %v7724 = vadd.f32 %v7692, %v7425
    %v7725 = vadd.f32 %v7693, %v7429
    %v7726 = vadd.f32 %v7694, %v7433
    %v7727 = vadd.f32 %v7695, %v7437
    %v7728 = vadd.f32 %v7696, %v7441
    %v7729 = vadd.f32 %v7697, %v7445
    %v7730 = vadd.f32 %v7698, %v7449
    %v7731 = vadd.f32 %v7699, %v7453
    %v7732 = vadd.f32 %v7700, %v7457
    %v7733 = vadd.f32 %v7701, %v7461
    %v7734 = vadd.f32 %v7702, %v7593
    %v7735 = vadd.f32 %v7703, %v7597
    %v7736 = vadd.f32 %v7704, %v7601
    %v7737 = vadd.f32 %v7705, %v7605
    %v7738 = vadd.f32 %v7706, %v7609
    %v7739 = vadd.f32 %v7707, %v7613
    %v7740 = vadd.f32 %v7708, %v7617
    %v7741 = vadd.f32 %v7709, %v7621
    %v7742 = vadd.f32 %v7710, %v7625
    %v7743 = vadd.f32 %v7711, %v7629
    %v7744 = vadd.f32 %v7712, %v7633
    %v7745 = vadd.f32 %v7713, %v7637
    %v7746 = vadd.f32 %v7714, %v7641
    %v7747 = vadd.f32 %v7715, %v7645
    %v7748 = vadd.f32 %v7716, %v7649
    %v7749 = vadd.f32 %v7717, %v7653
    %7750 = vst [vmem:[#allocation23] sm:$0xff] %v7718
    %7751 = vst [vmem:[#allocation23 + $0x8] sm:$0xff] %v7719
    %7752 = vst [vmem:[#allocation23 + $0x10] sm:$0xff] %v7720
    %7753 = vst [vmem:[#allocation23 + $0x18] sm:$0xff] %v7721
    %7754 = vst [vmem:[#allocation23 + $0x20] sm:$0xff] %v7722
    %7755 = vst [vmem:[#allocation23 + $0x28] sm:$0xff] %v7723
    %7756 = vst [vmem:[#allocation23 + $0x30] sm:$0xff] %v7724
    %7757 = vst [vmem:[#allocation23 + $0x38] sm:$0xff] %v7725
    %7758 = vst [vmem:[#allocation23 + $0x40] sm:$0xff] %v7726
    %7759 = vst [vmem:[#allocation23 + $0x48] sm:$0xff] %v7727
    %7760 = vst [vmem:[#allocation23 + $0x50] sm:$0xff] %v7728
    %7761 = vst [vmem:[#allocation23 + $0x58] sm:$0xff] %v7729
    %7762 = vst [vmem:[#allocation23 + $0x60] sm:$0xff] %v7730
    %7763 = vst [vmem:[#allocation23 + $0x68] sm:$0xff] %v7731
    %7764 = vst [vmem:[#allocation23 + $0x70] sm:$0xff] %v7732
    %7765 = vst [vmem:[#allocation23 + $0x78] sm:$0xff] %v7733
    %7766 = vst [vmem:[#allocation24] sm:$0xff] %v7734
    %7767 = vst [vmem:[#allocation24 + $0x8] sm:$0xff] %v7735
    %7768 = vst [vmem:[#allocation24 + $0x10] sm:$0xff] %v7736
    %7769 = vst [vmem:[#allocation24 + $0x18] sm:$0xff] %v7737
    %7770 = vst [vmem:[#allocation24 + $0x20] sm:$0xff] %v7738
    %7771 = vst [vmem:[#allocation24 + $0x28] sm:$0xff] %v7739
    %7772 = vst [vmem:[#allocation24 + $0x30] sm:$0xff] %v7740
    %7773 = vst [vmem:[#allocation24 + $0x38] sm:$0xff] %v7741
    %7774 = vst [vmem:[#allocation24 + $0x40] sm:$0xff] %v7742
    %7775 = vst [vmem:[#allocation24 + $0x48] sm:$0xff] %v7743
    %7776 = vst [vmem:[#allocation24 + $0x50] sm:$0xff] %v7744
    %7777 = vst [vmem:[#allocation24 + $0x58] sm:$0xff] %v7745
    %7778 = vst [vmem:[#allocation24 + $0x60] sm:$0xff] %v7746
    %7779 = vst [vmem:[#allocation24 + $0x68] sm:$0xff] %v7747
    %7780 = vst [vmem:[#allocation24 + $0x70] sm:$0xff] %v7748
    %7781 = vst [vmem:[#allocation24 + $0x78] sm:$0xff] %v7749
    // Predicated region
    $region106: #{tpu_custom_call.1} parent=1 // pred_check
      _
    $region107: #{tpu_custom_call.1} parent=1 // pred_check_branch
      %7783 = sbr.rel (0) target = $region109
    $region108: #{tpu_custom_call.1} parent=1 // pred_region
      %s7785 = ssub.s32 2048, 2048
      %7786 = vsyncadd [#allocation4], %s7785
      %s7787 = sshll.u32 [#allocation23], 4
      %s7788 = int_to_ptr.vmem [resolvable:$true] %s7787
      %7793 = dma.vmem_to_hbm [thread:$0]  %s7788, 2048, %s13, [#allocation4], 128, 128, 8
    $region109: #{tpu_custom_call.1} parent=1 // pred_fallthru
      _
    // Predicated region
    $region110: #{tpu_custom_call.1} parent=1 // pred_check
      _
    $region111: #{tpu_custom_call.1} parent=1 // pred_check_branch
      %7795 = sbr.rel (0) target = $region113
    $region112: #{tpu_custom_call.1} parent=1 // pred_region
      %s7797 = ssub.s32 2048, 2048
      %7798 = vsyncadd [#allocation25], %s7797
      %s7799 = sshll.u32 [#allocation24], 4
      %s7800 = int_to_ptr.vmem [resolvable:$true] %s7799
      %7805 = dma.vmem_to_hbm [thread:$0]  %s7800, 2048, %s14, [#allocation25], 128, 128, 8
    $region113: #{tpu_custom_call.1} parent=1 // pred_fallthru
      _
    // Predicated region
    $region114: #{tpu_custom_call.1} parent=1 // pred_check
      _
    $region115: #{tpu_custom_call.1} parent=1 // pred_check_branch
      %7807 = sbr.rel (0) target = $region117
    $region116: #{tpu_custom_call.1} parent=1 // pred_region
      %7808 = dma.done [#allocation4], 2048
    $region117: #{tpu_custom_call.1} parent=1 // pred_fallthru
      _
    // Predicated region
    $region118: #{tpu_custom_call.1} parent=1 // pred_check
      _
    $region119: #{tpu_custom_call.1} parent=1 // pred_check_branch
      %7810 = sbr.rel (0) target = $region121
    $region120: #{tpu_custom_call.1} parent=1 // pred_region
      %7811 = dma.done [#allocation25], 2048
    $region121: #{tpu_custom_call.1} parent=1 // pred_fallthru
      _
    %7812 = vsyncpa [#allocation3], 1
    %7813 = vsyncpa [#allocation6], 1
    %7814 = vsyncpa [#allocation9], 1
    %7815 = vsyncpa [#allocation12], 1
    %7816 = vsyncpa [#allocation15], 1
    %7817 = vsyncpa [#allocation18], 1
    %7818 = vsyncpa [#allocation21], 1
    %7819 = vsyncpa [#allocation4], 1
    %7820 = vsyncpa [#allocation25], 1

</llo_original>
